<compile_context>
chip_gen: v6e
topology: v6e:2x2x1
jax: 0.10.0
libtpu: 0.0.40
codegen_flags: <defaults>
</compile_context>

<pallas_src>
import jax
import jax.numpy as jnp
from jax.experimental import pallas as pl
from jax.experimental.pallas import tpu as pltpu


# ----------------------------------------------------------------------------
# Fused kernel: conv1+bn+relu -> conv2+bn+relu -> conv3+bn+relu -> global max
# One grid step == one image.
# ----------------------------------------------------------------------------
def _fused_kernel(
    x_col_ref,                        # (1, H*W, 9*Cin) layer-1 im2col'd input
    w1_ref, s1_ref, b1_ref,           # (9*Cin, C1), (1, C1), (1, C1)
    w2_ref, s2_ref, b2_ref,           # (9*C1, C2),  (1, C2), (1, C2)
    w3_ref, s3_ref, b3_ref,           # (9*C2, C3),  (1, C3), (1, C3)
    o_ref,                            # (1, 1, C3)   pooled features
    pad2_ref,                         # VMEM (H+2, W+2, C1)
    col2_ref,                         # VMEM (H*W, 9*C1)
    pad3_ref,                         # VMEM (H+2, W+2, C2)
    col3_ref,                         # VMEM (H*W, 9*C2)
):
    Hp, Wp, C1 = pad2_ref.shape
    H, W = Hp - 2, Wp - 2
    HW = H * W
    C2 = w2_ref.shape[1]
    C3 = w3_ref.shape[1]
    taps = [(dy, dx) for dy in range(3) for dx in range(3)]

    # Row-strip size: keep the live f32 accumulator small (<=16 vregs for the
    # widest layer) instead of materialising a full (H*W, C3) result at once.
    rows = max(1, 64 // W)
    while H % rows:
        rows -= 1
    strip = rows * W

    # Padding lives only in VMEM: zero the halo buffers (cheap memset);
    # interiors are fully overwritten below.
    pad2_ref[...] = jnp.zeros(pad2_ref.shape, pad2_ref.dtype)
    pad3_ref[...] = jnp.zeros(pad3_ref.shape, pad3_ref.dtype)

    # ---- layer 1: single wide-K matmul (K = 9*Cin), folded BN + ReLU -------
    s1 = s1_ref[...]
    b1 = b1_ref[...]
    y1 = jnp.dot(x_col_ref[0], w1_ref[...], preferred_element_type=jnp.float32)
    y1 = jnp.maximum(y1 * s1 + b1, 0.0)
    pad2_ref[1:H + 1, 1:W + 1, :] = y1.reshape(H, W, C1)

    # ---- layer 2: im2col into VMEM, strip matmuls with K = 9*C1 -------------
    for t, (dy, dx) in enumerate(taps):
        col2_ref[:, t * C1:(t + 1) * C1] = (
            pad2_ref[dy:dy + H, dx:dx + W, :].reshape(HW, C1))
    s2 = s2_ref[...]
    b2 = b2_ref[...]
    for r in range(0, HW, strip):
        y2 = jnp.dot(col2_ref[r:r + strip, :], w2_ref[...],
                     preferred_element_type=jnp.float32)
        y2 = jnp.maximum(y2 * s2 + b2, 0.0)
        h0 = r // W
        pad3_ref[1 + h0:1 + h0 + rows, 1:W + 1, :] = y2.reshape(rows, W, C2)

    # ---- layer 3 (K = 9*C2) + fused global max-pool epilogue ----------------
    for t, (dy, dx) in enumerate(taps):
        col3_ref[:, t * C2:(t + 1) * C2] = (
            pad3_ref[dy:dy + H, dx:dx + W, :].reshape(HW, C2))
    s3 = s3_ref[...]
    b3 = b3_ref[...]
    m = None
    for r in range(0, HW, strip):
        y3 = jnp.dot(col3_ref[r:r + strip, :], w3_ref[...],
                     preferred_element_type=jnp.float32)
        y3 = jnp.maximum(y3 * s3 + b3, 0.0)
        sm = jnp.max(y3, axis=0, keepdims=True)            # (1, C3)
        m = sm if m is None else jnp.maximum(m, sm)
    o_ref[...] = m.reshape(1, 1, C3).astype(o_ref.dtype)


# ----------------------------------------------------------------------------
# Wrapper: NCHW in, (N, 256, 1, 1) out (PyTorch convention).
# ----------------------------------------------------------------------------
def feature_extractor_forward(x_nchw, params):
    (w1, s1, b1), (w2, s2, b2), (w3, s3, b3) = params
    N, Cin, H, W = x_nchw.shape
    C1, C2, C3 = w1.shape[-1], w2.shape[-1], w3.shape[-1]

    x = jnp.transpose(x_nchw, (0, 2, 3, 1))                # NCHW -> NHWC
    # Host-side im2col of the Cin=3 input (tiny, pure data movement): avoids
    # a pathological 3-lane layout in the kernel and makes layer 1 one matmul.
    xp = jnp.pad(x, ((0, 0), (1, 1), (1, 1), (0, 0)))
    cols = [xp[:, dy:dy + H, dx:dx + W, :]
            for dy in range(3) for dx in range(3)]
    x_col = jnp.concatenate(cols, axis=-1).reshape(N, H * W, 9 * Cin)

    # Flatten HWIO conv weights to (9*Cin, Cout) matching the im2col ordering.
    w1f = w1.reshape(9 * Cin, C1)
    w2f = w2.reshape(9 * C1, C2)
    w3f = w3.reshape(9 * C2, C3)

    pooled = pl.pallas_call(
        _fused_kernel,
        out_shape=jax.ShapeDtypeStruct((N, 1, C3), jnp.float32),
        grid_spec=pltpu.PrefetchScalarGridSpec(
            num_scalar_prefetch=0,
            grid=(N,),
            in_specs=[
                pl.BlockSpec((1, H * W, 9 * Cin), lambda n: (n, 0, 0)),
                pl.BlockSpec((9 * Cin, C1), lambda n: (0, 0)),
                pl.BlockSpec((1, C1), lambda n: (0, 0)),
                pl.BlockSpec((1, C1), lambda n: (0, 0)),
                pl.BlockSpec((9 * C1, C2), lambda n: (0, 0)),
                pl.BlockSpec((1, C2), lambda n: (0, 0)),
                pl.BlockSpec((1, C2), lambda n: (0, 0)),
                pl.BlockSpec((9 * C2, C3), lambda n: (0, 0)),
                pl.BlockSpec((1, C3), lambda n: (0, 0)),
                pl.BlockSpec((1, C3), lambda n: (0, 0)),
            ],
            out_specs=pl.BlockSpec((1, 1, C3), lambda n: (n, 0, 0)),
            scratch_shapes=[
                pltpu.VMEM((H + 2, W + 2, C1), jnp.float32),
                pltpu.VMEM((H * W, 9 * C1), jnp.float32),
                pltpu.VMEM((H + 2, W + 2, C2), jnp.float32),
                pltpu.VMEM((H * W, 9 * C2), jnp.float32),
            ]),
        compiler_params=pltpu.CompilerParams(
            dimension_semantics=("parallel",)),   # batch across TCs on v7x
    )(x_col,
      w1f, s1.reshape(1, C1), b1.reshape(1, C1),
      w2f, s2.reshape(1, C2), b2.reshape(1, C2),
      w3f, s3.reshape(1, C3), b3.reshape(1, C3))

    return pooled.reshape(N, C3, 1, 1)


feature_extractor = jax.jit(feature_extractor_forward)


# ----------------------------------------------------------------------------
# Parameter construction (deterministic, synthetic), BN folded into (scale,bias)
# ----------------------------------------------------------------------------
def make_block_params(key, cin, cout, eps=1e-5):
    """Conv2d(cin, cout, 3, padding=1, bias=True) + BatchNorm2d(cout) (eval),
    folded into (weight[HWIO], scale, bias)."""
    kw, kb, kg, kbe, km, kv = jax.random.split(key, 6)
    fan_in = cin * 3 * 3
    bound = 1.0 / jnp.sqrt(fan_in)
    w = jax.random.uniform(kw, (3, 3, cin, cout), jnp.float32, -bound, bound)
    b = jax.random.uniform(kb, (cout,), jnp.float32, -bound, bound)
    gamma = 1.0 + 0.1 * jax.random.normal(kg, (cout,), jnp.float32)
    beta = 0.1 * jax.random.normal(kbe, (cout,), jnp.float32)
    running_mean = 0.1 * jax.random.normal(km, (cout,), jnp.float32)
    running_var = 1.0 + 0.1 * jax.random.uniform(kv, (cout,), jnp.float32)
    # y = gamma/sqrt(var+eps) * (conv(x) + b - mean) + beta
    scale = gamma / jnp.sqrt(running_var + eps)
    bias = scale * (b - running_mean) + beta
    return w, scale, bias


# ----------------------------------------------------------------------------
if __name__ == "__main__":
    key = jax.random.PRNGKey(0)
    k_in, k1, k2, k3 = jax.random.split(key, 4)

    # Small deterministic input consistent with the module (NCHW, 3 channels).
    x = jax.random.normal(k_in, (2, 3, 16, 16), jnp.float32)

    params = (
        make_block_params(k1, 3, 64),
        make_block_params(k2, 64, 128),
        make_block_params(k3, 128, 256),
    )

    out = feature_extractor(x, params)
    out = jax.block_until_ready(out)

    assert out.shape == (2, 256, 1, 1), out.shape
    assert out.dtype == jnp.float32
    print("KERNEL_OK")
</pallas_src>

<mosaic_0001>
module attributes {stable_mosaic.version = 11 : i64} {
  func.func @_fused_kernel(%arg0: i32, %arg1: memref<1x256x27xf32, #tpu.memory_space<vmem>>, %arg2: memref<27x64xf32, #tpu.memory_space<vmem>>, %arg3: memref<1x64xf32, #tpu.memory_space<vmem>>, %arg4: memref<1x64xf32, #tpu.memory_space<vmem>>, %arg5: memref<576x128xf32, #tpu.memory_space<vmem>>, %arg6: memref<1x128xf32, #tpu.memory_space<vmem>>, %arg7: memref<1x128xf32, #tpu.memory_space<vmem>>, %arg8: memref<1152x256xf32, #tpu.memory_space<vmem>>, %arg9: memref<1x256xf32, #tpu.memory_space<vmem>>, %arg10: memref<1x256xf32, #tpu.memory_space<vmem>>, %arg11: memref<1x1x256xf32, #tpu.memory_space<vmem>>, %arg12: memref<18x18x64xf32, #tpu.memory_space<vmem>>, %arg13: memref<256x576xf32, #tpu.memory_space<vmem>>, %arg14: memref<18x18x128xf32, #tpu.memory_space<vmem>>, %arg15: memref<256x1152xf32, #tpu.memory_space<vmem>>) attributes {dimension_semantics = [#tpu.dimension_semantics<parallel>], iteration_bounds = array<i64: 2>, scalar_prefetch = 0 : i64, scratch_operands = 4 : i64, tpu.core_type = #tpu.core_type<tc>, window_params = [{transform_indices = @transform_0, window_bounds = array<i64: 1, 256, 27>}, {pipeline_mode = #tpu.pipeline_mode<synchronous>, transform_indices = @transform_1, window_bounds = array<i64: 27, 64>}, {pipeline_mode = #tpu.pipeline_mode<synchronous>, transform_indices = @transform_2, window_bounds = array<i64: 1, 64>}, {pipeline_mode = #tpu.pipeline_mode<synchronous>, transform_indices = @transform_3, window_bounds = array<i64: 1, 64>}, {pipeline_mode = #tpu.pipeline_mode<synchronous>, transform_indices = @transform_4, window_bounds = array<i64: 576, 128>}, {pipeline_mode = #tpu.pipeline_mode<synchronous>, transform_indices = @transform_5, window_bounds = array<i64: 1, 128>}, {pipeline_mode = #tpu.pipeline_mode<synchronous>, transform_indices = @transform_6, window_bounds = array<i64: 1, 128>}, {pipeline_mode = #tpu.pipeline_mode<synchronous>, transform_indices = @transform_7, window_bounds = array<i64: 1152, 256>}, {pipeline_mode = #tpu.pipeline_mode<synchronous>, transform_indices = @transform_8, window_bounds = array<i64: 1, 256>}, {pipeline_mode = #tpu.pipeline_mode<synchronous>, transform_indices = @transform_9, window_bounds = array<i64: 1, 256>}, {transform_indices = @transform_10, window_bounds = array<i64: 1, 1, 256>}]} {
    %cst = arith.constant 0.000000e+00 : f32
    %0 = vector.broadcast %cst : f32 to vector<18x18x64xf32>
    %c0 = arith.constant 0 : index
    %c0_0 = arith.constant 0 : index
    %c0_1 = arith.constant 0 : index
    %1 = vector.load %arg12[%c0, %c0_0, %c0_1] : memref<18x18x64xf32, #tpu.memory_space<vmem>>, vector<18x18x64xf32>
    tpu.vector_store %arg12[%c0, %c0_0, %c0_1], %0 {strides = array<i32>} : memref<18x18x64xf32, #tpu.memory_space<vmem>>, vector<18x18x64xf32>,
    %cst_2 = arith.constant 0.000000e+00 : f32
    %2 = vector.broadcast %cst_2 : f32 to vector<18x18x128xf32>
    %c0_3 = arith.constant 0 : index
    %c0_4 = arith.constant 0 : index
    %c0_5 = arith.constant 0 : index
    %3 = vector.load %arg14[%c0_3, %c0_4, %c0_5] : memref<18x18x128xf32, #tpu.memory_space<vmem>>, vector<18x18x128xf32>
    tpu.vector_store %arg14[%c0_3, %c0_4, %c0_5], %2 {strides = array<i32>} : memref<18x18x128xf32, #tpu.memory_space<vmem>>, vector<18x18x128xf32>,
    %c0_6 = arith.constant 0 : index
    %c0_7 = arith.constant 0 : index
    %4 = vector.load %arg3[%c0_6, %c0_7] : memref<1x64xf32, #tpu.memory_space<vmem>>, vector<1x64xf32>
    %c0_8 = arith.constant 0 : index
    %c0_9 = arith.constant 0 : index
    %5 = vector.load %arg4[%c0_8, %c0_9] : memref<1x64xf32, #tpu.memory_space<vmem>>, vector<1x64xf32>
    %c0_10 = arith.constant 0 : index
    %c0_11 = arith.constant 0 : index
    %c0_12 = arith.constant 0 : index
    %6 = vector.load %arg1[%c0_10, %c0_11, %c0_12] : memref<1x256x27xf32, #tpu.memory_space<vmem>>, vector<1x256x27xf32>
    %7 = vector.shape_cast %6 : vector<1x256x27xf32> to vector<256x27xf32>
    %c0_13 = arith.constant 0 : index
    %c0_14 = arith.constant 0 : index
    %8 = vector.load %arg2[%c0_13, %c0_14] : memref<27x64xf32, #tpu.memory_space<vmem>>, vector<27x64xf32>
    %cst_15 = arith.constant dense<0.000000e+00> : vector<256x64xf32>
    %9 = tpu.matmul %7, %8, %cst_15 {dimension_numbers = #tpu.dot_dimension_numbers<[1], [0], [0], [1], [0, 0, 1, 1], [], []>} : vector<256x27xf32>, vector<27x64xf32>, vector<256x64xf32> -> vector<256x64xf32>
    %10 = vector.broadcast %4 : vector<1x64xf32> to vector<256x64xf32>
    %11 = arith.mulf %9, %10 : vector<256x64xf32>
    %12 = vector.broadcast %5 : vector<1x64xf32> to vector<256x64xf32>
    %13 = arith.addf %11, %12 : vector<256x64xf32>
    %cst_16 = arith.constant 0.000000e+00 : f32
    %14 = vector.broadcast %cst_16 : f32 to vector<256x64xf32>
    %15 = arith.maximumf %13, %14 : vector<256x64xf32>
    %16 = vector.shape_cast %15 : vector<256x64xf32> to vector<16x16x64xf32>
    %c1 = arith.constant 1 : index
    %c1_17 = arith.constant 1 : index
    %c0_18 = arith.constant 0 : index
    %17 = vector.load %arg12[%c1, %c1_17, %c0_18] : memref<18x18x64xf32, #tpu.memory_space<vmem>>, vector<16x16x64xf32>
    tpu.vector_store %arg12[%c1, %c1_17, %c0_18], %16 {strides = array<i32>} : memref<18x18x64xf32, #tpu.memory_space<vmem>>, vector<16x16x64xf32>,
    %c0_19 = arith.constant 0 : index
    %c0_20 = arith.constant 0 : index
    %c0_21 = arith.constant 0 : index
    %18 = vector.load %arg12[%c0_19, %c0_20, %c0_21] : memref<18x18x64xf32, #tpu.memory_space<vmem>>, vector<16x16x64xf32>
    %19 = vector.shape_cast %18 : vector<16x16x64xf32> to vector<256x64xf32>
    %c0_22 = arith.constant 0 : index
    %c0_23 = arith.constant 0 : index
    %20 = vector.load %arg13[%c0_22, %c0_23] : memref<256x576xf32, #tpu.memory_space<vmem>>, vector<256x64xf32>
    tpu.vector_store %arg13[%c0_22, %c0_23], %19 {strides = array<i32>} : memref<256x576xf32, #tpu.memory_space<vmem>>, vector<256x64xf32>,
    %c0_24 = arith.constant 0 : index
    %c1_25 = arith.constant 1 : index
    %c0_26 = arith.constant 0 : index
    %21 = vector.load %arg12[%c0_24, %c1_25, %c0_26] : memref<18x18x64xf32, #tpu.memory_space<vmem>>, vector<16x16x64xf32>
    %22 = vector.shape_cast %21 : vector<16x16x64xf32> to vector<256x64xf32>
    %c0_27 = arith.constant 0 : index
    %c64 = arith.constant 64 : index
    %23 = vector.load %arg13[%c0_27, %c64] : memref<256x576xf32, #tpu.memory_space<vmem>>, vector<256x64xf32>
    tpu.vector_store %arg13[%c0_27, %c64], %22 {strides = array<i32>} : memref<256x576xf32, #tpu.memory_space<vmem>>, vector<256x64xf32>,
    %c0_28 = arith.constant 0 : index
    %c2 = arith.constant 2 : index
    %c0_29 = arith.constant 0 : index
    %24 = vector.load %arg12[%c0_28, %c2, %c0_29] : memref<18x18x64xf32, #tpu.memory_space<vmem>>, vector<16x16x64xf32>
    %25 = vector.shape_cast %24 : vector<16x16x64xf32> to vector<256x64xf32>
    %c0_30 = arith.constant 0 : index
    %c128 = arith.constant 128 : index
    %26 = vector.load %arg13[%c0_30, %c128] : memref<256x576xf32, #tpu.memory_space<vmem>>, vector<256x64xf32>
    tpu.vector_store %arg13[%c0_30, %c128], %25 {strides = array<i32>} : memref<256x576xf32, #tpu.memory_space<vmem>>, vector<256x64xf32>,
    %c1_31 = arith.constant 1 : index
    %c0_32 = arith.constant 0 : index
    %c0_33 = arith.constant 0 : index
    %27 = vector.load %arg12[%c1_31, %c0_32, %c0_33] : memref<18x18x64xf32, #tpu.memory_space<vmem>>, vector<16x16x64xf32>
    %28 = vector.shape_cast %27 : vector<16x16x64xf32> to vector<256x64xf32>
    %c0_34 = arith.constant 0 : index
    %c192 = arith.constant 192 : index
    %29 = vector.load %arg13[%c0_34, %c192] : memref<256x576xf32, #tpu.memory_space<vmem>>, vector<256x64xf32>
    tpu.vector_store %arg13[%c0_34, %c192], %28 {strides = array<i32>} : memref<256x576xf32, #tpu.memory_space<vmem>>, vector<256x64xf32>,
    %c1_35 = arith.constant 1 : index
    %c1_36 = arith.constant 1 : index
    %c0_37 = arith.constant 0 : index
    %30 = vector.load %arg12[%c1_35, %c1_36, %c0_37] : memref<18x18x64xf32, #tpu.memory_space<vmem>>, vector<16x16x64xf32>
    %31 = vector.shape_cast %30 : vector<16x16x64xf32> to vector<256x64xf32>
    %c0_38 = arith.constant 0 : index
    %c256 = arith.constant 256 : index
    %32 = vector.load %arg13[%c0_38, %c256] : memref<256x576xf32, #tpu.memory_space<vmem>>, vector<256x64xf32>
    tpu.vector_store %arg13[%c0_38, %c256], %31 {strides = array<i32>} : memref<256x576xf32, #tpu.memory_space<vmem>>, vector<256x64xf32>,
    %c1_39 = arith.constant 1 : index
    %c2_40 = arith.constant 2 : index
    %c0_41 = arith.constant 0 : index
    %33 = vector.load %arg12[%c1_39, %c2_40, %c0_41] : memref<18x18x64xf32, #tpu.memory_space<vmem>>, vector<16x16x64xf32>
    %34 = vector.shape_cast %33 : vector<16x16x64xf32> to vector<256x64xf32>
    %c0_42 = arith.constant 0 : index
    %c320 = arith.constant 320 : index
    %35 = vector.load %arg13[%c0_42, %c320] : memref<256x576xf32, #tpu.memory_space<vmem>>, vector<256x64xf32>
    tpu.vector_store %arg13[%c0_42, %c320], %34 {strides = array<i32>} : memref<256x576xf32, #tpu.memory_space<vmem>>, vector<256x64xf32>,
    %c2_43 = arith.constant 2 : index
    %c0_44 = arith.constant 0 : index
    %c0_45 = arith.constant 0 : index
    %36 = vector.load %arg12[%c2_43, %c0_44, %c0_45] : memref<18x18x64xf32, #tpu.memory_space<vmem>>, vector<16x16x64xf32>
    %37 = vector.shape_cast %36 : vector<16x16x64xf32> to vector<256x64xf32>
    %c0_46 = arith.constant 0 : index
    %c384 = arith.constant 384 : index
    %38 = vector.load %arg13[%c0_46, %c384] : memref<256x576xf32, #tpu.memory_space<vmem>>, vector<256x64xf32>
    tpu.vector_store %arg13[%c0_46, %c384], %37 {strides = array<i32>} : memref<256x576xf32, #tpu.memory_space<vmem>>, vector<256x64xf32>,
    %c2_47 = arith.constant 2 : index
    %c1_48 = arith.constant 1 : index
    %c0_49 = arith.constant 0 : index
    %39 = vector.load %arg12[%c2_47, %c1_48, %c0_49] : memref<18x18x64xf32, #tpu.memory_space<vmem>>, vector<16x16x64xf32>
    %40 = vector.shape_cast %39 : vector<16x16x64xf32> to vector<256x64xf32>
    %c0_50 = arith.constant 0 : index
    %c448 = arith.constant 448 : index
    %41 = vector.load %arg13[%c0_50, %c448] : memref<256x576xf32, #tpu.memory_space<vmem>>, vector<256x64xf32>
    tpu.vector_store %arg13[%c0_50, %c448], %40 {strides = array<i32>} : memref<256x576xf32, #tpu.memory_space<vmem>>, vector<256x64xf32>,
    %c2_51 = arith.constant 2 : index
    %c2_52 = arith.constant 2 : index
    %c0_53 = arith.constant 0 : index
    %42 = vector.load %arg12[%c2_51, %c2_52, %c0_53] : memref<18x18x64xf32, #tpu.memory_space<vmem>>, vector<16x16x64xf32>
    %43 = vector.shape_cast %42 : vector<16x16x64xf32> to vector<256x64xf32>
    %c0_54 = arith.constant 0 : index
    %c512 = arith.constant 512 : index
    %44 = vector.load %arg13[%c0_54, %c512] : memref<256x576xf32, #tpu.memory_space<vmem>>, vector<256x64xf32>
    tpu.vector_store %arg13[%c0_54, %c512], %43 {strides = array<i32>} : memref<256x576xf32, #tpu.memory_space<vmem>>, vector<256x64xf32>,
    %c0_55 = arith.constant 0 : index
    %c0_56 = arith.constant 0 : index
    %45 = vector.load %arg6[%c0_55, %c0_56] : memref<1x128xf32, #tpu.memory_space<vmem>>, vector<1x128xf32>
    %c0_57 = arith.constant 0 : index
    %c0_58 = arith.constant 0 : index
    %46 = vector.load %arg7[%c0_57, %c0_58] : memref<1x128xf32, #tpu.memory_space<vmem>>, vector<1x128xf32>
    %c0_59 = arith.constant 0 : index
    %c0_60 = arith.constant 0 : index
    %47 = vector.load %arg13[%c0_59, %c0_60] : memref<256x576xf32, #tpu.memory_space<vmem>>, vector<64x576xf32>
    %c0_61 = arith.constant 0 : index
    %c0_62 = arith.constant 0 : index
    %48 = vector.load %arg5[%c0_61, %c0_62] : memref<576x128xf32, #tpu.memory_space<vmem>>, vector<576x128xf32>
    %cst_63 = arith.constant dense<0.000000e+00> : vector<64x128xf32>
    %49 = tpu.matmul %47, %48, %cst_63 {dimension_numbers = #tpu.dot_dimension_numbers<[1], [0], [0], [1], [0, 0, 1, 1], [], []>} : vector<64x576xf32>, vector<576x128xf32>, vector<64x128xf32> -> vector<64x128xf32>
    %50 = vector.broadcast %45 : vector<1x128xf32> to vector<64x128xf32>
    %51 = arith.mulf %49, %50 : vector<64x128xf32>
    %52 = vector.broadcast %46 : vector<1x128xf32> to vector<64x128xf32>
    %53 = arith.addf %51, %52 : vector<64x128xf32>
    %cst_64 = arith.constant 0.000000e+00 : f32
    %54 = vector.broadcast %cst_64 : f32 to vector<64x128xf32>
    %55 = arith.maximumf %53, %54 : vector<64x128xf32>
    %56 = vector.shape_cast %55 : vector<64x128xf32> to vector<4x16x128xf32>
    %c1_65 = arith.constant 1 : index
    %c1_66 = arith.constant 1 : index
    %c0_67 = arith.constant 0 : index
    %57 = vector.load %arg14[%c1_65, %c1_66, %c0_67] : memref<18x18x128xf32, #tpu.memory_space<vmem>>, vector<4x16x128xf32>
    tpu.vector_store %arg14[%c1_65, %c1_66, %c0_67], %56 {strides = array<i32>} : memref<18x18x128xf32, #tpu.memory_space<vmem>>, vector<4x16x128xf32>,
    %c64_68 = arith.constant 64 : index
    %c0_69 = arith.constant 0 : index
    %58 = vector.load %arg13[%c64_68, %c0_69] : memref<256x576xf32, #tpu.memory_space<vmem>>, vector<64x576xf32>
    %c0_70 = arith.constant 0 : index
    %c0_71 = arith.constant 0 : index
    %59 = vector.load %arg5[%c0_70, %c0_71] : memref<576x128xf32, #tpu.memory_space<vmem>>, vector<576x128xf32>
    %cst_72 = arith.constant dense<0.000000e+00> : vector<64x128xf32>
    %60 = tpu.matmul %58, %59, %cst_72 {dimension_numbers = #tpu.dot_dimension_numbers<[1], [0], [0], [1], [0, 0, 1, 1], [], []>} : vector<64x576xf32>, vector<576x128xf32>, vector<64x128xf32> -> vector<64x128xf32>
    %61 = vector.broadcast %45 : vector<1x128xf32> to vector<64x128xf32>
    %62 = arith.mulf %60, %61 : vector<64x128xf32>
    %63 = vector.broadcast %46 : vector<1x128xf32> to vector<64x128xf32>
    %64 = arith.addf %62, %63 : vector<64x128xf32>
    %cst_73 = arith.constant 0.000000e+00 : f32
    %65 = vector.broadcast %cst_73 : f32 to vector<64x128xf32>
    %66 = arith.maximumf %64, %65 : vector<64x128xf32>
    %67 = vector.shape_cast %66 : vector<64x128xf32> to vector<4x16x128xf32>
    %c5 = arith.constant 5 : index
    %c1_74 = arith.constant 1 : index
    %c0_75 = arith.constant 0 : index
    %68 = vector.load %arg14[%c5, %c1_74, %c0_75] : memref<18x18x128xf32, #tpu.memory_space<vmem>>, vector<4x16x128xf32>
    tpu.vector_store %arg14[%c5, %c1_74, %c0_75], %67 {strides = array<i32>} : memref<18x18x128xf32, #tpu.memory_space<vmem>>, vector<4x16x128xf32>,
    %c128_76 = arith.constant 128 : index
    %c0_77 = arith.constant 0 : index
    %69 = vector.load %arg13[%c128_76, %c0_77] : memref<256x576xf32, #tpu.memory_space<vmem>>, vector<64x576xf32>
    %c0_78 = arith.constant 0 : index
    %c0_79 = arith.constant 0 : index
    %70 = vector.load %arg5[%c0_78, %c0_79] : memref<576x128xf32, #tpu.memory_space<vmem>>, vector<576x128xf32>
    %cst_80 = arith.constant dense<0.000000e+00> : vector<64x128xf32>
    %71 = tpu.matmul %69, %70, %cst_80 {dimension_numbers = #tpu.dot_dimension_numbers<[1], [0], [0], [1], [0, 0, 1, 1], [], []>} : vector<64x576xf32>, vector<576x128xf32>, vector<64x128xf32> -> vector<64x128xf32>
    %72 = vector.broadcast %45 : vector<1x128xf32> to vector<64x128xf32>
    %73 = arith.mulf %71, %72 : vector<64x128xf32>
    %74 = vector.broadcast %46 : vector<1x128xf32> to vector<64x128xf32>
    %75 = arith.addf %73, %74 : vector<64x128xf32>
    %cst_81 = arith.constant 0.000000e+00 : f32
    %76 = vector.broadcast %cst_81 : f32 to vector<64x128xf32>
    %77 = arith.maximumf %75, %76 : vector<64x128xf32>
    %78 = vector.shape_cast %77 : vector<64x128xf32> to vector<4x16x128xf32>
    %c9 = arith.constant 9 : index
    %c1_82 = arith.constant 1 : index
    %c0_83 = arith.constant 0 : index
    %79 = vector.load %arg14[%c9, %c1_82, %c0_83] : memref<18x18x128xf32, #tpu.memory_space<vmem>>, vector<4x16x128xf32>
    tpu.vector_store %arg14[%c9, %c1_82, %c0_83], %78 {strides = array<i32>} : memref<18x18x128xf32, #tpu.memory_space<vmem>>, vector<4x16x128xf32>,
    %c192_84 = arith.constant 192 : index
    %c0_85 = arith.constant 0 : index
    %80 = vector.load %arg13[%c192_84, %c0_85] : memref<256x576xf32, #tpu.memory_space<vmem>>, vector<64x576xf32>
    %c0_86 = arith.constant 0 : index
    %c0_87 = arith.constant 0 : index
    %81 = vector.load %arg5[%c0_86, %c0_87] : memref<576x128xf32, #tpu.memory_space<vmem>>, vector<576x128xf32>
    %cst_88 = arith.constant dense<0.000000e+00> : vector<64x128xf32>
    %82 = tpu.matmul %80, %81, %cst_88 {dimension_numbers = #tpu.dot_dimension_numbers<[1], [0], [0], [1], [0, 0, 1, 1], [], []>} : vector<64x576xf32>, vector<576x128xf32>, vector<64x128xf32> -> vector<64x128xf32>
    %83 = vector.broadcast %45 : vector<1x128xf32> to vector<64x128xf32>
    %84 = arith.mulf %82, %83 : vector<64x128xf32>
    %85 = vector.broadcast %46 : vector<1x128xf32> to vector<64x128xf32>
    %86 = arith.addf %84, %85 : vector<64x128xf32>
    %cst_89 = arith.constant 0.000000e+00 : f32
    %87 = vector.broadcast %cst_89 : f32 to vector<64x128xf32>
    %88 = arith.maximumf %86, %87 : vector<64x128xf32>
    %89 = vector.shape_cast %88 : vector<64x128xf32> to vector<4x16x128xf32>
    %c13 = arith.constant 13 : index
    %c1_90 = arith.constant 1 : index
    %c0_91 = arith.constant 0 : index
    %90 = vector.load %arg14[%c13, %c1_90, %c0_91] : memref<18x18x128xf32, #tpu.memory_space<vmem>>, vector<4x16x128xf32>
    tpu.vector_store %arg14[%c13, %c1_90, %c0_91], %89 {strides = array<i32>} : memref<18x18x128xf32, #tpu.memory_space<vmem>>, vector<4x16x128xf32>,
    %c0_92 = arith.constant 0 : index
    %c0_93 = arith.constant 0 : index
    %c0_94 = arith.constant 0 : index
    %91 = vector.load %arg14[%c0_92, %c0_93, %c0_94] : memref<18x18x128xf32, #tpu.memory_space<vmem>>, vector<16x16x128xf32>
    %92 = vector.shape_cast %91 : vector<16x16x128xf32> to vector<256x128xf32>
    %c0_95 = arith.constant 0 : index
    %c0_96 = arith.constant 0 : index
    %93 = vector.load %arg15[%c0_95, %c0_96] : memref<256x1152xf32, #tpu.memory_space<vmem>>, vector<256x128xf32>
    tpu.vector_store %arg15[%c0_95, %c0_96], %92 {strides = array<i32>} : memref<256x1152xf32, #tpu.memory_space<vmem>>, vector<256x128xf32>,
    %c0_97 = arith.constant 0 : index
    %c1_98 = arith.constant 1 : index
    %c0_99 = arith.constant 0 : index
    %94 = vector.load %arg14[%c0_97, %c1_98, %c0_99] : memref<18x18x128xf32, #tpu.memory_space<vmem>>, vector<16x16x128xf32>
    %95 = vector.shape_cast %94 : vector<16x16x128xf32> to vector<256x128xf32>
    %c0_100 = arith.constant 0 : index
    %c128_101 = arith.constant 128 : index
    %96 = vector.load %arg15[%c0_100, %c128_101] : memref<256x1152xf32, #tpu.memory_space<vmem>>, vector<256x128xf32>
    tpu.vector_store %arg15[%c0_100, %c128_101], %95 {strides = array<i32>} : memref<256x1152xf32, #tpu.memory_space<vmem>>, vector<256x128xf32>,
    %c0_102 = arith.constant 0 : index
    %c2_103 = arith.constant 2 : index
    %c0_104 = arith.constant 0 : index
    %97 = vector.load %arg14[%c0_102, %c2_103, %c0_104] : memref<18x18x128xf32, #tpu.memory_space<vmem>>, vector<16x16x128xf32>
    %98 = vector.shape_cast %97 : vector<16x16x128xf32> to vector<256x128xf32>
    %c0_105 = arith.constant 0 : index
    %c256_106 = arith.constant 256 : index
    %99 = vector.load %arg15[%c0_105, %c256_106] : memref<256x1152xf32, #tpu.memory_space<vmem>>, vector<256x128xf32>
    tpu.vector_store %arg15[%c0_105, %c256_106], %98 {strides = array<i32>} : memref<256x1152xf32, #tpu.memory_space<vmem>>, vector<256x128xf32>,
    %c1_107 = arith.constant 1 : index
    %c0_108 = arith.constant 0 : index
    %c0_109 = arith.constant 0 : index
    %100 = vector.load %arg14[%c1_107, %c0_108, %c0_109] : memref<18x18x128xf32, #tpu.memory_space<vmem>>, vector<16x16x128xf32>
    %101 = vector.shape_cast %100 : vector<16x16x128xf32> to vector<256x128xf32>
    %c0_110 = arith.constant 0 : index
    %c384_111 = arith.constant 384 : index
    %102 = vector.load %arg15[%c0_110, %c384_111] : memref<256x1152xf32, #tpu.memory_space<vmem>>, vector<256x128xf32>
    tpu.vector_store %arg15[%c0_110, %c384_111], %101 {strides = array<i32>} : memref<256x1152xf32, #tpu.memory_space<vmem>>, vector<256x128xf32>,
    %c1_112 = arith.constant 1 : index
    %c1_113 = arith.constant 1 : index
    %c0_114 = arith.constant 0 : index
    %103 = vector.load %arg14[%c1_112, %c1_113, %c0_114] : memref<18x18x128xf32, #tpu.memory_space<vmem>>, vector<16x16x128xf32>
    %104 = vector.shape_cast %103 : vector<16x16x128xf32> to vector<256x128xf32>
    %c0_115 = arith.constant 0 : index
    %c512_116 = arith.constant 512 : index
    %105 = vector.load %arg15[%c0_115, %c512_116] : memref<256x1152xf32, #tpu.memory_space<vmem>>, vector<256x128xf32>
    tpu.vector_store %arg15[%c0_115, %c512_116], %104 {strides = array<i32>} : memref<256x1152xf32, #tpu.memory_space<vmem>>, vector<256x128xf32>,
    %c1_117 = arith.constant 1 : index
    %c2_118 = arith.constant 2 : index
    %c0_119 = arith.constant 0 : index
    %106 = vector.load %arg14[%c1_117, %c2_118, %c0_119] : memref<18x18x128xf32, #tpu.memory_space<vmem>>, vector<16x16x128xf32>
    %107 = vector.shape_cast %106 : vector<16x16x128xf32> to vector<256x128xf32>
    %c0_120 = arith.constant 0 : index
    %c640 = arith.constant 640 : index
    %108 = vector.load %arg15[%c0_120, %c640] : memref<256x1152xf32, #tpu.memory_space<vmem>>, vector<256x128xf32>
    tpu.vector_store %arg15[%c0_120, %c640], %107 {strides = array<i32>} : memref<256x1152xf32, #tpu.memory_space<vmem>>, vector<256x128xf32>,
    %c2_121 = arith.constant 2 : index
    %c0_122 = arith.constant 0 : index
    %c0_123 = arith.constant 0 : index
    %109 = vector.load %arg14[%c2_121, %c0_122, %c0_123] : memref<18x18x128xf32, #tpu.memory_space<vmem>>, vector<16x16x128xf32>
    %110 = vector.shape_cast %109 : vector<16x16x128xf32> to vector<256x128xf32>
    %c0_124 = arith.constant 0 : index
    %c768 = arith.constant 768 : index
    %111 = vector.load %arg15[%c0_124, %c768] : memref<256x1152xf32, #tpu.memory_space<vmem>>, vector<256x128xf32>
    tpu.vector_store %arg15[%c0_124, %c768], %110 {strides = array<i32>} : memref<256x1152xf32, #tpu.memory_space<vmem>>, vector<256x128xf32>,
    %c2_125 = arith.constant 2 : index
    %c1_126 = arith.constant 1 : index
    %c0_127 = arith.constant 0 : index
    %112 = vector.load %arg14[%c2_125, %c1_126, %c0_127] : memref<18x18x128xf32, #tpu.memory_space<vmem>>, vector<16x16x128xf32>
    %113 = vector.shape_cast %112 : vector<16x16x128xf32> to vector<256x128xf32>
    %c0_128 = arith.constant 0 : index
    %c896 = arith.constant 896 : index
    %114 = vector.load %arg15[%c0_128, %c896] : memref<256x1152xf32, #tpu.memory_space<vmem>>, vector<256x128xf32>
    tpu.vector_store %arg15[%c0_128, %c896], %113 {strides = array<i32>} : memref<256x1152xf32, #tpu.memory_space<vmem>>, vector<256x128xf32>,
    %c2_129 = arith.constant 2 : index
    %c2_130 = arith.constant 2 : index
    %c0_131 = arith.constant 0 : index
    %115 = vector.load %arg14[%c2_129, %c2_130, %c0_131] : memref<18x18x128xf32, #tpu.memory_space<vmem>>, vector<16x16x128xf32>
    %116 = vector.shape_cast %115 : vector<16x16x128xf32> to vector<256x128xf32>
    %c0_132 = arith.constant 0 : index
    %c1024 = arith.constant 1024 : index
    %117 = vector.load %arg15[%c0_132, %c1024] : memref<256x1152xf32, #tpu.memory_space<vmem>>, vector<256x128xf32>
    tpu.vector_store %arg15[%c0_132, %c1024], %116 {strides = array<i32>} : memref<256x1152xf32, #tpu.memory_space<vmem>>, vector<256x128xf32>,
    %c0_133 = arith.constant 0 : index
    %c0_134 = arith.constant 0 : index
    %118 = vector.load %arg9[%c0_133, %c0_134] : memref<1x256xf32, #tpu.memory_space<vmem>>, vector<1x256xf32>
    %c0_135 = arith.constant 0 : index
    %c0_136 = arith.constant 0 : index
    %119 = vector.load %arg10[%c0_135, %c0_136] : memref<1x256xf32, #tpu.memory_space<vmem>>, vector<1x256xf32>
    %c0_137 = arith.constant 0 : index
    %c0_138 = arith.constant 0 : index
    %120 = vector.load %arg15[%c0_137, %c0_138] : memref<256x1152xf32, #tpu.memory_space<vmem>>, vector<64x1152xf32>
    %c0_139 = arith.constant 0 : index
    %c0_140 = arith.constant 0 : index
    %121 = vector.load %arg8[%c0_139, %c0_140] : memref<1152x256xf32, #tpu.memory_space<vmem>>, vector<1152x256xf32>
    %cst_141 = arith.constant dense<0.000000e+00> : vector<64x256xf32>
    %122 = tpu.matmul %120, %121, %cst_141 {dimension_numbers = #tpu.dot_dimension_numbers<[1], [0], [0], [1], [0, 0, 1, 1], [], []>} : vector<64x1152xf32>, vector<1152x256xf32>, vector<64x256xf32> -> vector<64x256xf32>
    %123 = vector.broadcast %118 : vector<1x256xf32> to vector<64x256xf32>
    %124 = arith.mulf %122, %123 : vector<64x256xf32>
    %125 = vector.broadcast %119 : vector<1x256xf32> to vector<64x256xf32>
    %126 = arith.addf %124, %125 : vector<64x256xf32>
    %cst_142 = arith.constant 0.000000e+00 : f32
    %127 = vector.broadcast %cst_142 : f32 to vector<64x256xf32>
    %128 = arith.maximumf %126, %127 : vector<64x256xf32>
    %cst_143 = arith.constant dense<0xFF800000> : vector<256xf32>
    %129 = vector.multi_reduction <maximumf>, %128, %cst_143 [0] : vector<64x256xf32> to vector<256xf32>
    %130 = vector.shape_cast %129 : vector<256xf32> to vector<1x256xf32>
    %c64_144 = arith.constant 64 : index
    %c0_145 = arith.constant 0 : index
    %131 = vector.load %arg15[%c64_144, %c0_145] : memref<256x1152xf32, #tpu.memory_space<vmem>>, vector<64x1152xf32>
    %c0_146 = arith.constant 0 : index
    %c0_147 = arith.constant 0 : index
    %132 = vector.load %arg8[%c0_146, %c0_147] : memref<1152x256xf32, #tpu.memory_space<vmem>>, vector<1152x256xf32>
    %cst_148 = arith.constant dense<0.000000e+00> : vector<64x256xf32>
    %133 = tpu.matmul %131, %132, %cst_148 {dimension_numbers = #tpu.dot_dimension_numbers<[1], [0], [0], [1], [0, 0, 1, 1], [], []>} : vector<64x1152xf32>, vector<1152x256xf32>, vector<64x256xf32> -> vector<64x256xf32>
    %134 = vector.broadcast %118 : vector<1x256xf32> to vector<64x256xf32>
    %135 = arith.mulf %133, %134 : vector<64x256xf32>
    %136 = vector.broadcast %119 : vector<1x256xf32> to vector<64x256xf32>
    %137 = arith.addf %135, %136 : vector<64x256xf32>
    %cst_149 = arith.constant 0.000000e+00 : f32
    %138 = vector.broadcast %cst_149 : f32 to vector<64x256xf32>
    %139 = arith.maximumf %137, %138 : vector<64x256xf32>
    %cst_150 = arith.constant dense<0xFF800000> : vector<256xf32>
    %140 = vector.multi_reduction <maximumf>, %139, %cst_150 [0] : vector<64x256xf32> to vector<256xf32>
    %141 = vector.shape_cast %140 : vector<256xf32> to vector<1x256xf32>
    %142 = arith.maximumf %130, %141 : vector<1x256xf32>
    %c128_151 = arith.constant 128 : index
    %c0_152 = arith.constant 0 : index
    %143 = vector.load %arg15[%c128_151, %c0_152] : memref<256x1152xf32, #tpu.memory_space<vmem>>, vector<64x1152xf32>
    %c0_153 = arith.constant 0 : index
    %c0_154 = arith.constant 0 : index
    %144 = vector.load %arg8[%c0_153, %c0_154] : memref<1152x256xf32, #tpu.memory_space<vmem>>, vector<1152x256xf32>
    %cst_155 = arith.constant dense<0.000000e+00> : vector<64x256xf32>
    %145 = tpu.matmul %143, %144, %cst_155 {dimension_numbers = #tpu.dot_dimension_numbers<[1], [0], [0], [1], [0, 0, 1, 1], [], []>} : vector<64x1152xf32>, vector<1152x256xf32>, vector<64x256xf32> -> vector<64x256xf32>
    %146 = vector.broadcast %118 : vector<1x256xf32> to vector<64x256xf32>
    %147 = arith.mulf %145, %146 : vector<64x256xf32>
    %148 = vector.broadcast %119 : vector<1x256xf32> to vector<64x256xf32>
    %149 = arith.addf %147, %148 : vector<64x256xf32>
    %cst_156 = arith.constant 0.000000e+00 : f32
    %150 = vector.broadcast %cst_156 : f32 to vector<64x256xf32>
    %151 = arith.maximumf %149, %150 : vector<64x256xf32>
    %cst_157 = arith.constant dense<0xFF800000> : vector<256xf32>
    %152 = vector.multi_reduction <maximumf>, %151, %cst_157 [0] : vector<64x256xf32> to vector<256xf32>
    %153 = vector.shape_cast %152 : vector<256xf32> to vector<1x256xf32>
    %154 = arith.maximumf %142, %153 : vector<1x256xf32>
    %c192_158 = arith.constant 192 : index
    %c0_159 = arith.constant 0 : index
    %155 = vector.load %arg15[%c192_158, %c0_159] : memref<256x1152xf32, #tpu.memory_space<vmem>>, vector<64x1152xf32>
    %c0_160 = arith.constant 0 : index
    %c0_161 = arith.constant 0 : index
    %156 = vector.load %arg8[%c0_160, %c0_161] : memref<1152x256xf32, #tpu.memory_space<vmem>>, vector<1152x256xf32>
    %cst_162 = arith.constant dense<0.000000e+00> : vector<64x256xf32>
    %157 = tpu.matmul %155, %156, %cst_162 {dimension_numbers = #tpu.dot_dimension_numbers<[1], [0], [0], [1], [0, 0, 1, 1], [], []>} : vector<64x1152xf32>, vector<1152x256xf32>, vector<64x256xf32> -> vector<64x256xf32>
    %158 = vector.broadcast %118 : vector<1x256xf32> to vector<64x256xf32>
    %159 = arith.mulf %157, %158 : vector<64x256xf32>
    %160 = vector.broadcast %119 : vector<1x256xf32> to vector<64x256xf32>
    %161 = arith.addf %159, %160 : vector<64x256xf32>
    %cst_163 = arith.constant 0.000000e+00 : f32
    %162 = vector.broadcast %cst_163 : f32 to vector<64x256xf32>
    %163 = arith.maximumf %161, %162 : vector<64x256xf32>
    %cst_164 = arith.constant dense<0xFF800000> : vector<256xf32>
    %164 = vector.multi_reduction <maximumf>, %163, %cst_164 [0] : vector<64x256xf32> to vector<256xf32>
    %165 = vector.shape_cast %164 : vector<256xf32> to vector<1x256xf32>
    %166 = arith.maximumf %154, %165 : vector<1x256xf32>
    %167 = vector.shape_cast %166 : vector<1x256xf32> to vector<1x1x256xf32>
    %c0_165 = arith.constant 0 : index
    %c0_166 = arith.constant 0 : index
    %c0_167 = arith.constant 0 : index
    %168 = vector.load %arg11[%c0_165, %c0_166, %c0_167] : memref<1x1x256xf32, #tpu.memory_space<vmem>>, vector<1x1x256xf32>
    tpu.vector_store %arg11[%c0_165, %c0_166, %c0_167], %167 {strides = array<i32>} : memref<1x1x256xf32, #tpu.memory_space<vmem>>, vector<1x1x256xf32>,
    return
  }
  func.func @transform_0(%arg0: i32) -> (i32, i32, i32) {
    %c0_i32 = arith.constant 0 : i32
    %c0_i32_0 = arith.constant 0 : i32
    %c0_i32_1 = arith.constant 0 : i32
    return %arg0, %c0_i32, %c0_i32_0 : i32, i32, i32
  }
  func.func @transform_1(%arg0: i32) -> (i32, i32) {
    %c0_i32 = arith.constant 0 : i32
    %c0_i32_0 = arith.constant 0 : i32
    %c0_i32_1 = arith.constant 0 : i32
    return %c0_i32, %c0_i32_0 : i32, i32
  }
  func.func @transform_2(%arg0: i32) -> (i32, i32) {
    %c0_i32 = arith.constant 0 : i32
    %c0_i32_0 = arith.constant 0 : i32
    %c0_i32_1 = arith.constant 0 : i32
    return %c0_i32, %c0_i32_0 : i32, i32
  }
  func.func @transform_3(%arg0: i32) -> (i32, i32) {
    %c0_i32 = arith.constant 0 : i32
    %c0_i32_0 = arith.constant 0 : i32
    %c0_i32_1 = arith.constant 0 : i32
    return %c0_i32, %c0_i32_0 : i32, i32
  }
  func.func @transform_4(%arg0: i32) -> (i32, i32) {
    %c0_i32 = arith.constant 0 : i32
    %c0_i32_0 = arith.constant 0 : i32
    %c0_i32_1 = arith.constant 0 : i32
    return %c0_i32, %c0_i32_0 : i32, i32
  }
  func.func @transform_5(%arg0: i32) -> (i32, i32) {
    %c0_i32 = arith.constant 0 : i32
    %c0_i32_0 = arith.constant 0 : i32
    %c0_i32_1 = arith.constant 0 : i32
    return %c0_i32, %c0_i32_0 : i32, i32
  }
  func.func @transform_6(%arg0: i32) -> (i32, i32) {
    %c0_i32 = arith.constant 0 : i32
    %c0_i32_0 = arith.constant 0 : i32
    %c0_i32_1 = arith.constant 0 : i32
    return %c0_i32, %c0_i32_0 : i32, i32
  }
  func.func @transform_7(%arg0: i32) -> (i32, i32) {
    %c0_i32 = arith.constant 0 : i32
    %c0_i32_0 = arith.constant 0 : i32
    %c0_i32_1 = arith.constant 0 : i32
    return %c0_i32, %c0_i32_0 : i32, i32
  }
  func.func @transform_8(%arg0: i32) -> (i32, i32) {
    %c0_i32 = arith.constant 0 : i32
    %c0_i32_0 = arith.constant 0 : i32
    %c0_i32_1 = arith.constant 0 : i32
    return %c0_i32, %c0_i32_0 : i32, i32
  }
  func.func @transform_9(%arg0: i32) -> (i32, i32) {
    %c0_i32 = arith.constant 0 : i32
    %c0_i32_0 = arith.constant 0 : i32
    %c0_i32_1 = arith.constant 0 : i32
    return %c0_i32, %c0_i32_0 : i32, i32
  }
  func.func @transform_10(%arg0: i32) -> (i32, i32, i32) {
    %c0_i32 = arith.constant 0 : i32
    %c0_i32_0 = arith.constant 0 : i32
    %c0_i32_1 = arith.constant 0 : i32
    return %arg0, %c0_i32, %c0_i32_0 : i32, i32, i32
  }
}

</mosaic_0001>

<llo_original>
// kernel: feature_extractor_forward.1
$region0: #{feature_extractor_forward.1}
  #allocation0 [shape = 'u32[]', space=smem, size = 0x4, offset = 0x4, fixed_abs, tag = 'smem constant byte address 0x4 - core index']
  #allocation1 [shape = 'u32[144,128]{1,0:T(1,128)}', space=vmem, size = 0x12000, scoped, tag = 'internal scratch']
  #allocation2 [shape = 'f32[18,18,64]{2,1,0:T(8,128)}', space=vmem, size = 0x36000, scoped, tag = 'scratch operand']
  #allocation3 [shape = 'f32[256,576]{1,0:T(8,128)}', space=vmem, size = 0xa0000, scoped, tag = 'scratch operand']
  #allocation4 [shape = 'f32[18,18,128]{2,1,0:T(8,128)}', space=vmem, size = 0x36000, scoped, tag = 'scratch operand']
  #allocation5 [shape = 'f32[256,1152]{1,0:T(8,128)}', space=vmem, size = 0x120000, scoped, tag = 'scratch operand']
  %s0 = inlined_call_operand.vmem [shape: f32[2,256,27], index: 0, kind: input, shape index: {}]
  %s1 = inlined_call_operand.vmem [shape: f32[27,64], index: 1, kind: input, shape index: {}]
  %s2 = inlined_call_operand.vmem [shape: f32[1,64], index: 2, kind: input, shape index: {}]
  %s3 = inlined_call_operand.vmem [shape: f32[1,64], index: 3, kind: input, shape index: {}]
  %s4 = inlined_call_operand.vmem [shape: f32[576,128], index: 4, kind: input, shape index: {}]
  %s5 = inlined_call_operand.vmem [shape: f32[1,128], index: 5, kind: input, shape index: {}]
  %s6 = inlined_call_operand.vmem [shape: f32[1,128], index: 6, kind: input, shape index: {}]
  %s7 = inlined_call_operand.vmem [shape: f32[1152,256], index: 7, kind: input, shape index: {}]
  %s8 = inlined_call_operand.vmem [shape: f32[1,256], index: 8, kind: input, shape index: {}]
  %s9 = inlined_call_operand.vmem [shape: f32[1,256], index: 9, kind: input, shape index: {}]
  %s10 = inlined_call_operand.hbm [shape: f32[2,1,256], index: 10, kind: output, shape index: {}]
  %s11 = sld [smem:[#allocation0]]
  $region73: #{feature_extractor_forward.1} parent=0
    _
  %s13 = ssub.s32 1, %s11
  %s14 = scalar_select 0, %s13, %s11
  $region1: #{feature_extractor_forward.1} parent=0
    #allocation6 [shape = 'u8[2048]{0}', space=vmem, size = 0x800, scoped, tag = 'output window, operand 0']
    #allocation7 [shape = 's32[2]{0}', space=sflag, size = 0x8, scoped, tag = 'scoped memory for feature_extractor_forward.1']
    %15 = vsyncpa [#allocation7], 0
    %s16 = scalar_lea.sflag [#allocation7], 1
    %17 = vsyncpa %s16, 0
    loop: start=0, step=1, limit=4
    $region2: #{feature_extractor_forward.1} parent=1 // loop_pre_header
      _
    $region3: #{feature_extractor_forward.1} parent=1 // loop_header
      %s19 = sphi 0, %s23
      %p20 = scmp.ge.s32.totalorder %s19, 4
      %s29 = sphi 0, %s31
      %s32 = sphi 0, %s29
      %s33 = sphi 0, %s32
      %s49 = sphi 0, %s33
      %s53 = sphi 0, %s53
      %s55 = sphi 0, %s53
      %s56 = sphi 0, %s55
      %s70 = sphi 0, %s56
      %s74 = sphi 0, %s74
      %s76 = sphi 0, %s74
      %s77 = sphi 0, %s76
      %s91 = sphi 0, %s77
      %s95 = sphi 0, %s95
      %s97 = sphi 0, %s95
      %s98 = sphi 0, %s97
      %s112 = sphi 0, %s98
      %s116 = sphi 0, %s116
      %s118 = sphi 0, %s116
      %s119 = sphi 0, %s118
      %s133 = sphi 0, %s119
      %s137 = sphi 0, %s137
      %s139 = sphi 0, %s137
      %s140 = sphi 0, %s139
      %s154 = sphi 0, %s140
      %s158 = sphi 0, %s158
      %s160 = sphi 0, %s158
      %s161 = sphi 0, %s160
      %s175 = sphi 0, %s161
      %s179 = sphi 0, %s179
      %s181 = sphi 0, %s179
      %s182 = sphi 0, %s181
      %s196 = sphi 0, %s182
      %s200 = sphi 0, %s200
      %s202 = sphi 0, %s200
      %s203 = sphi 0, %s202
      %s217 = sphi 0, %s203
      %s221 = sphi 0, %s221
      %s223 = sphi 0, %s221
      %s224 = sphi 0, %s223
      %s238 = sphi 0, %s224
      %s244 = sphi 0, %s246
      %s247 = sphi 0, %s244
      %s248 = sphi 0, %s247
      %s264 = sphi 0, %s248
    $region4: #{feature_extractor_forward.1} parent=1 // loop_header_branch
      %22 = sbr.rel (%p20) target = $region8
    $region5: #{feature_extractor_forward.1} parent=1 // loop_body
      %s24 = ssub.s32 %s19, 1
      %s25 = ssub.s32 %s19, 2
      %s26 = sadd.s32 %s19, 1
      %s27 = ssub.s32 %s19, %s26
      %p28 = scmp.eq.s32.totalorder %s27, 0
      %s30 = sadd.s32 %s29, 1
      %s31 = scalar_select %p28, %s29, %s30
      %p34 = pneg %p28
      %p35 = scmp.eq.s32.totalorder %s19, 1
      %p36 = por %p34, %p35
      %p37 = scmp.ne.s32.totalorder %s29, %s32
      %p38 = scmp.eq.s32.totalorder %s19, 0
      %p39 = por %p37, %p38
      %p40 = scmp.ne.s32.totalorder %s29, %s32
      %p41 = scmp.eq.s32.totalorder %s24, 1
      %p42 = por %p40, %p41
      %p43 = scmp.ne.s32.totalorder %s32, %s33
      %p44 = scmp.eq.s32.totalorder %s24, 0
      %p45 = por %p43, %p44
      %p46 = scmp.ne.s32.totalorder %s32, %s33
      %p47 = scmp.eq.s32.totalorder %s25, 1
      %p48 = por %p46, %p47
      %p50 = scmp.ne.s32.totalorder %s33, %s49
      %p51 = scmp.eq.s32.totalorder %s25, 0
      %p52 = por %p50, %p51
      %s54 = sadd.s32 %s53, 1
      %p57 = scmp.eq.s32.totalorder %s19, 1
      %p58 = scmp.ne.s32.totalorder %s53, %s55
      %p59 = scmp.eq.s32.totalorder %s19, 0
      %p60 = por %p58, %p59
      %p61 = scmp.ne.s32.totalorder %s53, %s55
      %p62 = scmp.eq.s32.totalorder %s24, 1
      %p63 = por %p61, %p62
      %p64 = scmp.ne.s32.totalorder %s55, %s56
      %p65 = scmp.eq.s32.totalorder %s24, 0
      %p66 = por %p64, %p65
      %p67 = scmp.ne.s32.totalorder %s55, %s56
      %p68 = scmp.eq.s32.totalorder %s25, 1
      %p69 = por %p67, %p68
      %p71 = scmp.ne.s32.totalorder %s56, %s70
      %p72 = scmp.eq.s32.totalorder %s25, 0
      %p73 = por %p71, %p72
      %s75 = sadd.s32 %s74, 1
      %p78 = scmp.eq.s32.totalorder %s19, 1
      %p79 = scmp.ne.s32.totalorder %s74, %s76
      %p80 = scmp.eq.s32.totalorder %s19, 0
      %p81 = por %p79, %p80
      %p82 = scmp.ne.s32.totalorder %s74, %s76
      %p83 = scmp.eq.s32.totalorder %s24, 1
      %p84 = por %p82, %p83
      %p85 = scmp.ne.s32.totalorder %s76, %s77
      %p86 = scmp.eq.s32.totalorder %s24, 0
      %p87 = por %p85, %p86
      %p88 = scmp.ne.s32.totalorder %s76, %s77
      %p89 = scmp.eq.s32.totalorder %s25, 1
      %p90 = por %p88, %p89
      %p92 = scmp.ne.s32.totalorder %s77, %s91
      %p93 = scmp.eq.s32.totalorder %s25, 0
      %p94 = por %p92, %p93
      %s96 = sadd.s32 %s95, 1
      %p99 = scmp.eq.s32.totalorder %s19, 1
      %p100 = scmp.ne.s32.totalorder %s95, %s97
      %p101 = scmp.eq.s32.totalorder %s19, 0
      %p102 = por %p100, %p101
      %p103 = scmp.ne.s32.totalorder %s95, %s97
      %p104 = scmp.eq.s32.totalorder %s24, 1
      %p105 = por %p103, %p104
      %p106 = scmp.ne.s32.totalorder %s97, %s98
      %p107 = scmp.eq.s32.totalorder %s24, 0
      %p108 = por %p106, %p107
      %p109 = scmp.ne.s32.totalorder %s97, %s98
      %p110 = scmp.eq.s32.totalorder %s25, 1
      %p111 = por %p109, %p110
      %p113 = scmp.ne.s32.totalorder %s98, %s112
      %p114 = scmp.eq.s32.totalorder %s25, 0
      %p115 = por %p113, %p114
      %s117 = sadd.s32 %s116, 1
      %p120 = scmp.eq.s32.totalorder %s19, 1
      %p121 = scmp.ne.s32.totalorder %s116, %s118
      %p122 = scmp.eq.s32.totalorder %s19, 0
      %p123 = por %p121, %p122
      %p124 = scmp.ne.s32.totalorder %s116, %s118
      %p125 = scmp.eq.s32.totalorder %s24, 1
      %p126 = por %p124, %p125
      %p127 = scmp.ne.s32.totalorder %s118, %s119
      %p128 = scmp.eq.s32.totalorder %s24, 0
      %p129 = por %p127, %p128
      %p130 = scmp.ne.s32.totalorder %s118, %s119
      %p131 = scmp.eq.s32.totalorder %s25, 1
      %p132 = por %p130, %p131
      %p134 = scmp.ne.s32.totalorder %s119, %s133
      %p135 = scmp.eq.s32.totalorder %s25, 0
      %p136 = por %p134, %p135
      %s138 = sadd.s32 %s137, 1
      %p141 = scmp.eq.s32.totalorder %s19, 1
      %p142 = scmp.ne.s32.totalorder %s137, %s139
      %p143 = scmp.eq.s32.totalorder %s19, 0
      %p144 = por %p142, %p143
      %p145 = scmp.ne.s32.totalorder %s137, %s139
      %p146 = scmp.eq.s32.totalorder %s24, 1
      %p147 = por %p145, %p146
      %p148 = scmp.ne.s32.totalorder %s139, %s140
      %p149 = scmp.eq.s32.totalorder %s24, 0
      %p150 = por %p148, %p149
      %p151 = scmp.ne.s32.totalorder %s139, %s140
      %p152 = scmp.eq.s32.totalorder %s25, 1
      %p153 = por %p151, %p152
      %p155 = scmp.ne.s32.totalorder %s140, %s154
      %p156 = scmp.eq.s32.totalorder %s25, 0
      %p157 = por %p155, %p156
      %s159 = sadd.s32 %s158, 1
      %p162 = scmp.eq.s32.totalorder %s19, 1
      %p163 = scmp.ne.s32.totalorder %s158, %s160
      %p164 = scmp.eq.s32.totalorder %s19, 0
      %p165 = por %p163, %p164
      %p166 = scmp.ne.s32.totalorder %s158, %s160
      %p167 = scmp.eq.s32.totalorder %s24, 1
      %p168 = por %p166, %p167
      %p169 = scmp.ne.s32.totalorder %s160, %s161
      %p170 = scmp.eq.s32.totalorder %s24, 0
      %p171 = por %p169, %p170
      %p172 = scmp.ne.s32.totalorder %s160, %s161
      %p173 = scmp.eq.s32.totalorder %s25, 1
      %p174 = por %p172, %p173
      %p176 = scmp.ne.s32.totalorder %s161, %s175
      %p177 = scmp.eq.s32.totalorder %s25, 0
      %p178 = por %p176, %p177
      %s180 = sadd.s32 %s179, 1
      %p183 = scmp.eq.s32.totalorder %s19, 1
      %p184 = scmp.ne.s32.totalorder %s179, %s181
      %p185 = scmp.eq.s32.totalorder %s19, 0
      %p186 = por %p184, %p185
      %p187 = scmp.ne.s32.totalorder %s179, %s181
      %p188 = scmp.eq.s32.totalorder %s24, 1
      %p189 = por %p187, %p188
      %p190 = scmp.ne.s32.totalorder %s181, %s182
      %p191 = scmp.eq.s32.totalorder %s24, 0
      %p192 = por %p190, %p191
      %p193 = scmp.ne.s32.totalorder %s181, %s182
      %p194 = scmp.eq.s32.totalorder %s25, 1
      %p195 = por %p193, %p194
      %p197 = scmp.ne.s32.totalorder %s182, %s196
      %p198 = scmp.eq.s32.totalorder %s25, 0
      %p199 = por %p197, %p198
      %s201 = sadd.s32 %s200, 1
      %p204 = scmp.eq.s32.totalorder %s19, 1
      %p205 = scmp.ne.s32.totalorder %s200, %s202
      %p206 = scmp.eq.s32.totalorder %s19, 0
      %p207 = por %p205, %p206
      %p208 = scmp.ne.s32.totalorder %s200, %s202
      %p209 = scmp.eq.s32.totalorder %s24, 1
      %p210 = por %p208, %p209
      %p211 = scmp.ne.s32.totalorder %s202, %s203
      %p212 = scmp.eq.s32.totalorder %s24, 0
      %p213 = por %p211, %p212
      %p214 = scmp.ne.s32.totalorder %s202, %s203
      %p215 = scmp.eq.s32.totalorder %s25, 1
      %p216 = por %p214, %p215
      %p218 = scmp.ne.s32.totalorder %s203, %s217
      %p219 = scmp.eq.s32.totalorder %s25, 0
      %p220 = por %p218, %p219
      %s222 = sadd.s32 %s221, 1
      %p225 = scmp.eq.s32.totalorder %s19, 1
      %p226 = scmp.ne.s32.totalorder %s221, %s223
      %p227 = scmp.eq.s32.totalorder %s19, 0
      %p228 = por %p226, %p227
      %p229 = scmp.ne.s32.totalorder %s221, %s223
      %p230 = scmp.eq.s32.totalorder %s24, 1
      %p231 = por %p229, %p230
      %p232 = scmp.ne.s32.totalorder %s223, %s224
      %p233 = scmp.eq.s32.totalorder %s24, 0
      %p234 = por %p232, %p233
      %p235 = scmp.ne.s32.totalorder %s223, %s224
      %p236 = scmp.eq.s32.totalorder %s25, 1
      %p237 = por %p235, %p236
      %p239 = scmp.ne.s32.totalorder %s224, %s238
      %p240 = scmp.eq.s32.totalorder %s25, 0
      %p241 = por %p239, %p240
      %s242 = ssub.s32 %s19, %s26
      %p243 = scmp.eq.s32.totalorder %s242, 0
      %s245 = sadd.s32 %s244, 1
      %s246 = scalar_select %p243, %s244, %s245
      %p249 = pneg %p243
      %p250 = scmp.eq.s32.totalorder %s19, 1
      %p251 = por %p249, %p250
      %p252 = scmp.ne.s32.totalorder %s244, %s247
      %p253 = scmp.eq.s32.totalorder %s19, 0
      %p254 = por %p252, %p253
      %p255 = scmp.ne.s32.totalorder %s244, %s247
      %p256 = scmp.eq.s32.totalorder %s24, 1
      %p257 = por %p255, %p256
      %p258 = scmp.ne.s32.totalorder %s247, %s248
      %p259 = scmp.eq.s32.totalorder %s24, 0
      %p260 = por %p258, %p259
      %p261 = scmp.ne.s32.totalorder %s247, %s248
      %p262 = scmp.eq.s32.totalorder %s25, 1
      %p263 = por %p261, %p262
      %p265 = scmp.ne.s32.totalorder %s248, %s264
      %p266 = scmp.eq.s32.totalorder %s25, 0
      %p267 = por %p265, %p266
      %p268 = scmp.le.s32.totalorder 1, %s19
      %p269 = scmp.lt.s32.totalorder %s19, 3
      %p270 = pnand %p268, %p269
      %p271 = pneg %p270
      // Predicated region
      $region9: #{feature_extractor_forward.1} parent=5 // pred_check
        _
      $region10: #{feature_extractor_forward.1} parent=5 // pred_check_branch
        %273 = sbr.rel (%p270) target = $region12
      $region11: #{feature_extractor_forward.1} parent=5 // pred_region
        %s274 = ssub.s32 %s19, 1
        // Predicated region
        $region13: #{feature_extractor_forward.1} parent=11 // pred_check
          %p275 = pneg %p66
        $region14: #{feature_extractor_forward.1} parent=11 // pred_check_branch
          %277 = sbr.rel (%p275) target = $region16
        $region15: #{feature_extractor_forward.1} parent=11 // pred_region
          _
        $region16: #{feature_extractor_forward.1} parent=11 // pred_fallthru
          _
        // Predicated region
        $region17: #{feature_extractor_forward.1} parent=11 // pred_check
          %p278 = pneg %p87
        $region18: #{feature_extractor_forward.1} parent=11 // pred_check_branch
          %280 = sbr.rel (%p278) target = $region20
        $region19: #{feature_extractor_forward.1} parent=11 // pred_region
          _
        $region20: #{feature_extractor_forward.1} parent=11 // pred_fallthru
          _
        // Predicated region
        $region21: #{feature_extractor_forward.1} parent=11 // pred_check
          %p281 = pneg %p108
        $region22: #{feature_extractor_forward.1} parent=11 // pred_check_branch
          %283 = sbr.rel (%p281) target = $region24
        $region23: #{feature_extractor_forward.1} parent=11 // pred_region
          _
        $region24: #{feature_extractor_forward.1} parent=11 // pred_fallthru
          _
        // Predicated region
        $region25: #{feature_extractor_forward.1} parent=11 // pred_check
          %p284 = pneg %p129
        $region26: #{feature_extractor_forward.1} parent=11 // pred_check_branch
          %286 = sbr.rel (%p284) target = $region28
        $region27: #{feature_extractor_forward.1} parent=11 // pred_region
          _
        $region28: #{feature_extractor_forward.1} parent=11 // pred_fallthru
          _
        // Predicated region
        $region29: #{feature_extractor_forward.1} parent=11 // pred_check
          %p287 = pneg %p150
        $region30: #{feature_extractor_forward.1} parent=11 // pred_check_branch
          %289 = sbr.rel (%p287) target = $region32
        $region31: #{feature_extractor_forward.1} parent=11 // pred_region
          _
        $region32: #{feature_extractor_forward.1} parent=11 // pred_fallthru
          _
        // Predicated region
        $region33: #{feature_extractor_forward.1} parent=11 // pred_check
          %p290 = pneg %p171
        $region34: #{feature_extractor_forward.1} parent=11 // pred_check_branch
          %292 = sbr.rel (%p290) target = $region36
        $region35: #{feature_extractor_forward.1} parent=11 // pred_region
          _
        $region36: #{feature_extractor_forward.1} parent=11 // pred_fallthru
          _
        // Predicated region
        $region37: #{feature_extractor_forward.1} parent=11 // pred_check
          %p293 = pneg %p192
        $region38: #{feature_extractor_forward.1} parent=11 // pred_check_branch
          %295 = sbr.rel (%p293) target = $region40
        $region39: #{feature_extractor_forward.1} parent=11 // pred_region
          _
        $region40: #{feature_extractor_forward.1} parent=11 // pred_fallthru
          _
        // Predicated region
        $region41: #{feature_extractor_forward.1} parent=11 // pred_check
          %p296 = pneg %p213
        $region42: #{feature_extractor_forward.1} parent=11 // pred_check_branch
          %298 = sbr.rel (%p296) target = $region44
        $region43: #{feature_extractor_forward.1} parent=11 // pred_region
          _
        $region44: #{feature_extractor_forward.1} parent=11 // pred_fallthru
          _
        // Predicated region
        $region45: #{feature_extractor_forward.1} parent=11 // pred_check
          %p299 = pneg %p234
        $region46: #{feature_extractor_forward.1} parent=11 // pred_check_branch
          %301 = sbr.rel (%p299) target = $region48
        $region47: #{feature_extractor_forward.1} parent=11 // pred_region
          _
        $region48: #{feature_extractor_forward.1} parent=11 // pred_fallthru
          _
      $region12: #{feature_extractor_forward.1} parent=5 // pred_fallthru
        _
      %p302 = scmp.lt.s32.totalorder %s19, 2
      // Predicated region
      $region49: #{feature_extractor_forward.1} parent=5 // pred_check
        %p303 = pneg %p302
      $region50: #{feature_extractor_forward.1} parent=5 // pred_check_branch
        %305 = sbr.rel (%p303) target = $region52
      $region51: #{feature_extractor_forward.1} parent=5 // pred_region
        // Predicated region
        $region53: #{feature_extractor_forward.1} parent=51 // pred_check
          %p306 = pneg %p39
        $region54: #{feature_extractor_forward.1} parent=51 // pred_check_branch
          %308 = sbr.rel (%p306) target = $region56
        $region55: #{feature_extractor_forward.1} parent=51 // pred_region
          %p309 = scmp.lt.s32.totalorder %s19, 1
          %s310 = scalar_select %p309, %s19, 1
          %s311 = smul.addr %s310, 32
          %s312 = smul.addr %s311, 8
          %s313 = scalar_lea.vmem %s0, %s312
        $region56: #{feature_extractor_forward.1} parent=51 // pred_fallthru
          _
      $region52: #{feature_extractor_forward.1} parent=5 // pred_fallthru
        _
      %p314 = scmp.le.s32.totalorder 1, %s19
      %p315 = scmp.lt.s32.totalorder %s19, 3
      %p316 = pnand %p314, %p315
      %p317 = pneg %p316
      // Predicated region
      $region57: #{feature_extractor_forward.1} parent=5 // pred_check
        _
      $region58: #{feature_extractor_forward.1} parent=5 // pred_check_branch
        %319 = sbr.rel (%p316) target = $region60
      $region59: #{feature_extractor_forward.1} parent=5 // pred_region
        %s320 = ssub.s32 %s19, 1
        %p321 = scmp.lt.s32.totalorder %s24, 1
        %s322 = scalar_select %p321, %s24, 1
        %s323 = smul.addr %s322, 32
        %s324 = smul.addr %s323, 8
        %s325 = scalar_lea.vmem %s0, %s324
        %p326 = pneg %p45
        %p327 = pneg %p42
        %p328 = pneg %p66
        %p329 = pneg %p63
        %p330 = pneg %p87
        %p331 = pneg %p84
        %p332 = pneg %p108
        %p333 = pneg %p105
        %p334 = pneg %p129
        %p335 = pneg %p126
        %p336 = pneg %p150
        %p337 = pneg %p147
        %p338 = pneg %p171
        %p339 = pneg %p168
        %p340 = pneg %p192
        %p341 = pneg %p189
        %p342 = pneg %p213
        %p343 = pneg %p210
        %p344 = pneg %p234
        %p345 = pneg %p231
        %p346 = pneg %p260
        %p347 = pneg %p257
        %s348 = sand.u32 %s247, 1
        %s349 = scalar_lea.sflag [#allocation7], %s348
        %s350 = sand.u32 %s247, 1
        %s351 = smul.addr %s350, 2
        %s352 = scalar_lea.vmem [#allocation6], %s351
        %p353 = scmp.lt.s32.totalorder %s24, 1
        %s354 = scalar_select %p353, %s24, 1
        %s355 = smul.addr %s354, 32
        %s356 = smul.addr %s355, 8
        %s357 = scalar_lea.vmem %s0, %s356
        %vm358 = vcmask 523264
        %359 = vst.msk [vmem:[#allocation2] sm:$0xff] %vm358, 0.0
        %360 = vst.msk [vmem:[#allocation2 + $0x8] sm:$0xff] %vm358, 0.0
        %vm361 = vcmask 517120
        %362 = vst.msk [vmem:[#allocation2 + $0x10] sm:$0x3] %vm361, 0.0
        %363 = vst.msk [vmem:[#allocation2 + $0x18] sm:$0xff] %vm358, 0.0
        %364 = vst.msk [vmem:[#allocation2 + $0x20] sm:$0xff] %vm358, 0.0
        %365 = vst.msk [vmem:[#allocation2 + $0x28] sm:$0x3] %vm361, 0.0
        %366 = vst.msk [vmem:[#allocation2 + $0x30] sm:$0xff] %vm358, 0.0
        %367 = vst.msk [vmem:[#allocation2 + $0x38] sm:$0xff] %vm358, 0.0
        %368 = vst.msk [vmem:[#allocation2 + $0x40] sm:$0x3] %vm361, 0.0
        %369 = vst.msk [vmem:[#allocation2 + $0x48] sm:$0xff] %vm358, 0.0
        %370 = vst.msk [vmem:[#allocation2 + $0x50] sm:$0xff] %vm358, 0.0
        %371 = vst.msk [vmem:[#allocation2 + $0x58] sm:$0x3] %vm361, 0.0
        %372 = vst.msk [vmem:[#allocation2 + $0x60] sm:$0xff] %vm358, 0.0
        %373 = vst.msk [vmem:[#allocation2 + $0x68] sm:$0xff] %vm358, 0.0
        %374 = vst.msk [vmem:[#allocation2 + $0x70] sm:$0x3] %vm361, 0.0
        %375 = vst.msk [vmem:[#allocation2 + $0x78] sm:$0xff] %vm358, 0.0
        %376 = vst.msk [vmem:[#allocation2 + $0x80] sm:$0xff] %vm358, 0.0
        %377 = vst.msk [vmem:[#allocation2 + $0x88] sm:$0x3] %vm361, 0.0
        %378 = vst.msk [vmem:[#allocation2 + $0x90] sm:$0xff] %vm358, 0.0
        %379 = vst.msk [vmem:[#allocation2 + $0x98] sm:$0xff] %vm358, 0.0
        %380 = vst.msk [vmem:[#allocation2 + $0xa0] sm:$0x3] %vm361, 0.0
        %381 = vst.msk [vmem:[#allocation2 + $0xa8] sm:$0xff] %vm358, 0.0
        %382 = vst.msk [vmem:[#allocation2 + $0xb0] sm:$0xff] %vm358, 0.0
        %383 = vst.msk [vmem:[#allocation2 + $0xb8] sm:$0x3] %vm361, 0.0
        %384 = vst.msk [vmem:[#allocation2 + $0xc0] sm:$0xff] %vm358, 0.0
        %385 = vst.msk [vmem:[#allocation2 + $0xc8] sm:$0xff] %vm358, 0.0
        %386 = vst.msk [vmem:[#allocation2 + $0xd0] sm:$0x3] %vm361, 0.0
        %387 = vst.msk [vmem:[#allocation2 + $0xd8] sm:$0xff] %vm358, 0.0
        %388 = vst.msk [vmem:[#allocation2 + $0xe0] sm:$0xff] %vm358, 0.0
        %389 = vst.msk [vmem:[#allocation2 + $0xe8] sm:$0x3] %vm361, 0.0
        %390 = vst.msk [vmem:[#allocation2 + $0xf0] sm:$0xff] %vm358, 0.0
        %391 = vst.msk [vmem:[#allocation2 + $0xf8] sm:$0xff] %vm358, 0.0
        %392 = vst.msk [vmem:[#allocation2 + $0x100] sm:$0x3] %vm361, 0.0
        %393 = vst.msk [vmem:[#allocation2 + $0x108] sm:$0xff] %vm358, 0.0
        %394 = vst.msk [vmem:[#allocation2 + $0x110] sm:$0xff] %vm358, 0.0
        %395 = vst.msk [vmem:[#allocation2 + $0x118] sm:$0x3] %vm361, 0.0
        %396 = vst.msk [vmem:[#allocation2 + $0x120] sm:$0xff] %vm358, 0.0
        %397 = vst.msk [vmem:[#allocation2 + $0x128] sm:$0xff] %vm358, 0.0
        %398 = vst.msk [vmem:[#allocation2 + $0x130] sm:$0x3] %vm361, 0.0
        %399 = vst.msk [vmem:[#allocation2 + $0x138] sm:$0xff] %vm358, 0.0
        %400 = vst.msk [vmem:[#allocation2 + $0x140] sm:$0xff] %vm358, 0.0
        %401 = vst.msk [vmem:[#allocation2 + $0x148] sm:$0x3] %vm361, 0.0
        %402 = vst.msk [vmem:[#allocation2 + $0x150] sm:$0xff] %vm358, 0.0
        %403 = vst.msk [vmem:[#allocation2 + $0x158] sm:$0xff] %vm358, 0.0
        %404 = vst.msk [vmem:[#allocation2 + $0x160] sm:$0x3] %vm361, 0.0
        %405 = vst.msk [vmem:[#allocation2 + $0x168] sm:$0xff] %vm358, 0.0
        %406 = vst.msk [vmem:[#allocation2 + $0x170] sm:$0xff] %vm358, 0.0
        %407 = vst.msk [vmem:[#allocation2 + $0x178] sm:$0x3] %vm361, 0.0
        %408 = vst.msk [vmem:[#allocation2 + $0x180] sm:$0xff] %vm358, 0.0
        %409 = vst.msk [vmem:[#allocation2 + $0x188] sm:$0xff] %vm358, 0.0
        %410 = vst.msk [vmem:[#allocation2 + $0x190] sm:$0x3] %vm361, 0.0
        %411 = vst.msk [vmem:[#allocation2 + $0x198] sm:$0xff] %vm358, 0.0
        %412 = vst.msk [vmem:[#allocation2 + $0x1a0] sm:$0xff] %vm358, 0.0
        %413 = vst.msk [vmem:[#allocation2 + $0x1a8] sm:$0x3] %vm361, 0.0
        %414 = vst [vmem:[#allocation4] sm:$0xff] 0.0
        %415 = vst [vmem:[#allocation4 + $0x8] sm:$0xff] 0.0
        %416 = vst [vmem:[#allocation4 + $0x10] sm:$0x3] 0.0
        %417 = vst [vmem:[#allocation4 + $0x18] sm:$0xff] 0.0
        %418 = vst [vmem:[#allocation4 + $0x20] sm:$0xff] 0.0
        %419 = vst [vmem:[#allocation4 + $0x28] sm:$0x3] 0.0
        %420 = vst [vmem:[#allocation4 + $0x30] sm:$0xff] 0.0
        %421 = vst [vmem:[#allocation4 + $0x38] sm:$0xff] 0.0
        %422 = vst [vmem:[#allocation4 + $0x40] sm:$0x3] 0.0
        %423 = vst [vmem:[#allocation4 + $0x48] sm:$0xff] 0.0
        %424 = vst [vmem:[#allocation4 + $0x50] sm:$0xff] 0.0
        %425 = vst [vmem:[#allocation4 + $0x58] sm:$0x3] 0.0
        %426 = vst [vmem:[#allocation4 + $0x60] sm:$0xff] 0.0
        %427 = vst [vmem:[#allocation4 + $0x68] sm:$0xff] 0.0
        %428 = vst [vmem:[#allocation4 + $0x70] sm:$0x3] 0.0
        %429 = vst [vmem:[#allocation4 + $0x78] sm:$0xff] 0.0
        %430 = vst [vmem:[#allocation4 + $0x80] sm:$0xff] 0.0
        %431 = vst [vmem:[#allocation4 + $0x88] sm:$0x3] 0.0
        %432 = vst [vmem:[#allocation4 + $0x90] sm:$0xff] 0.0
        %433 = vst [vmem:[#allocation4 + $0x98] sm:$0xff] 0.0
        %434 = vst [vmem:[#allocation4 + $0xa0] sm:$0x3] 0.0
        %435 = vst [vmem:[#allocation4 + $0xa8] sm:$0xff] 0.0
        %436 = vst [vmem:[#allocation4 + $0xb0] sm:$0xff] 0.0
        %437 = vst [vmem:[#allocation4 + $0xb8] sm:$0x3] 0.0
        %438 = vst [vmem:[#allocation4 + $0xc0] sm:$0xff] 0.0
        %439 = vst [vmem:[#allocation4 + $0xc8] sm:$0xff] 0.0
        %440 = vst [vmem:[#allocation4 + $0xd0] sm:$0x3] 0.0
        %441 = vst [vmem:[#allocation4 + $0xd8] sm:$0xff] 0.0
        %442 = vst [vmem:[#allocation4 + $0xe0] sm:$0xff] 0.0
        %443 = vst [vmem:[#allocation4 + $0xe8] sm:$0x3] 0.0
        %444 = vst [vmem:[#allocation4 + $0xf0] sm:$0xff] 0.0
        %445 = vst [vmem:[#allocation4 + $0xf8] sm:$0xff] 0.0
        %446 = vst [vmem:[#allocation4 + $0x100] sm:$0x3] 0.0
        %447 = vst [vmem:[#allocation4 + $0x108] sm:$0xff] 0.0
        %448 = vst [vmem:[#allocation4 + $0x110] sm:$0xff] 0.0
        %449 = vst [vmem:[#allocation4 + $0x118] sm:$0x3] 0.0
        %450 = vst [vmem:[#allocation4 + $0x120] sm:$0xff] 0.0
        %451 = vst [vmem:[#allocation4 + $0x128] sm:$0xff] 0.0
        %452 = vst [vmem:[#allocation4 + $0x130] sm:$0x3] 0.0
        %453 = vst [vmem:[#allocation4 + $0x138] sm:$0xff] 0.0
        %454 = vst [vmem:[#allocation4 + $0x140] sm:$0xff] 0.0
        %455 = vst [vmem:[#allocation4 + $0x148] sm:$0x3] 0.0
        %456 = vst [vmem:[#allocation4 + $0x150] sm:$0xff] 0.0
        %457 = vst [vmem:[#allocation4 + $0x158] sm:$0xff] 0.0
        %458 = vst [vmem:[#allocation4 + $0x160] sm:$0x3] 0.0
        %459 = vst [vmem:[#allocation4 + $0x168] sm:$0xff] 0.0
        %460 = vst [vmem:[#allocation4 + $0x170] sm:$0xff] 0.0
        %461 = vst [vmem:[#allocation4 + $0x178] sm:$0x3] 0.0
        %462 = vst [vmem:[#allocation4 + $0x180] sm:$0xff] 0.0
        %463 = vst [vmem:[#allocation4 + $0x188] sm:$0xff] 0.0
        %464 = vst [vmem:[#allocation4 + $0x190] sm:$0x3] 0.0
        %465 = vst [vmem:[#allocation4 + $0x198] sm:$0xff] 0.0
        %466 = vst [vmem:[#allocation4 + $0x1a0] sm:$0xff] 0.0
        %467 = vst [vmem:[#allocation4 + $0x1a8] sm:$0x3] 0.0
        %v468 = vld [vmem:[%s2] sm:$0x1]
        %v469 = vld [vmem:[%s3] sm:$0x1]
        %v470 = vld [vmem:[%s357] sm:$0xff]
        %v471 = vld [vmem:[%s357 + $0x8] sm:$0xff]
        %v472 = vld [vmem:[%s357 + $0x10] sm:$0xff]
        %v473 = vld [vmem:[%s357 + $0x18] sm:$0xff]
        %v474 = vld [vmem:[%s357 + $0x20] sm:$0xff]
        %v475 = vld [vmem:[%s357 + $0x28] sm:$0xff]
        %v476 = vld [vmem:[%s357 + $0x30] sm:$0xff]
        %v477 = vld [vmem:[%s357 + $0x38] sm:$0xff]
        %v478 = vld [vmem:[%s357 + $0x40] sm:$0xff]
        %v479 = vld [vmem:[%s357 + $0x48] sm:$0xff]
        %v480 = vld [vmem:[%s357 + $0x50] sm:$0xff]
        %v481 = vld [vmem:[%s357 + $0x58] sm:$0xff]
        %v482 = vld [vmem:[%s357 + $0x60] sm:$0xff]
        %v483 = vld [vmem:[%s357 + $0x68] sm:$0xff]
        %v484 = vld [vmem:[%s357 + $0x70] sm:$0xff]
        %v485 = vld [vmem:[%s357 + $0x78] sm:$0xff]
        %v486 = vld [vmem:[%s357 + $0x80] sm:$0xff]
        %v487 = vld [vmem:[%s357 + $0x88] sm:$0xff]
        %v488 = vld [vmem:[%s357 + $0x90] sm:$0xff]
        %v489 = vld [vmem:[%s357 + $0x98] sm:$0xff]
        %v490 = vld [vmem:[%s357 + $0xa0] sm:$0xff]
        %v491 = vld [vmem:[%s357 + $0xa8] sm:$0xff]
        %v492 = vld [vmem:[%s357 + $0xb0] sm:$0xff]
        %v493 = vld [vmem:[%s357 + $0xb8] sm:$0xff]
        %v494 = vld [vmem:[%s357 + $0xc0] sm:$0xff]
        %v495 = vld [vmem:[%s357 + $0xc8] sm:$0xff]
        %v496 = vld [vmem:[%s357 + $0xd0] sm:$0xff]
        %v497 = vld [vmem:[%s357 + $0xd8] sm:$0xff]
        %v498 = vld [vmem:[%s357 + $0xe0] sm:$0xff]
        %v499 = vld [vmem:[%s357 + $0xe8] sm:$0xff]
        %v500 = vld [vmem:[%s357 + $0xf0] sm:$0xff]
        %v501 = vld [vmem:[%s357 + $0xf8] sm:$0xff]
        %v502 = vld [vmem:[%s1] sm:$0xff]
        %v503 = vld [vmem:[%s1 + $0x8] sm:$0xff]
        %v504 = vld [vmem:[%s1 + $0x10] sm:$0xff]
        %v505 = vld [vmem:[%s1 + $0x18] sm:$0x7]
        %vm506 = vcmask 220160
        %v508 = vsel %vm506, %v470, 0
        %v511 = vsel %vm506, %v471, 0
        %v514 = vsel %vm506, %v472, 0
        %v517 = vsel %vm506, %v473, 0
        %v520 = vsel %vm506, %v474, 0
        %v523 = vsel %vm506, %v475, 0
        %v526 = vsel %vm506, %v476, 0
        %v529 = vsel %vm506, %v477, 0
        %v532 = vsel %vm506, %v478, 0
        %v535 = vsel %vm506, %v479, 0
        %v538 = vsel %vm506, %v480, 0
        %v541 = vsel %vm506, %v481, 0
        %v544 = vsel %vm506, %v482, 0
        %v547 = vsel %vm506, %v483, 0
        %v550 = vsel %vm506, %v484, 0
        %v553 = vsel %vm506, %v485, 0
        %v556 = vsel %vm506, %v486, 0
        %v559 = vsel %vm506, %v487, 0
        %v562 = vsel %vm506, %v488, 0
        %v565 = vsel %vm506, %v489, 0
        %v568 = vsel %vm506, %v490, 0
        %v571 = vsel %vm506, %v491, 0
        %v574 = vsel %vm506, %v492, 0
        %v577 = vsel %vm506, %v493, 0
        %v580 = vsel %vm506, %v494, 0
        %v583 = vsel %vm506, %v495, 0
        %v586 = vsel %vm506, %v496, 0
        %v589 = vsel %vm506, %v497, 0
        %v592 = vsel %vm506, %v498, 0
        %v595 = vsel %vm506, %v499, 0
        %v598 = vsel %vm506, %v500, 0
        %v601 = vsel %vm506, %v501, 0
        %vm603 = vcmask 1042432
        %v605 = vsel %vm603, %v505, 0
        %607 = vmatprep.subr.mxu0 0.0
        %608 = vmatpush1.msra.mxu0 0.0
        %609 = vmatprep.subr.mxu0 0.0
        %610 = vmatpush1.msra.mxu0 0.0
        %611 = vmatprep.subr.mxu0 0.0
        %612 = vmatpush1.msra.mxu0 0.0
        %613 = vmatprep.subr.mxu0 0.0
        %614 = vmatpush1.msra.mxu0 0.0
        %615 = vmatprep.subr.mxu0 0.0
        %616 = vmatpush1.msra.mxu0 0.0
        %617 = vmatprep.subr.mxu0 0.0
        %618 = vmatpush1.msra.mxu0 0.0
        %619 = vmatprep.subr.mxu0 0.0
        %620 = vmatpush1.msra.mxu0 0.0
        %621 = vmatprep.subr.mxu0 0.0
        %622 = vmatpush1.msra.mxu0 0.0
        %623 = vmatprep.subr.mxu0 0.0
        %624 = vmatpush1.msra.mxu0 0.0
        %625 = vmatprep.subr.mxu0 0.0
        %626 = vmatpush1.msra.mxu0 0.0
        %627 = vmatprep.subr.mxu0 0.0
        %628 = vmatpush1.msra.mxu0 0.0
        %629 = vmatprep.subr.mxu0 0.0
        %630 = vmatpush1.msra.mxu0 0.0
        %631 = vmatprep.subr.mxu0 0.0
        %632 = vmatpush1.msra.mxu0 %v605
        %633 = vmatprep.subr.mxu0 0.0
        %634 = vmatpush1.msra.mxu0 %v504
        %635 = vmatprep.subr.mxu0 0.0
        %636 = vmatpush1.msra.mxu0 %v503
        %637 = vmatprep.subr.mxu0 0.0
        %638 = vmatpush1.msra.mxu0 %v502
        %639 = vmatprep.subr.mxu0 0.0
        %640 = vmatpush2.msra.mxu0 0.0
        %641 = vmatprep.subr.mxu0 0.0
        %642 = vmatpush2.msra.mxu0 0.0
        %643 = vmatprep.subr.mxu0 0.0
        %644 = vmatpush2.msra.mxu0 0.0
        %645 = vmatprep.subr.mxu0 0.0
        %646 = vmatpush2.msra.mxu0 0.0
        %647 = vmatprep.subr.mxu0 0.0
        %648 = vmatpush2.msra.mxu0 0.0
        %649 = vmatprep.subr.mxu0 0.0
        %650 = vmatpush2.msra.mxu0 0.0
        %651 = vmatprep.subr.mxu0 0.0
        %652 = vmatpush2.msra.mxu0 0.0
        %653 = vmatprep.subr.mxu0 0.0
        %654 = vmatpush2.msra.mxu0 0.0
        %655 = vmatprep.subr.mxu0 0.0
        %656 = vmatpush2.msra.mxu0 0.0
        %657 = vmatprep.subr.mxu0 0.0
        %658 = vmatpush2.msra.mxu0 0.0
        %659 = vmatprep.subr.mxu0 0.0
        %660 = vmatpush2.msra.mxu0 0.0
        %661 = vmatprep.subr.mxu0 0.0
        %662 = vmatpush2.msra.mxu0 0.0
        %663 = vmatprep.subr.mxu0 0.0
        %664 = vmatpush2.msra.mxu0 0.0
        %665 = vmatprep.subr.mxu0 0.0
        %666 = vmatpush2.msra.mxu0 0.0
        %667 = vmatprep.subr.mxu0 0.0
        %668 = vmatpush2.msra.mxu0 0.0
        %669 = vmatprep.subr.mxu0 0.0
        %670 = vmatpush2.msra.mxu0 0.0
        %671 = vmatprep.mubr.f32.mxu0 0.0
        %672 = vmatmul.mubr.f32.gmra.mxu0 %v508
        %v673 = vpop.f32.mrf.mxu0
        %v674 = vadd.f32 0.0, %v673
        %v675 = vpop.f32.mrf.mxu0
        %676 = vmatprep.mubr.f32.mxu0 0.0
        %677 = vmatmul.mubr.f32.gmra.mxu0 %v511
        %v678 = vpop.f32.mrf.mxu0
        %v679 = vadd.f32 0.0, %v678
        %v680 = vpop.f32.mrf.mxu0
        %681 = vmatprep.mubr.f32.mxu0 0.0
        %682 = vmatmul.mubr.f32.gmra.mxu0 %v514
        %v683 = vpop.f32.mrf.mxu0
        %v684 = vadd.f32 0.0, %v683
        %v685 = vpop.f32.mrf.mxu0
        %686 = vmatprep.mubr.f32.mxu0 0.0
        %687 = vmatmul.mubr.f32.gmra.mxu0 %v517
        %v688 = vpop.f32.mrf.mxu0
        %v689 = vadd.f32 0.0, %v688
        %v690 = vpop.f32.mrf.mxu0
        %691 = vmatprep.mubr.f32.mxu0 0.0
        %692 = vmatmul.mubr.f32.gmra.mxu0 %v520
        %v693 = vpop.f32.mrf.mxu0
        %v694 = vadd.f32 0.0, %v693
        %v695 = vpop.f32.mrf.mxu0
        %696 = vmatprep.mubr.f32.mxu0 0.0
        %697 = vmatmul.mubr.f32.gmra.mxu0 %v523
        %v698 = vpop.f32.mrf.mxu0
        %v699 = vadd.f32 0.0, %v698
        %v700 = vpop.f32.mrf.mxu0
        %701 = vmatprep.mubr.f32.mxu0 0.0
        %702 = vmatmul.mubr.f32.gmra.mxu0 %v526
        %v703 = vpop.f32.mrf.mxu0
        %v704 = vadd.f32 0.0, %v703
        %v705 = vpop.f32.mrf.mxu0
        %706 = vmatprep.mubr.f32.mxu0 0.0
        %707 = vmatmul.mubr.f32.gmra.mxu0 %v529
        %v708 = vpop.f32.mrf.mxu0
        %v709 = vadd.f32 0.0, %v708
        %v710 = vpop.f32.mrf.mxu0
        %711 = vmatprep.mubr.f32.mxu0 0.0
        %712 = vmatmul.mubr.f32.gmra.mxu0 %v532
        %v713 = vpop.f32.mrf.mxu0
        %v714 = vadd.f32 0.0, %v713
        %v715 = vpop.f32.mrf.mxu0
        %716 = vmatprep.mubr.f32.mxu0 0.0
        %717 = vmatmul.mubr.f32.gmra.mxu0 %v535
        %v718 = vpop.f32.mrf.mxu0
        %v719 = vadd.f32 0.0, %v718
        %v720 = vpop.f32.mrf.mxu0
        %721 = vmatprep.mubr.f32.mxu0 0.0
        %722 = vmatmul.mubr.f32.gmra.mxu0 %v538
        %v723 = vpop.f32.mrf.mxu0
        %v724 = vadd.f32 0.0, %v723
        %v725 = vpop.f32.mrf.mxu0
        %726 = vmatprep.mubr.f32.mxu0 0.0
        %727 = vmatmul.mubr.f32.gmra.mxu0 %v541
        %v728 = vpop.f32.mrf.mxu0
        %v729 = vadd.f32 0.0, %v728
        %v730 = vpop.f32.mrf.mxu0
        %731 = vmatprep.mubr.f32.mxu0 0.0
        %732 = vmatmul.mubr.f32.gmra.mxu0 %v544
        %v733 = vpop.f32.mrf.mxu0
        %v734 = vadd.f32 0.0, %v733
        %v735 = vpop.f32.mrf.mxu0
        %736 = vmatprep.mubr.f32.mxu0 0.0
        %737 = vmatmul.mubr.f32.gmra.mxu0 %v547
        %v738 = vpop.f32.mrf.mxu0
        %v739 = vadd.f32 0.0, %v738
        %v740 = vpop.f32.mrf.mxu0
        %741 = vmatprep.mubr.f32.mxu0 0.0
        %742 = vmatmul.mubr.f32.gmra.mxu0 %v550
        %v743 = vpop.f32.mrf.mxu0
        %v744 = vadd.f32 0.0, %v743
        %v745 = vpop.f32.mrf.mxu0
        %746 = vmatprep.mubr.f32.mxu0 0.0
        %747 = vmatmul.mubr.f32.gmra.mxu0 %v553
        %v748 = vpop.f32.mrf.mxu0
        %v749 = vadd.f32 0.0, %v748
        %v750 = vpop.f32.mrf.mxu0
        %751 = vmatprep.mubr.f32.mxu0 0.0
        %752 = vmatmul.mubr.f32.gmra.mxu0 %v556
        %v753 = vpop.f32.mrf.mxu0
        %v754 = vadd.f32 0.0, %v753
        %v755 = vpop.f32.mrf.mxu0
        %756 = vmatprep.mubr.f32.mxu0 0.0
        %757 = vmatmul.mubr.f32.gmra.mxu0 %v559
        %v758 = vpop.f32.mrf.mxu0
        %v759 = vadd.f32 0.0, %v758
        %v760 = vpop.f32.mrf.mxu0
        %761 = vmatprep.mubr.f32.mxu0 0.0
        %762 = vmatmul.mubr.f32.gmra.mxu0 %v562
        %v763 = vpop.f32.mrf.mxu0
        %v764 = vadd.f32 0.0, %v763
        %v765 = vpop.f32.mrf.mxu0
        %766 = vmatprep.mubr.f32.mxu0 0.0
        %767 = vmatmul.mubr.f32.gmra.mxu0 %v565
        %v768 = vpop.f32.mrf.mxu0
        %v769 = vadd.f32 0.0, %v768
        %v770 = vpop.f32.mrf.mxu0
        %771 = vmatprep.mubr.f32.mxu0 0.0
        %772 = vmatmul.mubr.f32.gmra.mxu0 %v568
        %v773 = vpop.f32.mrf.mxu0
        %v774 = vadd.f32 0.0, %v773
        %v775 = vpop.f32.mrf.mxu0
        %776 = vmatprep.mubr.f32.mxu0 0.0
        %777 = vmatmul.mubr.f32.gmra.mxu0 %v571
        %v778 = vpop.f32.mrf.mxu0
        %v779 = vadd.f32 0.0, %v778
        %v780 = vpop.f32.mrf.mxu0
        %781 = vmatprep.mubr.f32.mxu0 0.0
        %782 = vmatmul.mubr.f32.gmra.mxu0 %v574
        %v783 = vpop.f32.mrf.mxu0
        %v784 = vadd.f32 0.0, %v783
        %v785 = vpop.f32.mrf.mxu0
        %786 = vmatprep.mubr.f32.mxu0 0.0
        %787 = vmatmul.mubr.f32.gmra.mxu0 %v577
        %v788 = vpop.f32.mrf.mxu0
        %v789 = vadd.f32 0.0, %v788
        %v790 = vpop.f32.mrf.mxu0
        %791 = vmatprep.mubr.f32.mxu0 0.0
        %792 = vmatmul.mubr.f32.gmra.mxu0 %v580
        %v793 = vpop.f32.mrf.mxu0
        %v794 = vadd.f32 0.0, %v793
        %v795 = vpop.f32.mrf.mxu0
        %796 = vmatprep.mubr.f32.mxu0 0.0
        %797 = vmatmul.mubr.f32.gmra.mxu0 %v583
        %v798 = vpop.f32.mrf.mxu0
        %v799 = vadd.f32 0.0, %v798
        %v800 = vpop.f32.mrf.mxu0
        %801 = vmatprep.mubr.f32.mxu0 0.0
        %802 = vmatmul.mubr.f32.gmra.mxu0 %v586
        %v803 = vpop.f32.mrf.mxu0
        %v804 = vadd.f32 0.0, %v803
        %v805 = vpop.f32.mrf.mxu0
        %806 = vmatprep.mubr.f32.mxu0 0.0
        %807 = vmatmul.mubr.f32.gmra.mxu0 %v589
        %v808 = vpop.f32.mrf.mxu0
        %v809 = vadd.f32 0.0, %v808
        %v810 = vpop.f32.mrf.mxu0
        %811 = vmatprep.mubr.f32.mxu0 0.0
        %812 = vmatmul.mubr.f32.gmra.mxu0 %v592
        %v813 = vpop.f32.mrf.mxu0
        %v814 = vadd.f32 0.0, %v813
        %v815 = vpop.f32.mrf.mxu0
        %816 = vmatprep.mubr.f32.mxu0 0.0
        %817 = vmatmul.mubr.f32.gmra.mxu0 %v595
        %v818 = vpop.f32.mrf.mxu0
        %v819 = vadd.f32 0.0, %v818
        %v820 = vpop.f32.mrf.mxu0
        %821 = vmatprep.mubr.f32.mxu0 0.0
        %822 = vmatmul.mubr.f32.gmra.mxu0 %v598
        %v823 = vpop.f32.mrf.mxu0
        %v824 = vadd.f32 0.0, %v823
        %v825 = vpop.f32.mrf.mxu0
        %826 = vmatprep.mubr.f32.mxu0 0.0
        %827 = vmatmul.mubr.f32.gmra.mxu0 %v601
        %v828 = vpop.f32.mrf.mxu0
        %v829 = vadd.f32 0.0, %v828
        %v830 = vpop.f32.mrf.mxu0
        %831 = vdwg.mxu0
        %v833 = vlaneseq
        %v834 = vshrl.u32 %v833, 7
        %v835 = vsub.s32 0, %v834
        %v836 = vrot.slane %v468, %v835
        %v838 = vmul.f32 %v674, %v836
        %v839 = vmul.f32 %v679, %v836
        %v840 = vmul.f32 %v684, %v836
        %v841 = vmul.f32 %v689, %v836
        %v842 = vmul.f32 %v694, %v836
        %v843 = vmul.f32 %v699, %v836
        %v844 = vmul.f32 %v704, %v836
        %v845 = vmul.f32 %v709, %v836
        %v846 = vmul.f32 %v714, %v836
        %v847 = vmul.f32 %v719, %v836
        %v848 = vmul.f32 %v724, %v836
        %v849 = vmul.f32 %v729, %v836
        %v850 = vmul.f32 %v734, %v836
        %v851 = vmul.f32 %v739, %v836
        %v852 = vmul.f32 %v744, %v836
        %v853 = vmul.f32 %v749, %v836
        %v854 = vmul.f32 %v754, %v836
        %v855 = vmul.f32 %v759, %v836
        %v856 = vmul.f32 %v764, %v836
        %v857 = vmul.f32 %v769, %v836
        %v858 = vmul.f32 %v774, %v836
        %v859 = vmul.f32 %v779, %v836
        %v860 = vmul.f32 %v784, %v836
        %v861 = vmul.f32 %v789, %v836
        %v862 = vmul.f32 %v794, %v836
        %v863 = vmul.f32 %v799, %v836
        %v864 = vmul.f32 %v804, %v836
        %v865 = vmul.f32 %v809, %v836
        %v866 = vmul.f32 %v814, %v836
        %v867 = vmul.f32 %v819, %v836
        %v868 = vmul.f32 %v824, %v836
        %v869 = vmul.f32 %v829, %v836
        %v871 = vlaneseq
        %v872 = vshrl.u32 %v871, 7
        %v873 = vsub.s32 0, %v872
        %v874 = vrot.slane %v469, %v873
        %v876 = vadd.f32 %v838, %v874
        %v877 = vadd.f32 %v839, %v874
        %v878 = vadd.f32 %v840, %v874
        %v879 = vadd.f32 %v841, %v874
        %v880 = vadd.f32 %v842, %v874
        %v881 = vadd.f32 %v843, %v874
        %v882 = vadd.f32 %v844, %v874
        %v883 = vadd.f32 %v845, %v874
        %v884 = vadd.f32 %v846, %v874
        %v885 = vadd.f32 %v847, %v874
        %v886 = vadd.f32 %v848, %v874
        %v887 = vadd.f32 %v849, %v874
        %v888 = vadd.f32 %v850, %v874
        %v889 = vadd.f32 %v851, %v874
        %v890 = vadd.f32 %v852, %v874
        %v891 = vadd.f32 %v853, %v874
        %v892 = vadd.f32 %v854, %v874
        %v893 = vadd.f32 %v855, %v874
        %v894 = vadd.f32 %v856, %v874
        %v895 = vadd.f32 %v857, %v874
        %v896 = vadd.f32 %v858, %v874
        %v897 = vadd.f32 %v859, %v874
        %v898 = vadd.f32 %v860, %v874
        %v899 = vadd.f32 %v861, %v874
        %v900 = vadd.f32 %v862, %v874
        %v901 = vadd.f32 %v863, %v874
        %v902 = vadd.f32 %v864, %v874
        %v903 = vadd.f32 %v865, %v874
        %v904 = vadd.f32 %v866, %v874
        %v905 = vadd.f32 %v867, %v874
        %v906 = vadd.f32 %v868, %v874
        %v907 = vadd.f32 %v869, %v874
        %v908 = vmax.f32 %v876, 0.0
        %v909 = vmax.f32 %v877, 0.0
        %v910 = vmax.f32 %v878, 0.0
        %v911 = vmax.f32 %v879, 0.0
        %v912 = vmax.f32 %v880, 0.0
        %v913 = vmax.f32 %v881, 0.0
        %v914 = vmax.f32 %v882, 0.0
        %v915 = vmax.f32 %v883, 0.0
        %v916 = vmax.f32 %v884, 0.0
        %v917 = vmax.f32 %v885, 0.0
        %v918 = vmax.f32 %v886, 0.0
        %v919 = vmax.f32 %v887, 0.0
        %v920 = vmax.f32 %v888, 0.0
        %v921 = vmax.f32 %v889, 0.0
        %v922 = vmax.f32 %v890, 0.0
        %v923 = vmax.f32 %v891, 0.0
        %v924 = vmax.f32 %v892, 0.0
        %v925 = vmax.f32 %v893, 0.0
        %v926 = vmax.f32 %v894, 0.0
        %v927 = vmax.f32 %v895, 0.0
        %v928 = vmax.f32 %v896, 0.0
        %v929 = vmax.f32 %v897, 0.0
        %v930 = vmax.f32 %v898, 0.0
        %v931 = vmax.f32 %v899, 0.0
        %v932 = vmax.f32 %v900, 0.0
        %v933 = vmax.f32 %v901, 0.0
        %v934 = vmax.f32 %v902, 0.0
        %v935 = vmax.f32 %v903, 0.0
        %v936 = vmax.f32 %v904, 0.0
        %v937 = vmax.f32 %v905, 0.0
        %v938 = vmax.f32 %v906, 0.0
        %v939 = vmax.f32 %v907, 0.0
        %s940 = scalar_lea.vmem [#allocation2], 24
        %941 = vst.msk [vmem:[%s940 + $0x1] sm:$0xff] %vm358, %v908
        %942 = vst.msk [vmem:[%s940 + $0x9] sm:$0xff] %vm358, %v909
        %943 = vst.msk [vmem:[%s940 + $0x19] sm:$0xff] %vm358, %v910
        %944 = vst.msk [vmem:[%s940 + $0x21] sm:$0xff] %vm358, %v911
        %945 = vst.msk [vmem:[%s940 + $0x31] sm:$0xff] %vm358, %v912
        %946 = vst.msk [vmem:[%s940 + $0x39] sm:$0xff] %vm358, %v913
        %947 = vst.msk [vmem:[%s940 + $0x49] sm:$0xff] %vm358, %v914
        %948 = vst.msk [vmem:[%s940 + $0x51] sm:$0xff] %vm358, %v915
        %949 = vst.msk [vmem:[%s940 + $0x61] sm:$0xff] %vm358, %v916
        %950 = vst.msk [vmem:[%s940 + $0x69] sm:$0xff] %vm358, %v917
        %951 = vst.msk [vmem:[%s940 + $0x79] sm:$0xff] %vm358, %v918
        %952 = vst.msk [vmem:[%s940 + $0x81] sm:$0xff] %vm358, %v919
        %953 = vst.msk [vmem:[%s940 + $0x91] sm:$0xff] %vm358, %v920
        %954 = vst.msk [vmem:[%s940 + $0x99] sm:$0xff] %vm358, %v921
        %955 = vst.msk [vmem:[%s940 + $0xa9] sm:$0xff] %vm358, %v922
        %956 = vst.msk [vmem:[%s940 + $0xb1] sm:$0xff] %vm358, %v923
        %957 = vst.msk [vmem:[%s940 + $0xc1] sm:$0xff] %vm358, %v924
        %958 = vst.msk [vmem:[%s940 + $0xc9] sm:$0xff] %vm358, %v925
        %959 = vst.msk [vmem:[%s940 + $0xd9] sm:$0xff] %vm358, %v926
        %960 = vst.msk [vmem:[%s940 + $0xe1] sm:$0xff] %vm358, %v927
        %961 = vst.msk [vmem:[%s940 + $0xf1] sm:$0xff] %vm358, %v928
        %962 = vst.msk [vmem:[%s940 + $0xf9] sm:$0xff] %vm358, %v929
        %963 = vst.msk [vmem:[%s940 + $0x109] sm:$0xff] %vm358, %v930
        %964 = vst.msk [vmem:[%s940 + $0x111] sm:$0xff] %vm358, %v931
        %965 = vst.msk [vmem:[%s940 + $0x121] sm:$0xff] %vm358, %v932
        %966 = vst.msk [vmem:[%s940 + $0x129] sm:$0xff] %vm358, %v933
        %967 = vst.msk [vmem:[%s940 + $0x139] sm:$0xff] %vm358, %v934
        %968 = vst.msk [vmem:[%s940 + $0x141] sm:$0xff] %vm358, %v935
        %969 = vst.msk [vmem:[%s940 + $0x151] sm:$0xff] %vm358, %v936
        %970 = vst.msk [vmem:[%s940 + $0x159] sm:$0xff] %vm358, %v937
        %971 = vst.msk [vmem:[%s940 + $0x169] sm:$0xff] %vm358, %v938
        %972 = vst.msk [vmem:[%s940 + $0x171] sm:$0xff] %vm358, %v939
        %v973 = vld [vmem:[#allocation2] sm:$0xff]
        %v974 = vld [vmem:[#allocation2 + $0x8] sm:$0xff]
        %v975 = vld [vmem:[#allocation2 + $0x18] sm:$0xff]
        %v976 = vld [vmem:[#allocation2 + $0x20] sm:$0xff]
        %v977 = vld [vmem:[#allocation2 + $0x30] sm:$0xff]
        %v978 = vld [vmem:[#allocation2 + $0x38] sm:$0xff]
        %v979 = vld [vmem:[#allocation2 + $0x48] sm:$0xff]
        %v980 = vld [vmem:[#allocation2 + $0x50] sm:$0xff]
        %v981 = vld [vmem:[#allocation2 + $0x60] sm:$0xff]
        %v982 = vld [vmem:[#allocation2 + $0x68] sm:$0xff]
        %v983 = vld [vmem:[#allocation2 + $0x78] sm:$0xff]
        %v984 = vld [vmem:[#allocation2 + $0x80] sm:$0xff]
        %v985 = vld [vmem:[#allocation2 + $0x90] sm:$0xff]
        %v986 = vld [vmem:[#allocation2 + $0x98] sm:$0xff]
        %v987 = vld [vmem:[#allocation2 + $0xa8] sm:$0xff]
        %v988 = vld [vmem:[#allocation2 + $0xb0] sm:$0xff]
        %v989 = vld [vmem:[#allocation2 + $0xc0] sm:$0xff]
        %v990 = vld [vmem:[#allocation2 + $0xc8] sm:$0xff]
        %v991 = vld [vmem:[#allocation2 + $0xd8] sm:$0xff]
        %v992 = vld [vmem:[#allocation2 + $0xe0] sm:$0xff]
        %v993 = vld [vmem:[#allocation2 + $0xf0] sm:$0xff]
        %v994 = vld [vmem:[#allocation2 + $0xf8] sm:$0xff]
        %v995 = vld [vmem:[#allocation2 + $0x108] sm:$0xff]
        %v996 = vld [vmem:[#allocation2 + $0x110] sm:$0xff]
        %v997 = vld [vmem:[#allocation2 + $0x120] sm:$0xff]
        %v998 = vld [vmem:[#allocation2 + $0x128] sm:$0xff]
        %v999 = vld [vmem:[#allocation2 + $0x138] sm:$0xff]
        %v1000 = vld [vmem:[#allocation2 + $0x140] sm:$0xff]
        %v1001 = vld [vmem:[#allocation2 + $0x150] sm:$0xff]
        %v1002 = vld [vmem:[#allocation2 + $0x158] sm:$0xff]
        %v1003 = vld [vmem:[#allocation2 + $0x168] sm:$0xff]
        %v1004 = vld [vmem:[#allocation2 + $0x170] sm:$0xff]
        %1005 = vst.msk [vmem:[#allocation3] sm:$0xff] %vm358, %v973
        %1006 = vst.msk [vmem:[#allocation3 + $0x28] sm:$0xff] %vm358, %v974
        %1007 = vst.msk [vmem:[#allocation3 + $0x50] sm:$0xff] %vm358, %v975
        %1008 = vst.msk [vmem:[#allocation3 + $0x78] sm:$0xff] %vm358, %v976
        %1009 = vst.msk [vmem:[#allocation3 + $0xa0] sm:$0xff] %vm358, %v977
        %1010 = vst.msk [vmem:[#allocation3 + $0xc8] sm:$0xff] %vm358, %v978
        %1011 = vst.msk [vmem:[#allocation3 + $0xf0] sm:$0xff] %vm358, %v979
        %1012 = vst.msk [vmem:[#allocation3 + $0x118] sm:$0xff] %vm358, %v980
        %1013 = vst.msk [vmem:[#allocation3 + $0x140] sm:$0xff] %vm358, %v981
        %1014 = vst.msk [vmem:[#allocation3 + $0x168] sm:$0xff] %vm358, %v982
        %1015 = vst.msk [vmem:[#allocation3 + $0x190] sm:$0xff] %vm358, %v983
        %1016 = vst.msk [vmem:[#allocation3 + $0x1b8] sm:$0xff] %vm358, %v984
        %1017 = vst.msk [vmem:[#allocation3 + $0x1e0] sm:$0xff] %vm358, %v985
        %1018 = vst.msk [vmem:[#allocation3 + $0x208] sm:$0xff] %vm358, %v986
        %1019 = vst.msk [vmem:[#allocation3 + $0x230] sm:$0xff] %vm358, %v987
        %1020 = vst.msk [vmem:[#allocation3 + $0x258] sm:$0xff] %vm358, %v988
        %1021 = vst.msk [vmem:[#allocation3 + $0x280] sm:$0xff] %vm358, %v989
        %1022 = vst.msk [vmem:[#allocation3 + $0x2a8] sm:$0xff] %vm358, %v990
        %1023 = vst.msk [vmem:[#allocation3 + $0x2d0] sm:$0xff] %vm358, %v991
        %1024 = vst.msk [vmem:[#allocation3 + $0x2f8] sm:$0xff] %vm358, %v992
        %1025 = vst.msk [vmem:[#allocation3 + $0x320] sm:$0xff] %vm358, %v993
        %1026 = vst.msk [vmem:[#allocation3 + $0x348] sm:$0xff] %vm358, %v994
        %1027 = vst.msk [vmem:[#allocation3 + $0x370] sm:$0xff] %vm358, %v995
        %1028 = vst.msk [vmem:[#allocation3 + $0x398] sm:$0xff] %vm358, %v996
        %1029 = vst.msk [vmem:[#allocation3 + $0x3c0] sm:$0xff] %vm358, %v997
        %1030 = vst.msk [vmem:[#allocation3 + $0x3e8] sm:$0xff] %vm358, %v998
        %1031 = vst.msk [vmem:[#allocation3 + $0x410] sm:$0xff] %vm358, %v999
        %1032 = vst.msk [vmem:[#allocation3 + $0x438] sm:$0xff] %vm358, %v1000
        %1033 = vst.msk [vmem:[#allocation3 + $0x460] sm:$0xff] %vm358, %v1001
        %1034 = vst.msk [vmem:[#allocation3 + $0x488] sm:$0xff] %vm358, %v1002
        %1035 = vst.msk [vmem:[#allocation3 + $0x4b0] sm:$0xff] %vm358, %v1003
        %1036 = vst.msk [vmem:[#allocation3 + $0x4d8] sm:$0xff] %vm358, %v1004
        %v1037 = vld [vmem:[#allocation2 + $0x1] sm:$0xff]
        %v1038 = vld [vmem:[#allocation2 + $0x9] sm:$0xff]
        %v1039 = vld [vmem:[#allocation2 + $0x19] sm:$0xff]
        %v1040 = vld [vmem:[#allocation2 + $0x21] sm:$0xff]
        %v1041 = vld [vmem:[#allocation2 + $0x31] sm:$0xff]
        %v1042 = vld [vmem:[#allocation2 + $0x39] sm:$0xff]
        %v1043 = vld [vmem:[#allocation2 + $0x49] sm:$0xff]
        %v1044 = vld [vmem:[#allocation2 + $0x51] sm:$0xff]
        %v1045 = vld [vmem:[#allocation2 + $0x61] sm:$0xff]
        %v1046 = vld [vmem:[#allocation2 + $0x69] sm:$0xff]
        %v1047 = vld [vmem:[#allocation2 + $0x79] sm:$0xff]
        %v1048 = vld [vmem:[#allocation2 + $0x81] sm:$0xff]
        %v1049 = vld [vmem:[#allocation2 + $0x91] sm:$0xff]
        %v1050 = vld [vmem:[#allocation2 + $0x99] sm:$0xff]
        %v1051 = vld [vmem:[#allocation2 + $0xa9] sm:$0xff]
        %v1052 = vld [vmem:[#allocation2 + $0xb1] sm:$0xff]
        %v1053 = vld [vmem:[#allocation2 + $0xc1] sm:$0xff]
        %v1054 = vld [vmem:[#allocation2 + $0xc9] sm:$0xff]
        %v1055 = vld [vmem:[#allocation2 + $0xd9] sm:$0xff]
        %v1056 = vld [vmem:[#allocation2 + $0xe1] sm:$0xff]
        %v1057 = vld [vmem:[#allocation2 + $0xf1] sm:$0xff]
        %v1058 = vld [vmem:[#allocation2 + $0xf9] sm:$0xff]
        %v1059 = vld [vmem:[#allocation2 + $0x109] sm:$0xff]
        %v1060 = vld [vmem:[#allocation2 + $0x111] sm:$0xff]
        %v1061 = vld [vmem:[#allocation2 + $0x121] sm:$0xff]
        %v1062 = vld [vmem:[#allocation2 + $0x129] sm:$0xff]
        %v1063 = vld [vmem:[#allocation2 + $0x139] sm:$0xff]
        %v1064 = vld [vmem:[#allocation2 + $0x141] sm:$0xff]
        %v1065 = vld [vmem:[#allocation2 + $0x151] sm:$0xff]
        %v1066 = vld [vmem:[#allocation2 + $0x159] sm:$0xff]
        %v1067 = vld [vmem:[#allocation2 + $0x169] sm:$0xff]
        %v1068 = vld [vmem:[#allocation2 + $0x171] sm:$0xff]
        %1101 = vrot.lane.b32.xlu0 %v1037, 64
        %v1102 = vpop.permute.xlu0 %1101
        %1103 = vrot.lane.b32.xlu0 %v1038, 64
        %v1104 = vpop.permute.xlu0 %1103
        %1105 = vrot.lane.b32.xlu0 %v1039, 64
        %v1106 = vpop.permute.xlu0 %1105
        %1107 = vrot.lane.b32.xlu0 %v1040, 64
        %v1108 = vpop.permute.xlu0 %1107
        %1109 = vrot.lane.b32.xlu0 %v1041, 64
        %v1110 = vpop.permute.xlu0 %1109
        %1111 = vrot.lane.b32.xlu0 %v1042, 64
        %v1112 = vpop.permute.xlu0 %1111
        %1113 = vrot.lane.b32.xlu0 %v1043, 64
        %v1114 = vpop.permute.xlu0 %1113
        %1115 = vrot.lane.b32.xlu0 %v1044, 64
        %v1116 = vpop.permute.xlu0 %1115
        %1117 = vrot.lane.b32.xlu0 %v1045, 64
        %v1118 = vpop.permute.xlu0 %1117
        %1119 = vrot.lane.b32.xlu0 %v1046, 64
        %v1120 = vpop.permute.xlu0 %1119
        %1121 = vrot.lane.b32.xlu0 %v1047, 64
        %v1122 = vpop.permute.xlu0 %1121
        %1123 = vrot.lane.b32.xlu0 %v1048, 64
        %v1124 = vpop.permute.xlu0 %1123
        %1125 = vrot.lane.b32.xlu0 %v1049, 64
        %v1126 = vpop.permute.xlu0 %1125
        %1127 = vrot.lane.b32.xlu0 %v1050, 64
        %v1128 = vpop.permute.xlu0 %1127
        %1129 = vrot.lane.b32.xlu0 %v1051, 64
        %v1130 = vpop.permute.xlu0 %1129
        %1131 = vrot.lane.b32.xlu0 %v1052, 64
        %v1132 = vpop.permute.xlu0 %1131
        %1133 = vrot.lane.b32.xlu0 %v1053, 64
        %v1134 = vpop.permute.xlu0 %1133
        %1135 = vrot.lane.b32.xlu0 %v1054, 64
        %v1136 = vpop.permute.xlu0 %1135
        %1137 = vrot.lane.b32.xlu0 %v1055, 64
        %v1138 = vpop.permute.xlu0 %1137
        %1139 = vrot.lane.b32.xlu0 %v1056, 64
        %v1140 = vpop.permute.xlu0 %1139
        %1141 = vrot.lane.b32.xlu0 %v1057, 64
        %v1142 = vpop.permute.xlu0 %1141
        %1143 = vrot.lane.b32.xlu0 %v1058, 64
        %v1144 = vpop.permute.xlu0 %1143
        %1145 = vrot.lane.b32.xlu0 %v1059, 64
        %v1146 = vpop.permute.xlu0 %1145
        %1147 = vrot.lane.b32.xlu0 %v1060, 64
        %v1148 = vpop.permute.xlu0 %1147
        %1149 = vrot.lane.b32.xlu0 %v1061, 64
        %v1150 = vpop.permute.xlu0 %1149
        %1151 = vrot.lane.b32.xlu0 %v1062, 64
        %v1152 = vpop.permute.xlu0 %1151
        %1153 = vrot.lane.b32.xlu0 %v1063, 64
        %v1154 = vpop.permute.xlu0 %1153
        %1155 = vrot.lane.b32.xlu0 %v1064, 64
        %v1156 = vpop.permute.xlu0 %1155
        %1157 = vrot.lane.b32.xlu0 %v1065, 64
        %v1158 = vpop.permute.xlu0 %1157
        %1159 = vrot.lane.b32.xlu0 %v1066, 64
        %v1160 = vpop.permute.xlu0 %1159
        %1161 = vrot.lane.b32.xlu0 %v1067, 64
        %v1162 = vpop.permute.xlu0 %1161
        %1163 = vrot.lane.b32.xlu0 %v1068, 64
        %v1164 = vpop.permute.xlu0 %1163
        %vm1197 = vcmask 1048064
        %1198 = vst.msk [vmem:[#allocation3] sm:$0xff] %vm1197, %v1102
        %1199 = vst.msk [vmem:[#allocation3 + $0x28] sm:$0xff] %vm1197, %v1104
        %1200 = vst.msk [vmem:[#allocation3 + $0x50] sm:$0xff] %vm1197, %v1106
        %1201 = vst.msk [vmem:[#allocation3 + $0x78] sm:$0xff] %vm1197, %v1108
        %1202 = vst.msk [vmem:[#allocation3 + $0xa0] sm:$0xff] %vm1197, %v1110
        %1203 = vst.msk [vmem:[#allocation3 + $0xc8] sm:$0xff] %vm1197, %v1112
        %1204 = vst.msk [vmem:[#allocation3 + $0xf0] sm:$0xff] %vm1197, %v1114
        %1205 = vst.msk [vmem:[#allocation3 + $0x118] sm:$0xff] %vm1197, %v1116
        %1206 = vst.msk [vmem:[#allocation3 + $0x140] sm:$0xff] %vm1197, %v1118
        %1207 = vst.msk [vmem:[#allocation3 + $0x168] sm:$0xff] %vm1197, %v1120
        %1208 = vst.msk [vmem:[#allocation3 + $0x190] sm:$0xff] %vm1197, %v1122
        %1209 = vst.msk [vmem:[#allocation3 + $0x1b8] sm:$0xff] %vm1197, %v1124
        %1210 = vst.msk [vmem:[#allocation3 + $0x1e0] sm:$0xff] %vm1197, %v1126
        %1211 = vst.msk [vmem:[#allocation3 + $0x208] sm:$0xff] %vm1197, %v1128
        %1212 = vst.msk [vmem:[#allocation3 + $0x230] sm:$0xff] %vm1197, %v1130
        %1213 = vst.msk [vmem:[#allocation3 + $0x258] sm:$0xff] %vm1197, %v1132
        %1214 = vst.msk [vmem:[#allocation3 + $0x280] sm:$0xff] %vm1197, %v1134
        %1215 = vst.msk [vmem:[#allocation3 + $0x2a8] sm:$0xff] %vm1197, %v1136
        %1216 = vst.msk [vmem:[#allocation3 + $0x2d0] sm:$0xff] %vm1197, %v1138
        %1217 = vst.msk [vmem:[#allocation3 + $0x2f8] sm:$0xff] %vm1197, %v1140
        %1218 = vst.msk [vmem:[#allocation3 + $0x320] sm:$0xff] %vm1197, %v1142
        %1219 = vst.msk [vmem:[#allocation3 + $0x348] sm:$0xff] %vm1197, %v1144
        %1220 = vst.msk [vmem:[#allocation3 + $0x370] sm:$0xff] %vm1197, %v1146
        %1221 = vst.msk [vmem:[#allocation3 + $0x398] sm:$0xff] %vm1197, %v1148
        %1222 = vst.msk [vmem:[#allocation3 + $0x3c0] sm:$0xff] %vm1197, %v1150
        %1223 = vst.msk [vmem:[#allocation3 + $0x3e8] sm:$0xff] %vm1197, %v1152
        %1224 = vst.msk [vmem:[#allocation3 + $0x410] sm:$0xff] %vm1197, %v1154
        %1225 = vst.msk [vmem:[#allocation3 + $0x438] sm:$0xff] %vm1197, %v1156
        %1226 = vst.msk [vmem:[#allocation3 + $0x460] sm:$0xff] %vm1197, %v1158
        %1227 = vst.msk [vmem:[#allocation3 + $0x488] sm:$0xff] %vm1197, %v1160
        %1228 = vst.msk [vmem:[#allocation3 + $0x4b0] sm:$0xff] %vm1197, %v1162
        %1229 = vst.msk [vmem:[#allocation3 + $0x4d8] sm:$0xff] %vm1197, %v1164
        %v1230 = vld [vmem:[#allocation2 + $0x2] sm:$0xff]
        %v1231 = vld [vmem:[#allocation2 + $0xa] sm:$0xff]
        %v1232 = vld [vmem:[#allocation2 + $0x1a] sm:$0xff]
        %v1233 = vld [vmem:[#allocation2 + $0x22] sm:$0xff]
        %v1234 = vld [vmem:[#allocation2 + $0x32] sm:$0xff]
        %v1235 = vld [vmem:[#allocation2 + $0x3a] sm:$0xff]
        %v1236 = vld [vmem:[#allocation2 + $0x4a] sm:$0xff]
        %v1237 = vld [vmem:[#allocation2 + $0x52] sm:$0xff]
        %v1238 = vld [vmem:[#allocation2 + $0x62] sm:$0xff]
        %v1239 = vld [vmem:[#allocation2 + $0x6a] sm:$0xff]
        %v1240 = vld [vmem:[#allocation2 + $0x7a] sm:$0xff]
        %v1241 = vld [vmem:[#allocation2 + $0x82] sm:$0xff]
        %v1242 = vld [vmem:[#allocation2 + $0x92] sm:$0xff]
        %v1243 = vld [vmem:[#allocation2 + $0x9a] sm:$0xff]
        %v1244 = vld [vmem:[#allocation2 + $0xaa] sm:$0xff]
        %v1245 = vld [vmem:[#allocation2 + $0xb2] sm:$0xff]
        %v1246 = vld [vmem:[#allocation2 + $0xc2] sm:$0xff]
        %v1247 = vld [vmem:[#allocation2 + $0xca] sm:$0xff]
        %v1248 = vld [vmem:[#allocation2 + $0xda] sm:$0xff]
        %v1249 = vld [vmem:[#allocation2 + $0xe2] sm:$0xff]
        %v1250 = vld [vmem:[#allocation2 + $0xf2] sm:$0xff]
        %v1251 = vld [vmem:[#allocation2 + $0xfa] sm:$0xff]
        %v1252 = vld [vmem:[#allocation2 + $0x10a] sm:$0xff]
        %v1253 = vld [vmem:[#allocation2 + $0x112] sm:$0xff]
        %v1254 = vld [vmem:[#allocation2 + $0x122] sm:$0xff]
        %v1255 = vld [vmem:[#allocation2 + $0x12a] sm:$0xff]
        %v1256 = vld [vmem:[#allocation2 + $0x13a] sm:$0xff]
        %v1257 = vld [vmem:[#allocation2 + $0x142] sm:$0xff]
        %v1258 = vld [vmem:[#allocation2 + $0x152] sm:$0xff]
        %v1259 = vld [vmem:[#allocation2 + $0x15a] sm:$0xff]
        %v1260 = vld [vmem:[#allocation2 + $0x16a] sm:$0xff]
        %v1261 = vld [vmem:[#allocation2 + $0x172] sm:$0xff]
        %1262 = vst.msk [vmem:[#allocation3 + $0x8] sm:$0xff] %vm358, %v1230
        %1263 = vst.msk [vmem:[#allocation3 + $0x30] sm:$0xff] %vm358, %v1231
        %1264 = vst.msk [vmem:[#allocation3 + $0x58] sm:$0xff] %vm358, %v1232
        %1265 = vst.msk [vmem:[#allocation3 + $0x80] sm:$0xff] %vm358, %v1233
        %1266 = vst.msk [vmem:[#allocation3 + $0xa8] sm:$0xff] %vm358, %v1234
        %1267 = vst.msk [vmem:[#allocation3 + $0xd0] sm:$0xff] %vm358, %v1235
        %1268 = vst.msk [vmem:[#allocation3 + $0xf8] sm:$0xff] %vm358, %v1236
        %1269 = vst.msk [vmem:[#allocation3 + $0x120] sm:$0xff] %vm358, %v1237
        %1270 = vst.msk [vmem:[#allocation3 + $0x148] sm:$0xff] %vm358, %v1238
        %1271 = vst.msk [vmem:[#allocation3 + $0x170] sm:$0xff] %vm358, %v1239
        %1272 = vst.msk [vmem:[#allocation3 + $0x198] sm:$0xff] %vm358, %v1240
        %1273 = vst.msk [vmem:[#allocation3 + $0x1c0] sm:$0xff] %vm358, %v1241
        %1274 = vst.msk [vmem:[#allocation3 + $0x1e8] sm:$0xff] %vm358, %v1242
        %1275 = vst.msk [vmem:[#allocation3 + $0x210] sm:$0xff] %vm358, %v1243
        %1276 = vst.msk [vmem:[#allocation3 + $0x238] sm:$0xff] %vm358, %v1244
        %1277 = vst.msk [vmem:[#allocation3 + $0x260] sm:$0xff] %vm358, %v1245
        %1278 = vst.msk [vmem:[#allocation3 + $0x288] sm:$0xff] %vm358, %v1246
        %1279 = vst.msk [vmem:[#allocation3 + $0x2b0] sm:$0xff] %vm358, %v1247
        %1280 = vst.msk [vmem:[#allocation3 + $0x2d8] sm:$0xff] %vm358, %v1248
        %1281 = vst.msk [vmem:[#allocation3 + $0x300] sm:$0xff] %vm358, %v1249
        %1282 = vst.msk [vmem:[#allocation3 + $0x328] sm:$0xff] %vm358, %v1250
        %1283 = vst.msk [vmem:[#allocation3 + $0x350] sm:$0xff] %vm358, %v1251
        %1284 = vst.msk [vmem:[#allocation3 + $0x378] sm:$0xff] %vm358, %v1252
        %1285 = vst.msk [vmem:[#allocation3 + $0x3a0] sm:$0xff] %vm358, %v1253
        %1286 = vst.msk [vmem:[#allocation3 + $0x3c8] sm:$0xff] %vm358, %v1254
        %1287 = vst.msk [vmem:[#allocation3 + $0x3f0] sm:$0xff] %vm358, %v1255
        %1288 = vst.msk [vmem:[#allocation3 + $0x418] sm:$0xff] %vm358, %v1256
        %1289 = vst.msk [vmem:[#allocation3 + $0x440] sm:$0xff] %vm358, %v1257
        %1290 = vst.msk [vmem:[#allocation3 + $0x468] sm:$0xff] %vm358, %v1258
        %1291 = vst.msk [vmem:[#allocation3 + $0x490] sm:$0xff] %vm358, %v1259
        %1292 = vst.msk [vmem:[#allocation3 + $0x4b8] sm:$0xff] %vm358, %v1260
        %1293 = vst.msk [vmem:[#allocation3 + $0x4e0] sm:$0xff] %vm358, %v1261
        %v1294 = vld [vmem:[%s940] sm:$0xff]
        %v1295 = vld [vmem:[%s940 + $0x8] sm:$0xff]
        %v1296 = vld [vmem:[%s940 + $0x18] sm:$0xff]
        %v1297 = vld [vmem:[%s940 + $0x20] sm:$0xff]
        %v1298 = vld [vmem:[%s940 + $0x30] sm:$0xff]
        %v1299 = vld [vmem:[%s940 + $0x38] sm:$0xff]
        %v1300 = vld [vmem:[%s940 + $0x48] sm:$0xff]
        %v1301 = vld [vmem:[%s940 + $0x50] sm:$0xff]
        %v1302 = vld [vmem:[%s940 + $0x60] sm:$0xff]
        %v1303 = vld [vmem:[%s940 + $0x68] sm:$0xff]
        %v1304 = vld [vmem:[%s940 + $0x78] sm:$0xff]
        %v1305 = vld [vmem:[%s940 + $0x80] sm:$0xff]
        %v1306 = vld [vmem:[%s940 + $0x90] sm:$0xff]
        %v1307 = vld [vmem:[%s940 + $0x98] sm:$0xff]
        %v1308 = vld [vmem:[%s940 + $0xa8] sm:$0xff]
        %v1309 = vld [vmem:[%s940 + $0xb0] sm:$0xff]
        %v1310 = vld [vmem:[%s940 + $0xc0] sm:$0xff]
        %v1311 = vld [vmem:[%s940 + $0xc8] sm:$0xff]
        %v1312 = vld [vmem:[%s940 + $0xd8] sm:$0xff]
        %v1313 = vld [vmem:[%s940 + $0xe0] sm:$0xff]
        %v1314 = vld [vmem:[%s940 + $0xf0] sm:$0xff]
        %v1315 = vld [vmem:[%s940 + $0xf8] sm:$0xff]
        %v1316 = vld [vmem:[%s940 + $0x108] sm:$0xff]
        %v1317 = vld [vmem:[%s940 + $0x110] sm:$0xff]
        %v1318 = vld [vmem:[%s940 + $0x120] sm:$0xff]
        %v1319 = vld [vmem:[%s940 + $0x128] sm:$0xff]
        %v1320 = vld [vmem:[%s940 + $0x138] sm:$0xff]
        %v1321 = vld [vmem:[%s940 + $0x140] sm:$0xff]
        %v1322 = vld [vmem:[%s940 + $0x150] sm:$0xff]
        %v1323 = vld [vmem:[%s940 + $0x158] sm:$0xff]
        %v1324 = vld [vmem:[%s940 + $0x168] sm:$0xff]
        %v1325 = vld [vmem:[%s940 + $0x170] sm:$0xff]
        %1358 = vrot.lane.b32.xlu0 %v1294, 64
        %v1359 = vpop.permute.xlu0 %1358
        %1360 = vrot.lane.b32.xlu0 %v1295, 64
        %v1361 = vpop.permute.xlu0 %1360
        %1362 = vrot.lane.b32.xlu0 %v1296, 64
        %v1363 = vpop.permute.xlu0 %1362
        %1364 = vrot.lane.b32.xlu0 %v1297, 64
        %v1365 = vpop.permute.xlu0 %1364
        %1366 = vrot.lane.b32.xlu0 %v1298, 64
        %v1367 = vpop.permute.xlu0 %1366
        %1368 = vrot.lane.b32.xlu0 %v1299, 64
        %v1369 = vpop.permute.xlu0 %1368
        %1370 = vrot.lane.b32.xlu0 %v1300, 64
        %v1371 = vpop.permute.xlu0 %1370
        %1372 = vrot.lane.b32.xlu0 %v1301, 64
        %v1373 = vpop.permute.xlu0 %1372
        %1374 = vrot.lane.b32.xlu0 %v1302, 64
        %v1375 = vpop.permute.xlu0 %1374
        %1376 = vrot.lane.b32.xlu0 %v1303, 64
        %v1377 = vpop.permute.xlu0 %1376
        %1378 = vrot.lane.b32.xlu0 %v1304, 64
        %v1379 = vpop.permute.xlu0 %1378
        %1380 = vrot.lane.b32.xlu0 %v1305, 64
        %v1381 = vpop.permute.xlu0 %1380
        %1382 = vrot.lane.b32.xlu0 %v1306, 64
        %v1383 = vpop.permute.xlu0 %1382
        %1384 = vrot.lane.b32.xlu0 %v1307, 64
        %v1385 = vpop.permute.xlu0 %1384
        %1386 = vrot.lane.b32.xlu0 %v1308, 64
        %v1387 = vpop.permute.xlu0 %1386
        %1388 = vrot.lane.b32.xlu0 %v1309, 64
        %v1389 = vpop.permute.xlu0 %1388
        %1390 = vrot.lane.b32.xlu0 %v1310, 64
        %v1391 = vpop.permute.xlu0 %1390
        %1392 = vrot.lane.b32.xlu0 %v1311, 64
        %v1393 = vpop.permute.xlu0 %1392
        %1394 = vrot.lane.b32.xlu0 %v1312, 64
        %v1395 = vpop.permute.xlu0 %1394
        %1396 = vrot.lane.b32.xlu0 %v1313, 64
        %v1397 = vpop.permute.xlu0 %1396
        %1398 = vrot.lane.b32.xlu0 %v1314, 64
        %v1399 = vpop.permute.xlu0 %1398
        %1400 = vrot.lane.b32.xlu0 %v1315, 64
        %v1401 = vpop.permute.xlu0 %1400
        %1402 = vrot.lane.b32.xlu0 %v1316, 64
        %v1403 = vpop.permute.xlu0 %1402
        %1404 = vrot.lane.b32.xlu0 %v1317, 64
        %v1405 = vpop.permute.xlu0 %1404
        %1406 = vrot.lane.b32.xlu0 %v1318, 64
        %v1407 = vpop.permute.xlu0 %1406
        %1408 = vrot.lane.b32.xlu0 %v1319, 64
        %v1409 = vpop.permute.xlu0 %1408
        %1410 = vrot.lane.b32.xlu0 %v1320, 64
        %v1411 = vpop.permute.xlu0 %1410
        %1412 = vrot.lane.b32.xlu0 %v1321, 64
        %v1413 = vpop.permute.xlu0 %1412
        %1414 = vrot.lane.b32.xlu0 %v1322, 64
        %v1415 = vpop.permute.xlu0 %1414
        %1416 = vrot.lane.b32.xlu0 %v1323, 64
        %v1417 = vpop.permute.xlu0 %1416
        %1418 = vrot.lane.b32.xlu0 %v1324, 64
        %v1419 = vpop.permute.xlu0 %1418
        %1420 = vrot.lane.b32.xlu0 %v1325, 64
        %v1421 = vpop.permute.xlu0 %1420
        %1454 = vst.msk [vmem:[#allocation3 + $0x8] sm:$0xff] %vm1197, %v1359
        %1455 = vst.msk [vmem:[#allocation3 + $0x30] sm:$0xff] %vm1197, %v1361
        %1456 = vst.msk [vmem:[#allocation3 + $0x58] sm:$0xff] %vm1197, %v1363
        %1457 = vst.msk [vmem:[#allocation3 + $0x80] sm:$0xff] %vm1197, %v1365
        %1458 = vst.msk [vmem:[#allocation3 + $0xa8] sm:$0xff] %vm1197, %v1367
        %1459 = vst.msk [vmem:[#allocation3 + $0xd0] sm:$0xff] %vm1197, %v1369
        %1460 = vst.msk [vmem:[#allocation3 + $0xf8] sm:$0xff] %vm1197, %v1371
        %1461 = vst.msk [vmem:[#allocation3 + $0x120] sm:$0xff] %vm1197, %v1373
        %1462 = vst.msk [vmem:[#allocation3 + $0x148] sm:$0xff] %vm1197, %v1375
        %1463 = vst.msk [vmem:[#allocation3 + $0x170] sm:$0xff] %vm1197, %v1377
        %1464 = vst.msk [vmem:[#allocation3 + $0x198] sm:$0xff] %vm1197, %v1379
        %1465 = vst.msk [vmem:[#allocation3 + $0x1c0] sm:$0xff] %vm1197, %v1381
        %1466 = vst.msk [vmem:[#allocation3 + $0x1e8] sm:$0xff] %vm1197, %v1383
        %1467 = vst.msk [vmem:[#allocation3 + $0x210] sm:$0xff] %vm1197, %v1385
        %1468 = vst.msk [vmem:[#allocation3 + $0x238] sm:$0xff] %vm1197, %v1387
        %1469 = vst.msk [vmem:[#allocation3 + $0x260] sm:$0xff] %vm1197, %v1389
        %1470 = vst.msk [vmem:[#allocation3 + $0x288] sm:$0xff] %vm1197, %v1391
        %1471 = vst.msk [vmem:[#allocation3 + $0x2b0] sm:$0xff] %vm1197, %v1393
        %1472 = vst.msk [vmem:[#allocation3 + $0x2d8] sm:$0xff] %vm1197, %v1395
        %1473 = vst.msk [vmem:[#allocation3 + $0x300] sm:$0xff] %vm1197, %v1397
        %1474 = vst.msk [vmem:[#allocation3 + $0x328] sm:$0xff] %vm1197, %v1399
        %1475 = vst.msk [vmem:[#allocation3 + $0x350] sm:$0xff] %vm1197, %v1401
        %1476 = vst.msk [vmem:[#allocation3 + $0x378] sm:$0xff] %vm1197, %v1403
        %1477 = vst.msk [vmem:[#allocation3 + $0x3a0] sm:$0xff] %vm1197, %v1405
        %1478 = vst.msk [vmem:[#allocation3 + $0x3c8] sm:$0xff] %vm1197, %v1407
        %1479 = vst.msk [vmem:[#allocation3 + $0x3f0] sm:$0xff] %vm1197, %v1409
        %1480 = vst.msk [vmem:[#allocation3 + $0x418] sm:$0xff] %vm1197, %v1411
        %1481 = vst.msk [vmem:[#allocation3 + $0x440] sm:$0xff] %vm1197, %v1413
        %1482 = vst.msk [vmem:[#allocation3 + $0x468] sm:$0xff] %vm1197, %v1415
        %1483 = vst.msk [vmem:[#allocation3 + $0x490] sm:$0xff] %vm1197, %v1417
        %1484 = vst.msk [vmem:[#allocation3 + $0x4b8] sm:$0xff] %vm1197, %v1419
        %1485 = vst.msk [vmem:[#allocation3 + $0x4e0] sm:$0xff] %vm1197, %v1421
        %v1486 = vld [vmem:[%s940 + $0x1] sm:$0xff]
        %v1487 = vld [vmem:[%s940 + $0x9] sm:$0xff]
        %v1488 = vld [vmem:[%s940 + $0x19] sm:$0xff]
        %v1489 = vld [vmem:[%s940 + $0x21] sm:$0xff]
        %v1490 = vld [vmem:[%s940 + $0x31] sm:$0xff]
        %v1491 = vld [vmem:[%s940 + $0x39] sm:$0xff]
        %v1492 = vld [vmem:[%s940 + $0x49] sm:$0xff]
        %v1493 = vld [vmem:[%s940 + $0x51] sm:$0xff]
        %v1494 = vld [vmem:[%s940 + $0x61] sm:$0xff]
        %v1495 = vld [vmem:[%s940 + $0x69] sm:$0xff]
        %v1496 = vld [vmem:[%s940 + $0x79] sm:$0xff]
        %v1497 = vld [vmem:[%s940 + $0x81] sm:$0xff]
        %v1498 = vld [vmem:[%s940 + $0x91] sm:$0xff]
        %v1499 = vld [vmem:[%s940 + $0x99] sm:$0xff]
        %v1500 = vld [vmem:[%s940 + $0xa9] sm:$0xff]
        %v1501 = vld [vmem:[%s940 + $0xb1] sm:$0xff]
        %v1502 = vld [vmem:[%s940 + $0xc1] sm:$0xff]
        %v1503 = vld [vmem:[%s940 + $0xc9] sm:$0xff]
        %v1504 = vld [vmem:[%s940 + $0xd9] sm:$0xff]
        %v1505 = vld [vmem:[%s940 + $0xe1] sm:$0xff]
        %v1506 = vld [vmem:[%s940 + $0xf1] sm:$0xff]
        %v1507 = vld [vmem:[%s940 + $0xf9] sm:$0xff]
        %v1508 = vld [vmem:[%s940 + $0x109] sm:$0xff]
        %v1509 = vld [vmem:[%s940 + $0x111] sm:$0xff]
        %v1510 = vld [vmem:[%s940 + $0x121] sm:$0xff]
        %v1511 = vld [vmem:[%s940 + $0x129] sm:$0xff]
        %v1512 = vld [vmem:[%s940 + $0x139] sm:$0xff]
        %v1513 = vld [vmem:[%s940 + $0x141] sm:$0xff]
        %v1514 = vld [vmem:[%s940 + $0x151] sm:$0xff]
        %v1515 = vld [vmem:[%s940 + $0x159] sm:$0xff]
        %v1516 = vld [vmem:[%s940 + $0x169] sm:$0xff]
        %v1517 = vld [vmem:[%s940 + $0x171] sm:$0xff]
        %1518 = vst.msk [vmem:[#allocation3 + $0x10] sm:$0xff] %vm358, %v1486
        %1519 = vst.msk [vmem:[#allocation3 + $0x38] sm:$0xff] %vm358, %v1487
        %1520 = vst.msk [vmem:[#allocation3 + $0x60] sm:$0xff] %vm358, %v1488
        %1521 = vst.msk [vmem:[#allocation3 + $0x88] sm:$0xff] %vm358, %v1489
        %1522 = vst.msk [vmem:[#allocation3 + $0xb0] sm:$0xff] %vm358, %v1490
        %1523 = vst.msk [vmem:[#allocation3 + $0xd8] sm:$0xff] %vm358, %v1491
        %1524 = vst.msk [vmem:[#allocation3 + $0x100] sm:$0xff] %vm358, %v1492
        %1525 = vst.msk [vmem:[#allocation3 + $0x128] sm:$0xff] %vm358, %v1493
        %1526 = vst.msk [vmem:[#allocation3 + $0x150] sm:$0xff] %vm358, %v1494
        %1527 = vst.msk [vmem:[#allocation3 + $0x178] sm:$0xff] %vm358, %v1495
        %1528 = vst.msk [vmem:[#allocation3 + $0x1a0] sm:$0xff] %vm358, %v1496
        %1529 = vst.msk [vmem:[#allocation3 + $0x1c8] sm:$0xff] %vm358, %v1497
        %1530 = vst.msk [vmem:[#allocation3 + $0x1f0] sm:$0xff] %vm358, %v1498
        %1531 = vst.msk [vmem:[#allocation3 + $0x218] sm:$0xff] %vm358, %v1499
        %1532 = vst.msk [vmem:[#allocation3 + $0x240] sm:$0xff] %vm358, %v1500
        %1533 = vst.msk [vmem:[#allocation3 + $0x268] sm:$0xff] %vm358, %v1501
        %1534 = vst.msk [vmem:[#allocation3 + $0x290] sm:$0xff] %vm358, %v1502
        %1535 = vst.msk [vmem:[#allocation3 + $0x2b8] sm:$0xff] %vm358, %v1503
        %1536 = vst.msk [vmem:[#allocation3 + $0x2e0] sm:$0xff] %vm358, %v1504
        %1537 = vst.msk [vmem:[#allocation3 + $0x308] sm:$0xff] %vm358, %v1505
        %1538 = vst.msk [vmem:[#allocation3 + $0x330] sm:$0xff] %vm358, %v1506
        %1539 = vst.msk [vmem:[#allocation3 + $0x358] sm:$0xff] %vm358, %v1507
        %1540 = vst.msk [vmem:[#allocation3 + $0x380] sm:$0xff] %vm358, %v1508
        %1541 = vst.msk [vmem:[#allocation3 + $0x3a8] sm:$0xff] %vm358, %v1509
        %1542 = vst.msk [vmem:[#allocation3 + $0x3d0] sm:$0xff] %vm358, %v1510
        %1543 = vst.msk [vmem:[#allocation3 + $0x3f8] sm:$0xff] %vm358, %v1511
        %1544 = vst.msk [vmem:[#allocation3 + $0x420] sm:$0xff] %vm358, %v1512
        %1545 = vst.msk [vmem:[#allocation3 + $0x448] sm:$0xff] %vm358, %v1513
        %1546 = vst.msk [vmem:[#allocation3 + $0x470] sm:$0xff] %vm358, %v1514
        %1547 = vst.msk [vmem:[#allocation3 + $0x498] sm:$0xff] %vm358, %v1515
        %1548 = vst.msk [vmem:[#allocation3 + $0x4c0] sm:$0xff] %vm358, %v1516
        %1549 = vst.msk [vmem:[#allocation3 + $0x4e8] sm:$0xff] %vm358, %v1517
        %v1550 = vld [vmem:[%s940 + $0x2] sm:$0xff]
        %v1551 = vld [vmem:[%s940 + $0xa] sm:$0xff]
        %v1552 = vld [vmem:[%s940 + $0x1a] sm:$0xff]
        %v1553 = vld [vmem:[%s940 + $0x22] sm:$0xff]
        %v1554 = vld [vmem:[%s940 + $0x32] sm:$0xff]
        %v1555 = vld [vmem:[%s940 + $0x3a] sm:$0xff]
        %v1556 = vld [vmem:[%s940 + $0x4a] sm:$0xff]
        %v1557 = vld [vmem:[%s940 + $0x52] sm:$0xff]
        %v1558 = vld [vmem:[%s940 + $0x62] sm:$0xff]
        %v1559 = vld [vmem:[%s940 + $0x6a] sm:$0xff]
        %v1560 = vld [vmem:[%s940 + $0x7a] sm:$0xff]
        %v1561 = vld [vmem:[%s940 + $0x82] sm:$0xff]
        %v1562 = vld [vmem:[%s940 + $0x92] sm:$0xff]
        %v1563 = vld [vmem:[%s940 + $0x9a] sm:$0xff]
        %v1564 = vld [vmem:[%s940 + $0xaa] sm:$0xff]
        %v1565 = vld [vmem:[%s940 + $0xb2] sm:$0xff]
        %v1566 = vld [vmem:[%s940 + $0xc2] sm:$0xff]
        %v1567 = vld [vmem:[%s940 + $0xca] sm:$0xff]
        %v1568 = vld [vmem:[%s940 + $0xda] sm:$0xff]
        %v1569 = vld [vmem:[%s940 + $0xe2] sm:$0xff]
        %v1570 = vld [vmem:[%s940 + $0xf2] sm:$0xff]
        %v1571 = vld [vmem:[%s940 + $0xfa] sm:$0xff]
        %v1572 = vld [vmem:[%s940 + $0x10a] sm:$0xff]
        %v1573 = vld [vmem:[%s940 + $0x112] sm:$0xff]
        %v1574 = vld [vmem:[%s940 + $0x122] sm:$0xff]
        %v1575 = vld [vmem:[%s940 + $0x12a] sm:$0xff]
        %v1576 = vld [vmem:[%s940 + $0x13a] sm:$0xff]
        %v1577 = vld [vmem:[%s940 + $0x142] sm:$0xff]
        %v1578 = vld [vmem:[%s940 + $0x152] sm:$0xff]
        %v1579 = vld [vmem:[%s940 + $0x15a] sm:$0xff]
        %v1580 = vld [vmem:[%s940 + $0x16a] sm:$0xff]
        %v1581 = vld [vmem:[%s940 + $0x172] sm:$0xff]
        %1614 = vrot.lane.b32.xlu0 %v1550, 64
        %v1615 = vpop.permute.xlu0 %1614
        %1616 = vrot.lane.b32.xlu0 %v1551, 64
        %v1617 = vpop.permute.xlu0 %1616
        %1618 = vrot.lane.b32.xlu0 %v1552, 64
        %v1619 = vpop.permute.xlu0 %1618
        %1620 = vrot.lane.b32.xlu0 %v1553, 64
        %v1621 = vpop.permute.xlu0 %1620
        %1622 = vrot.lane.b32.xlu0 %v1554, 64
        %v1623 = vpop.permute.xlu0 %1622
        %1624 = vrot.lane.b32.xlu0 %v1555, 64
        %v1625 = vpop.permute.xlu0 %1624
        %1626 = vrot.lane.b32.xlu0 %v1556, 64
        %v1627 = vpop.permute.xlu0 %1626
        %1628 = vrot.lane.b32.xlu0 %v1557, 64
        %v1629 = vpop.permute.xlu0 %1628
        %1630 = vrot.lane.b32.xlu0 %v1558, 64
        %v1631 = vpop.permute.xlu0 %1630
        %1632 = vrot.lane.b32.xlu0 %v1559, 64
        %v1633 = vpop.permute.xlu0 %1632
        %1634 = vrot.lane.b32.xlu0 %v1560, 64
        %v1635 = vpop.permute.xlu0 %1634
        %1636 = vrot.lane.b32.xlu0 %v1561, 64
        %v1637 = vpop.permute.xlu0 %1636
        %1638 = vrot.lane.b32.xlu0 %v1562, 64
        %v1639 = vpop.permute.xlu0 %1638
        %1640 = vrot.lane.b32.xlu0 %v1563, 64
        %v1641 = vpop.permute.xlu0 %1640
        %1642 = vrot.lane.b32.xlu0 %v1564, 64
        %v1643 = vpop.permute.xlu0 %1642
        %1644 = vrot.lane.b32.xlu0 %v1565, 64
        %v1645 = vpop.permute.xlu0 %1644
        %1646 = vrot.lane.b32.xlu0 %v1566, 64
        %v1647 = vpop.permute.xlu0 %1646
        %1648 = vrot.lane.b32.xlu0 %v1567, 64
        %v1649 = vpop.permute.xlu0 %1648
        %1650 = vrot.lane.b32.xlu0 %v1568, 64
        %v1651 = vpop.permute.xlu0 %1650
        %1652 = vrot.lane.b32.xlu0 %v1569, 64
        %v1653 = vpop.permute.xlu0 %1652
        %1654 = vrot.lane.b32.xlu0 %v1570, 64
        %v1655 = vpop.permute.xlu0 %1654
        %1656 = vrot.lane.b32.xlu0 %v1571, 64
        %v1657 = vpop.permute.xlu0 %1656
        %1658 = vrot.lane.b32.xlu0 %v1572, 64
        %v1659 = vpop.permute.xlu0 %1658
        %1660 = vrot.lane.b32.xlu0 %v1573, 64
        %v1661 = vpop.permute.xlu0 %1660
        %1662 = vrot.lane.b32.xlu0 %v1574, 64
        %v1663 = vpop.permute.xlu0 %1662
        %1664 = vrot.lane.b32.xlu0 %v1575, 64
        %v1665 = vpop.permute.xlu0 %1664
        %1666 = vrot.lane.b32.xlu0 %v1576, 64
        %v1667 = vpop.permute.xlu0 %1666
        %1668 = vrot.lane.b32.xlu0 %v1577, 64
        %v1669 = vpop.permute.xlu0 %1668
        %1670 = vrot.lane.b32.xlu0 %v1578, 64
        %v1671 = vpop.permute.xlu0 %1670
        %1672 = vrot.lane.b32.xlu0 %v1579, 64
        %v1673 = vpop.permute.xlu0 %1672
        %1674 = vrot.lane.b32.xlu0 %v1580, 64
        %v1675 = vpop.permute.xlu0 %1674
        %1676 = vrot.lane.b32.xlu0 %v1581, 64
        %v1677 = vpop.permute.xlu0 %1676
        %1710 = vst.msk [vmem:[#allocation3 + $0x10] sm:$0xff] %vm1197, %v1615
        %1711 = vst.msk [vmem:[#allocation3 + $0x38] sm:$0xff] %vm1197, %v1617
        %1712 = vst.msk [vmem:[#allocation3 + $0x60] sm:$0xff] %vm1197, %v1619
        %1713 = vst.msk [vmem:[#allocation3 + $0x88] sm:$0xff] %vm1197, %v1621
        %1714 = vst.msk [vmem:[#allocation3 + $0xb0] sm:$0xff] %vm1197, %v1623
        %1715 = vst.msk [vmem:[#allocation3 + $0xd8] sm:$0xff] %vm1197, %v1625
        %1716 = vst.msk [vmem:[#allocation3 + $0x100] sm:$0xff] %vm1197, %v1627
        %1717 = vst.msk [vmem:[#allocation3 + $0x128] sm:$0xff] %vm1197, %v1629
        %1718 = vst.msk [vmem:[#allocation3 + $0x150] sm:$0xff] %vm1197, %v1631
        %1719 = vst.msk [vmem:[#allocation3 + $0x178] sm:$0xff] %vm1197, %v1633
        %1720 = vst.msk [vmem:[#allocation3 + $0x1a0] sm:$0xff] %vm1197, %v1635
        %1721 = vst.msk [vmem:[#allocation3 + $0x1c8] sm:$0xff] %vm1197, %v1637
        %1722 = vst.msk [vmem:[#allocation3 + $0x1f0] sm:$0xff] %vm1197, %v1639
        %1723 = vst.msk [vmem:[#allocation3 + $0x218] sm:$0xff] %vm1197, %v1641
        %1724 = vst.msk [vmem:[#allocation3 + $0x240] sm:$0xff] %vm1197, %v1643
        %1725 = vst.msk [vmem:[#allocation3 + $0x268] sm:$0xff] %vm1197, %v1645
        %1726 = vst.msk [vmem:[#allocation3 + $0x290] sm:$0xff] %vm1197, %v1647
        %1727 = vst.msk [vmem:[#allocation3 + $0x2b8] sm:$0xff] %vm1197, %v1649
        %1728 = vst.msk [vmem:[#allocation3 + $0x2e0] sm:$0xff] %vm1197, %v1651
        %1729 = vst.msk [vmem:[#allocation3 + $0x308] sm:$0xff] %vm1197, %v1653
        %1730 = vst.msk [vmem:[#allocation3 + $0x330] sm:$0xff] %vm1197, %v1655
        %1731 = vst.msk [vmem:[#allocation3 + $0x358] sm:$0xff] %vm1197, %v1657
        %1732 = vst.msk [vmem:[#allocation3 + $0x380] sm:$0xff] %vm1197, %v1659
        %1733 = vst.msk [vmem:[#allocation3 + $0x3a8] sm:$0xff] %vm1197, %v1661
        %1734 = vst.msk [vmem:[#allocation3 + $0x3d0] sm:$0xff] %vm1197, %v1663
        %1735 = vst.msk [vmem:[#allocation3 + $0x3f8] sm:$0xff] %vm1197, %v1665
        %1736 = vst.msk [vmem:[#allocation3 + $0x420] sm:$0xff] %vm1197, %v1667
        %1737 = vst.msk [vmem:[#allocation3 + $0x448] sm:$0xff] %vm1197, %v1669
        %1738 = vst.msk [vmem:[#allocation3 + $0x470] sm:$0xff] %vm1197, %v1671
        %1739 = vst.msk [vmem:[#allocation3 + $0x498] sm:$0xff] %vm1197, %v1673
        %1740 = vst.msk [vmem:[#allocation3 + $0x4c0] sm:$0xff] %vm1197, %v1675
        %1741 = vst.msk [vmem:[#allocation3 + $0x4e8] sm:$0xff] %vm1197, %v1677
        %s1742 = scalar_lea.vmem [#allocation2], 48
        %v1743 = vld [vmem:[%s1742] sm:$0xff]
        %v1744 = vld [vmem:[%s1742 + $0x8] sm:$0xff]
        %v1745 = vld [vmem:[%s1742 + $0x18] sm:$0xff]
        %v1746 = vld [vmem:[%s1742 + $0x20] sm:$0xff]
        %v1747 = vld [vmem:[%s1742 + $0x30] sm:$0xff]
        %v1748 = vld [vmem:[%s1742 + $0x38] sm:$0xff]
        %v1749 = vld [vmem:[%s1742 + $0x48] sm:$0xff]
        %v1750 = vld [vmem:[%s1742 + $0x50] sm:$0xff]
        %v1751 = vld [vmem:[%s1742 + $0x60] sm:$0xff]
        %v1752 = vld [vmem:[%s1742 + $0x68] sm:$0xff]
        %v1753 = vld [vmem:[%s1742 + $0x78] sm:$0xff]
        %v1754 = vld [vmem:[%s1742 + $0x80] sm:$0xff]
        %v1755 = vld [vmem:[%s1742 + $0x90] sm:$0xff]
        %v1756 = vld [vmem:[%s1742 + $0x98] sm:$0xff]
        %v1757 = vld [vmem:[%s1742 + $0xa8] sm:$0xff]
        %v1758 = vld [vmem:[%s1742 + $0xb0] sm:$0xff]
        %v1759 = vld [vmem:[%s1742 + $0xc0] sm:$0xff]
        %v1760 = vld [vmem:[%s1742 + $0xc8] sm:$0xff]
        %v1761 = vld [vmem:[%s1742 + $0xd8] sm:$0xff]
        %v1762 = vld [vmem:[%s1742 + $0xe0] sm:$0xff]
        %v1763 = vld [vmem:[%s1742 + $0xf0] sm:$0xff]
        %v1764 = vld [vmem:[%s1742 + $0xf8] sm:$0xff]
        %v1765 = vld [vmem:[%s1742 + $0x108] sm:$0xff]
        %v1766 = vld [vmem:[%s1742 + $0x110] sm:$0xff]
        %v1767 = vld [vmem:[%s1742 + $0x120] sm:$0xff]
        %v1768 = vld [vmem:[%s1742 + $0x128] sm:$0xff]
        %v1769 = vld [vmem:[%s1742 + $0x138] sm:$0xff]
        %v1770 = vld [vmem:[%s1742 + $0x140] sm:$0xff]
        %v1771 = vld [vmem:[%s1742 + $0x150] sm:$0xff]
        %v1772 = vld [vmem:[%s1742 + $0x158] sm:$0xff]
        %v1773 = vld [vmem:[%s1742 + $0x168] sm:$0xff]
        %v1774 = vld [vmem:[%s1742 + $0x170] sm:$0xff]
        %1775 = vst.msk [vmem:[#allocation3 + $0x18] sm:$0xff] %vm358, %v1743
        %1776 = vst.msk [vmem:[#allocation3 + $0x40] sm:$0xff] %vm358, %v1744
        %1777 = vst.msk [vmem:[#allocation3 + $0x68] sm:$0xff] %vm358, %v1745
        %1778 = vst.msk [vmem:[#allocation3 + $0x90] sm:$0xff] %vm358, %v1746
        %1779 = vst.msk [vmem:[#allocation3 + $0xb8] sm:$0xff] %vm358, %v1747
        %1780 = vst.msk [vmem:[#allocation3 + $0xe0] sm:$0xff] %vm358, %v1748
        %1781 = vst.msk [vmem:[#allocation3 + $0x108] sm:$0xff] %vm358, %v1749
        %1782 = vst.msk [vmem:[#allocation3 + $0x130] sm:$0xff] %vm358, %v1750
        %1783 = vst.msk [vmem:[#allocation3 + $0x158] sm:$0xff] %vm358, %v1751
        %1784 = vst.msk [vmem:[#allocation3 + $0x180] sm:$0xff] %vm358, %v1752
        %1785 = vst.msk [vmem:[#allocation3 + $0x1a8] sm:$0xff] %vm358, %v1753
        %1786 = vst.msk [vmem:[#allocation3 + $0x1d0] sm:$0xff] %vm358, %v1754
        %1787 = vst.msk [vmem:[#allocation3 + $0x1f8] sm:$0xff] %vm358, %v1755
        %1788 = vst.msk [vmem:[#allocation3 + $0x220] sm:$0xff] %vm358, %v1756
        %1789 = vst.msk [vmem:[#allocation3 + $0x248] sm:$0xff] %vm358, %v1757
        %1790 = vst.msk [vmem:[#allocation3 + $0x270] sm:$0xff] %vm358, %v1758
        %1791 = vst.msk [vmem:[#allocation3 + $0x298] sm:$0xff] %vm358, %v1759
        %1792 = vst.msk [vmem:[#allocation3 + $0x2c0] sm:$0xff] %vm358, %v1760
        %1793 = vst.msk [vmem:[#allocation3 + $0x2e8] sm:$0xff] %vm358, %v1761
        %1794 = vst.msk [vmem:[#allocation3 + $0x310] sm:$0xff] %vm358, %v1762
        %1795 = vst.msk [vmem:[#allocation3 + $0x338] sm:$0xff] %vm358, %v1763
        %1796 = vst.msk [vmem:[#allocation3 + $0x360] sm:$0xff] %vm358, %v1764
        %1797 = vst.msk [vmem:[#allocation3 + $0x388] sm:$0xff] %vm358, %v1765
        %1798 = vst.msk [vmem:[#allocation3 + $0x3b0] sm:$0xff] %vm358, %v1766
        %1799 = vst.msk [vmem:[#allocation3 + $0x3d8] sm:$0xff] %vm358, %v1767
        %1800 = vst.msk [vmem:[#allocation3 + $0x400] sm:$0xff] %vm358, %v1768
        %1801 = vst.msk [vmem:[#allocation3 + $0x428] sm:$0xff] %vm358, %v1769
        %1802 = vst.msk [vmem:[#allocation3 + $0x450] sm:$0xff] %vm358, %v1770
        %1803 = vst.msk [vmem:[#allocation3 + $0x478] sm:$0xff] %vm358, %v1771
        %1804 = vst.msk [vmem:[#allocation3 + $0x4a0] sm:$0xff] %vm358, %v1772
        %1805 = vst.msk [vmem:[#allocation3 + $0x4c8] sm:$0xff] %vm358, %v1773
        %1806 = vst.msk [vmem:[#allocation3 + $0x4f0] sm:$0xff] %vm358, %v1774
        %v1807 = vld [vmem:[%s1742 + $0x1] sm:$0xff]
        %v1808 = vld [vmem:[%s1742 + $0x9] sm:$0xff]
        %v1809 = vld [vmem:[%s1742 + $0x19] sm:$0xff]
        %v1810 = vld [vmem:[%s1742 + $0x21] sm:$0xff]
        %v1811 = vld [vmem:[%s1742 + $0x31] sm:$0xff]
        %v1812 = vld [vmem:[%s1742 + $0x39] sm:$0xff]
        %v1813 = vld [vmem:[%s1742 + $0x49] sm:$0xff]
        %v1814 = vld [vmem:[%s1742 + $0x51] sm:$0xff]
        %v1815 = vld [vmem:[%s1742 + $0x61] sm:$0xff]
        %v1816 = vld [vmem:[%s1742 + $0x69] sm:$0xff]
        %v1817 = vld [vmem:[%s1742 + $0x79] sm:$0xff]
        %v1818 = vld [vmem:[%s1742 + $0x81] sm:$0xff]
        %v1819 = vld [vmem:[%s1742 + $0x91] sm:$0xff]
        %v1820 = vld [vmem:[%s1742 + $0x99] sm:$0xff]
        %v1821 = vld [vmem:[%s1742 + $0xa9] sm:$0xff]
        %v1822 = vld [vmem:[%s1742 + $0xb1] sm:$0xff]
        %v1823 = vld [vmem:[%s1742 + $0xc1] sm:$0xff]
        %v1824 = vld [vmem:[%s1742 + $0xc9] sm:$0xff]
        %v1825 = vld [vmem:[%s1742 + $0xd9] sm:$0xff]
        %v1826 = vld [vmem:[%s1742 + $0xe1] sm:$0xff]
        %v1827 = vld [vmem:[%s1742 + $0xf1] sm:$0xff]
        %v1828 = vld [vmem:[%s1742 + $0xf9] sm:$0xff]
        %v1829 = vld [vmem:[%s1742 + $0x109] sm:$0xff]
        %v1830 = vld [vmem:[%s1742 + $0x111] sm:$0xff]
        %v1831 = vld [vmem:[%s1742 + $0x121] sm:$0xff]
        %v1832 = vld [vmem:[%s1742 + $0x129] sm:$0xff]
        %v1833 = vld [vmem:[%s1742 + $0x139] sm:$0xff]
        %v1834 = vld [vmem:[%s1742 + $0x141] sm:$0xff]
        %v1835 = vld [vmem:[%s1742 + $0x151] sm:$0xff]
        %v1836 = vld [vmem:[%s1742 + $0x159] sm:$0xff]
        %v1837 = vld [vmem:[%s1742 + $0x169] sm:$0xff]
        %v1838 = vld [vmem:[%s1742 + $0x171] sm:$0xff]
        %1871 = vrot.lane.b32.xlu0 %v1807, 64
        %v1872 = vpop.permute.xlu0 %1871
        %1873 = vrot.lane.b32.xlu0 %v1808, 64
        %v1874 = vpop.permute.xlu0 %1873
        %1875 = vrot.lane.b32.xlu0 %v1809, 64
        %v1876 = vpop.permute.xlu0 %1875
        %1877 = vrot.lane.b32.xlu0 %v1810, 64
        %v1878 = vpop.permute.xlu0 %1877
        %1879 = vrot.lane.b32.xlu0 %v1811, 64
        %v1880 = vpop.permute.xlu0 %1879
        %1881 = vrot.lane.b32.xlu0 %v1812, 64
        %v1882 = vpop.permute.xlu0 %1881
        %1883 = vrot.lane.b32.xlu0 %v1813, 64
        %v1884 = vpop.permute.xlu0 %1883
        %1885 = vrot.lane.b32.xlu0 %v1814, 64
        %v1886 = vpop.permute.xlu0 %1885
        %1887 = vrot.lane.b32.xlu0 %v1815, 64
        %v1888 = vpop.permute.xlu0 %1887
        %1889 = vrot.lane.b32.xlu0 %v1816, 64
        %v1890 = vpop.permute.xlu0 %1889
        %1891 = vrot.lane.b32.xlu0 %v1817, 64
        %v1892 = vpop.permute.xlu0 %1891
        %1893 = vrot.lane.b32.xlu0 %v1818, 64
        %v1894 = vpop.permute.xlu0 %1893
        %1895 = vrot.lane.b32.xlu0 %v1819, 64
        %v1896 = vpop.permute.xlu0 %1895
        %1897 = vrot.lane.b32.xlu0 %v1820, 64
        %v1898 = vpop.permute.xlu0 %1897
        %1899 = vrot.lane.b32.xlu0 %v1821, 64
        %v1900 = vpop.permute.xlu0 %1899
        %1901 = vrot.lane.b32.xlu0 %v1822, 64
        %v1902 = vpop.permute.xlu0 %1901
        %1903 = vrot.lane.b32.xlu0 %v1823, 64
        %v1904 = vpop.permute.xlu0 %1903
        %1905 = vrot.lane.b32.xlu0 %v1824, 64
        %v1906 = vpop.permute.xlu0 %1905
        %1907 = vrot.lane.b32.xlu0 %v1825, 64
        %v1908 = vpop.permute.xlu0 %1907
        %1909 = vrot.lane.b32.xlu0 %v1826, 64
        %v1910 = vpop.permute.xlu0 %1909
        %1911 = vrot.lane.b32.xlu0 %v1827, 64
        %v1912 = vpop.permute.xlu0 %1911
        %1913 = vrot.lane.b32.xlu0 %v1828, 64
        %v1914 = vpop.permute.xlu0 %1913
        %1915 = vrot.lane.b32.xlu0 %v1829, 64
        %v1916 = vpop.permute.xlu0 %1915
        %1917 = vrot.lane.b32.xlu0 %v1830, 64
        %v1918 = vpop.permute.xlu0 %1917
        %1919 = vrot.lane.b32.xlu0 %v1831, 64
        %v1920 = vpop.permute.xlu0 %1919
        %1921 = vrot.lane.b32.xlu0 %v1832, 64
        %v1922 = vpop.permute.xlu0 %1921
        %1923 = vrot.lane.b32.xlu0 %v1833, 64
        %v1924 = vpop.permute.xlu0 %1923
        %1925 = vrot.lane.b32.xlu0 %v1834, 64
        %v1926 = vpop.permute.xlu0 %1925
        %1927 = vrot.lane.b32.xlu0 %v1835, 64
        %v1928 = vpop.permute.xlu0 %1927
        %1929 = vrot.lane.b32.xlu0 %v1836, 64
        %v1930 = vpop.permute.xlu0 %1929
        %1931 = vrot.lane.b32.xlu0 %v1837, 64
        %v1932 = vpop.permute.xlu0 %1931
        %1933 = vrot.lane.b32.xlu0 %v1838, 64
        %v1934 = vpop.permute.xlu0 %1933
        %1967 = vst.msk [vmem:[#allocation3 + $0x18] sm:$0xff] %vm1197, %v1872
        %1968 = vst.msk [vmem:[#allocation3 + $0x40] sm:$0xff] %vm1197, %v1874
        %1969 = vst.msk [vmem:[#allocation3 + $0x68] sm:$0xff] %vm1197, %v1876
        %1970 = vst.msk [vmem:[#allocation3 + $0x90] sm:$0xff] %vm1197, %v1878
        %1971 = vst.msk [vmem:[#allocation3 + $0xb8] sm:$0xff] %vm1197, %v1880
        %1972 = vst.msk [vmem:[#allocation3 + $0xe0] sm:$0xff] %vm1197, %v1882
        %1973 = vst.msk [vmem:[#allocation3 + $0x108] sm:$0xff] %vm1197, %v1884
        %1974 = vst.msk [vmem:[#allocation3 + $0x130] sm:$0xff] %vm1197, %v1886
        %1975 = vst.msk [vmem:[#allocation3 + $0x158] sm:$0xff] %vm1197, %v1888
        %1976 = vst.msk [vmem:[#allocation3 + $0x180] sm:$0xff] %vm1197, %v1890
        %1977 = vst.msk [vmem:[#allocation3 + $0x1a8] sm:$0xff] %vm1197, %v1892
        %1978 = vst.msk [vmem:[#allocation3 + $0x1d0] sm:$0xff] %vm1197, %v1894
        %1979 = vst.msk [vmem:[#allocation3 + $0x1f8] sm:$0xff] %vm1197, %v1896
        %1980 = vst.msk [vmem:[#allocation3 + $0x220] sm:$0xff] %vm1197, %v1898
        %1981 = vst.msk [vmem:[#allocation3 + $0x248] sm:$0xff] %vm1197, %v1900
        %1982 = vst.msk [vmem:[#allocation3 + $0x270] sm:$0xff] %vm1197, %v1902
        %1983 = vst.msk [vmem:[#allocation3 + $0x298] sm:$0xff] %vm1197, %v1904
        %1984 = vst.msk [vmem:[#allocation3 + $0x2c0] sm:$0xff] %vm1197, %v1906
        %1985 = vst.msk [vmem:[#allocation3 + $0x2e8] sm:$0xff] %vm1197, %v1908
        %1986 = vst.msk [vmem:[#allocation3 + $0x310] sm:$0xff] %vm1197, %v1910
        %1987 = vst.msk [vmem:[#allocation3 + $0x338] sm:$0xff] %vm1197, %v1912
        %1988 = vst.msk [vmem:[#allocation3 + $0x360] sm:$0xff] %vm1197, %v1914
        %1989 = vst.msk [vmem:[#allocation3 + $0x388] sm:$0xff] %vm1197, %v1916
        %1990 = vst.msk [vmem:[#allocation3 + $0x3b0] sm:$0xff] %vm1197, %v1918
        %1991 = vst.msk [vmem:[#allocation3 + $0x3d8] sm:$0xff] %vm1197, %v1920
        %1992 = vst.msk [vmem:[#allocation3 + $0x400] sm:$0xff] %vm1197, %v1922
        %1993 = vst.msk [vmem:[#allocation3 + $0x428] sm:$0xff] %vm1197, %v1924
        %1994 = vst.msk [vmem:[#allocation3 + $0x450] sm:$0xff] %vm1197, %v1926
        %1995 = vst.msk [vmem:[#allocation3 + $0x478] sm:$0xff] %vm1197, %v1928
        %1996 = vst.msk [vmem:[#allocation3 + $0x4a0] sm:$0xff] %vm1197, %v1930
        %1997 = vst.msk [vmem:[#allocation3 + $0x4c8] sm:$0xff] %vm1197, %v1932
        %1998 = vst.msk [vmem:[#allocation3 + $0x4f0] sm:$0xff] %vm1197, %v1934
        %v1999 = vld [vmem:[%s1742 + $0x2] sm:$0xff]
        %v2000 = vld [vmem:[%s1742 + $0xa] sm:$0xff]
        %v2001 = vld [vmem:[%s1742 + $0x1a] sm:$0xff]
        %v2002 = vld [vmem:[%s1742 + $0x22] sm:$0xff]
        %v2003 = vld [vmem:[%s1742 + $0x32] sm:$0xff]
        %v2004 = vld [vmem:[%s1742 + $0x3a] sm:$0xff]
        %v2005 = vld [vmem:[%s1742 + $0x4a] sm:$0xff]
        %v2006 = vld [vmem:[%s1742 + $0x52] sm:$0xff]
        %v2007 = vld [vmem:[%s1742 + $0x62] sm:$0xff]
        %v2008 = vld [vmem:[%s1742 + $0x6a] sm:$0xff]
        %v2009 = vld [vmem:[%s1742 + $0x7a] sm:$0xff]
        %v2010 = vld [vmem:[%s1742 + $0x82] sm:$0xff]
        %v2011 = vld [vmem:[%s1742 + $0x92] sm:$0xff]
        %v2012 = vld [vmem:[%s1742 + $0x9a] sm:$0xff]
        %v2013 = vld [vmem:[%s1742 + $0xaa] sm:$0xff]
        %v2014 = vld [vmem:[%s1742 + $0xb2] sm:$0xff]
        %v2015 = vld [vmem:[%s1742 + $0xc2] sm:$0xff]
        %v2016 = vld [vmem:[%s1742 + $0xca] sm:$0xff]
        %v2017 = vld [vmem:[%s1742 + $0xda] sm:$0xff]
        %v2018 = vld [vmem:[%s1742 + $0xe2] sm:$0xff]
        %v2019 = vld [vmem:[%s1742 + $0xf2] sm:$0xff]
        %v2020 = vld [vmem:[%s1742 + $0xfa] sm:$0xff]
        %v2021 = vld [vmem:[%s1742 + $0x10a] sm:$0xff]
        %v2022 = vld [vmem:[%s1742 + $0x112] sm:$0xff]
        %v2023 = vld [vmem:[%s1742 + $0x122] sm:$0xff]
        %v2024 = vld [vmem:[%s1742 + $0x12a] sm:$0xff]
        %v2025 = vld [vmem:[%s1742 + $0x13a] sm:$0xff]
        %v2026 = vld [vmem:[%s1742 + $0x142] sm:$0xff]
        %v2027 = vld [vmem:[%s1742 + $0x152] sm:$0xff]
        %v2028 = vld [vmem:[%s1742 + $0x15a] sm:$0xff]
        %v2029 = vld [vmem:[%s1742 + $0x16a] sm:$0xff]
        %v2030 = vld [vmem:[%s1742 + $0x172] sm:$0xff]
        %2031 = vst.msk [vmem:[#allocation3 + $0x20] sm:$0xff] %vm358, %v1999
        %2032 = vst.msk [vmem:[#allocation3 + $0x48] sm:$0xff] %vm358, %v2000
        %2033 = vst.msk [vmem:[#allocation3 + $0x70] sm:$0xff] %vm358, %v2001
        %2034 = vst.msk [vmem:[#allocation3 + $0x98] sm:$0xff] %vm358, %v2002
        %2035 = vst.msk [vmem:[#allocation3 + $0xc0] sm:$0xff] %vm358, %v2003
        %2036 = vst.msk [vmem:[#allocation3 + $0xe8] sm:$0xff] %vm358, %v2004
        %2037 = vst.msk [vmem:[#allocation3 + $0x110] sm:$0xff] %vm358, %v2005
        %2038 = vst.msk [vmem:[#allocation3 + $0x138] sm:$0xff] %vm358, %v2006
        %2039 = vst.msk [vmem:[#allocation3 + $0x160] sm:$0xff] %vm358, %v2007
        %2040 = vst.msk [vmem:[#allocation3 + $0x188] sm:$0xff] %vm358, %v2008
        %2041 = vst.msk [vmem:[#allocation3 + $0x1b0] sm:$0xff] %vm358, %v2009
        %2042 = vst.msk [vmem:[#allocation3 + $0x1d8] sm:$0xff] %vm358, %v2010
        %2043 = vst.msk [vmem:[#allocation3 + $0x200] sm:$0xff] %vm358, %v2011
        %2044 = vst.msk [vmem:[#allocation3 + $0x228] sm:$0xff] %vm358, %v2012
        %2045 = vst.msk [vmem:[#allocation3 + $0x250] sm:$0xff] %vm358, %v2013
        %2046 = vst.msk [vmem:[#allocation3 + $0x278] sm:$0xff] %vm358, %v2014
        %2047 = vst.msk [vmem:[#allocation3 + $0x2a0] sm:$0xff] %vm358, %v2015
        %2048 = vst.msk [vmem:[#allocation3 + $0x2c8] sm:$0xff] %vm358, %v2016
        %2049 = vst.msk [vmem:[#allocation3 + $0x2f0] sm:$0xff] %vm358, %v2017
        %2050 = vst.msk [vmem:[#allocation3 + $0x318] sm:$0xff] %vm358, %v2018
        %2051 = vst.msk [vmem:[#allocation3 + $0x340] sm:$0xff] %vm358, %v2019
        %2052 = vst.msk [vmem:[#allocation3 + $0x368] sm:$0xff] %vm358, %v2020
        %2053 = vst.msk [vmem:[#allocation3 + $0x390] sm:$0xff] %vm358, %v2021
        %2054 = vst.msk [vmem:[#allocation3 + $0x3b8] sm:$0xff] %vm358, %v2022
        %2055 = vst.msk [vmem:[#allocation3 + $0x3e0] sm:$0xff] %vm358, %v2023
        %2056 = vst.msk [vmem:[#allocation3 + $0x408] sm:$0xff] %vm358, %v2024
        %2057 = vst.msk [vmem:[#allocation3 + $0x430] sm:$0xff] %vm358, %v2025
        %2058 = vst.msk [vmem:[#allocation3 + $0x458] sm:$0xff] %vm358, %v2026
        %2059 = vst.msk [vmem:[#allocation3 + $0x480] sm:$0xff] %vm358, %v2027
        %2060 = vst.msk [vmem:[#allocation3 + $0x4a8] sm:$0xff] %vm358, %v2028
        %2061 = vst.msk [vmem:[#allocation3 + $0x4d0] sm:$0xff] %vm358, %v2029
        %2062 = vst.msk [vmem:[#allocation3 + $0x4f8] sm:$0xff] %vm358, %v2030
        %v2063 = vld [vmem:[%s5] sm:$0x1]
        %v2064 = vld [vmem:[%s6] sm:$0x1]
        %v2065 = vld [vmem:[#allocation3] sm:$0xff]
        %v2066 = vld [vmem:[#allocation3 + $0x8] sm:$0xff]
        %v2067 = vld [vmem:[#allocation3 + $0x10] sm:$0xff]
        %v2068 = vld [vmem:[#allocation3 + $0x18] sm:$0xff]
        %v2069 = vld [vmem:[#allocation3 + $0x20] sm:$0xff]
        %v2070 = vld [vmem:[#allocation3 + $0x28] sm:$0xff]
        %v2071 = vld [vmem:[#allocation3 + $0x30] sm:$0xff]
        %v2072 = vld [vmem:[#allocation3 + $0x38] sm:$0xff]
        %v2073 = vld [vmem:[#allocation3 + $0x40] sm:$0xff]
        %v2074 = vld [vmem:[#allocation3 + $0x48] sm:$0xff]
        %v2075 = vld [vmem:[#allocation3 + $0x50] sm:$0xff]
        %v2076 = vld [vmem:[#allocation3 + $0x58] sm:$0xff]
        %v2077 = vld [vmem:[#allocation3 + $0x60] sm:$0xff]
        %v2078 = vld [vmem:[#allocation3 + $0x68] sm:$0xff]
        %v2079 = vld [vmem:[#allocation3 + $0x70] sm:$0xff]
        %v2080 = vld [vmem:[#allocation3 + $0x78] sm:$0xff]
        %v2081 = vld [vmem:[#allocation3 + $0x80] sm:$0xff]
        %v2082 = vld [vmem:[#allocation3 + $0x88] sm:$0xff]
        %v2083 = vld [vmem:[#allocation3 + $0x90] sm:$0xff]
        %v2084 = vld [vmem:[#allocation3 + $0x98] sm:$0xff]
        %v2085 = vld [vmem:[#allocation3 + $0xa0] sm:$0xff]
        %v2086 = vld [vmem:[#allocation3 + $0xa8] sm:$0xff]
        %v2087 = vld [vmem:[#allocation3 + $0xb0] sm:$0xff]
        %v2088 = vld [vmem:[#allocation3 + $0xb8] sm:$0xff]
        %v2089 = vld [vmem:[#allocation3 + $0xc0] sm:$0xff]
        %v2090 = vld [vmem:[#allocation3 + $0xc8] sm:$0xff]
        %v2091 = vld [vmem:[#allocation3 + $0xd0] sm:$0xff]
        %v2092 = vld [vmem:[#allocation3 + $0xd8] sm:$0xff]
        %v2093 = vld [vmem:[#allocation3 + $0xe0] sm:$0xff]
        %v2094 = vld [vmem:[#allocation3 + $0xe8] sm:$0xff]
        %v2095 = vld [vmem:[#allocation3 + $0xf0] sm:$0xff]
        %v2096 = vld [vmem:[#allocation3 + $0xf8] sm:$0xff]
        %v2097 = vld [vmem:[#allocation3 + $0x100] sm:$0xff]
        %v2098 = vld [vmem:[#allocation3 + $0x108] sm:$0xff]
        %v2099 = vld [vmem:[#allocation3 + $0x110] sm:$0xff]
        %v2100 = vld [vmem:[#allocation3 + $0x118] sm:$0xff]
        %v2101 = vld [vmem:[#allocation3 + $0x120] sm:$0xff]
        %v2102 = vld [vmem:[#allocation3 + $0x128] sm:$0xff]
        %v2103 = vld [vmem:[#allocation3 + $0x130] sm:$0xff]
        %v2104 = vld [vmem:[#allocation3 + $0x138] sm:$0xff]
        %v2105 = vld [vmem:[%s4] sm:$0xff]
        %v2106 = vld [vmem:[%s4 + $0x8] sm:$0xff]
        %v2107 = vld [vmem:[%s4 + $0x10] sm:$0xff]
        %v2108 = vld [vmem:[%s4 + $0x18] sm:$0xff]
        %v2109 = vld [vmem:[%s4 + $0x20] sm:$0xff]
        %v2110 = vld [vmem:[%s4 + $0x28] sm:$0xff]
        %v2111 = vld [vmem:[%s4 + $0x30] sm:$0xff]
        %v2112 = vld [vmem:[%s4 + $0x38] sm:$0xff]
        %v2113 = vld [vmem:[%s4 + $0x40] sm:$0xff]
        %v2114 = vld [vmem:[%s4 + $0x48] sm:$0xff]
        %v2115 = vld [vmem:[%s4 + $0x50] sm:$0xff]
        %v2116 = vld [vmem:[%s4 + $0x58] sm:$0xff]
        %v2117 = vld [vmem:[%s4 + $0x60] sm:$0xff]
        %v2118 = vld [vmem:[%s4 + $0x68] sm:$0xff]
        %v2119 = vld [vmem:[%s4 + $0x70] sm:$0xff]
        %v2120 = vld [vmem:[%s4 + $0x78] sm:$0xff]
        %v2121 = vld [vmem:[%s4 + $0x80] sm:$0xff]
        %v2122 = vld [vmem:[%s4 + $0x88] sm:$0xff]
        %v2123 = vld [vmem:[%s4 + $0x90] sm:$0xff]
        %v2124 = vld [vmem:[%s4 + $0x98] sm:$0xff]
        %v2125 = vld [vmem:[%s4 + $0xa0] sm:$0xff]
        %v2126 = vld [vmem:[%s4 + $0xa8] sm:$0xff]
        %v2127 = vld [vmem:[%s4 + $0xb0] sm:$0xff]
        %v2128 = vld [vmem:[%s4 + $0xb8] sm:$0xff]
        %v2129 = vld [vmem:[%s4 + $0xc0] sm:$0xff]
        %v2130 = vld [vmem:[%s4 + $0xc8] sm:$0xff]
        %v2131 = vld [vmem:[%s4 + $0xd0] sm:$0xff]
        %v2132 = vld [vmem:[%s4 + $0xd8] sm:$0xff]
        %v2133 = vld [vmem:[%s4 + $0xe0] sm:$0xff]
        %v2134 = vld [vmem:[%s4 + $0xe8] sm:$0xff]
        %v2135 = vld [vmem:[%s4 + $0xf0] sm:$0xff]
        %v2136 = vld [vmem:[%s4 + $0xf8] sm:$0xff]
        %v2137 = vld [vmem:[%s4 + $0x100] sm:$0xff]
        %v2138 = vld [vmem:[%s4 + $0x108] sm:$0xff]
        %v2139 = vld [vmem:[%s4 + $0x110] sm:$0xff]
        %v2140 = vld [vmem:[%s4 + $0x118] sm:$0xff]
        %v2141 = vld [vmem:[%s4 + $0x120] sm:$0xff]
        %v2142 = vld [vmem:[%s4 + $0x128] sm:$0xff]
        %v2143 = vld [vmem:[%s4 + $0x130] sm:$0xff]
        %v2144 = vld [vmem:[%s4 + $0x138] sm:$0xff]
        %v2145 = vld [vmem:[%s4 + $0x140] sm:$0xff]
        %v2146 = vld [vmem:[%s4 + $0x148] sm:$0xff]
        %v2147 = vld [vmem:[%s4 + $0x150] sm:$0xff]
        %v2148 = vld [vmem:[%s4 + $0x158] sm:$0xff]
        %v2149 = vld [vmem:[%s4 + $0x160] sm:$0xff]
        %v2150 = vld [vmem:[%s4 + $0x168] sm:$0xff]
        %v2151 = vld [vmem:[%s4 + $0x170] sm:$0xff]
        %v2152 = vld [vmem:[%s4 + $0x178] sm:$0xff]
        %v2153 = vld [vmem:[%s4 + $0x180] sm:$0xff]
        %v2154 = vld [vmem:[%s4 + $0x188] sm:$0xff]
        %v2155 = vld [vmem:[%s4 + $0x190] sm:$0xff]
        %v2156 = vld [vmem:[%s4 + $0x198] sm:$0xff]
        %v2157 = vld [vmem:[%s4 + $0x1a0] sm:$0xff]
        %v2158 = vld [vmem:[%s4 + $0x1a8] sm:$0xff]
        %v2159 = vld [vmem:[%s4 + $0x1b0] sm:$0xff]
        %v2160 = vld [vmem:[%s4 + $0x1b8] sm:$0xff]
        %v2161 = vld [vmem:[%s4 + $0x1c0] sm:$0xff]
        %v2162 = vld [vmem:[%s4 + $0x1c8] sm:$0xff]
        %v2163 = vld [vmem:[%s4 + $0x1d0] sm:$0xff]
        %v2164 = vld [vmem:[%s4 + $0x1d8] sm:$0xff]
        %v2165 = vld [vmem:[%s4 + $0x1e0] sm:$0xff]
        %v2166 = vld [vmem:[%s4 + $0x1e8] sm:$0xff]
        %v2167 = vld [vmem:[%s4 + $0x1f0] sm:$0xff]
        %v2168 = vld [vmem:[%s4 + $0x1f8] sm:$0xff]
        %v2169 = vld [vmem:[%s4 + $0x200] sm:$0xff]
        %v2170 = vld [vmem:[%s4 + $0x208] sm:$0xff]
        %v2171 = vld [vmem:[%s4 + $0x210] sm:$0xff]
        %v2172 = vld [vmem:[%s4 + $0x218] sm:$0xff]
        %v2173 = vld [vmem:[%s4 + $0x220] sm:$0xff]
        %v2174 = vld [vmem:[%s4 + $0x228] sm:$0xff]
        %v2175 = vld [vmem:[%s4 + $0x230] sm:$0xff]
        %v2176 = vld [vmem:[%s4 + $0x238] sm:$0xff]
        %v2178 = vsel %vm358, %v2069, 0
        %v2181 = vsel %vm358, %v2074, 0
        %v2184 = vsel %vm358, %v2079, 0
        %v2187 = vsel %vm358, %v2084, 0
        %v2190 = vsel %vm358, %v2089, 0
        %v2193 = vsel %vm358, %v2094, 0
        %v2196 = vsel %vm358, %v2099, 0
        %v2199 = vsel %vm358, %v2104, 0
        %2201 = vmatprep.subr.mxu0 0.0
        %2202 = vmatpush1.msra.mxu0 %v2120
        %2203 = vmatprep.subr.mxu0 0.0
        %2204 = vmatpush1.msra.mxu0 %v2119
        %2205 = vmatprep.subr.mxu0 0.0
        %2206 = vmatpush1.msra.mxu0 %v2118
        %2207 = vmatprep.subr.mxu0 0.0
        %2208 = vmatpush1.msra.mxu0 %v2117
        %2209 = vmatprep.subr.mxu0 0.0
        %2210 = vmatpush1.msra.mxu0 %v2116
        %2211 = vmatprep.subr.mxu0 0.0
        %2212 = vmatpush1.msra.mxu0 %v2115
        %2213 = vmatprep.subr.mxu0 0.0
        %2214 = vmatpush1.msra.mxu0 %v2114
        %2215 = vmatprep.subr.mxu0 0.0
        %2216 = vmatpush1.msra.mxu0 %v2113
        %2217 = vmatprep.subr.mxu0 0.0
        %2218 = vmatpush1.msra.mxu0 %v2112
        %2219 = vmatprep.subr.mxu0 0.0
        %2220 = vmatpush1.msra.mxu0 %v2111
        %2221 = vmatprep.subr.mxu0 0.0
        %2222 = vmatpush1.msra.mxu0 %v2110
        %2223 = vmatprep.subr.mxu0 0.0
        %2224 = vmatpush1.msra.mxu0 %v2109
        %2225 = vmatprep.subr.mxu0 0.0
        %2226 = vmatpush1.msra.mxu0 %v2108
        %2227 = vmatprep.subr.mxu0 0.0
        %2228 = vmatpush1.msra.mxu0 %v2107
        %2229 = vmatprep.subr.mxu0 0.0
        %2230 = vmatpush1.msra.mxu0 %v2106
        %2231 = vmatprep.subr.mxu0 0.0
        %2232 = vmatpush1.msra.mxu0 %v2105
        %2233 = vmatprep.subr.mxu0 0.0
        %2234 = vmatpush2.msra.mxu0 %v2136
        %2235 = vmatprep.subr.mxu0 0.0
        %2236 = vmatpush2.msra.mxu0 %v2135
        %2237 = vmatprep.subr.mxu0 0.0
        %2238 = vmatpush2.msra.mxu0 %v2134
        %2239 = vmatprep.subr.mxu0 0.0
        %2240 = vmatpush2.msra.mxu0 %v2133
        %2241 = vmatprep.subr.mxu0 0.0
        %2242 = vmatpush2.msra.mxu0 %v2132
        %2243 = vmatprep.subr.mxu0 0.0
        %2244 = vmatpush2.msra.mxu0 %v2131
        %2245 = vmatprep.subr.mxu0 0.0
        %2246 = vmatpush2.msra.mxu0 %v2130
        %2247 = vmatprep.subr.mxu0 0.0
        %2248 = vmatpush2.msra.mxu0 %v2129
        %2249 = vmatprep.subr.mxu0 0.0
        %2250 = vmatpush2.msra.mxu0 %v2128
        %2251 = vmatprep.subr.mxu0 0.0
        %2252 = vmatpush2.msra.mxu0 %v2127
        %2253 = vmatprep.subr.mxu0 0.0
        %2254 = vmatpush2.msra.mxu0 %v2126
        %2255 = vmatprep.subr.mxu0 0.0
        %2256 = vmatpush2.msra.mxu0 %v2125
        %2257 = vmatprep.subr.mxu0 0.0
        %2258 = vmatpush2.msra.mxu0 %v2124
        %2259 = vmatprep.subr.mxu0 0.0
        %2260 = vmatpush2.msra.mxu0 %v2123
        %2261 = vmatprep.subr.mxu0 0.0
        %2262 = vmatpush2.msra.mxu0 %v2122
        %2263 = vmatprep.subr.mxu0 0.0
        %2264 = vmatpush2.msra.mxu0 %v2121
        %2265 = vmatprep.mubr.f32.mxu0 %v2066
        %2266 = vmatmul.mubr.f32.gmra.mxu0 %v2065
        %v2267 = vpop.f32.mrf.mxu0
        %v2268 = vadd.f32 0.0, %v2267
        %v2269 = vpop.f32.mrf.mxu0
        %2270 = vmatprep.mubr.f32.mxu0 %v2071
        %2271 = vmatmul.mubr.f32.gmra.mxu0 %v2070
        %v2272 = vpop.f32.mrf.mxu0
        %v2273 = vadd.f32 0.0, %v2272
        %v2274 = vpop.f32.mrf.mxu0
        %2275 = vmatprep.mubr.f32.mxu0 %v2076
        %2276 = vmatmul.mubr.f32.gmra.mxu0 %v2075
        %v2277 = vpop.f32.mrf.mxu0
        %v2278 = vadd.f32 0.0, %v2277
        %v2279 = vpop.f32.mrf.mxu0
        %2280 = vmatprep.mubr.f32.mxu0 %v2081
        %2281 = vmatmul.mubr.f32.gmra.mxu0 %v2080
        %v2282 = vpop.f32.mrf.mxu0
        %v2283 = vadd.f32 0.0, %v2282
        %v2284 = vpop.f32.mrf.mxu0
        %2285 = vmatprep.mubr.f32.mxu0 %v2086
        %2286 = vmatmul.mubr.f32.gmra.mxu0 %v2085
        %v2287 = vpop.f32.mrf.mxu0
        %v2288 = vadd.f32 0.0, %v2287
        %v2289 = vpop.f32.mrf.mxu0
        %2290 = vmatprep.mubr.f32.mxu0 %v2091
        %2291 = vmatmul.mubr.f32.gmra.mxu0 %v2090
        %v2292 = vpop.f32.mrf.mxu0
        %v2293 = vadd.f32 0.0, %v2292
        %v2294 = vpop.f32.mrf.mxu0
        %2295 = vmatprep.mubr.f32.mxu0 %v2096
        %2296 = vmatmul.mubr.f32.gmra.mxu0 %v2095
        %v2297 = vpop.f32.mrf.mxu0
        %v2298 = vadd.f32 0.0, %v2297
        %v2299 = vpop.f32.mrf.mxu0
        %2300 = vmatprep.mubr.f32.mxu0 %v2101
        %2301 = vmatmul.mubr.f32.gmra.mxu0 %v2100
        %v2302 = vpop.f32.mrf.mxu0
        %v2303 = vadd.f32 0.0, %v2302
        %v2304 = vpop.f32.mrf.mxu0
        %2305 = vdwg.mxu0
        %2306 = vmatprep.subr.mxu0 0.0
        %2307 = vmatpush1.msra.mxu0 %v2152
        %2308 = vmatprep.subr.mxu0 0.0
        %2309 = vmatpush1.msra.mxu0 %v2151
        %2310 = vmatprep.subr.mxu0 0.0
        %2311 = vmatpush1.msra.mxu0 %v2150
        %2312 = vmatprep.subr.mxu0 0.0
        %2313 = vmatpush1.msra.mxu0 %v2149
        %2314 = vmatprep.subr.mxu0 0.0
        %2315 = vmatpush1.msra.mxu0 %v2148
        %2316 = vmatprep.subr.mxu0 0.0
        %2317 = vmatpush1.msra.mxu0 %v2147
        %2318 = vmatprep.subr.mxu0 0.0
        %2319 = vmatpush1.msra.mxu0 %v2146
        %2320 = vmatprep.subr.mxu0 0.0
        %2321 = vmatpush1.msra.mxu0 %v2145
        %2322 = vmatprep.subr.mxu0 0.0
        %2323 = vmatpush1.msra.mxu0 %v2144
        %2324 = vmatprep.subr.mxu0 0.0
        %2325 = vmatpush1.msra.mxu0 %v2143
        %2326 = vmatprep.subr.mxu0 0.0
        %2327 = vmatpush1.msra.mxu0 %v2142
        %2328 = vmatprep.subr.mxu0 0.0
        %2329 = vmatpush1.msra.mxu0 %v2141
        %2330 = vmatprep.subr.mxu0 0.0
        %2331 = vmatpush1.msra.mxu0 %v2140
        %2332 = vmatprep.subr.mxu0 0.0
        %2333 = vmatpush1.msra.mxu0 %v2139
        %2334 = vmatprep.subr.mxu0 0.0
        %2335 = vmatpush1.msra.mxu0 %v2138
        %2336 = vmatprep.subr.mxu0 0.0
        %2337 = vmatpush1.msra.mxu0 %v2137
        %2338 = vmatprep.subr.mxu0 0.0
        %2339 = vmatpush2.msra.mxu0 %v2168
        %2340 = vmatprep.subr.mxu0 0.0
        %2341 = vmatpush2.msra.mxu0 %v2167
        %2342 = vmatprep.subr.mxu0 0.0
        %2343 = vmatpush2.msra.mxu0 %v2166
        %2344 = vmatprep.subr.mxu0 0.0
        %2345 = vmatpush2.msra.mxu0 %v2165
        %2346 = vmatprep.subr.mxu0 0.0
        %2347 = vmatpush2.msra.mxu0 %v2164
        %2348 = vmatprep.subr.mxu0 0.0
        %2349 = vmatpush2.msra.mxu0 %v2163
        %2350 = vmatprep.subr.mxu0 0.0
        %2351 = vmatpush2.msra.mxu0 %v2162
        %2352 = vmatprep.subr.mxu0 0.0
        %2353 = vmatpush2.msra.mxu0 %v2161
        %2354 = vmatprep.subr.mxu0 0.0
        %2355 = vmatpush2.msra.mxu0 %v2160
        %2356 = vmatprep.subr.mxu0 0.0
        %2357 = vmatpush2.msra.mxu0 %v2159
        %2358 = vmatprep.subr.mxu0 0.0
        %2359 = vmatpush2.msra.mxu0 %v2158
        %2360 = vmatprep.subr.mxu0 0.0
        %2361 = vmatpush2.msra.mxu0 %v2157
        %2362 = vmatprep.subr.mxu0 0.0
        %2363 = vmatpush2.msra.mxu0 %v2156
        %2364 = vmatprep.subr.mxu0 0.0
        %2365 = vmatpush2.msra.mxu0 %v2155
        %2366 = vmatprep.subr.mxu0 0.0
        %2367 = vmatpush2.msra.mxu0 %v2154
        %2368 = vmatprep.subr.mxu0 0.0
        %2369 = vmatpush2.msra.mxu0 %v2153
        %2370 = vmatprep.mubr.f32.mxu0 %v2068
        %2371 = vmatmul.mubr.f32.gmra.mxu0 %v2067
        %v2372 = vpop.f32.mrf.mxu0
        %v2373 = vadd.f32 %v2268, %v2372
        %v2374 = vpop.f32.mrf.mxu0
        %2375 = vmatprep.mubr.f32.mxu0 %v2073
        %2376 = vmatmul.mubr.f32.gmra.mxu0 %v2072
        %v2377 = vpop.f32.mrf.mxu0
        %v2378 = vadd.f32 %v2273, %v2377
        %v2379 = vpop.f32.mrf.mxu0
        %2380 = vmatprep.mubr.f32.mxu0 %v2078
        %2381 = vmatmul.mubr.f32.gmra.mxu0 %v2077
        %v2382 = vpop.f32.mrf.mxu0
        %v2383 = vadd.f32 %v2278, %v2382
        %v2384 = vpop.f32.mrf.mxu0
        %2385 = vmatprep.mubr.f32.mxu0 %v2083
        %2386 = vmatmul.mubr.f32.gmra.mxu0 %v2082
        %v2387 = vpop.f32.mrf.mxu0
        %v2388 = vadd.f32 %v2283, %v2387
        %v2389 = vpop.f32.mrf.mxu0
        %2390 = vmatprep.mubr.f32.mxu0 %v2088
        %2391 = vmatmul.mubr.f32.gmra.mxu0 %v2087
        %v2392 = vpop.f32.mrf.mxu0
        %v2393 = vadd.f32 %v2288, %v2392
        %v2394 = vpop.f32.mrf.mxu0
        %2395 = vmatprep.mubr.f32.mxu0 %v2093
        %2396 = vmatmul.mubr.f32.gmra.mxu0 %v2092
        %v2397 = vpop.f32.mrf.mxu0
        %v2398 = vadd.f32 %v2293, %v2397
        %v2399 = vpop.f32.mrf.mxu0
        %2400 = vmatprep.mubr.f32.mxu0 %v2098
        %2401 = vmatmul.mubr.f32.gmra.mxu0 %v2097
        %v2402 = vpop.f32.mrf.mxu0
        %v2403 = vadd.f32 %v2298, %v2402
        %v2404 = vpop.f32.mrf.mxu0
        %2405 = vmatprep.mubr.f32.mxu0 %v2103
        %2406 = vmatmul.mubr.f32.gmra.mxu0 %v2102
        %v2407 = vpop.f32.mrf.mxu0
        %v2408 = vadd.f32 %v2303, %v2407
        %v2409 = vpop.f32.mrf.mxu0
        %2410 = vdwg.mxu0
        %2411 = vmatprep.subr.mxu0 0.0
        %2412 = vmatpush1.msra.mxu0 0.0
        %2413 = vmatprep.subr.mxu0 0.0
        %2414 = vmatpush1.msra.mxu0 0.0
        %2415 = vmatprep.subr.mxu0 0.0
        %2416 = vmatpush1.msra.mxu0 0.0
        %2417 = vmatprep.subr.mxu0 0.0
        %2418 = vmatpush1.msra.mxu0 0.0
        %2419 = vmatprep.subr.mxu0 0.0
        %2420 = vmatpush1.msra.mxu0 0.0
        %2421 = vmatprep.subr.mxu0 0.0
        %2422 = vmatpush1.msra.mxu0 0.0
        %2423 = vmatprep.subr.mxu0 0.0
        %2424 = vmatpush1.msra.mxu0 0.0
        %2425 = vmatprep.subr.mxu0 0.0
        %2426 = vmatpush1.msra.mxu0 0.0
        %2427 = vmatprep.subr.mxu0 0.0
        %2428 = vmatpush1.msra.mxu0 %v2176
        %2429 = vmatprep.subr.mxu0 0.0
        %2430 = vmatpush1.msra.mxu0 %v2175
        %2431 = vmatprep.subr.mxu0 0.0
        %2432 = vmatpush1.msra.mxu0 %v2174
        %2433 = vmatprep.subr.mxu0 0.0
        %2434 = vmatpush1.msra.mxu0 %v2173
        %2435 = vmatprep.subr.mxu0 0.0
        %2436 = vmatpush1.msra.mxu0 %v2172
        %2437 = vmatprep.subr.mxu0 0.0
        %2438 = vmatpush1.msra.mxu0 %v2171
        %2439 = vmatprep.subr.mxu0 0.0
        %2440 = vmatpush1.msra.mxu0 %v2170
        %2441 = vmatprep.subr.mxu0 0.0
        %2442 = vmatpush1.msra.mxu0 %v2169
        %2443 = vmatprep.subr.mxu0 0.0
        %2444 = vmatpush2.msra.mxu0 0.0
        %2445 = vmatprep.subr.mxu0 0.0
        %2446 = vmatpush2.msra.mxu0 0.0
        %2447 = vmatprep.subr.mxu0 0.0
        %2448 = vmatpush2.msra.mxu0 0.0
        %2449 = vmatprep.subr.mxu0 0.0
        %2450 = vmatpush2.msra.mxu0 0.0
        %2451 = vmatprep.subr.mxu0 0.0
        %2452 = vmatpush2.msra.mxu0 0.0
        %2453 = vmatprep.subr.mxu0 0.0
        %2454 = vmatpush2.msra.mxu0 0.0
        %2455 = vmatprep.subr.mxu0 0.0
        %2456 = vmatpush2.msra.mxu0 0.0
        %2457 = vmatprep.subr.mxu0 0.0
        %2458 = vmatpush2.msra.mxu0 0.0
        %2459 = vmatprep.subr.mxu0 0.0
        %2460 = vmatpush2.msra.mxu0 0.0
        %2461 = vmatprep.subr.mxu0 0.0
        %2462 = vmatpush2.msra.mxu0 0.0
        %2463 = vmatprep.subr.mxu0 0.0
        %2464 = vmatpush2.msra.mxu0 0.0
        %2465 = vmatprep.subr.mxu0 0.0
        %2466 = vmatpush2.msra.mxu0 0.0
        %2467 = vmatprep.subr.mxu0 0.0
        %2468 = vmatpush2.msra.mxu0 0.0
        %2469 = vmatprep.subr.mxu0 0.0
        %2470 = vmatpush2.msra.mxu0 0.0
        %2471 = vmatprep.subr.mxu0 0.0
        %2472 = vmatpush2.msra.mxu0 0.0
        %2473 = vmatprep.subr.mxu0 0.0
        %2474 = vmatpush2.msra.mxu0 0.0
        %2475 = vmatprep.mubr.f32.mxu0 0.0
        %2476 = vmatmul.mubr.f32.gmra.mxu0 %v2178
        %v2477 = vpop.f32.mrf.mxu0
        %v2478 = vadd.f32 %v2373, %v2477
        %v2479 = vpop.f32.mrf.mxu0
        %2480 = vmatprep.mubr.f32.mxu0 0.0
        %2481 = vmatmul.mubr.f32.gmra.mxu0 %v2181
        %v2482 = vpop.f32.mrf.mxu0
        %v2483 = vadd.f32 %v2378, %v2482
        %v2484 = vpop.f32.mrf.mxu0
        %2485 = vmatprep.mubr.f32.mxu0 0.0
        %2486 = vmatmul.mubr.f32.gmra.mxu0 %v2184
        %v2487 = vpop.f32.mrf.mxu0
        %v2488 = vadd.f32 %v2383, %v2487
        %v2489 = vpop.f32.mrf.mxu0
        %2490 = vmatprep.mubr.f32.mxu0 0.0
        %2491 = vmatmul.mubr.f32.gmra.mxu0 %v2187
        %v2492 = vpop.f32.mrf.mxu0
        %v2493 = vadd.f32 %v2388, %v2492
        %v2494 = vpop.f32.mrf.mxu0
        %2495 = vmatprep.mubr.f32.mxu0 0.0
        %2496 = vmatmul.mubr.f32.gmra.mxu0 %v2190
        %v2497 = vpop.f32.mrf.mxu0
        %v2498 = vadd.f32 %v2393, %v2497
        %v2499 = vpop.f32.mrf.mxu0
        %2500 = vmatprep.mubr.f32.mxu0 0.0
        %2501 = vmatmul.mubr.f32.gmra.mxu0 %v2193
        %v2502 = vpop.f32.mrf.mxu0
        %v2503 = vadd.f32 %v2398, %v2502
        %v2504 = vpop.f32.mrf.mxu0
        %2505 = vmatprep.mubr.f32.mxu0 0.0
        %2506 = vmatmul.mubr.f32.gmra.mxu0 %v2196
        %v2507 = vpop.f32.mrf.mxu0
        %v2508 = vadd.f32 %v2403, %v2507
        %v2509 = vpop.f32.mrf.mxu0
        %2510 = vmatprep.mubr.f32.mxu0 0.0
        %2511 = vmatmul.mubr.f32.gmra.mxu0 %v2199
        %v2512 = vpop.f32.mrf.mxu0
        %v2513 = vadd.f32 %v2408, %v2512
        %v2514 = vpop.f32.mrf.mxu0
        %2515 = vdwg.mxu0
        %v2517 = vlaneseq
        %v2518 = vshrl.u32 %v2517, 7
        %v2519 = vsub.s32 0, %v2518
        %v2520 = vrot.slane %v2063, %v2519
        %v2522 = vmul.f32 %v2478, %v2520
        %v2523 = vmul.f32 %v2483, %v2520
        %v2524 = vmul.f32 %v2488, %v2520
        %v2525 = vmul.f32 %v2493, %v2520
        %v2526 = vmul.f32 %v2498, %v2520
        %v2527 = vmul.f32 %v2503, %v2520
        %v2528 = vmul.f32 %v2508, %v2520
        %v2529 = vmul.f32 %v2513, %v2520
        %v2531 = vlaneseq
        %v2532 = vshrl.u32 %v2531, 7
        %v2533 = vsub.s32 0, %v2532
        %v2534 = vrot.slane %v2064, %v2533
        %v2536 = vadd.f32 %v2522, %v2534
        %v2537 = vadd.f32 %v2523, %v2534
        %v2538 = vadd.f32 %v2524, %v2534
        %v2539 = vadd.f32 %v2525, %v2534
        %v2540 = vadd.f32 %v2526, %v2534
        %v2541 = vadd.f32 %v2527, %v2534
        %v2542 = vadd.f32 %v2528, %v2534
        %v2543 = vadd.f32 %v2529, %v2534
        %v2544 = vmax.f32 %v2536, 0.0
        %v2545 = vmax.f32 %v2537, 0.0
        %v2546 = vmax.f32 %v2538, 0.0
        %v2547 = vmax.f32 %v2539, 0.0
        %v2548 = vmax.f32 %v2540, 0.0
        %v2549 = vmax.f32 %v2541, 0.0
        %v2550 = vmax.f32 %v2542, 0.0
        %v2551 = vmax.f32 %v2543, 0.0
        %s2552 = scalar_lea.vmem [#allocation4], 24
        %2553 = vst [vmem:[%s2552 + $0x1] sm:$0xff] %v2544
        %2554 = vst [vmem:[%s2552 + $0x9] sm:$0xff] %v2545
        %2555 = vst [vmem:[%s2552 + $0x19] sm:$0xff] %v2546
        %2556 = vst [vmem:[%s2552 + $0x21] sm:$0xff] %v2547
        %2557 = vst [vmem:[%s2552 + $0x31] sm:$0xff] %v2548
        %2558 = vst [vmem:[%s2552 + $0x39] sm:$0xff] %v2549
        %2559 = vst [vmem:[%s2552 + $0x49] sm:$0xff] %v2550
        %2560 = vst [vmem:[%s2552 + $0x51] sm:$0xff] %v2551
        %v2561 = vld [vmem:[#allocation3 + $0x140] sm:$0xff]
        %v2562 = vld [vmem:[#allocation3 + $0x148] sm:$0xff]
        %v2563 = vld [vmem:[#allocation3 + $0x150] sm:$0xff]
        %v2564 = vld [vmem:[#allocation3 + $0x158] sm:$0xff]
        %v2565 = vld [vmem:[#allocation3 + $0x160] sm:$0xff]
        %v2566 = vld [vmem:[#allocation3 + $0x168] sm:$0xff]
        %v2567 = vld [vmem:[#allocation3 + $0x170] sm:$0xff]
        %v2568 = vld [vmem:[#allocation3 + $0x178] sm:$0xff]
        %v2569 = vld [vmem:[#allocation3 + $0x180] sm:$0xff]
        %v2570 = vld [vmem:[#allocation3 + $0x188] sm:$0xff]
        %v2571 = vld [vmem:[#allocation3 + $0x190] sm:$0xff]
        %v2572 = vld [vmem:[#allocation3 + $0x198] sm:$0xff]
        %v2573 = vld [vmem:[#allocation3 + $0x1a0] sm:$0xff]
        %v2574 = vld [vmem:[#allocation3 + $0x1a8] sm:$0xff]
        %v2575 = vld [vmem:[#allocation3 + $0x1b0] sm:$0xff]
        %v2576 = vld [vmem:[#allocation3 + $0x1b8] sm:$0xff]
        %v2577 = vld [vmem:[#allocation3 + $0x1c0] sm:$0xff]
        %v2578 = vld [vmem:[#allocation3 + $0x1c8] sm:$0xff]
        %v2579 = vld [vmem:[#allocation3 + $0x1d0] sm:$0xff]
        %v2580 = vld [vmem:[#allocation3 + $0x1d8] sm:$0xff]
        %v2581 = vld [vmem:[#allocation3 + $0x1e0] sm:$0xff]
        %v2582 = vld [vmem:[#allocation3 + $0x1e8] sm:$0xff]
        %v2583 = vld [vmem:[#allocation3 + $0x1f0] sm:$0xff]
        %v2584 = vld [vmem:[#allocation3 + $0x1f8] sm:$0xff]
        %v2585 = vld [vmem:[#allocation3 + $0x200] sm:$0xff]
        %v2586 = vld [vmem:[#allocation3 + $0x208] sm:$0xff]
        %v2587 = vld [vmem:[#allocation3 + $0x210] sm:$0xff]
        %v2588 = vld [vmem:[#allocation3 + $0x218] sm:$0xff]
        %v2589 = vld [vmem:[#allocation3 + $0x220] sm:$0xff]
        %v2590 = vld [vmem:[#allocation3 + $0x228] sm:$0xff]
        %v2591 = vld [vmem:[#allocation3 + $0x230] sm:$0xff]
        %v2592 = vld [vmem:[#allocation3 + $0x238] sm:$0xff]
        %v2593 = vld [vmem:[#allocation3 + $0x240] sm:$0xff]
        %v2594 = vld [vmem:[#allocation3 + $0x248] sm:$0xff]
        %v2595 = vld [vmem:[#allocation3 + $0x250] sm:$0xff]
        %v2596 = vld [vmem:[#allocation3 + $0x258] sm:$0xff]
        %v2597 = vld [vmem:[#allocation3 + $0x260] sm:$0xff]
        %v2598 = vld [vmem:[#allocation3 + $0x268] sm:$0xff]
        %v2599 = vld [vmem:[#allocation3 + $0x270] sm:$0xff]
        %v2600 = vld [vmem:[#allocation3 + $0x278] sm:$0xff]
        %v2601 = vld [vmem:[%s4] sm:$0xff]
        %v2602 = vld [vmem:[%s4 + $0x8] sm:$0xff]
        %v2603 = vld [vmem:[%s4 + $0x10] sm:$0xff]
        %v2604 = vld [vmem:[%s4 + $0x18] sm:$0xff]
        %v2605 = vld [vmem:[%s4 + $0x20] sm:$0xff]
        %v2606 = vld [vmem:[%s4 + $0x28] sm:$0xff]
        %v2607 = vld [vmem:[%s4 + $0x30] sm:$0xff]
        %v2608 = vld [vmem:[%s4 + $0x38] sm:$0xff]
        %v2609 = vld [vmem:[%s4 + $0x40] sm:$0xff]
        %v2610 = vld [vmem:[%s4 + $0x48] sm:$0xff]
        %v2611 = vld [vmem:[%s4 + $0x50] sm:$0xff]
        %v2612 = vld [vmem:[%s4 + $0x58] sm:$0xff]
        %v2613 = vld [vmem:[%s4 + $0x60] sm:$0xff]
        %v2614 = vld [vmem:[%s4 + $0x68] sm:$0xff]
        %v2615 = vld [vmem:[%s4 + $0x70] sm:$0xff]
        %v2616 = vld [vmem:[%s4 + $0x78] sm:$0xff]
        %v2617 = vld [vmem:[%s4 + $0x80] sm:$0xff]
        %v2618 = vld [vmem:[%s4 + $0x88] sm:$0xff]
        %v2619 = vld [vmem:[%s4 + $0x90] sm:$0xff]
        %v2620 = vld [vmem:[%s4 + $0x98] sm:$0xff]
        %v2621 = vld [vmem:[%s4 + $0xa0] sm:$0xff]
        %v2622 = vld [vmem:[%s4 + $0xa8] sm:$0xff]
        %v2623 = vld [vmem:[%s4 + $0xb0] sm:$0xff]
        %v2624 = vld [vmem:[%s4 + $0xb8] sm:$0xff]
        %v2625 = vld [vmem:[%s4 + $0xc0] sm:$0xff]
        %v2626 = vld [vmem:[%s4 + $0xc8] sm:$0xff]
        %v2627 = vld [vmem:[%s4 + $0xd0] sm:$0xff]
        %v2628 = vld [vmem:[%s4 + $0xd8] sm:$0xff]
        %v2629 = vld [vmem:[%s4 + $0xe0] sm:$0xff]
        %v2630 = vld [vmem:[%s4 + $0xe8] sm:$0xff]
        %v2631 = vld [vmem:[%s4 + $0xf0] sm:$0xff]
        %v2632 = vld [vmem:[%s4 + $0xf8] sm:$0xff]
        %v2633 = vld [vmem:[%s4 + $0x100] sm:$0xff]
        %v2634 = vld [vmem:[%s4 + $0x108] sm:$0xff]
        %v2635 = vld [vmem:[%s4 + $0x110] sm:$0xff]
        %v2636 = vld [vmem:[%s4 + $0x118] sm:$0xff]
        %v2637 = vld [vmem:[%s4 + $0x120] sm:$0xff]
        %v2638 = vld [vmem:[%s4 + $0x128] sm:$0xff]
        %v2639 = vld [vmem:[%s4 + $0x130] sm:$0xff]
        %v2640 = vld [vmem:[%s4 + $0x138] sm:$0xff]
        %v2641 = vld [vmem:[%s4 + $0x140] sm:$0xff]
        %v2642 = vld [vmem:[%s4 + $0x148] sm:$0xff]
        %v2643 = vld [vmem:[%s4 + $0x150] sm:$0xff]
        %v2644 = vld [vmem:[%s4 + $0x158] sm:$0xff]
        %v2645 = vld [vmem:[%s4 + $0x160] sm:$0xff]
        %v2646 = vld [vmem:[%s4 + $0x168] sm:$0xff]
        %v2647 = vld [vmem:[%s4 + $0x170] sm:$0xff]
        %v2648 = vld [vmem:[%s4 + $0x178] sm:$0xff]
        %v2649 = vld [vmem:[%s4 + $0x180] sm:$0xff]
        %v2650 = vld [vmem:[%s4 + $0x188] sm:$0xff]
        %v2651 = vld [vmem:[%s4 + $0x190] sm:$0xff]
        %v2652 = vld [vmem:[%s4 + $0x198] sm:$0xff]
        %v2653 = vld [vmem:[%s4 + $0x1a0] sm:$0xff]
        %v2654 = vld [vmem:[%s4 + $0x1a8] sm:$0xff]
        %v2655 = vld [vmem:[%s4 + $0x1b0] sm:$0xff]
        %v2656 = vld [vmem:[%s4 + $0x1b8] sm:$0xff]
        %v2657 = vld [vmem:[%s4 + $0x1c0] sm:$0xff]
        %v2658 = vld [vmem:[%s4 + $0x1c8] sm:$0xff]
        %v2659 = vld [vmem:[%s4 + $0x1d0] sm:$0xff]
        %v2660 = vld [vmem:[%s4 + $0x1d8] sm:$0xff]
        %v2661 = vld [vmem:[%s4 + $0x1e0] sm:$0xff]
        %v2662 = vld [vmem:[%s4 + $0x1e8] sm:$0xff]
        %v2663 = vld [vmem:[%s4 + $0x1f0] sm:$0xff]
        %v2664 = vld [vmem:[%s4 + $0x1f8] sm:$0xff]
        %v2665 = vld [vmem:[%s4 + $0x200] sm:$0xff]
        %v2666 = vld [vmem:[%s4 + $0x208] sm:$0xff]
        %v2667 = vld [vmem:[%s4 + $0x210] sm:$0xff]
        %v2668 = vld [vmem:[%s4 + $0x218] sm:$0xff]
        %v2669 = vld [vmem:[%s4 + $0x220] sm:$0xff]
        %v2670 = vld [vmem:[%s4 + $0x228] sm:$0xff]
        %v2671 = vld [vmem:[%s4 + $0x230] sm:$0xff]
        %v2672 = vld [vmem:[%s4 + $0x238] sm:$0xff]
        %v2674 = vsel %vm358, %v2565, 0
        %v2677 = vsel %vm358, %v2570, 0
        %v2680 = vsel %vm358, %v2575, 0
        %v2683 = vsel %vm358, %v2580, 0
        %v2686 = vsel %vm358, %v2585, 0
        %v2689 = vsel %vm358, %v2590, 0
        %v2692 = vsel %vm358, %v2595, 0
        %v2695 = vsel %vm358, %v2600, 0
        %2697 = vmatprep.subr.mxu0 0.0
        %2698 = vmatpush1.msra.mxu0 %v2616
        %2699 = vmatprep.subr.mxu0 0.0
        %2700 = vmatpush1.msra.mxu0 %v2615
        %2701 = vmatprep.subr.mxu0 0.0
        %2702 = vmatpush1.msra.mxu0 %v2614
        %2703 = vmatprep.subr.mxu0 0.0
        %2704 = vmatpush1.msra.mxu0 %v2613
        %2705 = vmatprep.subr.mxu0 0.0
        %2706 = vmatpush1.msra.mxu0 %v2612
        %2707 = vmatprep.subr.mxu0 0.0
        %2708 = vmatpush1.msra.mxu0 %v2611
        %2709 = vmatprep.subr.mxu0 0.0
        %2710 = vmatpush1.msra.mxu0 %v2610
        %2711 = vmatprep.subr.mxu0 0.0
        %2712 = vmatpush1.msra.mxu0 %v2609
        %2713 = vmatprep.subr.mxu0 0.0
        %2714 = vmatpush1.msra.mxu0 %v2608
        %2715 = vmatprep.subr.mxu0 0.0
        %2716 = vmatpush1.msra.mxu0 %v2607
        %2717 = vmatprep.subr.mxu0 0.0
        %2718 = vmatpush1.msra.mxu0 %v2606
        %2719 = vmatprep.subr.mxu0 0.0
        %2720 = vmatpush1.msra.mxu0 %v2605
        %2721 = vmatprep.subr.mxu0 0.0
        %2722 = vmatpush1.msra.mxu0 %v2604
        %2723 = vmatprep.subr.mxu0 0.0
        %2724 = vmatpush1.msra.mxu0 %v2603
        %2725 = vmatprep.subr.mxu0 0.0
        %2726 = vmatpush1.msra.mxu0 %v2602
        %2727 = vmatprep.subr.mxu0 0.0
        %2728 = vmatpush1.msra.mxu0 %v2601
        %2729 = vmatprep.subr.mxu0 0.0
        %2730 = vmatpush2.msra.mxu0 %v2632
        %2731 = vmatprep.subr.mxu0 0.0
        %2732 = vmatpush2.msra.mxu0 %v2631
        %2733 = vmatprep.subr.mxu0 0.0
        %2734 = vmatpush2.msra.mxu0 %v2630
        %2735 = vmatprep.subr.mxu0 0.0
        %2736 = vmatpush2.msra.mxu0 %v2629
        %2737 = vmatprep.subr.mxu0 0.0
        %2738 = vmatpush2.msra.mxu0 %v2628
        %2739 = vmatprep.subr.mxu0 0.0
        %2740 = vmatpush2.msra.mxu0 %v2627
        %2741 = vmatprep.subr.mxu0 0.0
        %2742 = vmatpush2.msra.mxu0 %v2626
        %2743 = vmatprep.subr.mxu0 0.0
        %2744 = vmatpush2.msra.mxu0 %v2625
        %2745 = vmatprep.subr.mxu0 0.0
        %2746 = vmatpush2.msra.mxu0 %v2624
        %2747 = vmatprep.subr.mxu0 0.0
        %2748 = vmatpush2.msra.mxu0 %v2623
        %2749 = vmatprep.subr.mxu0 0.0
        %2750 = vmatpush2.msra.mxu0 %v2622
        %2751 = vmatprep.subr.mxu0 0.0
        %2752 = vmatpush2.msra.mxu0 %v2621
        %2753 = vmatprep.subr.mxu0 0.0
        %2754 = vmatpush2.msra.mxu0 %v2620
        %2755 = vmatprep.subr.mxu0 0.0
        %2756 = vmatpush2.msra.mxu0 %v2619
        %2757 = vmatprep.subr.mxu0 0.0
        %2758 = vmatpush2.msra.mxu0 %v2618
        %2759 = vmatprep.subr.mxu0 0.0
        %2760 = vmatpush2.msra.mxu0 %v2617
        %2761 = vmatprep.mubr.f32.mxu0 %v2562
        %2762 = vmatmul.mubr.f32.gmra.mxu0 %v2561
        %v2763 = vpop.f32.mrf.mxu0
        %v2764 = vadd.f32 0.0, %v2763
        %v2765 = vpop.f32.mrf.mxu0
        %2766 = vmatprep.mubr.f32.mxu0 %v2567
        %2767 = vmatmul.mubr.f32.gmra.mxu0 %v2566
        %v2768 = vpop.f32.mrf.mxu0
        %v2769 = vadd.f32 0.0, %v2768
        %v2770 = vpop.f32.mrf.mxu0
        %2771 = vmatprep.mubr.f32.mxu0 %v2572
        %2772 = vmatmul.mubr.f32.gmra.mxu0 %v2571
        %v2773 = vpop.f32.mrf.mxu0
        %v2774 = vadd.f32 0.0, %v2773
        %v2775 = vpop.f32.mrf.mxu0
        %2776 = vmatprep.mubr.f32.mxu0 %v2577
        %2777 = vmatmul.mubr.f32.gmra.mxu0 %v2576
        %v2778 = vpop.f32.mrf.mxu0
        %v2779 = vadd.f32 0.0, %v2778
        %v2780 = vpop.f32.mrf.mxu0
        %2781 = vmatprep.mubr.f32.mxu0 %v2582
        %2782 = vmatmul.mubr.f32.gmra.mxu0 %v2581
        %v2783 = vpop.f32.mrf.mxu0
        %v2784 = vadd.f32 0.0, %v2783
        %v2785 = vpop.f32.mrf.mxu0
        %2786 = vmatprep.mubr.f32.mxu0 %v2587
        %2787 = vmatmul.mubr.f32.gmra.mxu0 %v2586
        %v2788 = vpop.f32.mrf.mxu0
        %v2789 = vadd.f32 0.0, %v2788
        %v2790 = vpop.f32.mrf.mxu0
        %2791 = vmatprep.mubr.f32.mxu0 %v2592
        %2792 = vmatmul.mubr.f32.gmra.mxu0 %v2591
        %v2793 = vpop.f32.mrf.mxu0
        %v2794 = vadd.f32 0.0, %v2793
        %v2795 = vpop.f32.mrf.mxu0
        %2796 = vmatprep.mubr.f32.mxu0 %v2597
        %2797 = vmatmul.mubr.f32.gmra.mxu0 %v2596
        %v2798 = vpop.f32.mrf.mxu0
        %v2799 = vadd.f32 0.0, %v2798
        %v2800 = vpop.f32.mrf.mxu0
        %2801 = vdwg.mxu0
        %2802 = vmatprep.subr.mxu0 0.0
        %2803 = vmatpush1.msra.mxu0 %v2648
        %2804 = vmatprep.subr.mxu0 0.0
        %2805 = vmatpush1.msra.mxu0 %v2647
        %2806 = vmatprep.subr.mxu0 0.0
        %2807 = vmatpush1.msra.mxu0 %v2646
        %2808 = vmatprep.subr.mxu0 0.0
        %2809 = vmatpush1.msra.mxu0 %v2645
        %2810 = vmatprep.subr.mxu0 0.0
        %2811 = vmatpush1.msra.mxu0 %v2644
        %2812 = vmatprep.subr.mxu0 0.0
        %2813 = vmatpush1.msra.mxu0 %v2643
        %2814 = vmatprep.subr.mxu0 0.0
        %2815 = vmatpush1.msra.mxu0 %v2642
        %2816 = vmatprep.subr.mxu0 0.0
        %2817 = vmatpush1.msra.mxu0 %v2641
        %2818 = vmatprep.subr.mxu0 0.0
        %2819 = vmatpush1.msra.mxu0 %v2640
        %2820 = vmatprep.subr.mxu0 0.0
        %2821 = vmatpush1.msra.mxu0 %v2639
        %2822 = vmatprep.subr.mxu0 0.0
        %2823 = vmatpush1.msra.mxu0 %v2638
        %2824 = vmatprep.subr.mxu0 0.0
        %2825 = vmatpush1.msra.mxu0 %v2637
        %2826 = vmatprep.subr.mxu0 0.0
        %2827 = vmatpush1.msra.mxu0 %v2636
        %2828 = vmatprep.subr.mxu0 0.0
        %2829 = vmatpush1.msra.mxu0 %v2635
        %2830 = vmatprep.subr.mxu0 0.0
        %2831 = vmatpush1.msra.mxu0 %v2634
        %2832 = vmatprep.subr.mxu0 0.0
        %2833 = vmatpush1.msra.mxu0 %v2633
        %2834 = vmatprep.subr.mxu0 0.0
        %2835 = vmatpush2.msra.mxu0 %v2664
        %2836 = vmatprep.subr.mxu0 0.0
        %2837 = vmatpush2.msra.mxu0 %v2663
        %2838 = vmatprep.subr.mxu0 0.0
        %2839 = vmatpush2.msra.mxu0 %v2662
        %2840 = vmatprep.subr.mxu0 0.0
        %2841 = vmatpush2.msra.mxu0 %v2661
        %2842 = vmatprep.subr.mxu0 0.0
        %2843 = vmatpush2.msra.mxu0 %v2660
        %2844 = vmatprep.subr.mxu0 0.0
        %2845 = vmatpush2.msra.mxu0 %v2659
        %2846 = vmatprep.subr.mxu0 0.0
        %2847 = vmatpush2.msra.mxu0 %v2658
        %2848 = vmatprep.subr.mxu0 0.0
        %2849 = vmatpush2.msra.mxu0 %v2657
        %2850 = vmatprep.subr.mxu0 0.0
        %2851 = vmatpush2.msra.mxu0 %v2656
        %2852 = vmatprep.subr.mxu0 0.0
        %2853 = vmatpush2.msra.mxu0 %v2655
        %2854 = vmatprep.subr.mxu0 0.0
        %2855 = vmatpush2.msra.mxu0 %v2654
        %2856 = vmatprep.subr.mxu0 0.0
        %2857 = vmatpush2.msra.mxu0 %v2653
        %2858 = vmatprep.subr.mxu0 0.0
        %2859 = vmatpush2.msra.mxu0 %v2652
        %2860 = vmatprep.subr.mxu0 0.0
        %2861 = vmatpush2.msra.mxu0 %v2651
        %2862 = vmatprep.subr.mxu0 0.0
        %2863 = vmatpush2.msra.mxu0 %v2650
        %2864 = vmatprep.subr.mxu0 0.0
        %2865 = vmatpush2.msra.mxu0 %v2649
        %2866 = vmatprep.mubr.f32.mxu0 %v2564
        %2867 = vmatmul.mubr.f32.gmra.mxu0 %v2563
        %v2868 = vpop.f32.mrf.mxu0
        %v2869 = vadd.f32 %v2764, %v2868
        %v2870 = vpop.f32.mrf.mxu0
        %2871 = vmatprep.mubr.f32.mxu0 %v2569
        %2872 = vmatmul.mubr.f32.gmra.mxu0 %v2568
        %v2873 = vpop.f32.mrf.mxu0
        %v2874 = vadd.f32 %v2769, %v2873
        %v2875 = vpop.f32.mrf.mxu0
        %2876 = vmatprep.mubr.f32.mxu0 %v2574
        %2877 = vmatmul.mubr.f32.gmra.mxu0 %v2573
        %v2878 = vpop.f32.mrf.mxu0
        %v2879 = vadd.f32 %v2774, %v2878
        %v2880 = vpop.f32.mrf.mxu0
        %2881 = vmatprep.mubr.f32.mxu0 %v2579
        %2882 = vmatmul.mubr.f32.gmra.mxu0 %v2578
        %v2883 = vpop.f32.mrf.mxu0
        %v2884 = vadd.f32 %v2779, %v2883
        %v2885 = vpop.f32.mrf.mxu0
        %2886 = vmatprep.mubr.f32.mxu0 %v2584
        %2887 = vmatmul.mubr.f32.gmra.mxu0 %v2583
        %v2888 = vpop.f32.mrf.mxu0
        %v2889 = vadd.f32 %v2784, %v2888
        %v2890 = vpop.f32.mrf.mxu0
        %2891 = vmatprep.mubr.f32.mxu0 %v2589
        %2892 = vmatmul.mubr.f32.gmra.mxu0 %v2588
        %v2893 = vpop.f32.mrf.mxu0
        %v2894 = vadd.f32 %v2789, %v2893
        %v2895 = vpop.f32.mrf.mxu0
        %2896 = vmatprep.mubr.f32.mxu0 %v2594
        %2897 = vmatmul.mubr.f32.gmra.mxu0 %v2593
        %v2898 = vpop.f32.mrf.mxu0
        %v2899 = vadd.f32 %v2794, %v2898
        %v2900 = vpop.f32.mrf.mxu0
        %2901 = vmatprep.mubr.f32.mxu0 %v2599
        %2902 = vmatmul.mubr.f32.gmra.mxu0 %v2598
        %v2903 = vpop.f32.mrf.mxu0
        %v2904 = vadd.f32 %v2799, %v2903
        %v2905 = vpop.f32.mrf.mxu0
        %2906 = vdwg.mxu0
        %2907 = vmatprep.subr.mxu0 0.0
        %2908 = vmatpush1.msra.mxu0 0.0
        %2909 = vmatprep.subr.mxu0 0.0
        %2910 = vmatpush1.msra.mxu0 0.0
        %2911 = vmatprep.subr.mxu0 0.0
        %2912 = vmatpush1.msra.mxu0 0.0
        %2913 = vmatprep.subr.mxu0 0.0
        %2914 = vmatpush1.msra.mxu0 0.0
        %2915 = vmatprep.subr.mxu0 0.0
        %2916 = vmatpush1.msra.mxu0 0.0
        %2917 = vmatprep.subr.mxu0 0.0
        %2918 = vmatpush1.msra.mxu0 0.0
        %2919 = vmatprep.subr.mxu0 0.0
        %2920 = vmatpush1.msra.mxu0 0.0
        %2921 = vmatprep.subr.mxu0 0.0
        %2922 = vmatpush1.msra.mxu0 0.0
        %2923 = vmatprep.subr.mxu0 0.0
        %2924 = vmatpush1.msra.mxu0 %v2672
        %2925 = vmatprep.subr.mxu0 0.0
        %2926 = vmatpush1.msra.mxu0 %v2671
        %2927 = vmatprep.subr.mxu0 0.0
        %2928 = vmatpush1.msra.mxu0 %v2670
        %2929 = vmatprep.subr.mxu0 0.0
        %2930 = vmatpush1.msra.mxu0 %v2669
        %2931 = vmatprep.subr.mxu0 0.0
        %2932 = vmatpush1.msra.mxu0 %v2668
        %2933 = vmatprep.subr.mxu0 0.0
        %2934 = vmatpush1.msra.mxu0 %v2667
        %2935 = vmatprep.subr.mxu0 0.0
        %2936 = vmatpush1.msra.mxu0 %v2666
        %2937 = vmatprep.subr.mxu0 0.0
        %2938 = vmatpush1.msra.mxu0 %v2665
        %2939 = vmatprep.subr.mxu0 0.0
        %2940 = vmatpush2.msra.mxu0 0.0
        %2941 = vmatprep.subr.mxu0 0.0
        %2942 = vmatpush2.msra.mxu0 0.0
        %2943 = vmatprep.subr.mxu0 0.0
        %2944 = vmatpush2.msra.mxu0 0.0
        %2945 = vmatprep.subr.mxu0 0.0
        %2946 = vmatpush2.msra.mxu0 0.0
        %2947 = vmatprep.subr.mxu0 0.0
        %2948 = vmatpush2.msra.mxu0 0.0
        %2949 = vmatprep.subr.mxu0 0.0
        %2950 = vmatpush2.msra.mxu0 0.0
        %2951 = vmatprep.subr.mxu0 0.0
        %2952 = vmatpush2.msra.mxu0 0.0
        %2953 = vmatprep.subr.mxu0 0.0
        %2954 = vmatpush2.msra.mxu0 0.0
        %2955 = vmatprep.subr.mxu0 0.0
        %2956 = vmatpush2.msra.mxu0 0.0
        %2957 = vmatprep.subr.mxu0 0.0
        %2958 = vmatpush2.msra.mxu0 0.0
        %2959 = vmatprep.subr.mxu0 0.0
        %2960 = vmatpush2.msra.mxu0 0.0
        %2961 = vmatprep.subr.mxu0 0.0
        %2962 = vmatpush2.msra.mxu0 0.0
        %2963 = vmatprep.subr.mxu0 0.0
        %2964 = vmatpush2.msra.mxu0 0.0
        %2965 = vmatprep.subr.mxu0 0.0
        %2966 = vmatpush2.msra.mxu0 0.0
        %2967 = vmatprep.subr.mxu0 0.0
        %2968 = vmatpush2.msra.mxu0 0.0
        %2969 = vmatprep.subr.mxu0 0.0
        %2970 = vmatpush2.msra.mxu0 0.0
        %2971 = vmatprep.mubr.f32.mxu0 0.0
        %2972 = vmatmul.mubr.f32.gmra.mxu0 %v2674
        %v2973 = vpop.f32.mrf.mxu0
        %v2974 = vadd.f32 %v2869, %v2973
        %v2975 = vpop.f32.mrf.mxu0
        %2976 = vmatprep.mubr.f32.mxu0 0.0
        %2977 = vmatmul.mubr.f32.gmra.mxu0 %v2677
        %v2978 = vpop.f32.mrf.mxu0
        %v2979 = vadd.f32 %v2874, %v2978
        %v2980 = vpop.f32.mrf.mxu0
        %2981 = vmatprep.mubr.f32.mxu0 0.0
        %2982 = vmatmul.mubr.f32.gmra.mxu0 %v2680
        %v2983 = vpop.f32.mrf.mxu0
        %v2984 = vadd.f32 %v2879, %v2983
        %v2985 = vpop.f32.mrf.mxu0
        %2986 = vmatprep.mubr.f32.mxu0 0.0
        %2987 = vmatmul.mubr.f32.gmra.mxu0 %v2683
        %v2988 = vpop.f32.mrf.mxu0
        %v2989 = vadd.f32 %v2884, %v2988
        %v2990 = vpop.f32.mrf.mxu0
        %2991 = vmatprep.mubr.f32.mxu0 0.0
        %2992 = vmatmul.mubr.f32.gmra.mxu0 %v2686
        %v2993 = vpop.f32.mrf.mxu0
        %v2994 = vadd.f32 %v2889, %v2993
        %v2995 = vpop.f32.mrf.mxu0
        %2996 = vmatprep.mubr.f32.mxu0 0.0
        %2997 = vmatmul.mubr.f32.gmra.mxu0 %v2689
        %v2998 = vpop.f32.mrf.mxu0
        %v2999 = vadd.f32 %v2894, %v2998
        %v3000 = vpop.f32.mrf.mxu0
        %3001 = vmatprep.mubr.f32.mxu0 0.0
        %3002 = vmatmul.mubr.f32.gmra.mxu0 %v2692
        %v3003 = vpop.f32.mrf.mxu0
        %v3004 = vadd.f32 %v2899, %v3003
        %v3005 = vpop.f32.mrf.mxu0
        %3006 = vmatprep.mubr.f32.mxu0 0.0
        %3007 = vmatmul.mubr.f32.gmra.mxu0 %v2695
        %v3008 = vpop.f32.mrf.mxu0
        %v3009 = vadd.f32 %v2904, %v3008
        %v3010 = vpop.f32.mrf.mxu0
        %3011 = vdwg.mxu0
        %v3012 = vmul.f32 %v2974, %v2520
        %v3013 = vmul.f32 %v2979, %v2520
        %v3014 = vmul.f32 %v2984, %v2520
        %v3015 = vmul.f32 %v2989, %v2520
        %v3016 = vmul.f32 %v2994, %v2520
        %v3017 = vmul.f32 %v2999, %v2520
        %v3018 = vmul.f32 %v3004, %v2520
        %v3019 = vmul.f32 %v3009, %v2520
        %v3020 = vadd.f32 %v3012, %v2534
        %v3021 = vadd.f32 %v3013, %v2534
        %v3022 = vadd.f32 %v3014, %v2534
        %v3023 = vadd.f32 %v3015, %v2534
        %v3024 = vadd.f32 %v3016, %v2534
        %v3025 = vadd.f32 %v3017, %v2534
        %v3026 = vadd.f32 %v3018, %v2534
        %v3027 = vadd.f32 %v3019, %v2534
        %v3028 = vmax.f32 %v3020, 0.0
        %v3029 = vmax.f32 %v3021, 0.0
        %v3030 = vmax.f32 %v3022, 0.0
        %v3031 = vmax.f32 %v3023, 0.0
        %v3032 = vmax.f32 %v3024, 0.0
        %v3033 = vmax.f32 %v3025, 0.0
        %v3034 = vmax.f32 %v3026, 0.0
        %v3035 = vmax.f32 %v3027, 0.0
        %s3036 = scalar_lea.vmem [#allocation4], 120
        %3037 = vst [vmem:[%s3036 + $0x1] sm:$0xff] %v3028
        %3038 = vst [vmem:[%s3036 + $0x9] sm:$0xff] %v3029
        %3039 = vst [vmem:[%s3036 + $0x19] sm:$0xff] %v3030
        %3040 = vst [vmem:[%s3036 + $0x21] sm:$0xff] %v3031
        %3041 = vst [vmem:[%s3036 + $0x31] sm:$0xff] %v3032
        %3042 = vst [vmem:[%s3036 + $0x39] sm:$0xff] %v3033
        %3043 = vst [vmem:[%s3036 + $0x49] sm:$0xff] %v3034
        %3044 = vst [vmem:[%s3036 + $0x51] sm:$0xff] %v3035
        %v3045 = vld [vmem:[#allocation3 + $0x280] sm:$0xff]
        %v3046 = vld [vmem:[#allocation3 + $0x288] sm:$0xff]
        %v3047 = vld [vmem:[#allocation3 + $0x290] sm:$0xff]
        %v3048 = vld [vmem:[#allocation3 + $0x298] sm:$0xff]
        %v3049 = vld [vmem:[#allocation3 + $0x2a0] sm:$0xff]
        %v3050 = vld [vmem:[#allocation3 + $0x2a8] sm:$0xff]
        %v3051 = vld [vmem:[#allocation3 + $0x2b0] sm:$0xff]
        %v3052 = vld [vmem:[#allocation3 + $0x2b8] sm:$0xff]
        %v3053 = vld [vmem:[#allocation3 + $0x2c0] sm:$0xff]
        %v3054 = vld [vmem:[#allocation3 + $0x2c8] sm:$0xff]
        %v3055 = vld [vmem:[#allocation3 + $0x2d0] sm:$0xff]
        %v3056 = vld [vmem:[#allocation3 + $0x2d8] sm:$0xff]
        %v3057 = vld [vmem:[#allocation3 + $0x2e0] sm:$0xff]
        %v3058 = vld [vmem:[#allocation3 + $0x2e8] sm:$0xff]
        %v3059 = vld [vmem:[#allocation3 + $0x2f0] sm:$0xff]
        %v3060 = vld [vmem:[#allocation3 + $0x2f8] sm:$0xff]
        %v3061 = vld [vmem:[#allocation3 + $0x300] sm:$0xff]
        %v3062 = vld [vmem:[#allocation3 + $0x308] sm:$0xff]
        %v3063 = vld [vmem:[#allocation3 + $0x310] sm:$0xff]
        %v3064 = vld [vmem:[#allocation3 + $0x318] sm:$0xff]
        %v3065 = vld [vmem:[#allocation3 + $0x320] sm:$0xff]
        %v3066 = vld [vmem:[#allocation3 + $0x328] sm:$0xff]
        %v3067 = vld [vmem:[#allocation3 + $0x330] sm:$0xff]
        %v3068 = vld [vmem:[#allocation3 + $0x338] sm:$0xff]
        %v3069 = vld [vmem:[#allocation3 + $0x340] sm:$0xff]
        %v3070 = vld [vmem:[#allocation3 + $0x348] sm:$0xff]
        %v3071 = vld [vmem:[#allocation3 + $0x350] sm:$0xff]
        %v3072 = vld [vmem:[#allocation3 + $0x358] sm:$0xff]
        %v3073 = vld [vmem:[#allocation3 + $0x360] sm:$0xff]
        %v3074 = vld [vmem:[#allocation3 + $0x368] sm:$0xff]
        %v3075 = vld [vmem:[#allocation3 + $0x370] sm:$0xff]
        %v3076 = vld [vmem:[#allocation3 + $0x378] sm:$0xff]
        %v3077 = vld [vmem:[#allocation3 + $0x380] sm:$0xff]
        %v3078 = vld [vmem:[#allocation3 + $0x388] sm:$0xff]
        %v3079 = vld [vmem:[#allocation3 + $0x390] sm:$0xff]
        %v3080 = vld [vmem:[#allocation3 + $0x398] sm:$0xff]
        %v3081 = vld [vmem:[#allocation3 + $0x3a0] sm:$0xff]
        %v3082 = vld [vmem:[#allocation3 + $0x3a8] sm:$0xff]
        %v3083 = vld [vmem:[#allocation3 + $0x3b0] sm:$0xff]
        %v3084 = vld [vmem:[#allocation3 + $0x3b8] sm:$0xff]
        %v3085 = vld [vmem:[%s4] sm:$0xff]
        %v3086 = vld [vmem:[%s4 + $0x8] sm:$0xff]
        %v3087 = vld [vmem:[%s4 + $0x10] sm:$0xff]
        %v3088 = vld [vmem:[%s4 + $0x18] sm:$0xff]
        %v3089 = vld [vmem:[%s4 + $0x20] sm:$0xff]
        %v3090 = vld [vmem:[%s4 + $0x28] sm:$0xff]
        %v3091 = vld [vmem:[%s4 + $0x30] sm:$0xff]
        %v3092 = vld [vmem:[%s4 + $0x38] sm:$0xff]
        %v3093 = vld [vmem:[%s4 + $0x40] sm:$0xff]
        %v3094 = vld [vmem:[%s4 + $0x48] sm:$0xff]
        %v3095 = vld [vmem:[%s4 + $0x50] sm:$0xff]
        %v3096 = vld [vmem:[%s4 + $0x58] sm:$0xff]
        %v3097 = vld [vmem:[%s4 + $0x60] sm:$0xff]
        %v3098 = vld [vmem:[%s4 + $0x68] sm:$0xff]
        %v3099 = vld [vmem:[%s4 + $0x70] sm:$0xff]
        %v3100 = vld [vmem:[%s4 + $0x78] sm:$0xff]
        %v3101 = vld [vmem:[%s4 + $0x80] sm:$0xff]
        %v3102 = vld [vmem:[%s4 + $0x88] sm:$0xff]
        %v3103 = vld [vmem:[%s4 + $0x90] sm:$0xff]
        %v3104 = vld [vmem:[%s4 + $0x98] sm:$0xff]
        %v3105 = vld [vmem:[%s4 + $0xa0] sm:$0xff]
        %v3106 = vld [vmem:[%s4 + $0xa8] sm:$0xff]
        %v3107 = vld [vmem:[%s4 + $0xb0] sm:$0xff]
        %v3108 = vld [vmem:[%s4 + $0xb8] sm:$0xff]
        %v3109 = vld [vmem:[%s4 + $0xc0] sm:$0xff]
        %v3110 = vld [vmem:[%s4 + $0xc8] sm:$0xff]
        %v3111 = vld [vmem:[%s4 + $0xd0] sm:$0xff]
        %v3112 = vld [vmem:[%s4 + $0xd8] sm:$0xff]
        %v3113 = vld [vmem:[%s4 + $0xe0] sm:$0xff]
        %v3114 = vld [vmem:[%s4 + $0xe8] sm:$0xff]
        %v3115 = vld [vmem:[%s4 + $0xf0] sm:$0xff]
        %v3116 = vld [vmem:[%s4 + $0xf8] sm:$0xff]
        %v3117 = vld [vmem:[%s4 + $0x100] sm:$0xff]
        %v3118 = vld [vmem:[%s4 + $0x108] sm:$0xff]
        %v3119 = vld [vmem:[%s4 + $0x110] sm:$0xff]
        %v3120 = vld [vmem:[%s4 + $0x118] sm:$0xff]
        %v3121 = vld [vmem:[%s4 + $0x120] sm:$0xff]
        %v3122 = vld [vmem:[%s4 + $0x128] sm:$0xff]
        %v3123 = vld [vmem:[%s4 + $0x130] sm:$0xff]
        %v3124 = vld [vmem:[%s4 + $0x138] sm:$0xff]
        %v3125 = vld [vmem:[%s4 + $0x140] sm:$0xff]
        %v3126 = vld [vmem:[%s4 + $0x148] sm:$0xff]
        %v3127 = vld [vmem:[%s4 + $0x150] sm:$0xff]
        %v3128 = vld [vmem:[%s4 + $0x158] sm:$0xff]
        %v3129 = vld [vmem:[%s4 + $0x160] sm:$0xff]
        %v3130 = vld [vmem:[%s4 + $0x168] sm:$0xff]
        %v3131 = vld [vmem:[%s4 + $0x170] sm:$0xff]
        %v3132 = vld [vmem:[%s4 + $0x178] sm:$0xff]
        %v3133 = vld [vmem:[%s4 + $0x180] sm:$0xff]
        %v3134 = vld [vmem:[%s4 + $0x188] sm:$0xff]
        %v3135 = vld [vmem:[%s4 + $0x190] sm:$0xff]
        %v3136 = vld [vmem:[%s4 + $0x198] sm:$0xff]
        %v3137 = vld [vmem:[%s4 + $0x1a0] sm:$0xff]
        %v3138 = vld [vmem:[%s4 + $0x1a8] sm:$0xff]
        %v3139 = vld [vmem:[%s4 + $0x1b0] sm:$0xff]
        %v3140 = vld [vmem:[%s4 + $0x1b8] sm:$0xff]
        %v3141 = vld [vmem:[%s4 + $0x1c0] sm:$0xff]
        %v3142 = vld [vmem:[%s4 + $0x1c8] sm:$0xff]
        %v3143 = vld [vmem:[%s4 + $0x1d0] sm:$0xff]
        %v3144 = vld [vmem:[%s4 + $0x1d8] sm:$0xff]
        %v3145 = vld [vmem:[%s4 + $0x1e0] sm:$0xff]
        %v3146 = vld [vmem:[%s4 + $0x1e8] sm:$0xff]
        %v3147 = vld [vmem:[%s4 + $0x1f0] sm:$0xff]
        %v3148 = vld [vmem:[%s4 + $0x1f8] sm:$0xff]
        %v3149 = vld [vmem:[%s4 + $0x200] sm:$0xff]
        %v3150 = vld [vmem:[%s4 + $0x208] sm:$0xff]
        %v3151 = vld [vmem:[%s4 + $0x210] sm:$0xff]
        %v3152 = vld [vmem:[%s4 + $0x218] sm:$0xff]
        %v3153 = vld [vmem:[%s4 + $0x220] sm:$0xff]
        %v3154 = vld [vmem:[%s4 + $0x228] sm:$0xff]
        %v3155 = vld [vmem:[%s4 + $0x230] sm:$0xff]
        %v3156 = vld [vmem:[%s4 + $0x238] sm:$0xff]
        %v3158 = vsel %vm358, %v3049, 0
        %v3161 = vsel %vm358, %v3054, 0
        %v3164 = vsel %vm358, %v3059, 0
        %v3167 = vsel %vm358, %v3064, 0
        %v3170 = vsel %vm358, %v3069, 0
        %v3173 = vsel %vm358, %v3074, 0
        %v3176 = vsel %vm358, %v3079, 0
        %v3179 = vsel %vm358, %v3084, 0
        %3181 = vmatprep.subr.mxu0 0.0
        %3182 = vmatpush1.msra.mxu0 %v3100
        %3183 = vmatprep.subr.mxu0 0.0
        %3184 = vmatpush1.msra.mxu0 %v3099
        %3185 = vmatprep.subr.mxu0 0.0
        %3186 = vmatpush1.msra.mxu0 %v3098
        %3187 = vmatprep.subr.mxu0 0.0
        %3188 = vmatpush1.msra.mxu0 %v3097
        %3189 = vmatprep.subr.mxu0 0.0
        %3190 = vmatpush1.msra.mxu0 %v3096
        %3191 = vmatprep.subr.mxu0 0.0
        %3192 = vmatpush1.msra.mxu0 %v3095
        %3193 = vmatprep.subr.mxu0 0.0
        %3194 = vmatpush1.msra.mxu0 %v3094
        %3195 = vmatprep.subr.mxu0 0.0
        %3196 = vmatpush1.msra.mxu0 %v3093
        %3197 = vmatprep.subr.mxu0 0.0
        %3198 = vmatpush1.msra.mxu0 %v3092
        %3199 = vmatprep.subr.mxu0 0.0
        %3200 = vmatpush1.msra.mxu0 %v3091
        %3201 = vmatprep.subr.mxu0 0.0
        %3202 = vmatpush1.msra.mxu0 %v3090
        %3203 = vmatprep.subr.mxu0 0.0
        %3204 = vmatpush1.msra.mxu0 %v3089
        %3205 = vmatprep.subr.mxu0 0.0
        %3206 = vmatpush1.msra.mxu0 %v3088
        %3207 = vmatprep.subr.mxu0 0.0
        %3208 = vmatpush1.msra.mxu0 %v3087
        %3209 = vmatprep.subr.mxu0 0.0
        %3210 = vmatpush1.msra.mxu0 %v3086
        %3211 = vmatprep.subr.mxu0 0.0
        %3212 = vmatpush1.msra.mxu0 %v3085
        %3213 = vmatprep.subr.mxu0 0.0
        %3214 = vmatpush2.msra.mxu0 %v3116
        %3215 = vmatprep.subr.mxu0 0.0
        %3216 = vmatpush2.msra.mxu0 %v3115
        %3217 = vmatprep.subr.mxu0 0.0
        %3218 = vmatpush2.msra.mxu0 %v3114
        %3219 = vmatprep.subr.mxu0 0.0
        %3220 = vmatpush2.msra.mxu0 %v3113
        %3221 = vmatprep.subr.mxu0 0.0
        %3222 = vmatpush2.msra.mxu0 %v3112
        %3223 = vmatprep.subr.mxu0 0.0
        %3224 = vmatpush2.msra.mxu0 %v3111
        %3225 = vmatprep.subr.mxu0 0.0
        %3226 = vmatpush2.msra.mxu0 %v3110
        %3227 = vmatprep.subr.mxu0 0.0
        %3228 = vmatpush2.msra.mxu0 %v3109
        %3229 = vmatprep.subr.mxu0 0.0
        %3230 = vmatpush2.msra.mxu0 %v3108
        %3231 = vmatprep.subr.mxu0 0.0
        %3232 = vmatpush2.msra.mxu0 %v3107
        %3233 = vmatprep.subr.mxu0 0.0
        %3234 = vmatpush2.msra.mxu0 %v3106
        %3235 = vmatprep.subr.mxu0 0.0
        %3236 = vmatpush2.msra.mxu0 %v3105
        %3237 = vmatprep.subr.mxu0 0.0
        %3238 = vmatpush2.msra.mxu0 %v3104
        %3239 = vmatprep.subr.mxu0 0.0
        %3240 = vmatpush2.msra.mxu0 %v3103
        %3241 = vmatprep.subr.mxu0 0.0
        %3242 = vmatpush2.msra.mxu0 %v3102
        %3243 = vmatprep.subr.mxu0 0.0
        %3244 = vmatpush2.msra.mxu0 %v3101
        %3245 = vmatprep.mubr.f32.mxu0 %v3046
        %3246 = vmatmul.mubr.f32.gmra.mxu0 %v3045
        %v3247 = vpop.f32.mrf.mxu0
        %v3248 = vadd.f32 0.0, %v3247
        %v3249 = vpop.f32.mrf.mxu0
        %3250 = vmatprep.mubr.f32.mxu0 %v3051
        %3251 = vmatmul.mubr.f32.gmra.mxu0 %v3050
        %v3252 = vpop.f32.mrf.mxu0
        %v3253 = vadd.f32 0.0, %v3252
        %v3254 = vpop.f32.mrf.mxu0
        %3255 = vmatprep.mubr.f32.mxu0 %v3056
        %3256 = vmatmul.mubr.f32.gmra.mxu0 %v3055
        %v3257 = vpop.f32.mrf.mxu0
        %v3258 = vadd.f32 0.0, %v3257
        %v3259 = vpop.f32.mrf.mxu0
        %3260 = vmatprep.mubr.f32.mxu0 %v3061
        %3261 = vmatmul.mubr.f32.gmra.mxu0 %v3060
        %v3262 = vpop.f32.mrf.mxu0
        %v3263 = vadd.f32 0.0, %v3262
        %v3264 = vpop.f32.mrf.mxu0
        %3265 = vmatprep.mubr.f32.mxu0 %v3066
        %3266 = vmatmul.mubr.f32.gmra.mxu0 %v3065
        %v3267 = vpop.f32.mrf.mxu0
        %v3268 = vadd.f32 0.0, %v3267
        %v3269 = vpop.f32.mrf.mxu0
        %3270 = vmatprep.mubr.f32.mxu0 %v3071
        %3271 = vmatmul.mubr.f32.gmra.mxu0 %v3070
        %v3272 = vpop.f32.mrf.mxu0
        %v3273 = vadd.f32 0.0, %v3272
        %v3274 = vpop.f32.mrf.mxu0
        %3275 = vmatprep.mubr.f32.mxu0 %v3076
        %3276 = vmatmul.mubr.f32.gmra.mxu0 %v3075
        %v3277 = vpop.f32.mrf.mxu0
        %v3278 = vadd.f32 0.0, %v3277
        %v3279 = vpop.f32.mrf.mxu0
        %3280 = vmatprep.mubr.f32.mxu0 %v3081
        %3281 = vmatmul.mubr.f32.gmra.mxu0 %v3080
        %v3282 = vpop.f32.mrf.mxu0
        %v3283 = vadd.f32 0.0, %v3282
        %v3284 = vpop.f32.mrf.mxu0
        %3285 = vdwg.mxu0
        %3286 = vmatprep.subr.mxu0 0.0
        %3287 = vmatpush1.msra.mxu0 %v3132
        %3288 = vmatprep.subr.mxu0 0.0
        %3289 = vmatpush1.msra.mxu0 %v3131
        %3290 = vmatprep.subr.mxu0 0.0
        %3291 = vmatpush1.msra.mxu0 %v3130
        %3292 = vmatprep.subr.mxu0 0.0
        %3293 = vmatpush1.msra.mxu0 %v3129
        %3294 = vmatprep.subr.mxu0 0.0
        %3295 = vmatpush1.msra.mxu0 %v3128
        %3296 = vmatprep.subr.mxu0 0.0
        %3297 = vmatpush1.msra.mxu0 %v3127
        %3298 = vmatprep.subr.mxu0 0.0
        %3299 = vmatpush1.msra.mxu0 %v3126
        %3300 = vmatprep.subr.mxu0 0.0
        %3301 = vmatpush1.msra.mxu0 %v3125
        %3302 = vmatprep.subr.mxu0 0.0
        %3303 = vmatpush1.msra.mxu0 %v3124
        %3304 = vmatprep.subr.mxu0 0.0
        %3305 = vmatpush1.msra.mxu0 %v3123
        %3306 = vmatprep.subr.mxu0 0.0
        %3307 = vmatpush1.msra.mxu0 %v3122
        %3308 = vmatprep.subr.mxu0 0.0
        %3309 = vmatpush1.msra.mxu0 %v3121
        %3310 = vmatprep.subr.mxu0 0.0
        %3311 = vmatpush1.msra.mxu0 %v3120
        %3312 = vmatprep.subr.mxu0 0.0
        %3313 = vmatpush1.msra.mxu0 %v3119
        %3314 = vmatprep.subr.mxu0 0.0
        %3315 = vmatpush1.msra.mxu0 %v3118
        %3316 = vmatprep.subr.mxu0 0.0
        %3317 = vmatpush1.msra.mxu0 %v3117
        %3318 = vmatprep.subr.mxu0 0.0
        %3319 = vmatpush2.msra.mxu0 %v3148
        %3320 = vmatprep.subr.mxu0 0.0
        %3321 = vmatpush2.msra.mxu0 %v3147
        %3322 = vmatprep.subr.mxu0 0.0
        %3323 = vmatpush2.msra.mxu0 %v3146
        %3324 = vmatprep.subr.mxu0 0.0
        %3325 = vmatpush2.msra.mxu0 %v3145
        %3326 = vmatprep.subr.mxu0 0.0
        %3327 = vmatpush2.msra.mxu0 %v3144
        %3328 = vmatprep.subr.mxu0 0.0
        %3329 = vmatpush2.msra.mxu0 %v3143
        %3330 = vmatprep.subr.mxu0 0.0
        %3331 = vmatpush2.msra.mxu0 %v3142
        %3332 = vmatprep.subr.mxu0 0.0
        %3333 = vmatpush2.msra.mxu0 %v3141
        %3334 = vmatprep.subr.mxu0 0.0
        %3335 = vmatpush2.msra.mxu0 %v3140
        %3336 = vmatprep.subr.mxu0 0.0
        %3337 = vmatpush2.msra.mxu0 %v3139
        %3338 = vmatprep.subr.mxu0 0.0
        %3339 = vmatpush2.msra.mxu0 %v3138
        %3340 = vmatprep.subr.mxu0 0.0
        %3341 = vmatpush2.msra.mxu0 %v3137
        %3342 = vmatprep.subr.mxu0 0.0
        %3343 = vmatpush2.msra.mxu0 %v3136
        %3344 = vmatprep.subr.mxu0 0.0
        %3345 = vmatpush2.msra.mxu0 %v3135
        %3346 = vmatprep.subr.mxu0 0.0
        %3347 = vmatpush2.msra.mxu0 %v3134
        %3348 = vmatprep.subr.mxu0 0.0
        %3349 = vmatpush2.msra.mxu0 %v3133
        %3350 = vmatprep.mubr.f32.mxu0 %v3048
        %3351 = vmatmul.mubr.f32.gmra.mxu0 %v3047
        %v3352 = vpop.f32.mrf.mxu0
        %v3353 = vadd.f32 %v3248, %v3352
        %v3354 = vpop.f32.mrf.mxu0
        %3355 = vmatprep.mubr.f32.mxu0 %v3053
        %3356 = vmatmul.mubr.f32.gmra.mxu0 %v3052
        %v3357 = vpop.f32.mrf.mxu0
        %v3358 = vadd.f32 %v3253, %v3357
        %v3359 = vpop.f32.mrf.mxu0
        %3360 = vmatprep.mubr.f32.mxu0 %v3058
        %3361 = vmatmul.mubr.f32.gmra.mxu0 %v3057
        %v3362 = vpop.f32.mrf.mxu0
        %v3363 = vadd.f32 %v3258, %v3362
        %v3364 = vpop.f32.mrf.mxu0
        %3365 = vmatprep.mubr.f32.mxu0 %v3063
        %3366 = vmatmul.mubr.f32.gmra.mxu0 %v3062
        %v3367 = vpop.f32.mrf.mxu0
        %v3368 = vadd.f32 %v3263, %v3367
        %v3369 = vpop.f32.mrf.mxu0
        %3370 = vmatprep.mubr.f32.mxu0 %v3068
        %3371 = vmatmul.mubr.f32.gmra.mxu0 %v3067
        %v3372 = vpop.f32.mrf.mxu0
        %v3373 = vadd.f32 %v3268, %v3372
        %v3374 = vpop.f32.mrf.mxu0
        %3375 = vmatprep.mubr.f32.mxu0 %v3073
        %3376 = vmatmul.mubr.f32.gmra.mxu0 %v3072
        %v3377 = vpop.f32.mrf.mxu0
        %v3378 = vadd.f32 %v3273, %v3377
        %v3379 = vpop.f32.mrf.mxu0
        %3380 = vmatprep.mubr.f32.mxu0 %v3078
        %3381 = vmatmul.mubr.f32.gmra.mxu0 %v3077
        %v3382 = vpop.f32.mrf.mxu0
        %v3383 = vadd.f32 %v3278, %v3382
        %v3384 = vpop.f32.mrf.mxu0
        %3385 = vmatprep.mubr.f32.mxu0 %v3083
        %3386 = vmatmul.mubr.f32.gmra.mxu0 %v3082
        %v3387 = vpop.f32.mrf.mxu0
        %v3388 = vadd.f32 %v3283, %v3387
        %v3389 = vpop.f32.mrf.mxu0
        %3390 = vdwg.mxu0
        %3391 = vmatprep.subr.mxu0 0.0
        %3392 = vmatpush1.msra.mxu0 0.0
        %3393 = vmatprep.subr.mxu0 0.0
        %3394 = vmatpush1.msra.mxu0 0.0
        %3395 = vmatprep.subr.mxu0 0.0
        %3396 = vmatpush1.msra.mxu0 0.0
        %3397 = vmatprep.subr.mxu0 0.0
        %3398 = vmatpush1.msra.mxu0 0.0
        %3399 = vmatprep.subr.mxu0 0.0
        %3400 = vmatpush1.msra.mxu0 0.0
        %3401 = vmatprep.subr.mxu0 0.0
        %3402 = vmatpush1.msra.mxu0 0.0
        %3403 = vmatprep.subr.mxu0 0.0
        %3404 = vmatpush1.msra.mxu0 0.0
        %3405 = vmatprep.subr.mxu0 0.0
        %3406 = vmatpush1.msra.mxu0 0.0
        %3407 = vmatprep.subr.mxu0 0.0
        %3408 = vmatpush1.msra.mxu0 %v3156
        %3409 = vmatprep.subr.mxu0 0.0
        %3410 = vmatpush1.msra.mxu0 %v3155
        %3411 = vmatprep.subr.mxu0 0.0
        %3412 = vmatpush1.msra.mxu0 %v3154
        %3413 = vmatprep.subr.mxu0 0.0
        %3414 = vmatpush1.msra.mxu0 %v3153
        %3415 = vmatprep.subr.mxu0 0.0
        %3416 = vmatpush1.msra.mxu0 %v3152
        %3417 = vmatprep.subr.mxu0 0.0
        %3418 = vmatpush1.msra.mxu0 %v3151
        %3419 = vmatprep.subr.mxu0 0.0
        %3420 = vmatpush1.msra.mxu0 %v3150
        %3421 = vmatprep.subr.mxu0 0.0
        %3422 = vmatpush1.msra.mxu0 %v3149
        %3423 = vmatprep.subr.mxu0 0.0
        %3424 = vmatpush2.msra.mxu0 0.0
        %3425 = vmatprep.subr.mxu0 0.0
        %3426 = vmatpush2.msra.mxu0 0.0
        %3427 = vmatprep.subr.mxu0 0.0
        %3428 = vmatpush2.msra.mxu0 0.0
        %3429 = vmatprep.subr.mxu0 0.0
        %3430 = vmatpush2.msra.mxu0 0.0
        %3431 = vmatprep.subr.mxu0 0.0
        %3432 = vmatpush2.msra.mxu0 0.0
        %3433 = vmatprep.subr.mxu0 0.0
        %3434 = vmatpush2.msra.mxu0 0.0
        %3435 = vmatprep.subr.mxu0 0.0
        %3436 = vmatpush2.msra.mxu0 0.0
        %3437 = vmatprep.subr.mxu0 0.0
        %3438 = vmatpush2.msra.mxu0 0.0
        %3439 = vmatprep.subr.mxu0 0.0
        %3440 = vmatpush2.msra.mxu0 0.0
        %3441 = vmatprep.subr.mxu0 0.0
        %3442 = vmatpush2.msra.mxu0 0.0
        %3443 = vmatprep.subr.mxu0 0.0
        %3444 = vmatpush2.msra.mxu0 0.0
        %3445 = vmatprep.subr.mxu0 0.0
        %3446 = vmatpush2.msra.mxu0 0.0
        %3447 = vmatprep.subr.mxu0 0.0
        %3448 = vmatpush2.msra.mxu0 0.0
        %3449 = vmatprep.subr.mxu0 0.0
        %3450 = vmatpush2.msra.mxu0 0.0
        %3451 = vmatprep.subr.mxu0 0.0
        %3452 = vmatpush2.msra.mxu0 0.0
        %3453 = vmatprep.subr.mxu0 0.0
        %3454 = vmatpush2.msra.mxu0 0.0
        %3455 = vmatprep.mubr.f32.mxu0 0.0
        %3456 = vmatmul.mubr.f32.gmra.mxu0 %v3158
        %v3457 = vpop.f32.mrf.mxu0
        %v3458 = vadd.f32 %v3353, %v3457
        %v3459 = vpop.f32.mrf.mxu0
        %3460 = vmatprep.mubr.f32.mxu0 0.0
        %3461 = vmatmul.mubr.f32.gmra.mxu0 %v3161
        %v3462 = vpop.f32.mrf.mxu0
        %v3463 = vadd.f32 %v3358, %v3462
        %v3464 = vpop.f32.mrf.mxu0
        %3465 = vmatprep.mubr.f32.mxu0 0.0
        %3466 = vmatmul.mubr.f32.gmra.mxu0 %v3164
        %v3467 = vpop.f32.mrf.mxu0
        %v3468 = vadd.f32 %v3363, %v3467
        %v3469 = vpop.f32.mrf.mxu0
        %3470 = vmatprep.mubr.f32.mxu0 0.0
        %3471 = vmatmul.mubr.f32.gmra.mxu0 %v3167
        %v3472 = vpop.f32.mrf.mxu0
        %v3473 = vadd.f32 %v3368, %v3472
        %v3474 = vpop.f32.mrf.mxu0
        %3475 = vmatprep.mubr.f32.mxu0 0.0
        %3476 = vmatmul.mubr.f32.gmra.mxu0 %v3170
        %v3477 = vpop.f32.mrf.mxu0
        %v3478 = vadd.f32 %v3373, %v3477
        %v3479 = vpop.f32.mrf.mxu0
        %3480 = vmatprep.mubr.f32.mxu0 0.0
        %3481 = vmatmul.mubr.f32.gmra.mxu0 %v3173
        %v3482 = vpop.f32.mrf.mxu0
        %v3483 = vadd.f32 %v3378, %v3482
        %v3484 = vpop.f32.mrf.mxu0
        %3485 = vmatprep.mubr.f32.mxu0 0.0
        %3486 = vmatmul.mubr.f32.gmra.mxu0 %v3176
        %v3487 = vpop.f32.mrf.mxu0
        %v3488 = vadd.f32 %v3383, %v3487
        %v3489 = vpop.f32.mrf.mxu0
        %3490 = vmatprep.mubr.f32.mxu0 0.0
        %3491 = vmatmul.mubr.f32.gmra.mxu0 %v3179
        %v3492 = vpop.f32.mrf.mxu0
        %v3493 = vadd.f32 %v3388, %v3492
        %v3494 = vpop.f32.mrf.mxu0
        %3495 = vdwg.mxu0
        %v3496 = vmul.f32 %v3458, %v2520
        %v3497 = vmul.f32 %v3463, %v2520
        %v3498 = vmul.f32 %v3468, %v2520
        %v3499 = vmul.f32 %v3473, %v2520
        %v3500 = vmul.f32 %v3478, %v2520
        %v3501 = vmul.f32 %v3483, %v2520
        %v3502 = vmul.f32 %v3488, %v2520
        %v3503 = vmul.f32 %v3493, %v2520
        %v3504 = vadd.f32 %v3496, %v2534
        %v3505 = vadd.f32 %v3497, %v2534
        %v3506 = vadd.f32 %v3498, %v2534
        %v3507 = vadd.f32 %v3499, %v2534
        %v3508 = vadd.f32 %v3500, %v2534
        %v3509 = vadd.f32 %v3501, %v2534
        %v3510 = vadd.f32 %v3502, %v2534
        %v3511 = vadd.f32 %v3503, %v2534
        %v3512 = vmax.f32 %v3504, 0.0
        %v3513 = vmax.f32 %v3505, 0.0
        %v3514 = vmax.f32 %v3506, 0.0
        %v3515 = vmax.f32 %v3507, 0.0
        %v3516 = vmax.f32 %v3508, 0.0
        %v3517 = vmax.f32 %v3509, 0.0
        %v3518 = vmax.f32 %v3510, 0.0
        %v3519 = vmax.f32 %v3511, 0.0
        %s3520 = scalar_lea.vmem [#allocation4], 216
        %3521 = vst [vmem:[%s3520 + $0x1] sm:$0xff] %v3512
        %3522 = vst [vmem:[%s3520 + $0x9] sm:$0xff] %v3513
        %3523 = vst [vmem:[%s3520 + $0x19] sm:$0xff] %v3514
        %3524 = vst [vmem:[%s3520 + $0x21] sm:$0xff] %v3515
        %3525 = vst [vmem:[%s3520 + $0x31] sm:$0xff] %v3516
        %3526 = vst [vmem:[%s3520 + $0x39] sm:$0xff] %v3517
        %3527 = vst [vmem:[%s3520 + $0x49] sm:$0xff] %v3518
        %3528 = vst [vmem:[%s3520 + $0x51] sm:$0xff] %v3519
        %v3529 = vld [vmem:[#allocation3 + $0x3c0] sm:$0xff]
        %v3530 = vld [vmem:[#allocation3 + $0x3c8] sm:$0xff]
        %v3531 = vld [vmem:[#allocation3 + $0x3d0] sm:$0xff]
        %v3532 = vld [vmem:[#allocation3 + $0x3d8] sm:$0xff]
        %v3533 = vld [vmem:[#allocation3 + $0x3e0] sm:$0xff]
        %v3534 = vld [vmem:[#allocation3 + $0x3e8] sm:$0xff]
        %v3535 = vld [vmem:[#allocation3 + $0x3f0] sm:$0xff]
        %v3536 = vld [vmem:[#allocation3 + $0x3f8] sm:$0xff]
        %v3537 = vld [vmem:[#allocation3 + $0x400] sm:$0xff]
        %v3538 = vld [vmem:[#allocation3 + $0x408] sm:$0xff]
        %v3539 = vld [vmem:[#allocation3 + $0x410] sm:$0xff]
        %v3540 = vld [vmem:[#allocation3 + $0x418] sm:$0xff]
        %v3541 = vld [vmem:[#allocation3 + $0x420] sm:$0xff]
        %v3542 = vld [vmem:[#allocation3 + $0x428] sm:$0xff]
        %v3543 = vld [vmem:[#allocation3 + $0x430] sm:$0xff]
        %v3544 = vld [vmem:[#allocation3 + $0x438] sm:$0xff]
        %v3545 = vld [vmem:[#allocation3 + $0x440] sm:$0xff]
        %v3546 = vld [vmem:[#allocation3 + $0x448] sm:$0xff]
        %v3547 = vld [vmem:[#allocation3 + $0x450] sm:$0xff]
        %v3548 = vld [vmem:[#allocation3 + $0x458] sm:$0xff]
        %v3549 = vld [vmem:[#allocation3 + $0x460] sm:$0xff]
        %v3550 = vld [vmem:[#allocation3 + $0x468] sm:$0xff]
        %v3551 = vld [vmem:[#allocation3 + $0x470] sm:$0xff]
        %v3552 = vld [vmem:[#allocation3 + $0x478] sm:$0xff]
        %v3553 = vld [vmem:[#allocation3 + $0x480] sm:$0xff]
        %v3554 = vld [vmem:[#allocation3 + $0x488] sm:$0xff]
        %v3555 = vld [vmem:[#allocation3 + $0x490] sm:$0xff]
        %v3556 = vld [vmem:[#allocation3 + $0x498] sm:$0xff]
        %v3557 = vld [vmem:[#allocation3 + $0x4a0] sm:$0xff]
        %v3558 = vld [vmem:[#allocation3 + $0x4a8] sm:$0xff]
        %v3559 = vld [vmem:[#allocation3 + $0x4b0] sm:$0xff]
        %v3560 = vld [vmem:[#allocation3 + $0x4b8] sm:$0xff]
        %v3561 = vld [vmem:[#allocation3 + $0x4c0] sm:$0xff]
        %v3562 = vld [vmem:[#allocation3 + $0x4c8] sm:$0xff]
        %v3563 = vld [vmem:[#allocation3 + $0x4d0] sm:$0xff]
        %v3564 = vld [vmem:[#allocation3 + $0x4d8] sm:$0xff]
        %v3565 = vld [vmem:[#allocation3 + $0x4e0] sm:$0xff]
        %v3566 = vld [vmem:[#allocation3 + $0x4e8] sm:$0xff]
        %v3567 = vld [vmem:[#allocation3 + $0x4f0] sm:$0xff]
        %v3568 = vld [vmem:[#allocation3 + $0x4f8] sm:$0xff]
        %v3569 = vld [vmem:[%s4] sm:$0xff]
        %v3570 = vld [vmem:[%s4 + $0x8] sm:$0xff]
        %v3571 = vld [vmem:[%s4 + $0x10] sm:$0xff]
        %v3572 = vld [vmem:[%s4 + $0x18] sm:$0xff]
        %v3573 = vld [vmem:[%s4 + $0x20] sm:$0xff]
        %v3574 = vld [vmem:[%s4 + $0x28] sm:$0xff]
        %v3575 = vld [vmem:[%s4 + $0x30] sm:$0xff]
        %v3576 = vld [vmem:[%s4 + $0x38] sm:$0xff]
        %v3577 = vld [vmem:[%s4 + $0x40] sm:$0xff]
        %v3578 = vld [vmem:[%s4 + $0x48] sm:$0xff]
        %v3579 = vld [vmem:[%s4 + $0x50] sm:$0xff]
        %v3580 = vld [vmem:[%s4 + $0x58] sm:$0xff]
        %v3581 = vld [vmem:[%s4 + $0x60] sm:$0xff]
        %v3582 = vld [vmem:[%s4 + $0x68] sm:$0xff]
        %v3583 = vld [vmem:[%s4 + $0x70] sm:$0xff]
        %v3584 = vld [vmem:[%s4 + $0x78] sm:$0xff]
        %v3585 = vld [vmem:[%s4 + $0x80] sm:$0xff]
        %v3586 = vld [vmem:[%s4 + $0x88] sm:$0xff]
        %v3587 = vld [vmem:[%s4 + $0x90] sm:$0xff]
        %v3588 = vld [vmem:[%s4 + $0x98] sm:$0xff]
        %v3589 = vld [vmem:[%s4 + $0xa0] sm:$0xff]
        %v3590 = vld [vmem:[%s4 + $0xa8] sm:$0xff]
        %v3591 = vld [vmem:[%s4 + $0xb0] sm:$0xff]
        %v3592 = vld [vmem:[%s4 + $0xb8] sm:$0xff]
        %v3593 = vld [vmem:[%s4 + $0xc0] sm:$0xff]
        %v3594 = vld [vmem:[%s4 + $0xc8] sm:$0xff]
        %v3595 = vld [vmem:[%s4 + $0xd0] sm:$0xff]
        %v3596 = vld [vmem:[%s4 + $0xd8] sm:$0xff]
        %v3597 = vld [vmem:[%s4 + $0xe0] sm:$0xff]
        %v3598 = vld [vmem:[%s4 + $0xe8] sm:$0xff]
        %v3599 = vld [vmem:[%s4 + $0xf0] sm:$0xff]
        %v3600 = vld [vmem:[%s4 + $0xf8] sm:$0xff]
        %v3601 = vld [vmem:[%s4 + $0x100] sm:$0xff]
        %v3602 = vld [vmem:[%s4 + $0x108] sm:$0xff]
        %v3603 = vld [vmem:[%s4 + $0x110] sm:$0xff]
        %v3604 = vld [vmem:[%s4 + $0x118] sm:$0xff]
        %v3605 = vld [vmem:[%s4 + $0x120] sm:$0xff]
        %v3606 = vld [vmem:[%s4 + $0x128] sm:$0xff]
        %v3607 = vld [vmem:[%s4 + $0x130] sm:$0xff]
        %v3608 = vld [vmem:[%s4 + $0x138] sm:$0xff]
        %v3609 = vld [vmem:[%s4 + $0x140] sm:$0xff]
        %v3610 = vld [vmem:[%s4 + $0x148] sm:$0xff]
        %v3611 = vld [vmem:[%s4 + $0x150] sm:$0xff]
        %v3612 = vld [vmem:[%s4 + $0x158] sm:$0xff]
        %v3613 = vld [vmem:[%s4 + $0x160] sm:$0xff]
        %v3614 = vld [vmem:[%s4 + $0x168] sm:$0xff]
        %v3615 = vld [vmem:[%s4 + $0x170] sm:$0xff]
        %v3616 = vld [vmem:[%s4 + $0x178] sm:$0xff]
        %v3617 = vld [vmem:[%s4 + $0x180] sm:$0xff]
        %v3618 = vld [vmem:[%s4 + $0x188] sm:$0xff]
        %v3619 = vld [vmem:[%s4 + $0x190] sm:$0xff]
        %v3620 = vld [vmem:[%s4 + $0x198] sm:$0xff]
        %v3621 = vld [vmem:[%s4 + $0x1a0] sm:$0xff]
        %v3622 = vld [vmem:[%s4 + $0x1a8] sm:$0xff]
        %v3623 = vld [vmem:[%s4 + $0x1b0] sm:$0xff]
        %v3624 = vld [vmem:[%s4 + $0x1b8] sm:$0xff]
        %v3625 = vld [vmem:[%s4 + $0x1c0] sm:$0xff]
        %v3626 = vld [vmem:[%s4 + $0x1c8] sm:$0xff]
        %v3627 = vld [vmem:[%s4 + $0x1d0] sm:$0xff]
        %v3628 = vld [vmem:[%s4 + $0x1d8] sm:$0xff]
        %v3629 = vld [vmem:[%s4 + $0x1e0] sm:$0xff]
        %v3630 = vld [vmem:[%s4 + $0x1e8] sm:$0xff]
        %v3631 = vld [vmem:[%s4 + $0x1f0] sm:$0xff]
        %v3632 = vld [vmem:[%s4 + $0x1f8] sm:$0xff]
        %v3633 = vld [vmem:[%s4 + $0x200] sm:$0xff]
        %v3634 = vld [vmem:[%s4 + $0x208] sm:$0xff]
        %v3635 = vld [vmem:[%s4 + $0x210] sm:$0xff]
        %v3636 = vld [vmem:[%s4 + $0x218] sm:$0xff]
        %v3637 = vld [vmem:[%s4 + $0x220] sm:$0xff]
        %v3638 = vld [vmem:[%s4 + $0x228] sm:$0xff]
        %v3639 = vld [vmem:[%s4 + $0x230] sm:$0xff]
        %v3640 = vld [vmem:[%s4 + $0x238] sm:$0xff]
        %v3642 = vsel %vm358, %v3533, 0
        %v3645 = vsel %vm358, %v3538, 0
        %v3648 = vsel %vm358, %v3543, 0
        %v3651 = vsel %vm358, %v3548, 0
        %v3654 = vsel %vm358, %v3553, 0
        %v3657 = vsel %vm358, %v3558, 0
        %v3660 = vsel %vm358, %v3563, 0
        %v3663 = vsel %vm358, %v3568, 0
        %3665 = vmatprep.subr.mxu0 0.0
        %3666 = vmatpush1.msra.mxu0 %v3584
        %3667 = vmatprep.subr.mxu0 0.0
        %3668 = vmatpush1.msra.mxu0 %v3583
        %3669 = vmatprep.subr.mxu0 0.0
        %3670 = vmatpush1.msra.mxu0 %v3582
        %3671 = vmatprep.subr.mxu0 0.0
        %3672 = vmatpush1.msra.mxu0 %v3581
        %3673 = vmatprep.subr.mxu0 0.0
        %3674 = vmatpush1.msra.mxu0 %v3580
        %3675 = vmatprep.subr.mxu0 0.0
        %3676 = vmatpush1.msra.mxu0 %v3579
        %3677 = vmatprep.subr.mxu0 0.0
        %3678 = vmatpush1.msra.mxu0 %v3578
        %3679 = vmatprep.subr.mxu0 0.0
        %3680 = vmatpush1.msra.mxu0 %v3577
        %3681 = vmatprep.subr.mxu0 0.0
        %3682 = vmatpush1.msra.mxu0 %v3576
        %3683 = vmatprep.subr.mxu0 0.0
        %3684 = vmatpush1.msra.mxu0 %v3575
        %3685 = vmatprep.subr.mxu0 0.0
        %3686 = vmatpush1.msra.mxu0 %v3574
        %3687 = vmatprep.subr.mxu0 0.0
        %3688 = vmatpush1.msra.mxu0 %v3573
        %3689 = vmatprep.subr.mxu0 0.0
        %3690 = vmatpush1.msra.mxu0 %v3572
        %3691 = vmatprep.subr.mxu0 0.0
        %3692 = vmatpush1.msra.mxu0 %v3571
        %3693 = vmatprep.subr.mxu0 0.0
        %3694 = vmatpush1.msra.mxu0 %v3570
        %3695 = vmatprep.subr.mxu0 0.0
        %3696 = vmatpush1.msra.mxu0 %v3569
        %3697 = vmatprep.subr.mxu0 0.0
        %3698 = vmatpush2.msra.mxu0 %v3600
        %3699 = vmatprep.subr.mxu0 0.0
        %3700 = vmatpush2.msra.mxu0 %v3599
        %3701 = vmatprep.subr.mxu0 0.0
        %3702 = vmatpush2.msra.mxu0 %v3598
        %3703 = vmatprep.subr.mxu0 0.0
        %3704 = vmatpush2.msra.mxu0 %v3597
        %3705 = vmatprep.subr.mxu0 0.0
        %3706 = vmatpush2.msra.mxu0 %v3596
        %3707 = vmatprep.subr.mxu0 0.0
        %3708 = vmatpush2.msra.mxu0 %v3595
        %3709 = vmatprep.subr.mxu0 0.0
        %3710 = vmatpush2.msra.mxu0 %v3594
        %3711 = vmatprep.subr.mxu0 0.0
        %3712 = vmatpush2.msra.mxu0 %v3593
        %3713 = vmatprep.subr.mxu0 0.0
        %3714 = vmatpush2.msra.mxu0 %v3592
        %3715 = vmatprep.subr.mxu0 0.0
        %3716 = vmatpush2.msra.mxu0 %v3591
        %3717 = vmatprep.subr.mxu0 0.0
        %3718 = vmatpush2.msra.mxu0 %v3590
        %3719 = vmatprep.subr.mxu0 0.0
        %3720 = vmatpush2.msra.mxu0 %v3589
        %3721 = vmatprep.subr.mxu0 0.0
        %3722 = vmatpush2.msra.mxu0 %v3588
        %3723 = vmatprep.subr.mxu0 0.0
        %3724 = vmatpush2.msra.mxu0 %v3587
        %3725 = vmatprep.subr.mxu0 0.0
        %3726 = vmatpush2.msra.mxu0 %v3586
        %3727 = vmatprep.subr.mxu0 0.0
        %3728 = vmatpush2.msra.mxu0 %v3585
        %3729 = vmatprep.mubr.f32.mxu0 %v3530
        %3730 = vmatmul.mubr.f32.gmra.mxu0 %v3529
        %v3731 = vpop.f32.mrf.mxu0
        %v3732 = vadd.f32 0.0, %v3731
        %v3733 = vpop.f32.mrf.mxu0
        %3734 = vmatprep.mubr.f32.mxu0 %v3535
        %3735 = vmatmul.mubr.f32.gmra.mxu0 %v3534
        %v3736 = vpop.f32.mrf.mxu0
        %v3737 = vadd.f32 0.0, %v3736
        %v3738 = vpop.f32.mrf.mxu0
        %3739 = vmatprep.mubr.f32.mxu0 %v3540
        %3740 = vmatmul.mubr.f32.gmra.mxu0 %v3539
        %v3741 = vpop.f32.mrf.mxu0
        %v3742 = vadd.f32 0.0, %v3741
        %v3743 = vpop.f32.mrf.mxu0
        %3744 = vmatprep.mubr.f32.mxu0 %v3545
        %3745 = vmatmul.mubr.f32.gmra.mxu0 %v3544
        %v3746 = vpop.f32.mrf.mxu0
        %v3747 = vadd.f32 0.0, %v3746
        %v3748 = vpop.f32.mrf.mxu0
        %3749 = vmatprep.mubr.f32.mxu0 %v3550
        %3750 = vmatmul.mubr.f32.gmra.mxu0 %v3549
        %v3751 = vpop.f32.mrf.mxu0
        %v3752 = vadd.f32 0.0, %v3751
        %v3753 = vpop.f32.mrf.mxu0
        %3754 = vmatprep.mubr.f32.mxu0 %v3555
        %3755 = vmatmul.mubr.f32.gmra.mxu0 %v3554
        %v3756 = vpop.f32.mrf.mxu0
        %v3757 = vadd.f32 0.0, %v3756
        %v3758 = vpop.f32.mrf.mxu0
        %3759 = vmatprep.mubr.f32.mxu0 %v3560
        %3760 = vmatmul.mubr.f32.gmra.mxu0 %v3559
        %v3761 = vpop.f32.mrf.mxu0
        %v3762 = vadd.f32 0.0, %v3761
        %v3763 = vpop.f32.mrf.mxu0
        %3764 = vmatprep.mubr.f32.mxu0 %v3565
        %3765 = vmatmul.mubr.f32.gmra.mxu0 %v3564
        %v3766 = vpop.f32.mrf.mxu0
        %v3767 = vadd.f32 0.0, %v3766
        %v3768 = vpop.f32.mrf.mxu0
        %3769 = vdwg.mxu0
        %3770 = vmatprep.subr.mxu0 0.0
        %3771 = vmatpush1.msra.mxu0 %v3616
        %3772 = vmatprep.subr.mxu0 0.0
        %3773 = vmatpush1.msra.mxu0 %v3615
        %3774 = vmatprep.subr.mxu0 0.0
        %3775 = vmatpush1.msra.mxu0 %v3614
        %3776 = vmatprep.subr.mxu0 0.0
        %3777 = vmatpush1.msra.mxu0 %v3613
        %3778 = vmatprep.subr.mxu0 0.0
        %3779 = vmatpush1.msra.mxu0 %v3612
        %3780 = vmatprep.subr.mxu0 0.0
        %3781 = vmatpush1.msra.mxu0 %v3611
        %3782 = vmatprep.subr.mxu0 0.0
        %3783 = vmatpush1.msra.mxu0 %v3610
        %3784 = vmatprep.subr.mxu0 0.0
        %3785 = vmatpush1.msra.mxu0 %v3609
        %3786 = vmatprep.subr.mxu0 0.0
        %3787 = vmatpush1.msra.mxu0 %v3608
        %3788 = vmatprep.subr.mxu0 0.0
        %3789 = vmatpush1.msra.mxu0 %v3607
        %3790 = vmatprep.subr.mxu0 0.0
        %3791 = vmatpush1.msra.mxu0 %v3606
        %3792 = vmatprep.subr.mxu0 0.0
        %3793 = vmatpush1.msra.mxu0 %v3605
        %3794 = vmatprep.subr.mxu0 0.0
        %3795 = vmatpush1.msra.mxu0 %v3604
        %3796 = vmatprep.subr.mxu0 0.0
        %3797 = vmatpush1.msra.mxu0 %v3603
        %3798 = vmatprep.subr.mxu0 0.0
        %3799 = vmatpush1.msra.mxu0 %v3602
        %3800 = vmatprep.subr.mxu0 0.0
        %3801 = vmatpush1.msra.mxu0 %v3601
        %3802 = vmatprep.subr.mxu0 0.0
        %3803 = vmatpush2.msra.mxu0 %v3632
        %3804 = vmatprep.subr.mxu0 0.0
        %3805 = vmatpush2.msra.mxu0 %v3631
        %3806 = vmatprep.subr.mxu0 0.0
        %3807 = vmatpush2.msra.mxu0 %v3630
        %3808 = vmatprep.subr.mxu0 0.0
        %3809 = vmatpush2.msra.mxu0 %v3629
        %3810 = vmatprep.subr.mxu0 0.0
        %3811 = vmatpush2.msra.mxu0 %v3628
        %3812 = vmatprep.subr.mxu0 0.0
        %3813 = vmatpush2.msra.mxu0 %v3627
        %3814 = vmatprep.subr.mxu0 0.0
        %3815 = vmatpush2.msra.mxu0 %v3626
        %3816 = vmatprep.subr.mxu0 0.0
        %3817 = vmatpush2.msra.mxu0 %v3625
        %3818 = vmatprep.subr.mxu0 0.0
        %3819 = vmatpush2.msra.mxu0 %v3624
        %3820 = vmatprep.subr.mxu0 0.0
        %3821 = vmatpush2.msra.mxu0 %v3623
        %3822 = vmatprep.subr.mxu0 0.0
        %3823 = vmatpush2.msra.mxu0 %v3622
        %3824 = vmatprep.subr.mxu0 0.0
        %3825 = vmatpush2.msra.mxu0 %v3621
        %3826 = vmatprep.subr.mxu0 0.0
        %3827 = vmatpush2.msra.mxu0 %v3620
        %3828 = vmatprep.subr.mxu0 0.0
        %3829 = vmatpush2.msra.mxu0 %v3619
        %3830 = vmatprep.subr.mxu0 0.0
        %3831 = vmatpush2.msra.mxu0 %v3618
        %3832 = vmatprep.subr.mxu0 0.0
        %3833 = vmatpush2.msra.mxu0 %v3617
        %3834 = vmatprep.mubr.f32.mxu0 %v3532
        %3835 = vmatmul.mubr.f32.gmra.mxu0 %v3531
        %v3836 = vpop.f32.mrf.mxu0
        %v3837 = vadd.f32 %v3732, %v3836
        %v3838 = vpop.f32.mrf.mxu0
        %3839 = vmatprep.mubr.f32.mxu0 %v3537
        %3840 = vmatmul.mubr.f32.gmra.mxu0 %v3536
        %v3841 = vpop.f32.mrf.mxu0
        %v3842 = vadd.f32 %v3737, %v3841
        %v3843 = vpop.f32.mrf.mxu0
        %3844 = vmatprep.mubr.f32.mxu0 %v3542
        %3845 = vmatmul.mubr.f32.gmra.mxu0 %v3541
        %v3846 = vpop.f32.mrf.mxu0
        %v3847 = vadd.f32 %v3742, %v3846
        %v3848 = vpop.f32.mrf.mxu0
        %3849 = vmatprep.mubr.f32.mxu0 %v3547
        %3850 = vmatmul.mubr.f32.gmra.mxu0 %v3546
        %v3851 = vpop.f32.mrf.mxu0
        %v3852 = vadd.f32 %v3747, %v3851
        %v3853 = vpop.f32.mrf.mxu0
        %3854 = vmatprep.mubr.f32.mxu0 %v3552
        %3855 = vmatmul.mubr.f32.gmra.mxu0 %v3551
        %v3856 = vpop.f32.mrf.mxu0
        %v3857 = vadd.f32 %v3752, %v3856
        %v3858 = vpop.f32.mrf.mxu0
        %3859 = vmatprep.mubr.f32.mxu0 %v3557
        %3860 = vmatmul.mubr.f32.gmra.mxu0 %v3556
        %v3861 = vpop.f32.mrf.mxu0
        %v3862 = vadd.f32 %v3757, %v3861
        %v3863 = vpop.f32.mrf.mxu0
        %3864 = vmatprep.mubr.f32.mxu0 %v3562
        %3865 = vmatmul.mubr.f32.gmra.mxu0 %v3561
        %v3866 = vpop.f32.mrf.mxu0
        %v3867 = vadd.f32 %v3762, %v3866
        %v3868 = vpop.f32.mrf.mxu0
        %3869 = vmatprep.mubr.f32.mxu0 %v3567
        %3870 = vmatmul.mubr.f32.gmra.mxu0 %v3566
        %v3871 = vpop.f32.mrf.mxu0
        %v3872 = vadd.f32 %v3767, %v3871
        %v3873 = vpop.f32.mrf.mxu0
        %3874 = vdwg.mxu0
        %3875 = vmatprep.subr.mxu0 0.0
        %3876 = vmatpush1.msra.mxu0 0.0
        %3877 = vmatprep.subr.mxu0 0.0
        %3878 = vmatpush1.msra.mxu0 0.0
        %3879 = vmatprep.subr.mxu0 0.0
        %3880 = vmatpush1.msra.mxu0 0.0
        %3881 = vmatprep.subr.mxu0 0.0
        %3882 = vmatpush1.msra.mxu0 0.0
        %3883 = vmatprep.subr.mxu0 0.0
        %3884 = vmatpush1.msra.mxu0 0.0
        %3885 = vmatprep.subr.mxu0 0.0
        %3886 = vmatpush1.msra.mxu0 0.0
        %3887 = vmatprep.subr.mxu0 0.0
        %3888 = vmatpush1.msra.mxu0 0.0
        %3889 = vmatprep.subr.mxu0 0.0
        %3890 = vmatpush1.msra.mxu0 0.0
        %3891 = vmatprep.subr.mxu0 0.0
        %3892 = vmatpush1.msra.mxu0 %v3640
        %3893 = vmatprep.subr.mxu0 0.0
        %3894 = vmatpush1.msra.mxu0 %v3639
        %3895 = vmatprep.subr.mxu0 0.0
        %3896 = vmatpush1.msra.mxu0 %v3638
        %3897 = vmatprep.subr.mxu0 0.0
        %3898 = vmatpush1.msra.mxu0 %v3637
        %3899 = vmatprep.subr.mxu0 0.0
        %3900 = vmatpush1.msra.mxu0 %v3636
        %3901 = vmatprep.subr.mxu0 0.0
        %3902 = vmatpush1.msra.mxu0 %v3635
        %3903 = vmatprep.subr.mxu0 0.0
        %3904 = vmatpush1.msra.mxu0 %v3634
        %3905 = vmatprep.subr.mxu0 0.0
        %3906 = vmatpush1.msra.mxu0 %v3633
        %3907 = vmatprep.subr.mxu0 0.0
        %3908 = vmatpush2.msra.mxu0 0.0
        %3909 = vmatprep.subr.mxu0 0.0
        %3910 = vmatpush2.msra.mxu0 0.0
        %3911 = vmatprep.subr.mxu0 0.0
        %3912 = vmatpush2.msra.mxu0 0.0
        %3913 = vmatprep.subr.mxu0 0.0
        %3914 = vmatpush2.msra.mxu0 0.0
        %3915 = vmatprep.subr.mxu0 0.0
        %3916 = vmatpush2.msra.mxu0 0.0
        %3917 = vmatprep.subr.mxu0 0.0
        %3918 = vmatpush2.msra.mxu0 0.0
        %3919 = vmatprep.subr.mxu0 0.0
        %3920 = vmatpush2.msra.mxu0 0.0
        %3921 = vmatprep.subr.mxu0 0.0
        %3922 = vmatpush2.msra.mxu0 0.0
        %3923 = vmatprep.subr.mxu0 0.0
        %3924 = vmatpush2.msra.mxu0 0.0
        %3925 = vmatprep.subr.mxu0 0.0
        %3926 = vmatpush2.msra.mxu0 0.0
        %3927 = vmatprep.subr.mxu0 0.0
        %3928 = vmatpush2.msra.mxu0 0.0
        %3929 = vmatprep.subr.mxu0 0.0
        %3930 = vmatpush2.msra.mxu0 0.0
        %3931 = vmatprep.subr.mxu0 0.0
        %3932 = vmatpush2.msra.mxu0 0.0
        %3933 = vmatprep.subr.mxu0 0.0
        %3934 = vmatpush2.msra.mxu0 0.0
        %3935 = vmatprep.subr.mxu0 0.0
        %3936 = vmatpush2.msra.mxu0 0.0
        %3937 = vmatprep.subr.mxu0 0.0
        %3938 = vmatpush2.msra.mxu0 0.0
        %3939 = vmatprep.mubr.f32.mxu0 0.0
        %3940 = vmatmul.mubr.f32.gmra.mxu0 %v3642
        %v3941 = vpop.f32.mrf.mxu0
        %v3942 = vadd.f32 %v3837, %v3941
        %v3943 = vpop.f32.mrf.mxu0
        %3944 = vmatprep.mubr.f32.mxu0 0.0
        %3945 = vmatmul.mubr.f32.gmra.mxu0 %v3645
        %v3946 = vpop.f32.mrf.mxu0
        %v3947 = vadd.f32 %v3842, %v3946
        %v3948 = vpop.f32.mrf.mxu0
        %3949 = vmatprep.mubr.f32.mxu0 0.0
        %3950 = vmatmul.mubr.f32.gmra.mxu0 %v3648
        %v3951 = vpop.f32.mrf.mxu0
        %v3952 = vadd.f32 %v3847, %v3951
        %v3953 = vpop.f32.mrf.mxu0
        %3954 = vmatprep.mubr.f32.mxu0 0.0
        %3955 = vmatmul.mubr.f32.gmra.mxu0 %v3651
        %v3956 = vpop.f32.mrf.mxu0
        %v3957 = vadd.f32 %v3852, %v3956
        %v3958 = vpop.f32.mrf.mxu0
        %3959 = vmatprep.mubr.f32.mxu0 0.0
        %3960 = vmatmul.mubr.f32.gmra.mxu0 %v3654
        %v3961 = vpop.f32.mrf.mxu0
        %v3962 = vadd.f32 %v3857, %v3961
        %v3963 = vpop.f32.mrf.mxu0
        %3964 = vmatprep.mubr.f32.mxu0 0.0
        %3965 = vmatmul.mubr.f32.gmra.mxu0 %v3657
        %v3966 = vpop.f32.mrf.mxu0
        %v3967 = vadd.f32 %v3862, %v3966
        %v3968 = vpop.f32.mrf.mxu0
        %3969 = vmatprep.mubr.f32.mxu0 0.0
        %3970 = vmatmul.mubr.f32.gmra.mxu0 %v3660
        %v3971 = vpop.f32.mrf.mxu0
        %v3972 = vadd.f32 %v3867, %v3971
        %v3973 = vpop.f32.mrf.mxu0
        %3974 = vmatprep.mubr.f32.mxu0 0.0
        %3975 = vmatmul.mubr.f32.gmra.mxu0 %v3663
        %v3976 = vpop.f32.mrf.mxu0
        %v3977 = vadd.f32 %v3872, %v3976
        %v3978 = vpop.f32.mrf.mxu0
        %3979 = vdwg.mxu0
        %v3980 = vmul.f32 %v3942, %v2520
        %v3981 = vmul.f32 %v3947, %v2520
        %v3982 = vmul.f32 %v3952, %v2520
        %v3983 = vmul.f32 %v3957, %v2520
        %v3984 = vmul.f32 %v3962, %v2520
        %v3985 = vmul.f32 %v3967, %v2520
        %v3986 = vmul.f32 %v3972, %v2520
        %v3987 = vmul.f32 %v3977, %v2520
        %v3988 = vadd.f32 %v3980, %v2534
        %v3989 = vadd.f32 %v3981, %v2534
        %v3990 = vadd.f32 %v3982, %v2534
        %v3991 = vadd.f32 %v3983, %v2534
        %v3992 = vadd.f32 %v3984, %v2534
        %v3993 = vadd.f32 %v3985, %v2534
        %v3994 = vadd.f32 %v3986, %v2534
        %v3995 = vadd.f32 %v3987, %v2534
        %v3996 = vmax.f32 %v3988, 0.0
        %v3997 = vmax.f32 %v3989, 0.0
        %v3998 = vmax.f32 %v3990, 0.0
        %v3999 = vmax.f32 %v3991, 0.0
        %v4000 = vmax.f32 %v3992, 0.0
        %v4001 = vmax.f32 %v3993, 0.0
        %v4002 = vmax.f32 %v3994, 0.0
        %v4003 = vmax.f32 %v3995, 0.0
        %s4004 = scalar_lea.vmem [#allocation4], 312
        %4005 = vst [vmem:[%s4004 + $0x1] sm:$0xff] %v3996
        %4006 = vst [vmem:[%s4004 + $0x9] sm:$0xff] %v3997
        %4007 = vst [vmem:[%s4004 + $0x19] sm:$0xff] %v3998
        %4008 = vst [vmem:[%s4004 + $0x21] sm:$0xff] %v3999
        %4009 = vst [vmem:[%s4004 + $0x31] sm:$0xff] %v4000
        %4010 = vst [vmem:[%s4004 + $0x39] sm:$0xff] %v4001
        %4011 = vst [vmem:[%s4004 + $0x49] sm:$0xff] %v4002
        %4012 = vst [vmem:[%s4004 + $0x51] sm:$0xff] %v4003
        %v4013 = vld [vmem:[#allocation4] sm:$0xff]
        %v4014 = vld [vmem:[#allocation4 + $0x8] sm:$0xff]
        %v4015 = vld [vmem:[#allocation4 + $0x18] sm:$0xff]
        %v4016 = vld [vmem:[#allocation4 + $0x20] sm:$0xff]
        %v4017 = vld [vmem:[#allocation4 + $0x30] sm:$0xff]
        %v4018 = vld [vmem:[#allocation4 + $0x38] sm:$0xff]
        %v4019 = vld [vmem:[#allocation4 + $0x48] sm:$0xff]
        %v4020 = vld [vmem:[#allocation4 + $0x50] sm:$0xff]
        %v4021 = vld [vmem:[#allocation4 + $0x60] sm:$0xff]
        %v4022 = vld [vmem:[#allocation4 + $0x68] sm:$0xff]
        %v4023 = vld [vmem:[#allocation4 + $0x78] sm:$0xff]
        %v4024 = vld [vmem:[#allocation4 + $0x80] sm:$0xff]
        %v4025 = vld [vmem:[#allocation4 + $0x90] sm:$0xff]
        %v4026 = vld [vmem:[#allocation4 + $0x98] sm:$0xff]
        %v4027 = vld [vmem:[#allocation4 + $0xa8] sm:$0xff]
        %v4028 = vld [vmem:[#allocation4 + $0xb0] sm:$0xff]
        %v4029 = vld [vmem:[#allocation4 + $0xc0] sm:$0xff]
        %v4030 = vld [vmem:[#allocation4 + $0xc8] sm:$0xff]
        %v4031 = vld [vmem:[#allocation4 + $0xd8] sm:$0xff]
        %v4032 = vld [vmem:[#allocation4 + $0xe0] sm:$0xff]
        %v4033 = vld [vmem:[#allocation4 + $0xf0] sm:$0xff]
        %v4034 = vld [vmem:[#allocation4 + $0xf8] sm:$0xff]
        %v4035 = vld [vmem:[#allocation4 + $0x108] sm:$0xff]
        %v4036 = vld [vmem:[#allocation4 + $0x110] sm:$0xff]
        %v4037 = vld [vmem:[#allocation4 + $0x120] sm:$0xff]
        %v4038 = vld [vmem:[#allocation4 + $0x128] sm:$0xff]
        %v4039 = vld [vmem:[#allocation4 + $0x138] sm:$0xff]
        %v4040 = vld [vmem:[#allocation4 + $0x140] sm:$0xff]
        %v4041 = vld [vmem:[#allocation4 + $0x150] sm:$0xff]
        %v4042 = vld [vmem:[#allocation4 + $0x158] sm:$0xff]
        %v4043 = vld [vmem:[#allocation4 + $0x168] sm:$0xff]
        %v4044 = vld [vmem:[#allocation4 + $0x170] sm:$0xff]
        %4045 = vst [vmem:[#allocation5] sm:$0xff] %v4013
        %4046 = vst [vmem:[#allocation5 + $0x48] sm:$0xff] %v4014
        %4047 = vst [vmem:[#allocation5 + $0x90] sm:$0xff] %v4015
        %4048 = vst [vmem:[#allocation5 + $0xd8] sm:$0xff] %v4016
        %4049 = vst [vmem:[#allocation5 + $0x120] sm:$0xff] %v4017
        %4050 = vst [vmem:[#allocation5 + $0x168] sm:$0xff] %v4018
        %4051 = vst [vmem:[#allocation5 + $0x1b0] sm:$0xff] %v4019
        %4052 = vst [vmem:[#allocation5 + $0x1f8] sm:$0xff] %v4020
        %4053 = vst [vmem:[#allocation5 + $0x240] sm:$0xff] %v4021
        %4054 = vst [vmem:[#allocation5 + $0x288] sm:$0xff] %v4022
        %4055 = vst [vmem:[#allocation5 + $0x2d0] sm:$0xff] %v4023
        %4056 = vst [vmem:[#allocation5 + $0x318] sm:$0xff] %v4024
        %4057 = vst [vmem:[#allocation5 + $0x360] sm:$0xff] %v4025
        %4058 = vst [vmem:[#allocation5 + $0x3a8] sm:$0xff] %v4026
        %4059 = vst [vmem:[#allocation5 + $0x3f0] sm:$0xff] %v4027
        %4060 = vst [vmem:[#allocation5 + $0x438] sm:$0xff] %v4028
        %4061 = vst [vmem:[#allocation5 + $0x480] sm:$0xff] %v4029
        %4062 = vst [vmem:[#allocation5 + $0x4c8] sm:$0xff] %v4030
        %4063 = vst [vmem:[#allocation5 + $0x510] sm:$0xff] %v4031
        %4064 = vst [vmem:[#allocation5 + $0x558] sm:$0xff] %v4032
        %4065 = vst [vmem:[#allocation5 + $0x5a0] sm:$0xff] %v4033
        %4066 = vst [vmem:[#allocation5 + $0x5e8] sm:$0xff] %v4034
        %4067 = vst [vmem:[#allocation5 + $0x630] sm:$0xff] %v4035
        %4068 = vst [vmem:[#allocation5 + $0x678] sm:$0xff] %v4036
        %4069 = vst [vmem:[#allocation5 + $0x6c0] sm:$0xff] %v4037
        %4070 = vst [vmem:[#allocation5 + $0x708] sm:$0xff] %v4038
        %4071 = vst [vmem:[#allocation5 + $0x750] sm:$0xff] %v4039
        %4072 = vst [vmem:[#allocation5 + $0x798] sm:$0xff] %v4040
        %4073 = vst [vmem:[#allocation5 + $0x7e0] sm:$0xff] %v4041
        %4074 = vst [vmem:[#allocation5 + $0x828] sm:$0xff] %v4042
        %4075 = vst [vmem:[#allocation5 + $0x870] sm:$0xff] %v4043
        %4076 = vst [vmem:[#allocation5 + $0x8b8] sm:$0xff] %v4044
        %v4077 = vld [vmem:[#allocation4 + $0x1] sm:$0xff]
        %v4078 = vld [vmem:[#allocation4 + $0x9] sm:$0xff]
        %v4079 = vld [vmem:[#allocation4 + $0x19] sm:$0xff]
        %v4080 = vld [vmem:[#allocation4 + $0x21] sm:$0xff]
        %v4081 = vld [vmem:[#allocation4 + $0x31] sm:$0xff]
        %v4082 = vld [vmem:[#allocation4 + $0x39] sm:$0xff]
        %v4083 = vld [vmem:[#allocation4 + $0x49] sm:$0xff]
        %v4084 = vld [vmem:[#allocation4 + $0x51] sm:$0xff]
        %v4085 = vld [vmem:[#allocation4 + $0x61] sm:$0xff]
        %v4086 = vld [vmem:[#allocation4 + $0x69] sm:$0xff]
        %v4087 = vld [vmem:[#allocation4 + $0x79] sm:$0xff]
        %v4088 = vld [vmem:[#allocation4 + $0x81] sm:$0xff]
        %v4089 = vld [vmem:[#allocation4 + $0x91] sm:$0xff]
        %v4090 = vld [vmem:[#allocation4 + $0x99] sm:$0xff]
        %v4091 = vld [vmem:[#allocation4 + $0xa9] sm:$0xff]
        %v4092 = vld [vmem:[#allocation4 + $0xb1] sm:$0xff]
        %v4093 = vld [vmem:[#allocation4 + $0xc1] sm:$0xff]
        %v4094 = vld [vmem:[#allocation4 + $0xc9] sm:$0xff]
        %v4095 = vld [vmem:[#allocation4 + $0xd9] sm:$0xff]
        %v4096 = vld [vmem:[#allocation4 + $0xe1] sm:$0xff]
        %v4097 = vld [vmem:[#allocation4 + $0xf1] sm:$0xff]
        %v4098 = vld [vmem:[#allocation4 + $0xf9] sm:$0xff]
        %v4099 = vld [vmem:[#allocation4 + $0x109] sm:$0xff]
        %v4100 = vld [vmem:[#allocation4 + $0x111] sm:$0xff]
        %v4101 = vld [vmem:[#allocation4 + $0x121] sm:$0xff]
        %v4102 = vld [vmem:[#allocation4 + $0x129] sm:$0xff]
        %v4103 = vld [vmem:[#allocation4 + $0x139] sm:$0xff]
        %v4104 = vld [vmem:[#allocation4 + $0x141] sm:$0xff]
        %v4105 = vld [vmem:[#allocation4 + $0x151] sm:$0xff]
        %v4106 = vld [vmem:[#allocation4 + $0x159] sm:$0xff]
        %v4107 = vld [vmem:[#allocation4 + $0x169] sm:$0xff]
        %v4108 = vld [vmem:[#allocation4 + $0x171] sm:$0xff]
        %4109 = vst [vmem:[#allocation5 + $0x8] sm:$0xff] %v4077
        %4110 = vst [vmem:[#allocation5 + $0x50] sm:$0xff] %v4078
        %4111 = vst [vmem:[#allocation5 + $0x98] sm:$0xff] %v4079
        %4112 = vst [vmem:[#allocation5 + $0xe0] sm:$0xff] %v4080
        %4113 = vst [vmem:[#allocation5 + $0x128] sm:$0xff] %v4081
        %4114 = vst [vmem:[#allocation5 + $0x170] sm:$0xff] %v4082
        %4115 = vst [vmem:[#allocation5 + $0x1b8] sm:$0xff] %v4083
        %4116 = vst [vmem:[#allocation5 + $0x200] sm:$0xff] %v4084
        %4117 = vst [vmem:[#allocation5 + $0x248] sm:$0xff] %v4085
        %4118 = vst [vmem:[#allocation5 + $0x290] sm:$0xff] %v4086
        %4119 = vst [vmem:[#allocation5 + $0x2d8] sm:$0xff] %v4087
        %4120 = vst [vmem:[#allocation5 + $0x320] sm:$0xff] %v4088
        %4121 = vst [vmem:[#allocation5 + $0x368] sm:$0xff] %v4089
        %4122 = vst [vmem:[#allocation5 + $0x3b0] sm:$0xff] %v4090
        %4123 = vst [vmem:[#allocation5 + $0x3f8] sm:$0xff] %v4091
        %4124 = vst [vmem:[#allocation5 + $0x440] sm:$0xff] %v4092
        %4125 = vst [vmem:[#allocation5 + $0x488] sm:$0xff] %v4093
        %4126 = vst [vmem:[#allocation5 + $0x4d0] sm:$0xff] %v4094
        %4127 = vst [vmem:[#allocation5 + $0x518] sm:$0xff] %v4095
        %4128 = vst [vmem:[#allocation5 + $0x560] sm:$0xff] %v4096
        %4129 = vst [vmem:[#allocation5 + $0x5a8] sm:$0xff] %v4097
        %4130 = vst [vmem:[#allocation5 + $0x5f0] sm:$0xff] %v4098
        %4131 = vst [vmem:[#allocation5 + $0x638] sm:$0xff] %v4099
        %4132 = vst [vmem:[#allocation5 + $0x680] sm:$0xff] %v4100
        %4133 = vst [vmem:[#allocation5 + $0x6c8] sm:$0xff] %v4101
        %4134 = vst [vmem:[#allocation5 + $0x710] sm:$0xff] %v4102
        %4135 = vst [vmem:[#allocation5 + $0x758] sm:$0xff] %v4103
        %4136 = vst [vmem:[#allocation5 + $0x7a0] sm:$0xff] %v4104
        %4137 = vst [vmem:[#allocation5 + $0x7e8] sm:$0xff] %v4105
        %4138 = vst [vmem:[#allocation5 + $0x830] sm:$0xff] %v4106
        %4139 = vst [vmem:[#allocation5 + $0x878] sm:$0xff] %v4107
        %4140 = vst [vmem:[#allocation5 + $0x8c0] sm:$0xff] %v4108
        %v4141 = vld [vmem:[#allocation4 + $0x2] sm:$0xff]
        %v4142 = vld [vmem:[#allocation4 + $0xa] sm:$0xff]
        %v4143 = vld [vmem:[#allocation4 + $0x1a] sm:$0xff]
        %v4144 = vld [vmem:[#allocation4 + $0x22] sm:$0xff]
        %v4145 = vld [vmem:[#allocation4 + $0x32] sm:$0xff]
        %v4146 = vld [vmem:[#allocation4 + $0x3a] sm:$0xff]
        %v4147 = vld [vmem:[#allocation4 + $0x4a] sm:$0xff]
        %v4148 = vld [vmem:[#allocation4 + $0x52] sm:$0xff]
        %v4149 = vld [vmem:[#allocation4 + $0x62] sm:$0xff]
        %v4150 = vld [vmem:[#allocation4 + $0x6a] sm:$0xff]
        %v4151 = vld [vmem:[#allocation4 + $0x7a] sm:$0xff]
        %v4152 = vld [vmem:[#allocation4 + $0x82] sm:$0xff]
        %v4153 = vld [vmem:[#allocation4 + $0x92] sm:$0xff]
        %v4154 = vld [vmem:[#allocation4 + $0x9a] sm:$0xff]
        %v4155 = vld [vmem:[#allocation4 + $0xaa] sm:$0xff]
        %v4156 = vld [vmem:[#allocation4 + $0xb2] sm:$0xff]
        %v4157 = vld [vmem:[#allocation4 + $0xc2] sm:$0xff]
        %v4158 = vld [vmem:[#allocation4 + $0xca] sm:$0xff]
        %v4159 = vld [vmem:[#allocation4 + $0xda] sm:$0xff]
        %v4160 = vld [vmem:[#allocation4 + $0xe2] sm:$0xff]
        %v4161 = vld [vmem:[#allocation4 + $0xf2] sm:$0xff]
        %v4162 = vld [vmem:[#allocation4 + $0xfa] sm:$0xff]
        %v4163 = vld [vmem:[#allocation4 + $0x10a] sm:$0xff]
        %v4164 = vld [vmem:[#allocation4 + $0x112] sm:$0xff]
        %v4165 = vld [vmem:[#allocation4 + $0x122] sm:$0xff]
        %v4166 = vld [vmem:[#allocation4 + $0x12a] sm:$0xff]
        %v4167 = vld [vmem:[#allocation4 + $0x13a] sm:$0xff]
        %v4168 = vld [vmem:[#allocation4 + $0x142] sm:$0xff]
        %v4169 = vld [vmem:[#allocation4 + $0x152] sm:$0xff]
        %v4170 = vld [vmem:[#allocation4 + $0x15a] sm:$0xff]
        %v4171 = vld [vmem:[#allocation4 + $0x16a] sm:$0xff]
        %v4172 = vld [vmem:[#allocation4 + $0x172] sm:$0xff]
        %4173 = vst [vmem:[#allocation5 + $0x10] sm:$0xff] %v4141
        %4174 = vst [vmem:[#allocation5 + $0x58] sm:$0xff] %v4142
        %4175 = vst [vmem:[#allocation5 + $0xa0] sm:$0xff] %v4143
        %4176 = vst [vmem:[#allocation5 + $0xe8] sm:$0xff] %v4144
        %4177 = vst [vmem:[#allocation5 + $0x130] sm:$0xff] %v4145
        %4178 = vst [vmem:[#allocation5 + $0x178] sm:$0xff] %v4146
        %4179 = vst [vmem:[#allocation5 + $0x1c0] sm:$0xff] %v4147
        %4180 = vst [vmem:[#allocation5 + $0x208] sm:$0xff] %v4148
        %4181 = vst [vmem:[#allocation5 + $0x250] sm:$0xff] %v4149
        %4182 = vst [vmem:[#allocation5 + $0x298] sm:$0xff] %v4150
        %4183 = vst [vmem:[#allocation5 + $0x2e0] sm:$0xff] %v4151
        %4184 = vst [vmem:[#allocation5 + $0x328] sm:$0xff] %v4152
        %4185 = vst [vmem:[#allocation5 + $0x370] sm:$0xff] %v4153
        %4186 = vst [vmem:[#allocation5 + $0x3b8] sm:$0xff] %v4154
        %4187 = vst [vmem:[#allocation5 + $0x400] sm:$0xff] %v4155
        %4188 = vst [vmem:[#allocation5 + $0x448] sm:$0xff] %v4156
        %4189 = vst [vmem:[#allocation5 + $0x490] sm:$0xff] %v4157
        %4190 = vst [vmem:[#allocation5 + $0x4d8] sm:$0xff] %v4158
        %4191 = vst [vmem:[#allocation5 + $0x520] sm:$0xff] %v4159
        %4192 = vst [vmem:[#allocation5 + $0x568] sm:$0xff] %v4160
        %4193 = vst [vmem:[#allocation5 + $0x5b0] sm:$0xff] %v4161
        %4194 = vst [vmem:[#allocation5 + $0x5f8] sm:$0xff] %v4162
        %4195 = vst [vmem:[#allocation5 + $0x640] sm:$0xff] %v4163
        %4196 = vst [vmem:[#allocation5 + $0x688] sm:$0xff] %v4164
        %4197 = vst [vmem:[#allocation5 + $0x6d0] sm:$0xff] %v4165
        %4198 = vst [vmem:[#allocation5 + $0x718] sm:$0xff] %v4166
        %4199 = vst [vmem:[#allocation5 + $0x760] sm:$0xff] %v4167
        %4200 = vst [vmem:[#allocation5 + $0x7a8] sm:$0xff] %v4168
        %4201 = vst [vmem:[#allocation5 + $0x7f0] sm:$0xff] %v4169
        %4202 = vst [vmem:[#allocation5 + $0x838] sm:$0xff] %v4170
        %4203 = vst [vmem:[#allocation5 + $0x880] sm:$0xff] %v4171
        %4204 = vst [vmem:[#allocation5 + $0x8c8] sm:$0xff] %v4172
        %v4205 = vld [vmem:[%s2552] sm:$0xff]
        %v4206 = vld [vmem:[%s2552 + $0x8] sm:$0xff]
        %v4207 = vld [vmem:[%s2552 + $0x18] sm:$0xff]
        %v4208 = vld [vmem:[%s2552 + $0x20] sm:$0xff]
        %v4209 = vld [vmem:[%s2552 + $0x30] sm:$0xff]
        %v4210 = vld [vmem:[%s2552 + $0x38] sm:$0xff]
        %v4211 = vld [vmem:[%s2552 + $0x48] sm:$0xff]
        %v4212 = vld [vmem:[%s2552 + $0x50] sm:$0xff]
        %v4213 = vld [vmem:[%s2552 + $0x60] sm:$0xff]
        %v4214 = vld [vmem:[%s2552 + $0x68] sm:$0xff]
        %v4215 = vld [vmem:[%s2552 + $0x78] sm:$0xff]
        %v4216 = vld [vmem:[%s2552 + $0x80] sm:$0xff]
        %v4217 = vld [vmem:[%s2552 + $0x90] sm:$0xff]
        %v4218 = vld [vmem:[%s2552 + $0x98] sm:$0xff]
        %v4219 = vld [vmem:[%s2552 + $0xa8] sm:$0xff]
        %v4220 = vld [vmem:[%s2552 + $0xb0] sm:$0xff]
        %v4221 = vld [vmem:[%s2552 + $0xc0] sm:$0xff]
        %v4222 = vld [vmem:[%s2552 + $0xc8] sm:$0xff]
        %v4223 = vld [vmem:[%s2552 + $0xd8] sm:$0xff]
        %v4224 = vld [vmem:[%s2552 + $0xe0] sm:$0xff]
        %v4225 = vld [vmem:[%s2552 + $0xf0] sm:$0xff]
        %v4226 = vld [vmem:[%s2552 + $0xf8] sm:$0xff]
        %v4227 = vld [vmem:[%s2552 + $0x108] sm:$0xff]
        %v4228 = vld [vmem:[%s2552 + $0x110] sm:$0xff]
        %v4229 = vld [vmem:[%s2552 + $0x120] sm:$0xff]
        %v4230 = vld [vmem:[%s2552 + $0x128] sm:$0xff]
        %v4231 = vld [vmem:[%s2552 + $0x138] sm:$0xff]
        %v4232 = vld [vmem:[%s2552 + $0x140] sm:$0xff]
        %v4233 = vld [vmem:[%s2552 + $0x150] sm:$0xff]
        %v4234 = vld [vmem:[%s2552 + $0x158] sm:$0xff]
        %v4235 = vld [vmem:[%s2552 + $0x168] sm:$0xff]
        %v4236 = vld [vmem:[%s2552 + $0x170] sm:$0xff]
        %4237 = vst [vmem:[#allocation5 + $0x18] sm:$0xff] %v4205
        %4238 = vst [vmem:[#allocation5 + $0x60] sm:$0xff] %v4206
        %4239 = vst [vmem:[#allocation5 + $0xa8] sm:$0xff] %v4207
        %4240 = vst [vmem:[#allocation5 + $0xf0] sm:$0xff] %v4208
        %4241 = vst [vmem:[#allocation5 + $0x138] sm:$0xff] %v4209
        %4242 = vst [vmem:[#allocation5 + $0x180] sm:$0xff] %v4210
        %4243 = vst [vmem:[#allocation5 + $0x1c8] sm:$0xff] %v4211
        %4244 = vst [vmem:[#allocation5 + $0x210] sm:$0xff] %v4212
        %4245 = vst [vmem:[#allocation5 + $0x258] sm:$0xff] %v4213
        %4246 = vst [vmem:[#allocation5 + $0x2a0] sm:$0xff] %v4214
        %4247 = vst [vmem:[#allocation5 + $0x2e8] sm:$0xff] %v4215
        %4248 = vst [vmem:[#allocation5 + $0x330] sm:$0xff] %v4216
        %4249 = vst [vmem:[#allocation5 + $0x378] sm:$0xff] %v4217
        %4250 = vst [vmem:[#allocation5 + $0x3c0] sm:$0xff] %v4218
        %4251 = vst [vmem:[#allocation5 + $0x408] sm:$0xff] %v4219
        %4252 = vst [vmem:[#allocation5 + $0x450] sm:$0xff] %v4220
        %4253 = vst [vmem:[#allocation5 + $0x498] sm:$0xff] %v4221
        %4254 = vst [vmem:[#allocation5 + $0x4e0] sm:$0xff] %v4222
        %4255 = vst [vmem:[#allocation5 + $0x528] sm:$0xff] %v4223
        %4256 = vst [vmem:[#allocation5 + $0x570] sm:$0xff] %v4224
        %4257 = vst [vmem:[#allocation5 + $0x5b8] sm:$0xff] %v4225
        %4258 = vst [vmem:[#allocation5 + $0x600] sm:$0xff] %v4226
        %4259 = vst [vmem:[#allocation5 + $0x648] sm:$0xff] %v4227
        %4260 = vst [vmem:[#allocation5 + $0x690] sm:$0xff] %v4228
        %4261 = vst [vmem:[#allocation5 + $0x6d8] sm:$0xff] %v4229
        %4262 = vst [vmem:[#allocation5 + $0x720] sm:$0xff] %v4230
        %4263 = vst [vmem:[#allocation5 + $0x768] sm:$0xff] %v4231
        %4264 = vst [vmem:[#allocation5 + $0x7b0] sm:$0xff] %v4232
        %4265 = vst [vmem:[#allocation5 + $0x7f8] sm:$0xff] %v4233
        %4266 = vst [vmem:[#allocation5 + $0x840] sm:$0xff] %v4234
        %4267 = vst [vmem:[#allocation5 + $0x888] sm:$0xff] %v4235
        %4268 = vst [vmem:[#allocation5 + $0x8d0] sm:$0xff] %v4236
        %v4269 = vld [vmem:[%s2552 + $0x1] sm:$0xff]
        %v4270 = vld [vmem:[%s2552 + $0x9] sm:$0xff]
        %v4271 = vld [vmem:[%s2552 + $0x19] sm:$0xff]
        %v4272 = vld [vmem:[%s2552 + $0x21] sm:$0xff]
        %v4273 = vld [vmem:[%s2552 + $0x31] sm:$0xff]
        %v4274 = vld [vmem:[%s2552 + $0x39] sm:$0xff]
        %v4275 = vld [vmem:[%s2552 + $0x49] sm:$0xff]
        %v4276 = vld [vmem:[%s2552 + $0x51] sm:$0xff]
        %v4277 = vld [vmem:[%s2552 + $0x61] sm:$0xff]
        %v4278 = vld [vmem:[%s2552 + $0x69] sm:$0xff]
        %v4279 = vld [vmem:[%s2552 + $0x79] sm:$0xff]
        %v4280 = vld [vmem:[%s2552 + $0x81] sm:$0xff]
        %v4281 = vld [vmem:[%s2552 + $0x91] sm:$0xff]
        %v4282 = vld [vmem:[%s2552 + $0x99] sm:$0xff]
        %v4283 = vld [vmem:[%s2552 + $0xa9] sm:$0xff]
        %v4284 = vld [vmem:[%s2552 + $0xb1] sm:$0xff]
        %v4285 = vld [vmem:[%s2552 + $0xc1] sm:$0xff]
        %v4286 = vld [vmem:[%s2552 + $0xc9] sm:$0xff]
        %v4287 = vld [vmem:[%s2552 + $0xd9] sm:$0xff]
        %v4288 = vld [vmem:[%s2552 + $0xe1] sm:$0xff]
        %v4289 = vld [vmem:[%s2552 + $0xf1] sm:$0xff]
        %v4290 = vld [vmem:[%s2552 + $0xf9] sm:$0xff]
        %v4291 = vld [vmem:[%s2552 + $0x109] sm:$0xff]
        %v4292 = vld [vmem:[%s2552 + $0x111] sm:$0xff]
        %v4293 = vld [vmem:[%s2552 + $0x121] sm:$0xff]
        %v4294 = vld [vmem:[%s2552 + $0x129] sm:$0xff]
        %v4295 = vld [vmem:[%s2552 + $0x139] sm:$0xff]
        %v4296 = vld [vmem:[%s2552 + $0x141] sm:$0xff]
        %v4297 = vld [vmem:[%s2552 + $0x151] sm:$0xff]
        %v4298 = vld [vmem:[%s2552 + $0x159] sm:$0xff]
        %v4299 = vld [vmem:[%s2552 + $0x169] sm:$0xff]
        %v4300 = vld [vmem:[%s2552 + $0x171] sm:$0xff]
        %4301 = vst [vmem:[#allocation5 + $0x20] sm:$0xff] %v4269
        %4302 = vst [vmem:[#allocation5 + $0x68] sm:$0xff] %v4270
        %4303 = vst [vmem:[#allocation5 + $0xb0] sm:$0xff] %v4271
        %4304 = vst [vmem:[#allocation5 + $0xf8] sm:$0xff] %v4272
        %4305 = vst [vmem:[#allocation5 + $0x140] sm:$0xff] %v4273
        %4306 = vst [vmem:[#allocation5 + $0x188] sm:$0xff] %v4274
        %4307 = vst [vmem:[#allocation5 + $0x1d0] sm:$0xff] %v4275
        %4308 = vst [vmem:[#allocation5 + $0x218] sm:$0xff] %v4276
        %4309 = vst [vmem:[#allocation5 + $0x260] sm:$0xff] %v4277
        %4310 = vst [vmem:[#allocation5 + $0x2a8] sm:$0xff] %v4278
        %4311 = vst [vmem:[#allocation5 + $0x2f0] sm:$0xff] %v4279
        %4312 = vst [vmem:[#allocation5 + $0x338] sm:$0xff] %v4280
        %4313 = vst [vmem:[#allocation5 + $0x380] sm:$0xff] %v4281
        %4314 = vst [vmem:[#allocation5 + $0x3c8] sm:$0xff] %v4282
        %4315 = vst [vmem:[#allocation5 + $0x410] sm:$0xff] %v4283
        %4316 = vst [vmem:[#allocation5 + $0x458] sm:$0xff] %v4284
        %4317 = vst [vmem:[#allocation5 + $0x4a0] sm:$0xff] %v4285
        %4318 = vst [vmem:[#allocation5 + $0x4e8] sm:$0xff] %v4286
        %4319 = vst [vmem:[#allocation5 + $0x530] sm:$0xff] %v4287
        %4320 = vst [vmem:[#allocation5 + $0x578] sm:$0xff] %v4288
        %4321 = vst [vmem:[#allocation5 + $0x5c0] sm:$0xff] %v4289
        %4322 = vst [vmem:[#allocation5 + $0x608] sm:$0xff] %v4290
        %4323 = vst [vmem:[#allocation5 + $0x650] sm:$0xff] %v4291
        %4324 = vst [vmem:[#allocation5 + $0x698] sm:$0xff] %v4292
        %4325 = vst [vmem:[#allocation5 + $0x6e0] sm:$0xff] %v4293
        %4326 = vst [vmem:[#allocation5 + $0x728] sm:$0xff] %v4294
        %4327 = vst [vmem:[#allocation5 + $0x770] sm:$0xff] %v4295
        %4328 = vst [vmem:[#allocation5 + $0x7b8] sm:$0xff] %v4296
        %4329 = vst [vmem:[#allocation5 + $0x800] sm:$0xff] %v4297
        %4330 = vst [vmem:[#allocation5 + $0x848] sm:$0xff] %v4298
        %4331 = vst [vmem:[#allocation5 + $0x890] sm:$0xff] %v4299
        %4332 = vst [vmem:[#allocation5 + $0x8d8] sm:$0xff] %v4300
        %v4333 = vld [vmem:[%s2552 + $0x2] sm:$0xff]
        %v4334 = vld [vmem:[%s2552 + $0xa] sm:$0xff]
        %v4335 = vld [vmem:[%s2552 + $0x1a] sm:$0xff]
        %v4336 = vld [vmem:[%s2552 + $0x22] sm:$0xff]
        %v4337 = vld [vmem:[%s2552 + $0x32] sm:$0xff]
        %v4338 = vld [vmem:[%s2552 + $0x3a] sm:$0xff]
        %v4339 = vld [vmem:[%s2552 + $0x4a] sm:$0xff]
        %v4340 = vld [vmem:[%s2552 + $0x52] sm:$0xff]
        %v4341 = vld [vmem:[%s2552 + $0x62] sm:$0xff]
        %v4342 = vld [vmem:[%s2552 + $0x6a] sm:$0xff]
        %v4343 = vld [vmem:[%s2552 + $0x7a] sm:$0xff]
        %v4344 = vld [vmem:[%s2552 + $0x82] sm:$0xff]
        %v4345 = vld [vmem:[%s2552 + $0x92] sm:$0xff]
        %v4346 = vld [vmem:[%s2552 + $0x9a] sm:$0xff]
        %v4347 = vld [vmem:[%s2552 + $0xaa] sm:$0xff]
        %v4348 = vld [vmem:[%s2552 + $0xb2] sm:$0xff]
        %v4349 = vld [vmem:[%s2552 + $0xc2] sm:$0xff]
        %v4350 = vld [vmem:[%s2552 + $0xca] sm:$0xff]
        %v4351 = vld [vmem:[%s2552 + $0xda] sm:$0xff]
        %v4352 = vld [vmem:[%s2552 + $0xe2] sm:$0xff]
        %v4353 = vld [vmem:[%s2552 + $0xf2] sm:$0xff]
        %v4354 = vld [vmem:[%s2552 + $0xfa] sm:$0xff]
        %v4355 = vld [vmem:[%s2552 + $0x10a] sm:$0xff]
        %v4356 = vld [vmem:[%s2552 + $0x112] sm:$0xff]
        %v4357 = vld [vmem:[%s2552 + $0x122] sm:$0xff]
        %v4358 = vld [vmem:[%s2552 + $0x12a] sm:$0xff]
        %v4359 = vld [vmem:[%s2552 + $0x13a] sm:$0xff]
        %v4360 = vld [vmem:[%s2552 + $0x142] sm:$0xff]
        %v4361 = vld [vmem:[%s2552 + $0x152] sm:$0xff]
        %v4362 = vld [vmem:[%s2552 + $0x15a] sm:$0xff]
        %v4363 = vld [vmem:[%s2552 + $0x16a] sm:$0xff]
        %v4364 = vld [vmem:[%s2552 + $0x172] sm:$0xff]
        %4365 = vst [vmem:[#allocation5 + $0x28] sm:$0xff] %v4333
        %4366 = vst [vmem:[#allocation5 + $0x70] sm:$0xff] %v4334
        %4367 = vst [vmem:[#allocation5 + $0xb8] sm:$0xff] %v4335
        %4368 = vst [vmem:[#allocation5 + $0x100] sm:$0xff] %v4336
        %4369 = vst [vmem:[#allocation5 + $0x148] sm:$0xff] %v4337
        %4370 = vst [vmem:[#allocation5 + $0x190] sm:$0xff] %v4338
        %4371 = vst [vmem:[#allocation5 + $0x1d8] sm:$0xff] %v4339
        %4372 = vst [vmem:[#allocation5 + $0x220] sm:$0xff] %v4340
        %4373 = vst [vmem:[#allocation5 + $0x268] sm:$0xff] %v4341
        %4374 = vst [vmem:[#allocation5 + $0x2b0] sm:$0xff] %v4342
        %4375 = vst [vmem:[#allocation5 + $0x2f8] sm:$0xff] %v4343
        %4376 = vst [vmem:[#allocation5 + $0x340] sm:$0xff] %v4344
        %4377 = vst [vmem:[#allocation5 + $0x388] sm:$0xff] %v4345
        %4378 = vst [vmem:[#allocation5 + $0x3d0] sm:$0xff] %v4346
        %4379 = vst [vmem:[#allocation5 + $0x418] sm:$0xff] %v4347
        %4380 = vst [vmem:[#allocation5 + $0x460] sm:$0xff] %v4348
        %4381 = vst [vmem:[#allocation5 + $0x4a8] sm:$0xff] %v4349
        %4382 = vst [vmem:[#allocation5 + $0x4f0] sm:$0xff] %v4350
        %4383 = vst [vmem:[#allocation5 + $0x538] sm:$0xff] %v4351
        %4384 = vst [vmem:[#allocation5 + $0x580] sm:$0xff] %v4352
        %4385 = vst [vmem:[#allocation5 + $0x5c8] sm:$0xff] %v4353
        %4386 = vst [vmem:[#allocation5 + $0x610] sm:$0xff] %v4354
        %4387 = vst [vmem:[#allocation5 + $0x658] sm:$0xff] %v4355
        %4388 = vst [vmem:[#allocation5 + $0x6a0] sm:$0xff] %v4356
        %4389 = vst [vmem:[#allocation5 + $0x6e8] sm:$0xff] %v4357
        %4390 = vst [vmem:[#allocation5 + $0x730] sm:$0xff] %v4358
        %4391 = vst [vmem:[#allocation5 + $0x778] sm:$0xff] %v4359
        %4392 = vst [vmem:[#allocation5 + $0x7c0] sm:$0xff] %v4360
        %4393 = vst [vmem:[#allocation5 + $0x808] sm:$0xff] %v4361
        %4394 = vst [vmem:[#allocation5 + $0x850] sm:$0xff] %v4362
        %4395 = vst [vmem:[#allocation5 + $0x898] sm:$0xff] %v4363
        %4396 = vst [vmem:[#allocation5 + $0x8e0] sm:$0xff] %v4364
        %s4397 = scalar_lea.vmem [#allocation4], 48
        %v4398 = vld [vmem:[%s4397] sm:$0xff]
        %v4399 = vld [vmem:[%s4397 + $0x8] sm:$0xff]
        %v4400 = vld [vmem:[%s4397 + $0x18] sm:$0xff]
        %v4401 = vld [vmem:[%s4397 + $0x20] sm:$0xff]
        %v4402 = vld [vmem:[%s4397 + $0x30] sm:$0xff]
        %v4403 = vld [vmem:[%s4397 + $0x38] sm:$0xff]
        %v4404 = vld [vmem:[%s4397 + $0x48] sm:$0xff]
        %v4405 = vld [vmem:[%s4397 + $0x50] sm:$0xff]
        %v4406 = vld [vmem:[%s4397 + $0x60] sm:$0xff]
        %v4407 = vld [vmem:[%s4397 + $0x68] sm:$0xff]
        %v4408 = vld [vmem:[%s4397 + $0x78] sm:$0xff]
        %v4409 = vld [vmem:[%s4397 + $0x80] sm:$0xff]
        %v4410 = vld [vmem:[%s4397 + $0x90] sm:$0xff]
        %v4411 = vld [vmem:[%s4397 + $0x98] sm:$0xff]
        %v4412 = vld [vmem:[%s4397 + $0xa8] sm:$0xff]
        %v4413 = vld [vmem:[%s4397 + $0xb0] sm:$0xff]
        %v4414 = vld [vmem:[%s4397 + $0xc0] sm:$0xff]
        %v4415 = vld [vmem:[%s4397 + $0xc8] sm:$0xff]
        %v4416 = vld [vmem:[%s4397 + $0xd8] sm:$0xff]
        %v4417 = vld [vmem:[%s4397 + $0xe0] sm:$0xff]
        %v4418 = vld [vmem:[%s4397 + $0xf0] sm:$0xff]
        %v4419 = vld [vmem:[%s4397 + $0xf8] sm:$0xff]
        %v4420 = vld [vmem:[%s4397 + $0x108] sm:$0xff]
        %v4421 = vld [vmem:[%s4397 + $0x110] sm:$0xff]
        %v4422 = vld [vmem:[%s4397 + $0x120] sm:$0xff]
        %v4423 = vld [vmem:[%s4397 + $0x128] sm:$0xff]
        %v4424 = vld [vmem:[%s4397 + $0x138] sm:$0xff]
        %v4425 = vld [vmem:[%s4397 + $0x140] sm:$0xff]
        %v4426 = vld [vmem:[%s4397 + $0x150] sm:$0xff]
        %v4427 = vld [vmem:[%s4397 + $0x158] sm:$0xff]
        %v4428 = vld [vmem:[%s4397 + $0x168] sm:$0xff]
        %v4429 = vld [vmem:[%s4397 + $0x170] sm:$0xff]
        %4430 = vst [vmem:[#allocation5 + $0x30] sm:$0xff] %v4398
        %4431 = vst [vmem:[#allocation5 + $0x78] sm:$0xff] %v4399
        %4432 = vst [vmem:[#allocation5 + $0xc0] sm:$0xff] %v4400
        %4433 = vst [vmem:[#allocation5 + $0x108] sm:$0xff] %v4401
        %4434 = vst [vmem:[#allocation5 + $0x150] sm:$0xff] %v4402
        %4435 = vst [vmem:[#allocation5 + $0x198] sm:$0xff] %v4403
        %4436 = vst [vmem:[#allocation5 + $0x1e0] sm:$0xff] %v4404
        %4437 = vst [vmem:[#allocation5 + $0x228] sm:$0xff] %v4405
        %4438 = vst [vmem:[#allocation5 + $0x270] sm:$0xff] %v4406
        %4439 = vst [vmem:[#allocation5 + $0x2b8] sm:$0xff] %v4407
        %4440 = vst [vmem:[#allocation5 + $0x300] sm:$0xff] %v4408
        %4441 = vst [vmem:[#allocation5 + $0x348] sm:$0xff] %v4409
        %4442 = vst [vmem:[#allocation5 + $0x390] sm:$0xff] %v4410
        %4443 = vst [vmem:[#allocation5 + $0x3d8] sm:$0xff] %v4411
        %4444 = vst [vmem:[#allocation5 + $0x420] sm:$0xff] %v4412
        %4445 = vst [vmem:[#allocation5 + $0x468] sm:$0xff] %v4413
        %4446 = vst [vmem:[#allocation5 + $0x4b0] sm:$0xff] %v4414
        %4447 = vst [vmem:[#allocation5 + $0x4f8] sm:$0xff] %v4415
        %4448 = vst [vmem:[#allocation5 + $0x540] sm:$0xff] %v4416
        %4449 = vst [vmem:[#allocation5 + $0x588] sm:$0xff] %v4417
        %4450 = vst [vmem:[#allocation5 + $0x5d0] sm:$0xff] %v4418
        %4451 = vst [vmem:[#allocation5 + $0x618] sm:$0xff] %v4419
        %4452 = vst [vmem:[#allocation5 + $0x660] sm:$0xff] %v4420
        %4453 = vst [vmem:[#allocation5 + $0x6a8] sm:$0xff] %v4421
        %4454 = vst [vmem:[#allocation5 + $0x6f0] sm:$0xff] %v4422
        %4455 = vst [vmem:[#allocation5 + $0x738] sm:$0xff] %v4423
        %4456 = vst [vmem:[#allocation5 + $0x780] sm:$0xff] %v4424
        %4457 = vst [vmem:[#allocation5 + $0x7c8] sm:$0xff] %v4425
        %4458 = vst [vmem:[#allocation5 + $0x810] sm:$0xff] %v4426
        %4459 = vst [vmem:[#allocation5 + $0x858] sm:$0xff] %v4427
        %4460 = vst [vmem:[#allocation5 + $0x8a0] sm:$0xff] %v4428
        %4461 = vst [vmem:[#allocation5 + $0x8e8] sm:$0xff] %v4429
        %v4462 = vld [vmem:[%s4397 + $0x1] sm:$0xff]
        %v4463 = vld [vmem:[%s4397 + $0x9] sm:$0xff]
        %v4464 = vld [vmem:[%s4397 + $0x19] sm:$0xff]
        %v4465 = vld [vmem:[%s4397 + $0x21] sm:$0xff]
        %v4466 = vld [vmem:[%s4397 + $0x31] sm:$0xff]
        %v4467 = vld [vmem:[%s4397 + $0x39] sm:$0xff]
        %v4468 = vld [vmem:[%s4397 + $0x49] sm:$0xff]
        %v4469 = vld [vmem:[%s4397 + $0x51] sm:$0xff]
        %v4470 = vld [vmem:[%s4397 + $0x61] sm:$0xff]
        %v4471 = vld [vmem:[%s4397 + $0x69] sm:$0xff]
        %v4472 = vld [vmem:[%s4397 + $0x79] sm:$0xff]
        %v4473 = vld [vmem:[%s4397 + $0x81] sm:$0xff]
        %v4474 = vld [vmem:[%s4397 + $0x91] sm:$0xff]
        %v4475 = vld [vmem:[%s4397 + $0x99] sm:$0xff]
        %v4476 = vld [vmem:[%s4397 + $0xa9] sm:$0xff]
        %v4477 = vld [vmem:[%s4397 + $0xb1] sm:$0xff]
        %v4478 = vld [vmem:[%s4397 + $0xc1] sm:$0xff]
        %v4479 = vld [vmem:[%s4397 + $0xc9] sm:$0xff]
        %v4480 = vld [vmem:[%s4397 + $0xd9] sm:$0xff]
        %v4481 = vld [vmem:[%s4397 + $0xe1] sm:$0xff]
        %v4482 = vld [vmem:[%s4397 + $0xf1] sm:$0xff]
        %v4483 = vld [vmem:[%s4397 + $0xf9] sm:$0xff]
        %v4484 = vld [vmem:[%s4397 + $0x109] sm:$0xff]
        %v4485 = vld [vmem:[%s4397 + $0x111] sm:$0xff]
        %v4486 = vld [vmem:[%s4397 + $0x121] sm:$0xff]
        %v4487 = vld [vmem:[%s4397 + $0x129] sm:$0xff]
        %v4488 = vld [vmem:[%s4397 + $0x139] sm:$0xff]
        %v4489 = vld [vmem:[%s4397 + $0x141] sm:$0xff]
        %v4490 = vld [vmem:[%s4397 + $0x151] sm:$0xff]
        %v4491 = vld [vmem:[%s4397 + $0x159] sm:$0xff]
        %v4492 = vld [vmem:[%s4397 + $0x169] sm:$0xff]
        %v4493 = vld [vmem:[%s4397 + $0x171] sm:$0xff]
        %4494 = vst [vmem:[#allocation5 + $0x38] sm:$0xff] %v4462
        %4495 = vst [vmem:[#allocation5 + $0x80] sm:$0xff] %v4463
        %4496 = vst [vmem:[#allocation5 + $0xc8] sm:$0xff] %v4464
        %4497 = vst [vmem:[#allocation5 + $0x110] sm:$0xff] %v4465
        %4498 = vst [vmem:[#allocation5 + $0x158] sm:$0xff] %v4466
        %4499 = vst [vmem:[#allocation5 + $0x1a0] sm:$0xff] %v4467
        %4500 = vst [vmem:[#allocation5 + $0x1e8] sm:$0xff] %v4468
        %4501 = vst [vmem:[#allocation5 + $0x230] sm:$0xff] %v4469
        %4502 = vst [vmem:[#allocation5 + $0x278] sm:$0xff] %v4470
        %4503 = vst [vmem:[#allocation5 + $0x2c0] sm:$0xff] %v4471
        %4504 = vst [vmem:[#allocation5 + $0x308] sm:$0xff] %v4472
        %4505 = vst [vmem:[#allocation5 + $0x350] sm:$0xff] %v4473
        %4506 = vst [vmem:[#allocation5 + $0x398] sm:$0xff] %v4474
        %4507 = vst [vmem:[#allocation5 + $0x3e0] sm:$0xff] %v4475
        %4508 = vst [vmem:[#allocation5 + $0x428] sm:$0xff] %v4476
        %4509 = vst [vmem:[#allocation5 + $0x470] sm:$0xff] %v4477
        %4510 = vst [vmem:[#allocation5 + $0x4b8] sm:$0xff] %v4478
        %4511 = vst [vmem:[#allocation5 + $0x500] sm:$0xff] %v4479
        %4512 = vst [vmem:[#allocation5 + $0x548] sm:$0xff] %v4480
        %4513 = vst [vmem:[#allocation5 + $0x590] sm:$0xff] %v4481
        %4514 = vst [vmem:[#allocation5 + $0x5d8] sm:$0xff] %v4482
        %4515 = vst [vmem:[#allocation5 + $0x620] sm:$0xff] %v4483
        %4516 = vst [vmem:[#allocation5 + $0x668] sm:$0xff] %v4484
        %4517 = vst [vmem:[#allocation5 + $0x6b0] sm:$0xff] %v4485
        %4518 = vst [vmem:[#allocation5 + $0x6f8] sm:$0xff] %v4486
        %4519 = vst [vmem:[#allocation5 + $0x740] sm:$0xff] %v4487
        %4520 = vst [vmem:[#allocation5 + $0x788] sm:$0xff] %v4488
        %4521 = vst [vmem:[#allocation5 + $0x7d0] sm:$0xff] %v4489
        %4522 = vst [vmem:[#allocation5 + $0x818] sm:$0xff] %v4490
        %4523 = vst [vmem:[#allocation5 + $0x860] sm:$0xff] %v4491
        %4524 = vst [vmem:[#allocation5 + $0x8a8] sm:$0xff] %v4492
        %4525 = vst [vmem:[#allocation5 + $0x8f0] sm:$0xff] %v4493
        %v4526 = vld [vmem:[%s4397 + $0x2] sm:$0xff]
        %v4527 = vld [vmem:[%s4397 + $0xa] sm:$0xff]
        %v4528 = vld [vmem:[%s4397 + $0x1a] sm:$0xff]
        %v4529 = vld [vmem:[%s4397 + $0x22] sm:$0xff]
        %v4530 = vld [vmem:[%s4397 + $0x32] sm:$0xff]
        %v4531 = vld [vmem:[%s4397 + $0x3a] sm:$0xff]
        %v4532 = vld [vmem:[%s4397 + $0x4a] sm:$0xff]
        %v4533 = vld [vmem:[%s4397 + $0x52] sm:$0xff]
        %v4534 = vld [vmem:[%s4397 + $0x62] sm:$0xff]
        %v4535 = vld [vmem:[%s4397 + $0x6a] sm:$0xff]
        %v4536 = vld [vmem:[%s4397 + $0x7a] sm:$0xff]
        %v4537 = vld [vmem:[%s4397 + $0x82] sm:$0xff]
        %v4538 = vld [vmem:[%s4397 + $0x92] sm:$0xff]
        %v4539 = vld [vmem:[%s4397 + $0x9a] sm:$0xff]
        %v4540 = vld [vmem:[%s4397 + $0xaa] sm:$0xff]
        %v4541 = vld [vmem:[%s4397 + $0xb2] sm:$0xff]
        %v4542 = vld [vmem:[%s4397 + $0xc2] sm:$0xff]
        %v4543 = vld [vmem:[%s4397 + $0xca] sm:$0xff]
        %v4544 = vld [vmem:[%s4397 + $0xda] sm:$0xff]
        %v4545 = vld [vmem:[%s4397 + $0xe2] sm:$0xff]
        %v4546 = vld [vmem:[%s4397 + $0xf2] sm:$0xff]
        %v4547 = vld [vmem:[%s4397 + $0xfa] sm:$0xff]
        %v4548 = vld [vmem:[%s4397 + $0x10a] sm:$0xff]
        %v4549 = vld [vmem:[%s4397 + $0x112] sm:$0xff]
        %v4550 = vld [vmem:[%s4397 + $0x122] sm:$0xff]
        %v4551 = vld [vmem:[%s4397 + $0x12a] sm:$0xff]
        %v4552 = vld [vmem:[%s4397 + $0x13a] sm:$0xff]
        %v4553 = vld [vmem:[%s4397 + $0x142] sm:$0xff]
        %v4554 = vld [vmem:[%s4397 + $0x152] sm:$0xff]
        %v4555 = vld [vmem:[%s4397 + $0x15a] sm:$0xff]
        %v4556 = vld [vmem:[%s4397 + $0x16a] sm:$0xff]
        %v4557 = vld [vmem:[%s4397 + $0x172] sm:$0xff]
        %4558 = vst [vmem:[#allocation5 + $0x40] sm:$0xff] %v4526
        %4559 = vst [vmem:[#allocation5 + $0x88] sm:$0xff] %v4527
        %4560 = vst [vmem:[#allocation5 + $0xd0] sm:$0xff] %v4528
        %4561 = vst [vmem:[#allocation5 + $0x118] sm:$0xff] %v4529
        %4562 = vst [vmem:[#allocation5 + $0x160] sm:$0xff] %v4530
        %4563 = vst [vmem:[#allocation5 + $0x1a8] sm:$0xff] %v4531
        %4564 = vst [vmem:[#allocation5 + $0x1f0] sm:$0xff] %v4532
        %4565 = vst [vmem:[#allocation5 + $0x238] sm:$0xff] %v4533
        %4566 = vst [vmem:[#allocation5 + $0x280] sm:$0xff] %v4534
        %4567 = vst [vmem:[#allocation5 + $0x2c8] sm:$0xff] %v4535
        %4568 = vst [vmem:[#allocation5 + $0x310] sm:$0xff] %v4536
        %4569 = vst [vmem:[#allocation5 + $0x358] sm:$0xff] %v4537
        %4570 = vst [vmem:[#allocation5 + $0x3a0] sm:$0xff] %v4538
        %4571 = vst [vmem:[#allocation5 + $0x3e8] sm:$0xff] %v4539
        %4572 = vst [vmem:[#allocation5 + $0x430] sm:$0xff] %v4540
        %4573 = vst [vmem:[#allocation5 + $0x478] sm:$0xff] %v4541
        %4574 = vst [vmem:[#allocation5 + $0x4c0] sm:$0xff] %v4542
        %4575 = vst [vmem:[#allocation5 + $0x508] sm:$0xff] %v4543
        %4576 = vst [vmem:[#allocation5 + $0x550] sm:$0xff] %v4544
        %4577 = vst [vmem:[#allocation5 + $0x598] sm:$0xff] %v4545
        %4578 = vst [vmem:[#allocation5 + $0x5e0] sm:$0xff] %v4546
        %4579 = vst [vmem:[#allocation5 + $0x628] sm:$0xff] %v4547
        %4580 = vst [vmem:[#allocation5 + $0x670] sm:$0xff] %v4548
        %4581 = vst [vmem:[#allocation5 + $0x6b8] sm:$0xff] %v4549
        %4582 = vst [vmem:[#allocation5 + $0x700] sm:$0xff] %v4550
        %4583 = vst [vmem:[#allocation5 + $0x748] sm:$0xff] %v4551
        %4584 = vst [vmem:[#allocation5 + $0x790] sm:$0xff] %v4552
        %4585 = vst [vmem:[#allocation5 + $0x7d8] sm:$0xff] %v4553
        %4586 = vst [vmem:[#allocation5 + $0x820] sm:$0xff] %v4554
        %4587 = vst [vmem:[#allocation5 + $0x868] sm:$0xff] %v4555
        %4588 = vst [vmem:[#allocation5 + $0x8b0] sm:$0xff] %v4556
        %4589 = vst [vmem:[#allocation5 + $0x8f8] sm:$0xff] %v4557
        %v4590 = vld [vmem:[%s8] sm:$0x3]
        %v4591 = vld [vmem:[%s9] sm:$0x3]
        %v4592 = vld [vmem:[#allocation5] sm:$0xff]
        %v4593 = vld [vmem:[#allocation5 + $0x8] sm:$0xff]
        %v4594 = vld [vmem:[#allocation5 + $0x10] sm:$0xff]
        %v4595 = vld [vmem:[#allocation5 + $0x18] sm:$0xff]
        %v4596 = vld [vmem:[#allocation5 + $0x20] sm:$0xff]
        %v4597 = vld [vmem:[#allocation5 + $0x28] sm:$0xff]
        %v4598 = vld [vmem:[#allocation5 + $0x30] sm:$0xff]
        %v4599 = vld [vmem:[#allocation5 + $0x38] sm:$0xff]
        %v4600 = vld [vmem:[#allocation5 + $0x40] sm:$0xff]
        %v4601 = vld [vmem:[#allocation5 + $0x48] sm:$0xff]
        %v4602 = vld [vmem:[#allocation5 + $0x50] sm:$0xff]
        %v4603 = vld [vmem:[#allocation5 + $0x58] sm:$0xff]
        %v4604 = vld [vmem:[#allocation5 + $0x60] sm:$0xff]
        %v4605 = vld [vmem:[#allocation5 + $0x68] sm:$0xff]
        %v4606 = vld [vmem:[#allocation5 + $0x70] sm:$0xff]
        %v4607 = vld [vmem:[#allocation5 + $0x78] sm:$0xff]
        %v4608 = vld [vmem:[#allocation5 + $0x80] sm:$0xff]
        %v4609 = vld [vmem:[#allocation5 + $0x88] sm:$0xff]
        %v4610 = vld [vmem:[#allocation5 + $0x90] sm:$0xff]
        %v4611 = vld [vmem:[#allocation5 + $0x98] sm:$0xff]
        %v4612 = vld [vmem:[#allocation5 + $0xa0] sm:$0xff]
        %v4613 = vld [vmem:[#allocation5 + $0xa8] sm:$0xff]
        %v4614 = vld [vmem:[#allocation5 + $0xb0] sm:$0xff]
        %v4615 = vld [vmem:[#allocation5 + $0xb8] sm:$0xff]
        %v4616 = vld [vmem:[#allocation5 + $0xc0] sm:$0xff]
        %v4617 = vld [vmem:[#allocation5 + $0xc8] sm:$0xff]
        %v4618 = vld [vmem:[#allocation5 + $0xd0] sm:$0xff]
        %v4619 = vld [vmem:[#allocation5 + $0xd8] sm:$0xff]
        %v4620 = vld [vmem:[#allocation5 + $0xe0] sm:$0xff]
        %v4621 = vld [vmem:[#allocation5 + $0xe8] sm:$0xff]
        %v4622 = vld [vmem:[#allocation5 + $0xf0] sm:$0xff]
        %v4623 = vld [vmem:[#allocation5 + $0xf8] sm:$0xff]
        %v4624 = vld [vmem:[#allocation5 + $0x100] sm:$0xff]
        %v4625 = vld [vmem:[#allocation5 + $0x108] sm:$0xff]
        %v4626 = vld [vmem:[#allocation5 + $0x110] sm:$0xff]
        %v4627 = vld [vmem:[#allocation5 + $0x118] sm:$0xff]
        %v4628 = vld [vmem:[#allocation5 + $0x120] sm:$0xff]
        %v4629 = vld [vmem:[#allocation5 + $0x128] sm:$0xff]
        %v4630 = vld [vmem:[#allocation5 + $0x130] sm:$0xff]
        %v4631 = vld [vmem:[#allocation5 + $0x138] sm:$0xff]
        %v4632 = vld [vmem:[#allocation5 + $0x140] sm:$0xff]
        %v4633 = vld [vmem:[#allocation5 + $0x148] sm:$0xff]
        %v4634 = vld [vmem:[#allocation5 + $0x150] sm:$0xff]
        %v4635 = vld [vmem:[#allocation5 + $0x158] sm:$0xff]
        %v4636 = vld [vmem:[#allocation5 + $0x160] sm:$0xff]
        %v4637 = vld [vmem:[#allocation5 + $0x168] sm:$0xff]
        %v4638 = vld [vmem:[#allocation5 + $0x170] sm:$0xff]
        %v4639 = vld [vmem:[#allocation5 + $0x178] sm:$0xff]
        %v4640 = vld [vmem:[#allocation5 + $0x180] sm:$0xff]
        %v4641 = vld [vmem:[#allocation5 + $0x188] sm:$0xff]
        %v4642 = vld [vmem:[#allocation5 + $0x190] sm:$0xff]
        %v4643 = vld [vmem:[#allocation5 + $0x198] sm:$0xff]
        %v4644 = vld [vmem:[#allocation5 + $0x1a0] sm:$0xff]
        %v4645 = vld [vmem:[#allocation5 + $0x1a8] sm:$0xff]
        %v4646 = vld [vmem:[#allocation5 + $0x1b0] sm:$0xff]
        %v4647 = vld [vmem:[#allocation5 + $0x1b8] sm:$0xff]
        %v4648 = vld [vmem:[#allocation5 + $0x1c0] sm:$0xff]
        %v4649 = vld [vmem:[#allocation5 + $0x1c8] sm:$0xff]
        %v4650 = vld [vmem:[#allocation5 + $0x1d0] sm:$0xff]
        %v4651 = vld [vmem:[#allocation5 + $0x1d8] sm:$0xff]
        %v4652 = vld [vmem:[#allocation5 + $0x1e0] sm:$0xff]
        %v4653 = vld [vmem:[#allocation5 + $0x1e8] sm:$0xff]
        %v4654 = vld [vmem:[#allocation5 + $0x1f0] sm:$0xff]
        %v4655 = vld [vmem:[#allocation5 + $0x1f8] sm:$0xff]
        %v4656 = vld [vmem:[#allocation5 + $0x200] sm:$0xff]
        %v4657 = vld [vmem:[#allocation5 + $0x208] sm:$0xff]
        %v4658 = vld [vmem:[#allocation5 + $0x210] sm:$0xff]
        %v4659 = vld [vmem:[#allocation5 + $0x218] sm:$0xff]
        %v4660 = vld [vmem:[#allocation5 + $0x220] sm:$0xff]
        %v4661 = vld [vmem:[#allocation5 + $0x228] sm:$0xff]
        %v4662 = vld [vmem:[#allocation5 + $0x230] sm:$0xff]
        %v4663 = vld [vmem:[#allocation5 + $0x238] sm:$0xff]
        %v4664 = vld [vmem:[%s7] sm:$0xff]
        %v4665 = vld [vmem:[%s7 + $0x8] sm:$0xff]
        %v4666 = vld [vmem:[%s7 + $0x10] sm:$0xff]
        %v4667 = vld [vmem:[%s7 + $0x18] sm:$0xff]
        %v4668 = vld [vmem:[%s7 + $0x20] sm:$0xff]
        %v4669 = vld [vmem:[%s7 + $0x28] sm:$0xff]
        %v4670 = vld [vmem:[%s7 + $0x30] sm:$0xff]
        %v4671 = vld [vmem:[%s7 + $0x38] sm:$0xff]
        %v4672 = vld [vmem:[%s7 + $0x40] sm:$0xff]
        %v4673 = vld [vmem:[%s7 + $0x48] sm:$0xff]
        %v4674 = vld [vmem:[%s7 + $0x50] sm:$0xff]
        %v4675 = vld [vmem:[%s7 + $0x58] sm:$0xff]
        %v4676 = vld [vmem:[%s7 + $0x60] sm:$0xff]
        %v4677 = vld [vmem:[%s7 + $0x68] sm:$0xff]
        %v4678 = vld [vmem:[%s7 + $0x70] sm:$0xff]
        %v4679 = vld [vmem:[%s7 + $0x78] sm:$0xff]
        %v4680 = vld [vmem:[%s7 + $0x80] sm:$0xff]
        %v4681 = vld [vmem:[%s7 + $0x88] sm:$0xff]
        %v4682 = vld [vmem:[%s7 + $0x90] sm:$0xff]
        %v4683 = vld [vmem:[%s7 + $0x98] sm:$0xff]
        %v4684 = vld [vmem:[%s7 + $0xa0] sm:$0xff]
        %v4685 = vld [vmem:[%s7 + $0xa8] sm:$0xff]
        %v4686 = vld [vmem:[%s7 + $0xb0] sm:$0xff]
        %v4687 = vld [vmem:[%s7 + $0xb8] sm:$0xff]
        %v4688 = vld [vmem:[%s7 + $0xc0] sm:$0xff]
        %v4689 = vld [vmem:[%s7 + $0xc8] sm:$0xff]
        %v4690 = vld [vmem:[%s7 + $0xd0] sm:$0xff]
        %v4691 = vld [vmem:[%s7 + $0xd8] sm:$0xff]
        %v4692 = vld [vmem:[%s7 + $0xe0] sm:$0xff]
        %v4693 = vld [vmem:[%s7 + $0xe8] sm:$0xff]
        %v4694 = vld [vmem:[%s7 + $0xf0] sm:$0xff]
        %v4695 = vld [vmem:[%s7 + $0xf8] sm:$0xff]
        %v4696 = vld [vmem:[%s7 + $0x100] sm:$0xff]
        %v4697 = vld [vmem:[%s7 + $0x108] sm:$0xff]
        %v4698 = vld [vmem:[%s7 + $0x110] sm:$0xff]
        %v4699 = vld [vmem:[%s7 + $0x118] sm:$0xff]
        %v4700 = vld [vmem:[%s7 + $0x120] sm:$0xff]
        %v4701 = vld [vmem:[%s7 + $0x128] sm:$0xff]
        %v4702 = vld [vmem:[%s7 + $0x130] sm:$0xff]
        %v4703 = vld [vmem:[%s7 + $0x138] sm:$0xff]
        %v4704 = vld [vmem:[%s7 + $0x140] sm:$0xff]
        %v4705 = vld [vmem:[%s7 + $0x148] sm:$0xff]
        %v4706 = vld [vmem:[%s7 + $0x150] sm:$0xff]
        %v4707 = vld [vmem:[%s7 + $0x158] sm:$0xff]
        %v4708 = vld [vmem:[%s7 + $0x160] sm:$0xff]
        %v4709 = vld [vmem:[%s7 + $0x168] sm:$0xff]
        %v4710 = vld [vmem:[%s7 + $0x170] sm:$0xff]
        %v4711 = vld [vmem:[%s7 + $0x178] sm:$0xff]
        %v4712 = vld [vmem:[%s7 + $0x180] sm:$0xff]
        %v4713 = vld [vmem:[%s7 + $0x188] sm:$0xff]
        %v4714 = vld [vmem:[%s7 + $0x190] sm:$0xff]
        %v4715 = vld [vmem:[%s7 + $0x198] sm:$0xff]
        %v4716 = vld [vmem:[%s7 + $0x1a0] sm:$0xff]
        %v4717 = vld [vmem:[%s7 + $0x1a8] sm:$0xff]
        %v4718 = vld [vmem:[%s7 + $0x1b0] sm:$0xff]
        %v4719 = vld [vmem:[%s7 + $0x1b8] sm:$0xff]
        %v4720 = vld [vmem:[%s7 + $0x1c0] sm:$0xff]
        %v4721 = vld [vmem:[%s7 + $0x1c8] sm:$0xff]
        %v4722 = vld [vmem:[%s7 + $0x1d0] sm:$0xff]
        %v4723 = vld [vmem:[%s7 + $0x1d8] sm:$0xff]
        %v4724 = vld [vmem:[%s7 + $0x1e0] sm:$0xff]
        %v4725 = vld [vmem:[%s7 + $0x1e8] sm:$0xff]
        %v4726 = vld [vmem:[%s7 + $0x1f0] sm:$0xff]
        %v4727 = vld [vmem:[%s7 + $0x1f8] sm:$0xff]
        %v4728 = vld [vmem:[%s7 + $0x200] sm:$0xff]
        %v4729 = vld [vmem:[%s7 + $0x208] sm:$0xff]
        %v4730 = vld [vmem:[%s7 + $0x210] sm:$0xff]
        %v4731 = vld [vmem:[%s7 + $0x218] sm:$0xff]
        %v4732 = vld [vmem:[%s7 + $0x220] sm:$0xff]
        %v4733 = vld [vmem:[%s7 + $0x228] sm:$0xff]
        %v4734 = vld [vmem:[%s7 + $0x230] sm:$0xff]
        %v4735 = vld [vmem:[%s7 + $0x238] sm:$0xff]
        %v4736 = vld [vmem:[%s7 + $0x240] sm:$0xff]
        %v4737 = vld [vmem:[%s7 + $0x248] sm:$0xff]
        %v4738 = vld [vmem:[%s7 + $0x250] sm:$0xff]
        %v4739 = vld [vmem:[%s7 + $0x258] sm:$0xff]
        %v4740 = vld [vmem:[%s7 + $0x260] sm:$0xff]
        %v4741 = vld [vmem:[%s7 + $0x268] sm:$0xff]
        %v4742 = vld [vmem:[%s7 + $0x270] sm:$0xff]
        %v4743 = vld [vmem:[%s7 + $0x278] sm:$0xff]
        %v4744 = vld [vmem:[%s7 + $0x280] sm:$0xff]
        %v4745 = vld [vmem:[%s7 + $0x288] sm:$0xff]
        %v4746 = vld [vmem:[%s7 + $0x290] sm:$0xff]
        %v4747 = vld [vmem:[%s7 + $0x298] sm:$0xff]
        %v4748 = vld [vmem:[%s7 + $0x2a0] sm:$0xff]
        %v4749 = vld [vmem:[%s7 + $0x2a8] sm:$0xff]
        %v4750 = vld [vmem:[%s7 + $0x2b0] sm:$0xff]
        %v4751 = vld [vmem:[%s7 + $0x2b8] sm:$0xff]
        %v4752 = vld [vmem:[%s7 + $0x2c0] sm:$0xff]
        %v4753 = vld [vmem:[%s7 + $0x2c8] sm:$0xff]
        %v4754 = vld [vmem:[%s7 + $0x2d0] sm:$0xff]
        %v4755 = vld [vmem:[%s7 + $0x2d8] sm:$0xff]
        %v4756 = vld [vmem:[%s7 + $0x2e0] sm:$0xff]
        %v4757 = vld [vmem:[%s7 + $0x2e8] sm:$0xff]
        %v4758 = vld [vmem:[%s7 + $0x2f0] sm:$0xff]
        %v4759 = vld [vmem:[%s7 + $0x2f8] sm:$0xff]
        %v4760 = vld [vmem:[%s7 + $0x300] sm:$0xff]
        %v4761 = vld [vmem:[%s7 + $0x308] sm:$0xff]
        %v4762 = vld [vmem:[%s7 + $0x310] sm:$0xff]
        %v4763 = vld [vmem:[%s7 + $0x318] sm:$0xff]
        %v4764 = vld [vmem:[%s7 + $0x320] sm:$0xff]
        %v4765 = vld [vmem:[%s7 + $0x328] sm:$0xff]
        %v4766 = vld [vmem:[%s7 + $0x330] sm:$0xff]
        %v4767 = vld [vmem:[%s7 + $0x338] sm:$0xff]
        %v4768 = vld [vmem:[%s7 + $0x340] sm:$0xff]
        %v4769 = vld [vmem:[%s7 + $0x348] sm:$0xff]
        %v4770 = vld [vmem:[%s7 + $0x350] sm:$0xff]
        %v4771 = vld [vmem:[%s7 + $0x358] sm:$0xff]
        %v4772 = vld [vmem:[%s7 + $0x360] sm:$0xff]
        %v4773 = vld [vmem:[%s7 + $0x368] sm:$0xff]
        %v4774 = vld [vmem:[%s7 + $0x370] sm:$0xff]
        %v4775 = vld [vmem:[%s7 + $0x378] sm:$0xff]
        %v4776 = vld [vmem:[%s7 + $0x380] sm:$0xff]
        %v4777 = vld [vmem:[%s7 + $0x388] sm:$0xff]
        %v4778 = vld [vmem:[%s7 + $0x390] sm:$0xff]
        %v4779 = vld [vmem:[%s7 + $0x398] sm:$0xff]
        %v4780 = vld [vmem:[%s7 + $0x3a0] sm:$0xff]
        %v4781 = vld [vmem:[%s7 + $0x3a8] sm:$0xff]
        %v4782 = vld [vmem:[%s7 + $0x3b0] sm:$0xff]
        %v4783 = vld [vmem:[%s7 + $0x3b8] sm:$0xff]
        %v4784 = vld [vmem:[%s7 + $0x3c0] sm:$0xff]
        %v4785 = vld [vmem:[%s7 + $0x3c8] sm:$0xff]
        %v4786 = vld [vmem:[%s7 + $0x3d0] sm:$0xff]
        %v4787 = vld [vmem:[%s7 + $0x3d8] sm:$0xff]
        %v4788 = vld [vmem:[%s7 + $0x3e0] sm:$0xff]
        %v4789 = vld [vmem:[%s7 + $0x3e8] sm:$0xff]
        %v4790 = vld [vmem:[%s7 + $0x3f0] sm:$0xff]
        %v4791 = vld [vmem:[%s7 + $0x3f8] sm:$0xff]
        %v4792 = vld [vmem:[%s7 + $0x400] sm:$0xff]
        %v4793 = vld [vmem:[%s7 + $0x408] sm:$0xff]
        %v4794 = vld [vmem:[%s7 + $0x410] sm:$0xff]
        %v4795 = vld [vmem:[%s7 + $0x418] sm:$0xff]
        %v4796 = vld [vmem:[%s7 + $0x420] sm:$0xff]
        %v4797 = vld [vmem:[%s7 + $0x428] sm:$0xff]
        %v4798 = vld [vmem:[%s7 + $0x430] sm:$0xff]
        %v4799 = vld [vmem:[%s7 + $0x438] sm:$0xff]
        %v4800 = vld [vmem:[%s7 + $0x440] sm:$0xff]
        %v4801 = vld [vmem:[%s7 + $0x448] sm:$0xff]
        %v4802 = vld [vmem:[%s7 + $0x450] sm:$0xff]
        %v4803 = vld [vmem:[%s7 + $0x458] sm:$0xff]
        %v4804 = vld [vmem:[%s7 + $0x460] sm:$0xff]
        %v4805 = vld [vmem:[%s7 + $0x468] sm:$0xff]
        %v4806 = vld [vmem:[%s7 + $0x470] sm:$0xff]
        %v4807 = vld [vmem:[%s7 + $0x478] sm:$0xff]
        %v4808 = vld [vmem:[%s7 + $0x480] sm:$0xff]
        %v4809 = vld [vmem:[%s7 + $0x488] sm:$0xff]
        %v4810 = vld [vmem:[%s7 + $0x490] sm:$0xff]
        %v4811 = vld [vmem:[%s7 + $0x498] sm:$0xff]
        %v4812 = vld [vmem:[%s7 + $0x4a0] sm:$0xff]
        %v4813 = vld [vmem:[%s7 + $0x4a8] sm:$0xff]
        %v4814 = vld [vmem:[%s7 + $0x4b0] sm:$0xff]
        %v4815 = vld [vmem:[%s7 + $0x4b8] sm:$0xff]
        %v4816 = vld [vmem:[%s7 + $0x4c0] sm:$0xff]
        %v4817 = vld [vmem:[%s7 + $0x4c8] sm:$0xff]
        %v4818 = vld [vmem:[%s7 + $0x4d0] sm:$0xff]
        %v4819 = vld [vmem:[%s7 + $0x4d8] sm:$0xff]
        %v4820 = vld [vmem:[%s7 + $0x4e0] sm:$0xff]
        %v4821 = vld [vmem:[%s7 + $0x4e8] sm:$0xff]
        %v4822 = vld [vmem:[%s7 + $0x4f0] sm:$0xff]
        %v4823 = vld [vmem:[%s7 + $0x4f8] sm:$0xff]
        %v4824 = vld [vmem:[%s7 + $0x500] sm:$0xff]
        %v4825 = vld [vmem:[%s7 + $0x508] sm:$0xff]
        %v4826 = vld [vmem:[%s7 + $0x510] sm:$0xff]
        %v4827 = vld [vmem:[%s7 + $0x518] sm:$0xff]
        %v4828 = vld [vmem:[%s7 + $0x520] sm:$0xff]
        %v4829 = vld [vmem:[%s7 + $0x528] sm:$0xff]
        %v4830 = vld [vmem:[%s7 + $0x530] sm:$0xff]
        %v4831 = vld [vmem:[%s7 + $0x538] sm:$0xff]
        %v4832 = vld [vmem:[%s7 + $0x540] sm:$0xff]
        %v4833 = vld [vmem:[%s7 + $0x548] sm:$0xff]
        %v4834 = vld [vmem:[%s7 + $0x550] sm:$0xff]
        %v4835 = vld [vmem:[%s7 + $0x558] sm:$0xff]
        %v4836 = vld [vmem:[%s7 + $0x560] sm:$0xff]
        %v4837 = vld [vmem:[%s7 + $0x568] sm:$0xff]
        %v4838 = vld [vmem:[%s7 + $0x570] sm:$0xff]
        %v4839 = vld [vmem:[%s7 + $0x578] sm:$0xff]
        %v4840 = vld [vmem:[%s7 + $0x580] sm:$0xff]
        %v4841 = vld [vmem:[%s7 + $0x588] sm:$0xff]
        %v4842 = vld [vmem:[%s7 + $0x590] sm:$0xff]
        %v4843 = vld [vmem:[%s7 + $0x598] sm:$0xff]
        %v4844 = vld [vmem:[%s7 + $0x5a0] sm:$0xff]
        %v4845 = vld [vmem:[%s7 + $0x5a8] sm:$0xff]
        %v4846 = vld [vmem:[%s7 + $0x5b0] sm:$0xff]
        %v4847 = vld [vmem:[%s7 + $0x5b8] sm:$0xff]
        %v4848 = vld [vmem:[%s7 + $0x5c0] sm:$0xff]
        %v4849 = vld [vmem:[%s7 + $0x5c8] sm:$0xff]
        %v4850 = vld [vmem:[%s7 + $0x5d0] sm:$0xff]
        %v4851 = vld [vmem:[%s7 + $0x5d8] sm:$0xff]
        %v4852 = vld [vmem:[%s7 + $0x5e0] sm:$0xff]
        %v4853 = vld [vmem:[%s7 + $0x5e8] sm:$0xff]
        %v4854 = vld [vmem:[%s7 + $0x5f0] sm:$0xff]
        %v4855 = vld [vmem:[%s7 + $0x5f8] sm:$0xff]
        %v4856 = vld [vmem:[%s7 + $0x600] sm:$0xff]
        %v4857 = vld [vmem:[%s7 + $0x608] sm:$0xff]
        %v4858 = vld [vmem:[%s7 + $0x610] sm:$0xff]
        %v4859 = vld [vmem:[%s7 + $0x618] sm:$0xff]
        %v4860 = vld [vmem:[%s7 + $0x620] sm:$0xff]
        %v4861 = vld [vmem:[%s7 + $0x628] sm:$0xff]
        %v4862 = vld [vmem:[%s7 + $0x630] sm:$0xff]
        %v4863 = vld [vmem:[%s7 + $0x638] sm:$0xff]
        %v4864 = vld [vmem:[%s7 + $0x640] sm:$0xff]
        %v4865 = vld [vmem:[%s7 + $0x648] sm:$0xff]
        %v4866 = vld [vmem:[%s7 + $0x650] sm:$0xff]
        %v4867 = vld [vmem:[%s7 + $0x658] sm:$0xff]
        %v4868 = vld [vmem:[%s7 + $0x660] sm:$0xff]
        %v4869 = vld [vmem:[%s7 + $0x668] sm:$0xff]
        %v4870 = vld [vmem:[%s7 + $0x670] sm:$0xff]
        %v4871 = vld [vmem:[%s7 + $0x678] sm:$0xff]
        %v4872 = vld [vmem:[%s7 + $0x680] sm:$0xff]
        %v4873 = vld [vmem:[%s7 + $0x688] sm:$0xff]
        %v4874 = vld [vmem:[%s7 + $0x690] sm:$0xff]
        %v4875 = vld [vmem:[%s7 + $0x698] sm:$0xff]
        %v4876 = vld [vmem:[%s7 + $0x6a0] sm:$0xff]
        %v4877 = vld [vmem:[%s7 + $0x6a8] sm:$0xff]
        %v4878 = vld [vmem:[%s7 + $0x6b0] sm:$0xff]
        %v4879 = vld [vmem:[%s7 + $0x6b8] sm:$0xff]
        %v4880 = vld [vmem:[%s7 + $0x6c0] sm:$0xff]
        %v4881 = vld [vmem:[%s7 + $0x6c8] sm:$0xff]
        %v4882 = vld [vmem:[%s7 + $0x6d0] sm:$0xff]
        %v4883 = vld [vmem:[%s7 + $0x6d8] sm:$0xff]
        %v4884 = vld [vmem:[%s7 + $0x6e0] sm:$0xff]
        %v4885 = vld [vmem:[%s7 + $0x6e8] sm:$0xff]
        %v4886 = vld [vmem:[%s7 + $0x6f0] sm:$0xff]
        %v4887 = vld [vmem:[%s7 + $0x6f8] sm:$0xff]
        %v4888 = vld [vmem:[%s7 + $0x700] sm:$0xff]
        %v4889 = vld [vmem:[%s7 + $0x708] sm:$0xff]
        %v4890 = vld [vmem:[%s7 + $0x710] sm:$0xff]
        %v4891 = vld [vmem:[%s7 + $0x718] sm:$0xff]
        %v4892 = vld [vmem:[%s7 + $0x720] sm:$0xff]
        %v4893 = vld [vmem:[%s7 + $0x728] sm:$0xff]
        %v4894 = vld [vmem:[%s7 + $0x730] sm:$0xff]
        %v4895 = vld [vmem:[%s7 + $0x738] sm:$0xff]
        %v4896 = vld [vmem:[%s7 + $0x740] sm:$0xff]
        %v4897 = vld [vmem:[%s7 + $0x748] sm:$0xff]
        %v4898 = vld [vmem:[%s7 + $0x750] sm:$0xff]
        %v4899 = vld [vmem:[%s7 + $0x758] sm:$0xff]
        %v4900 = vld [vmem:[%s7 + $0x760] sm:$0xff]
        %v4901 = vld [vmem:[%s7 + $0x768] sm:$0xff]
        %v4902 = vld [vmem:[%s7 + $0x770] sm:$0xff]
        %v4903 = vld [vmem:[%s7 + $0x778] sm:$0xff]
        %v4904 = vld [vmem:[%s7 + $0x780] sm:$0xff]
        %v4905 = vld [vmem:[%s7 + $0x788] sm:$0xff]
        %v4906 = vld [vmem:[%s7 + $0x790] sm:$0xff]
        %v4907 = vld [vmem:[%s7 + $0x798] sm:$0xff]
        %v4908 = vld [vmem:[%s7 + $0x7a0] sm:$0xff]
        %v4909 = vld [vmem:[%s7 + $0x7a8] sm:$0xff]
        %v4910 = vld [vmem:[%s7 + $0x7b0] sm:$0xff]
        %v4911 = vld [vmem:[%s7 + $0x7b8] sm:$0xff]
        %v4912 = vld [vmem:[%s7 + $0x7c0] sm:$0xff]
        %v4913 = vld [vmem:[%s7 + $0x7c8] sm:$0xff]
        %v4914 = vld [vmem:[%s7 + $0x7d0] sm:$0xff]
        %v4915 = vld [vmem:[%s7 + $0x7d8] sm:$0xff]
        %v4916 = vld [vmem:[%s7 + $0x7e0] sm:$0xff]
        %v4917 = vld [vmem:[%s7 + $0x7e8] sm:$0xff]
        %v4918 = vld [vmem:[%s7 + $0x7f0] sm:$0xff]
        %v4919 = vld [vmem:[%s7 + $0x7f8] sm:$0xff]
        %v4920 = vld [vmem:[%s7 + $0x800] sm:$0xff]
        %v4921 = vld [vmem:[%s7 + $0x808] sm:$0xff]
        %v4922 = vld [vmem:[%s7 + $0x810] sm:$0xff]
        %v4923 = vld [vmem:[%s7 + $0x818] sm:$0xff]
        %v4924 = vld [vmem:[%s7 + $0x820] sm:$0xff]
        %v4925 = vld [vmem:[%s7 + $0x828] sm:$0xff]
        %v4926 = vld [vmem:[%s7 + $0x830] sm:$0xff]
        %v4927 = vld [vmem:[%s7 + $0x838] sm:$0xff]
        %v4928 = vld [vmem:[%s7 + $0x840] sm:$0xff]
        %v4929 = vld [vmem:[%s7 + $0x848] sm:$0xff]
        %v4930 = vld [vmem:[%s7 + $0x850] sm:$0xff]
        %v4931 = vld [vmem:[%s7 + $0x858] sm:$0xff]
        %v4932 = vld [vmem:[%s7 + $0x860] sm:$0xff]
        %v4933 = vld [vmem:[%s7 + $0x868] sm:$0xff]
        %v4934 = vld [vmem:[%s7 + $0x870] sm:$0xff]
        %v4935 = vld [vmem:[%s7 + $0x878] sm:$0xff]
        %v4936 = vld [vmem:[%s7 + $0x880] sm:$0xff]
        %v4937 = vld [vmem:[%s7 + $0x888] sm:$0xff]
        %v4938 = vld [vmem:[%s7 + $0x890] sm:$0xff]
        %v4939 = vld [vmem:[%s7 + $0x898] sm:$0xff]
        %v4940 = vld [vmem:[%s7 + $0x8a0] sm:$0xff]
        %v4941 = vld [vmem:[%s7 + $0x8a8] sm:$0xff]
        %v4942 = vld [vmem:[%s7 + $0x8b0] sm:$0xff]
        %v4943 = vld [vmem:[%s7 + $0x8b8] sm:$0xff]
        %v4944 = vld [vmem:[%s7 + $0x8c0] sm:$0xff]
        %v4945 = vld [vmem:[%s7 + $0x8c8] sm:$0xff]
        %v4946 = vld [vmem:[%s7 + $0x8d0] sm:$0xff]
        %v4947 = vld [vmem:[%s7 + $0x8d8] sm:$0xff]
        %v4948 = vld [vmem:[%s7 + $0x8e0] sm:$0xff]
        %v4949 = vld [vmem:[%s7 + $0x8e8] sm:$0xff]
        %v4950 = vld [vmem:[%s7 + $0x8f0] sm:$0xff]
        %v4951 = vld [vmem:[%s7 + $0x8f8] sm:$0xff]
        %4952 = vmatprep.subr.mxu0 %v4695
        %4953 = vmatpush1.msra.mxu0 %v4694
        %4954 = vmatprep.subr.mxu0 %v4693
        %4955 = vmatpush1.msra.mxu0 %v4692
        %4956 = vmatprep.subr.mxu0 %v4691
        %4957 = vmatpush1.msra.mxu0 %v4690
        %4958 = vmatprep.subr.mxu0 %v4689
        %4959 = vmatpush1.msra.mxu0 %v4688
        %4960 = vmatprep.subr.mxu0 %v4687
        %4961 = vmatpush1.msra.mxu0 %v4686
        %4962 = vmatprep.subr.mxu0 %v4685
        %4963 = vmatpush1.msra.mxu0 %v4684
        %4964 = vmatprep.subr.mxu0 %v4683
        %4965 = vmatpush1.msra.mxu0 %v4682
        %4966 = vmatprep.subr.mxu0 %v4681
        %4967 = vmatpush1.msra.mxu0 %v4680
        %4968 = vmatprep.subr.mxu0 %v4679
        %4969 = vmatpush1.msra.mxu0 %v4678
        %4970 = vmatprep.subr.mxu0 %v4677
        %4971 = vmatpush1.msra.mxu0 %v4676
        %4972 = vmatprep.subr.mxu0 %v4675
        %4973 = vmatpush1.msra.mxu0 %v4674
        %4974 = vmatprep.subr.mxu0 %v4673
        %4975 = vmatpush1.msra.mxu0 %v4672
        %4976 = vmatprep.subr.mxu0 %v4671
        %4977 = vmatpush1.msra.mxu0 %v4670
        %4978 = vmatprep.subr.mxu0 %v4669
        %4979 = vmatpush1.msra.mxu0 %v4668
        %4980 = vmatprep.subr.mxu0 %v4667
        %4981 = vmatpush1.msra.mxu0 %v4666
        %4982 = vmatprep.subr.mxu0 %v4665
        %4983 = vmatpush1.msra.mxu0 %v4664
        %4984 = vmatprep.subr.mxu0 %v4727
        %4985 = vmatpush2.msra.mxu0 %v4726
        %4986 = vmatprep.subr.mxu0 %v4725
        %4987 = vmatpush2.msra.mxu0 %v4724
        %4988 = vmatprep.subr.mxu0 %v4723
        %4989 = vmatpush2.msra.mxu0 %v4722
        %4990 = vmatprep.subr.mxu0 %v4721
        %4991 = vmatpush2.msra.mxu0 %v4720
        %4992 = vmatprep.subr.mxu0 %v4719
        %4993 = vmatpush2.msra.mxu0 %v4718
        %4994 = vmatprep.subr.mxu0 %v4717
        %4995 = vmatpush2.msra.mxu0 %v4716
        %4996 = vmatprep.subr.mxu0 %v4715
        %4997 = vmatpush2.msra.mxu0 %v4714
        %4998 = vmatprep.subr.mxu0 %v4713
        %4999 = vmatpush2.msra.mxu0 %v4712
        %5000 = vmatprep.subr.mxu0 %v4711
        %5001 = vmatpush2.msra.mxu0 %v4710
        %5002 = vmatprep.subr.mxu0 %v4709
        %5003 = vmatpush2.msra.mxu0 %v4708
        %5004 = vmatprep.subr.mxu0 %v4707
        %5005 = vmatpush2.msra.mxu0 %v4706
        %5006 = vmatprep.subr.mxu0 %v4705
        %5007 = vmatpush2.msra.mxu0 %v4704
        %5008 = vmatprep.subr.mxu0 %v4703
        %5009 = vmatpush2.msra.mxu0 %v4702
        %5010 = vmatprep.subr.mxu0 %v4701
        %5011 = vmatpush2.msra.mxu0 %v4700
        %5012 = vmatprep.subr.mxu0 %v4699
        %5013 = vmatpush2.msra.mxu0 %v4698
        %5014 = vmatprep.subr.mxu0 %v4697
        %5015 = vmatpush2.msra.mxu0 %v4696
        %5016 = vmatprep.mubr.f32.mxu0 %v4593
        %5017 = vmatmul.mubr.f32.gmra.mxu0 %v4592
        %v5018 = vpop.f32.mrf.mxu0
        %v5019 = vadd.f32 0.0, %v5018
        %v5020 = vpop.f32.mrf.mxu0
        %v5021 = vadd.f32 0.0, %v5020
        %5022 = vmatprep.mubr.f32.mxu0 %v4602
        %5023 = vmatmul.mubr.f32.gmra.mxu0 %v4601
        %v5024 = vpop.f32.mrf.mxu0
        %v5025 = vadd.f32 0.0, %v5024
        %v5026 = vpop.f32.mrf.mxu0
        %v5027 = vadd.f32 0.0, %v5026
        %5028 = vmatprep.mubr.f32.mxu0 %v4611
        %5029 = vmatmul.mubr.f32.gmra.mxu0 %v4610
        %v5030 = vpop.f32.mrf.mxu0
        %v5031 = vadd.f32 0.0, %v5030
        %v5032 = vpop.f32.mrf.mxu0
        %v5033 = vadd.f32 0.0, %v5032
        %5034 = vmatprep.mubr.f32.mxu0 %v4620
        %5035 = vmatmul.mubr.f32.gmra.mxu0 %v4619
        %v5036 = vpop.f32.mrf.mxu0
        %v5037 = vadd.f32 0.0, %v5036
        %v5038 = vpop.f32.mrf.mxu0
        %v5039 = vadd.f32 0.0, %v5038
        %5040 = vmatprep.mubr.f32.mxu0 %v4629
        %5041 = vmatmul.mubr.f32.gmra.mxu0 %v4628
        %v5042 = vpop.f32.mrf.mxu0
        %v5043 = vadd.f32 0.0, %v5042
        %v5044 = vpop.f32.mrf.mxu0
        %v5045 = vadd.f32 0.0, %v5044
        %5046 = vmatprep.mubr.f32.mxu0 %v4638
        %5047 = vmatmul.mubr.f32.gmra.mxu0 %v4637
        %v5048 = vpop.f32.mrf.mxu0
        %v5049 = vadd.f32 0.0, %v5048
        %v5050 = vpop.f32.mrf.mxu0
        %v5051 = vadd.f32 0.0, %v5050
        %5052 = vmatprep.mubr.f32.mxu0 %v4647
        %5053 = vmatmul.mubr.f32.gmra.mxu0 %v4646
        %v5054 = vpop.f32.mrf.mxu0
        %v5055 = vadd.f32 0.0, %v5054
        %v5056 = vpop.f32.mrf.mxu0
        %v5057 = vadd.f32 0.0, %v5056
        %5058 = vmatprep.mubr.f32.mxu0 %v4656
        %5059 = vmatmul.mubr.f32.gmra.mxu0 %v4655
        %v5060 = vpop.f32.mrf.mxu0
        %v5061 = vadd.f32 0.0, %v5060
        %v5062 = vpop.f32.mrf.mxu0
        %v5063 = vadd.f32 0.0, %v5062
        %5064 = vdwg.mxu0
        %5065 = vmatprep.subr.mxu0 %v4759
        %5066 = vmatpush1.msra.mxu0 %v4758
        %5067 = vmatprep.subr.mxu0 %v4757
        %5068 = vmatpush1.msra.mxu0 %v4756
        %5069 = vmatprep.subr.mxu0 %v4755
        %5070 = vmatpush1.msra.mxu0 %v4754
        %5071 = vmatprep.subr.mxu0 %v4753
        %5072 = vmatpush1.msra.mxu0 %v4752
        %5073 = vmatprep.subr.mxu0 %v4751
        %5074 = vmatpush1.msra.mxu0 %v4750
        %5075 = vmatprep.subr.mxu0 %v4749
        %5076 = vmatpush1.msra.mxu0 %v4748
        %5077 = vmatprep.subr.mxu0 %v4747
        %5078 = vmatpush1.msra.mxu0 %v4746
        %5079 = vmatprep.subr.mxu0 %v4745
        %5080 = vmatpush1.msra.mxu0 %v4744
        %5081 = vmatprep.subr.mxu0 %v4743
        %5082 = vmatpush1.msra.mxu0 %v4742
        %5083 = vmatprep.subr.mxu0 %v4741
        %5084 = vmatpush1.msra.mxu0 %v4740
        %5085 = vmatprep.subr.mxu0 %v4739
        %5086 = vmatpush1.msra.mxu0 %v4738
        %5087 = vmatprep.subr.mxu0 %v4737
        %5088 = vmatpush1.msra.mxu0 %v4736
        %5089 = vmatprep.subr.mxu0 %v4735
        %5090 = vmatpush1.msra.mxu0 %v4734
        %5091 = vmatprep.subr.mxu0 %v4733
        %5092 = vmatpush1.msra.mxu0 %v4732
        %5093 = vmatprep.subr.mxu0 %v4731
        %5094 = vmatpush1.msra.mxu0 %v4730
        %5095 = vmatprep.subr.mxu0 %v4729
        %5096 = vmatpush1.msra.mxu0 %v4728
        %5097 = vmatprep.subr.mxu0 %v4791
        %5098 = vmatpush2.msra.mxu0 %v4790
        %5099 = vmatprep.subr.mxu0 %v4789
        %5100 = vmatpush2.msra.mxu0 %v4788
        %5101 = vmatprep.subr.mxu0 %v4787
        %5102 = vmatpush2.msra.mxu0 %v4786
        %5103 = vmatprep.subr.mxu0 %v4785
        %5104 = vmatpush2.msra.mxu0 %v4784
        %5105 = vmatprep.subr.mxu0 %v4783
        %5106 = vmatpush2.msra.mxu0 %v4782
        %5107 = vmatprep.subr.mxu0 %v4781
        %5108 = vmatpush2.msra.mxu0 %v4780
        %5109 = vmatprep.subr.mxu0 %v4779
        %5110 = vmatpush2.msra.mxu0 %v4778
        %5111 = vmatprep.subr.mxu0 %v4777
        %5112 = vmatpush2.msra.mxu0 %v4776
        %5113 = vmatprep.subr.mxu0 %v4775
        %5114 = vmatpush2.msra.mxu0 %v4774
        %5115 = vmatprep.subr.mxu0 %v4773
        %5116 = vmatpush2.msra.mxu0 %v4772
        %5117 = vmatprep.subr.mxu0 %v4771
        %5118 = vmatpush2.msra.mxu0 %v4770
        %5119 = vmatprep.subr.mxu0 %v4769
        %5120 = vmatpush2.msra.mxu0 %v4768
        %5121 = vmatprep.subr.mxu0 %v4767
        %5122 = vmatpush2.msra.mxu0 %v4766
        %5123 = vmatprep.subr.mxu0 %v4765
        %5124 = vmatpush2.msra.mxu0 %v4764
        %5125 = vmatprep.subr.mxu0 %v4763
        %5126 = vmatpush2.msra.mxu0 %v4762
        %5127 = vmatprep.subr.mxu0 %v4761
        %5128 = vmatpush2.msra.mxu0 %v4760
        %5129 = vmatprep.mubr.f32.mxu0 %v4595
        %5130 = vmatmul.mubr.f32.gmra.mxu0 %v4594
        %v5131 = vpop.f32.mrf.mxu0
        %v5132 = vadd.f32 %v5019, %v5131
        %v5133 = vpop.f32.mrf.mxu0
        %v5134 = vadd.f32 %v5021, %v5133
        %5135 = vmatprep.mubr.f32.mxu0 %v4604
        %5136 = vmatmul.mubr.f32.gmra.mxu0 %v4603
        %v5137 = vpop.f32.mrf.mxu0
        %v5138 = vadd.f32 %v5025, %v5137
        %v5139 = vpop.f32.mrf.mxu0
        %v5140 = vadd.f32 %v5027, %v5139
        %5141 = vmatprep.mubr.f32.mxu0 %v4613
        %5142 = vmatmul.mubr.f32.gmra.mxu0 %v4612
        %v5143 = vpop.f32.mrf.mxu0
        %v5144 = vadd.f32 %v5031, %v5143
        %v5145 = vpop.f32.mrf.mxu0
        %v5146 = vadd.f32 %v5033, %v5145
        %5147 = vmatprep.mubr.f32.mxu0 %v4622
        %5148 = vmatmul.mubr.f32.gmra.mxu0 %v4621
        %v5149 = vpop.f32.mrf.mxu0
        %v5150 = vadd.f32 %v5037, %v5149
        %v5151 = vpop.f32.mrf.mxu0
        %v5152 = vadd.f32 %v5039, %v5151
        %5153 = vmatprep.mubr.f32.mxu0 %v4631
        %5154 = vmatmul.mubr.f32.gmra.mxu0 %v4630
        %v5155 = vpop.f32.mrf.mxu0
        %v5156 = vadd.f32 %v5043, %v5155
        %v5157 = vpop.f32.mrf.mxu0
        %v5158 = vadd.f32 %v5045, %v5157
        %5159 = vmatprep.mubr.f32.mxu0 %v4640
        %5160 = vmatmul.mubr.f32.gmra.mxu0 %v4639
        %v5161 = vpop.f32.mrf.mxu0
        %v5162 = vadd.f32 %v5049, %v5161
        %v5163 = vpop.f32.mrf.mxu0
        %v5164 = vadd.f32 %v5051, %v5163
        %5165 = vmatprep.mubr.f32.mxu0 %v4649
        %5166 = vmatmul.mubr.f32.gmra.mxu0 %v4648
        %v5167 = vpop.f32.mrf.mxu0
        %v5168 = vadd.f32 %v5055, %v5167
        %v5169 = vpop.f32.mrf.mxu0
        %v5170 = vadd.f32 %v5057, %v5169
        %5171 = vmatprep.mubr.f32.mxu0 %v4658
        %5172 = vmatmul.mubr.f32.gmra.mxu0 %v4657
        %v5173 = vpop.f32.mrf.mxu0
        %v5174 = vadd.f32 %v5061, %v5173
        %v5175 = vpop.f32.mrf.mxu0
        %v5176 = vadd.f32 %v5063, %v5175
        %5177 = vdwg.mxu0
        %5178 = vmatprep.subr.mxu0 %v4823
        %5179 = vmatpush1.msra.mxu0 %v4822
        %5180 = vmatprep.subr.mxu0 %v4821
        %5181 = vmatpush1.msra.mxu0 %v4820
        %5182 = vmatprep.subr.mxu0 %v4819
        %5183 = vmatpush1.msra.mxu0 %v4818
        %5184 = vmatprep.subr.mxu0 %v4817
        %5185 = vmatpush1.msra.mxu0 %v4816
        %5186 = vmatprep.subr.mxu0 %v4815
        %5187 = vmatpush1.msra.mxu0 %v4814
        %5188 = vmatprep.subr.mxu0 %v4813
        %5189 = vmatpush1.msra.mxu0 %v4812
        %5190 = vmatprep.subr.mxu0 %v4811
        %5191 = vmatpush1.msra.mxu0 %v4810
        %5192 = vmatprep.subr.mxu0 %v4809
        %5193 = vmatpush1.msra.mxu0 %v4808
        %5194 = vmatprep.subr.mxu0 %v4807
        %5195 = vmatpush1.msra.mxu0 %v4806
        %5196 = vmatprep.subr.mxu0 %v4805
        %5197 = vmatpush1.msra.mxu0 %v4804
        %5198 = vmatprep.subr.mxu0 %v4803
        %5199 = vmatpush1.msra.mxu0 %v4802
        %5200 = vmatprep.subr.mxu0 %v4801
        %5201 = vmatpush1.msra.mxu0 %v4800
        %5202 = vmatprep.subr.mxu0 %v4799
        %5203 = vmatpush1.msra.mxu0 %v4798
        %5204 = vmatprep.subr.mxu0 %v4797
        %5205 = vmatpush1.msra.mxu0 %v4796
        %5206 = vmatprep.subr.mxu0 %v4795
        %5207 = vmatpush1.msra.mxu0 %v4794
        %5208 = vmatprep.subr.mxu0 %v4793
        %5209 = vmatpush1.msra.mxu0 %v4792
        %5210 = vmatprep.subr.mxu0 %v4855
        %5211 = vmatpush2.msra.mxu0 %v4854
        %5212 = vmatprep.subr.mxu0 %v4853
        %5213 = vmatpush2.msra.mxu0 %v4852
        %5214 = vmatprep.subr.mxu0 %v4851
        %5215 = vmatpush2.msra.mxu0 %v4850
        %5216 = vmatprep.subr.mxu0 %v4849
        %5217 = vmatpush2.msra.mxu0 %v4848
        %5218 = vmatprep.subr.mxu0 %v4847
        %5219 = vmatpush2.msra.mxu0 %v4846
        %5220 = vmatprep.subr.mxu0 %v4845
        %5221 = vmatpush2.msra.mxu0 %v4844
        %5222 = vmatprep.subr.mxu0 %v4843
        %5223 = vmatpush2.msra.mxu0 %v4842
        %5224 = vmatprep.subr.mxu0 %v4841
        %5225 = vmatpush2.msra.mxu0 %v4840
        %5226 = vmatprep.subr.mxu0 %v4839
        %5227 = vmatpush2.msra.mxu0 %v4838
        %5228 = vmatprep.subr.mxu0 %v4837
        %5229 = vmatpush2.msra.mxu0 %v4836
        %5230 = vmatprep.subr.mxu0 %v4835
        %5231 = vmatpush2.msra.mxu0 %v4834
        %5232 = vmatprep.subr.mxu0 %v4833
        %5233 = vmatpush2.msra.mxu0 %v4832
        %5234 = vmatprep.subr.mxu0 %v4831
        %5235 = vmatpush2.msra.mxu0 %v4830
        %5236 = vmatprep.subr.mxu0 %v4829
        %5237 = vmatpush2.msra.mxu0 %v4828
        %5238 = vmatprep.subr.mxu0 %v4827
        %5239 = vmatpush2.msra.mxu0 %v4826
        %5240 = vmatprep.subr.mxu0 %v4825
        %5241 = vmatpush2.msra.mxu0 %v4824
        %5242 = vmatprep.mubr.f32.mxu0 %v4597
        %5243 = vmatmul.mubr.f32.gmra.mxu0 %v4596
        %v5244 = vpop.f32.mrf.mxu0
        %v5245 = vadd.f32 %v5132, %v5244
        %v5246 = vpop.f32.mrf.mxu0
        %v5247 = vadd.f32 %v5134, %v5246
        %5248 = vmatprep.mubr.f32.mxu0 %v4606
        %5249 = vmatmul.mubr.f32.gmra.mxu0 %v4605
        %v5250 = vpop.f32.mrf.mxu0
        %v5251 = vadd.f32 %v5138, %v5250
        %v5252 = vpop.f32.mrf.mxu0
        %v5253 = vadd.f32 %v5140, %v5252
        %5254 = vmatprep.mubr.f32.mxu0 %v4615
        %5255 = vmatmul.mubr.f32.gmra.mxu0 %v4614
        %v5256 = vpop.f32.mrf.mxu0
        %v5257 = vadd.f32 %v5144, %v5256
        %v5258 = vpop.f32.mrf.mxu0
        %v5259 = vadd.f32 %v5146, %v5258
        %5260 = vmatprep.mubr.f32.mxu0 %v4624
        %5261 = vmatmul.mubr.f32.gmra.mxu0 %v4623
        %v5262 = vpop.f32.mrf.mxu0
        %v5263 = vadd.f32 %v5150, %v5262
        %v5264 = vpop.f32.mrf.mxu0
        %v5265 = vadd.f32 %v5152, %v5264
        %5266 = vmatprep.mubr.f32.mxu0 %v4633
        %5267 = vmatmul.mubr.f32.gmra.mxu0 %v4632
        %v5268 = vpop.f32.mrf.mxu0
        %v5269 = vadd.f32 %v5156, %v5268
        %v5270 = vpop.f32.mrf.mxu0
        %v5271 = vadd.f32 %v5158, %v5270
        %5272 = vmatprep.mubr.f32.mxu0 %v4642
        %5273 = vmatmul.mubr.f32.gmra.mxu0 %v4641
        %v5274 = vpop.f32.mrf.mxu0
        %v5275 = vadd.f32 %v5162, %v5274
        %v5276 = vpop.f32.mrf.mxu0
        %v5277 = vadd.f32 %v5164, %v5276
        %5278 = vmatprep.mubr.f32.mxu0 %v4651
        %5279 = vmatmul.mubr.f32.gmra.mxu0 %v4650
        %v5280 = vpop.f32.mrf.mxu0
        %v5281 = vadd.f32 %v5168, %v5280
        %v5282 = vpop.f32.mrf.mxu0
        %v5283 = vadd.f32 %v5170, %v5282
        %5284 = vmatprep.mubr.f32.mxu0 %v4660
        %5285 = vmatmul.mubr.f32.gmra.mxu0 %v4659
        %v5286 = vpop.f32.mrf.mxu0
        %v5287 = vadd.f32 %v5174, %v5286
        %v5288 = vpop.f32.mrf.mxu0
        %v5289 = vadd.f32 %v5176, %v5288
        %5290 = vdwg.mxu0
        %5291 = vmatprep.subr.mxu0 %v4887
        %5292 = vmatpush1.msra.mxu0 %v4886
        %5293 = vmatprep.subr.mxu0 %v4885
        %5294 = vmatpush1.msra.mxu0 %v4884
        %5295 = vmatprep.subr.mxu0 %v4883
        %5296 = vmatpush1.msra.mxu0 %v4882
        %5297 = vmatprep.subr.mxu0 %v4881
        %5298 = vmatpush1.msra.mxu0 %v4880
        %5299 = vmatprep.subr.mxu0 %v4879
        %5300 = vmatpush1.msra.mxu0 %v4878
        %5301 = vmatprep.subr.mxu0 %v4877
        %5302 = vmatpush1.msra.mxu0 %v4876
        %5303 = vmatprep.subr.mxu0 %v4875
        %5304 = vmatpush1.msra.mxu0 %v4874
        %5305 = vmatprep.subr.mxu0 %v4873
        %5306 = vmatpush1.msra.mxu0 %v4872
        %5307 = vmatprep.subr.mxu0 %v4871
        %5308 = vmatpush1.msra.mxu0 %v4870
        %5309 = vmatprep.subr.mxu0 %v4869
        %5310 = vmatpush1.msra.mxu0 %v4868
        %5311 = vmatprep.subr.mxu0 %v4867
        %5312 = vmatpush1.msra.mxu0 %v4866
        %5313 = vmatprep.subr.mxu0 %v4865
        %5314 = vmatpush1.msra.mxu0 %v4864
        %5315 = vmatprep.subr.mxu0 %v4863
        %5316 = vmatpush1.msra.mxu0 %v4862
        %5317 = vmatprep.subr.mxu0 %v4861
        %5318 = vmatpush1.msra.mxu0 %v4860
        %5319 = vmatprep.subr.mxu0 %v4859
        %5320 = vmatpush1.msra.mxu0 %v4858
        %5321 = vmatprep.subr.mxu0 %v4857
        %5322 = vmatpush1.msra.mxu0 %v4856
        %5323 = vmatprep.subr.mxu0 %v4919
        %5324 = vmatpush2.msra.mxu0 %v4918
        %5325 = vmatprep.subr.mxu0 %v4917
        %5326 = vmatpush2.msra.mxu0 %v4916
        %5327 = vmatprep.subr.mxu0 %v4915
        %5328 = vmatpush2.msra.mxu0 %v4914
        %5329 = vmatprep.subr.mxu0 %v4913
        %5330 = vmatpush2.msra.mxu0 %v4912
        %5331 = vmatprep.subr.mxu0 %v4911
        %5332 = vmatpush2.msra.mxu0 %v4910
        %5333 = vmatprep.subr.mxu0 %v4909
        %5334 = vmatpush2.msra.mxu0 %v4908
        %5335 = vmatprep.subr.mxu0 %v4907
        %5336 = vmatpush2.msra.mxu0 %v4906
        %5337 = vmatprep.subr.mxu0 %v4905
        %5338 = vmatpush2.msra.mxu0 %v4904
        %5339 = vmatprep.subr.mxu0 %v4903
        %5340 = vmatpush2.msra.mxu0 %v4902
        %5341 = vmatprep.subr.mxu0 %v4901
        %5342 = vmatpush2.msra.mxu0 %v4900
        %5343 = vmatprep.subr.mxu0 %v4899
        %5344 = vmatpush2.msra.mxu0 %v4898
        %5345 = vmatprep.subr.mxu0 %v4897
        %5346 = vmatpush2.msra.mxu0 %v4896
        %5347 = vmatprep.subr.mxu0 %v4895
        %5348 = vmatpush2.msra.mxu0 %v4894
        %5349 = vmatprep.subr.mxu0 %v4893
        %5350 = vmatpush2.msra.mxu0 %v4892
        %5351 = vmatprep.subr.mxu0 %v4891
        %5352 = vmatpush2.msra.mxu0 %v4890
        %5353 = vmatprep.subr.mxu0 %v4889
        %5354 = vmatpush2.msra.mxu0 %v4888
        %5355 = vmatprep.mubr.f32.mxu0 %v4599
        %5356 = vmatmul.mubr.f32.gmra.mxu0 %v4598
        %v5357 = vpop.f32.mrf.mxu0
        %v5358 = vadd.f32 %v5245, %v5357
        %v5359 = vpop.f32.mrf.mxu0
        %v5360 = vadd.f32 %v5247, %v5359
        %5361 = vmatprep.mubr.f32.mxu0 %v4608
        %5362 = vmatmul.mubr.f32.gmra.mxu0 %v4607
        %v5363 = vpop.f32.mrf.mxu0
        %v5364 = vadd.f32 %v5251, %v5363
        %v5365 = vpop.f32.mrf.mxu0
        %v5366 = vadd.f32 %v5253, %v5365
        %5367 = vmatprep.mubr.f32.mxu0 %v4617
        %5368 = vmatmul.mubr.f32.gmra.mxu0 %v4616
        %v5369 = vpop.f32.mrf.mxu0
        %v5370 = vadd.f32 %v5257, %v5369
        %v5371 = vpop.f32.mrf.mxu0
        %v5372 = vadd.f32 %v5259, %v5371
        %5373 = vmatprep.mubr.f32.mxu0 %v4626
        %5374 = vmatmul.mubr.f32.gmra.mxu0 %v4625
        %v5375 = vpop.f32.mrf.mxu0
        %v5376 = vadd.f32 %v5263, %v5375
        %v5377 = vpop.f32.mrf.mxu0
        %v5378 = vadd.f32 %v5265, %v5377
        %5379 = vmatprep.mubr.f32.mxu0 %v4635
        %5380 = vmatmul.mubr.f32.gmra.mxu0 %v4634
        %v5381 = vpop.f32.mrf.mxu0
        %v5382 = vadd.f32 %v5269, %v5381
        %v5383 = vpop.f32.mrf.mxu0
        %v5384 = vadd.f32 %v5271, %v5383
        %5385 = vmatprep.mubr.f32.mxu0 %v4644
        %5386 = vmatmul.mubr.f32.gmra.mxu0 %v4643
        %v5387 = vpop.f32.mrf.mxu0
        %v5388 = vadd.f32 %v5275, %v5387
        %v5389 = vpop.f32.mrf.mxu0
        %v5390 = vadd.f32 %v5277, %v5389
        %5391 = vmatprep.mubr.f32.mxu0 %v4653
        %5392 = vmatmul.mubr.f32.gmra.mxu0 %v4652
        %v5393 = vpop.f32.mrf.mxu0
        %v5394 = vadd.f32 %v5281, %v5393
        %v5395 = vpop.f32.mrf.mxu0
        %v5396 = vadd.f32 %v5283, %v5395
        %5397 = vmatprep.mubr.f32.mxu0 %v4662
        %5398 = vmatmul.mubr.f32.gmra.mxu0 %v4661
        %v5399 = vpop.f32.mrf.mxu0
        %v5400 = vadd.f32 %v5287, %v5399
        %v5401 = vpop.f32.mrf.mxu0
        %v5402 = vadd.f32 %v5289, %v5401
        %5403 = vdwg.mxu0
        %5404 = vmatprep.subr.mxu0 %v4951
        %5405 = vmatpush1.msra.mxu0 %v4950
        %5406 = vmatprep.subr.mxu0 %v4949
        %5407 = vmatpush1.msra.mxu0 %v4948
        %5408 = vmatprep.subr.mxu0 %v4947
        %5409 = vmatpush1.msra.mxu0 %v4946
        %5410 = vmatprep.subr.mxu0 %v4945
        %5411 = vmatpush1.msra.mxu0 %v4944
        %5412 = vmatprep.subr.mxu0 %v4943
        %5413 = vmatpush1.msra.mxu0 %v4942
        %5414 = vmatprep.subr.mxu0 %v4941
        %5415 = vmatpush1.msra.mxu0 %v4940
        %5416 = vmatprep.subr.mxu0 %v4939
        %5417 = vmatpush1.msra.mxu0 %v4938
        %5418 = vmatprep.subr.mxu0 %v4937
        %5419 = vmatpush1.msra.mxu0 %v4936
        %5420 = vmatprep.subr.mxu0 %v4935
        %5421 = vmatpush1.msra.mxu0 %v4934
        %5422 = vmatprep.subr.mxu0 %v4933
        %5423 = vmatpush1.msra.mxu0 %v4932
        %5424 = vmatprep.subr.mxu0 %v4931
        %5425 = vmatpush1.msra.mxu0 %v4930
        %5426 = vmatprep.subr.mxu0 %v4929
        %5427 = vmatpush1.msra.mxu0 %v4928
        %5428 = vmatprep.subr.mxu0 %v4927
        %5429 = vmatpush1.msra.mxu0 %v4926
        %5430 = vmatprep.subr.mxu0 %v4925
        %5431 = vmatpush1.msra.mxu0 %v4924
        %5432 = vmatprep.subr.mxu0 %v4923
        %5433 = vmatpush1.msra.mxu0 %v4922
        %5434 = vmatprep.subr.mxu0 %v4921
        %5435 = vmatpush1.msra.mxu0 %v4920
        %5436 = vmatprep.subr.mxu0 0.0
        %5437 = vmatpush2.msra.mxu0 0.0
        %5438 = vmatprep.subr.mxu0 0.0
        %5439 = vmatpush2.msra.mxu0 0.0
        %5440 = vmatprep.subr.mxu0 0.0
        %5441 = vmatpush2.msra.mxu0 0.0
        %5442 = vmatprep.subr.mxu0 0.0
        %5443 = vmatpush2.msra.mxu0 0.0
        %5444 = vmatprep.subr.mxu0 0.0
        %5445 = vmatpush2.msra.mxu0 0.0
        %5446 = vmatprep.subr.mxu0 0.0
        %5447 = vmatpush2.msra.mxu0 0.0
        %5448 = vmatprep.subr.mxu0 0.0
        %5449 = vmatpush2.msra.mxu0 0.0
        %5450 = vmatprep.subr.mxu0 0.0
        %5451 = vmatpush2.msra.mxu0 0.0
        %5452 = vmatprep.subr.mxu0 0.0
        %5453 = vmatpush2.msra.mxu0 0.0
        %5454 = vmatprep.subr.mxu0 0.0
        %5455 = vmatpush2.msra.mxu0 0.0
        %5456 = vmatprep.subr.mxu0 0.0
        %5457 = vmatpush2.msra.mxu0 0.0
        %5458 = vmatprep.subr.mxu0 0.0
        %5459 = vmatpush2.msra.mxu0 0.0
        %5460 = vmatprep.subr.mxu0 0.0
        %5461 = vmatpush2.msra.mxu0 0.0
        %5462 = vmatprep.subr.mxu0 0.0
        %5463 = vmatpush2.msra.mxu0 0.0
        %5464 = vmatprep.subr.mxu0 0.0
        %5465 = vmatpush2.msra.mxu0 0.0
        %5466 = vmatprep.subr.mxu0 0.0
        %5467 = vmatpush2.msra.mxu0 0.0
        %5468 = vmatprep.mubr.f32.mxu0 0.0
        %5469 = vmatmul.mubr.f32.gmra.mxu0 %v4600
        %v5470 = vpop.f32.mrf.mxu0
        %v5471 = vadd.f32 %v5358, %v5470
        %v5472 = vpop.f32.mrf.mxu0
        %v5473 = vadd.f32 %v5360, %v5472
        %5474 = vmatprep.mubr.f32.mxu0 0.0
        %5475 = vmatmul.mubr.f32.gmra.mxu0 %v4609
        %v5476 = vpop.f32.mrf.mxu0
        %v5477 = vadd.f32 %v5364, %v5476
        %v5478 = vpop.f32.mrf.mxu0
        %v5479 = vadd.f32 %v5366, %v5478
        %5480 = vmatprep.mubr.f32.mxu0 0.0
        %5481 = vmatmul.mubr.f32.gmra.mxu0 %v4618
        %v5482 = vpop.f32.mrf.mxu0
        %v5483 = vadd.f32 %v5370, %v5482
        %v5484 = vpop.f32.mrf.mxu0
        %v5485 = vadd.f32 %v5372, %v5484
        %5486 = vmatprep.mubr.f32.mxu0 0.0
        %5487 = vmatmul.mubr.f32.gmra.mxu0 %v4627
        %v5488 = vpop.f32.mrf.mxu0
        %v5489 = vadd.f32 %v5376, %v5488
        %v5490 = vpop.f32.mrf.mxu0
        %v5491 = vadd.f32 %v5378, %v5490
        %5492 = vmatprep.mubr.f32.mxu0 0.0
        %5493 = vmatmul.mubr.f32.gmra.mxu0 %v4636
        %v5494 = vpop.f32.mrf.mxu0
        %v5495 = vadd.f32 %v5382, %v5494
        %v5496 = vpop.f32.mrf.mxu0
        %v5497 = vadd.f32 %v5384, %v5496
        %5498 = vmatprep.mubr.f32.mxu0 0.0
        %5499 = vmatmul.mubr.f32.gmra.mxu0 %v4645
        %v5500 = vpop.f32.mrf.mxu0
        %v5501 = vadd.f32 %v5388, %v5500
        %v5502 = vpop.f32.mrf.mxu0
        %v5503 = vadd.f32 %v5390, %v5502
        %5504 = vmatprep.mubr.f32.mxu0 0.0
        %5505 = vmatmul.mubr.f32.gmra.mxu0 %v4654
        %v5506 = vpop.f32.mrf.mxu0
        %v5507 = vadd.f32 %v5394, %v5506
        %v5508 = vpop.f32.mrf.mxu0
        %v5509 = vadd.f32 %v5396, %v5508
        %5510 = vmatprep.mubr.f32.mxu0 0.0
        %5511 = vmatmul.mubr.f32.gmra.mxu0 %v4663
        %v5512 = vpop.f32.mrf.mxu0
        %v5513 = vadd.f32 %v5400, %v5512
        %v5514 = vpop.f32.mrf.mxu0
        %v5515 = vadd.f32 %v5402, %v5514
        %5516 = vdwg.mxu0
        %v5518 = vlaneseq
        %v5519 = vshrl.u32 %v5518, 7
        %v5520 = vsub.s32 0, %v5519
        %v5521 = vrot.slane %v4590, %v5520
        %v5522 = vlaneseq
        %v5523 = vshrl.u32 %v5522, 7
        %v5524 = vsub.s32 1, %v5523
        %v5525 = vrot.slane %v4590, %v5524
        %v5528 = vmul.f32 %v5471, %v5521
        %v5529 = vmul.f32 %v5473, %v5525
        %v5530 = vmul.f32 %v5477, %v5521
        %v5531 = vmul.f32 %v5479, %v5525
        %v5532 = vmul.f32 %v5483, %v5521
        %v5533 = vmul.f32 %v5485, %v5525
        %v5534 = vmul.f32 %v5489, %v5521
        %v5535 = vmul.f32 %v5491, %v5525
        %v5536 = vmul.f32 %v5495, %v5521
        %v5537 = vmul.f32 %v5497, %v5525
        %v5538 = vmul.f32 %v5501, %v5521
        %v5539 = vmul.f32 %v5503, %v5525
        %v5540 = vmul.f32 %v5507, %v5521
        %v5541 = vmul.f32 %v5509, %v5525
        %v5542 = vmul.f32 %v5513, %v5521
        %v5543 = vmul.f32 %v5515, %v5525
        %v5545 = vlaneseq
        %v5546 = vshrl.u32 %v5545, 7
        %v5547 = vsub.s32 0, %v5546
        %v5548 = vrot.slane %v4591, %v5547
        %v5549 = vlaneseq
        %v5550 = vshrl.u32 %v5549, 7
        %v5551 = vsub.s32 1, %v5550
        %v5552 = vrot.slane %v4591, %v5551
        %v5555 = vadd.f32 %v5528, %v5548
        %v5556 = vadd.f32 %v5529, %v5552
        %v5557 = vadd.f32 %v5530, %v5548
        %v5558 = vadd.f32 %v5531, %v5552
        %v5559 = vadd.f32 %v5532, %v5548
        %v5560 = vadd.f32 %v5533, %v5552
        %v5561 = vadd.f32 %v5534, %v5548
        %v5562 = vadd.f32 %v5535, %v5552
        %v5563 = vadd.f32 %v5536, %v5548
        %v5564 = vadd.f32 %v5537, %v5552
        %v5565 = vadd.f32 %v5538, %v5548
        %v5566 = vadd.f32 %v5539, %v5552
        %v5567 = vadd.f32 %v5540, %v5548
        %v5568 = vadd.f32 %v5541, %v5552
        %v5569 = vadd.f32 %v5542, %v5548
        %v5570 = vadd.f32 %v5543, %v5552
        %v5571 = vmax.f32 %v5555, 0.0
        %v5572 = vmax.f32 %v5556, 0.0
        %v5573 = vmax.f32 %v5557, 0.0
        %v5574 = vmax.f32 %v5558, 0.0
        %v5575 = vmax.f32 %v5559, 0.0
        %v5576 = vmax.f32 %v5560, 0.0
        %v5577 = vmax.f32 %v5561, 0.0
        %v5578 = vmax.f32 %v5562, 0.0
        %v5579 = vmax.f32 %v5563, 0.0
        %v5580 = vmax.f32 %v5564, 0.0
        %v5581 = vmax.f32 %v5565, 0.0
        %v5582 = vmax.f32 %v5566, 0.0
        %v5583 = vmax.f32 %v5567, 0.0
        %v5584 = vmax.f32 %v5568, 0.0
        %v5585 = vmax.f32 %v5569, 0.0
        %v5586 = vmax.f32 %v5570, 0.0
        %v5587 = vmax.f32 %v5571, %v5575
        %v5588 = vmax.f32 %v5573, %v5577
        %v5589 = vmax.f32 %v5587, %v5579
        %v5590 = vmax.f32 %v5588, %v5581
        %v5591 = vmax.f32 %v5589, %v5583
        %v5592 = vmax.f32 %v5590, %v5585
        %v5593 = vmax.f32 %v5591, %v5592
        %v5594 = vrot.slane %v5593, 4
        %v5595 = vmax.f32 %v5593, %v5594
        %v5596 = vrot.slane %v5595, 2
        %v5597 = vmax.f32 %v5595, %v5596
        %v5598 = vrot.slane %v5597, 1
        %v5599 = vmax.f32 %v5597, %v5598
        %v5600 = vmax.f32 %v5572, %v5576
        %v5601 = vmax.f32 %v5574, %v5578
        %v5602 = vmax.f32 %v5600, %v5580
        %v5603 = vmax.f32 %v5601, %v5582
        %v5604 = vmax.f32 %v5602, %v5584
        %v5605 = vmax.f32 %v5603, %v5586
        %v5606 = vmax.f32 %v5604, %v5605
        %v5607 = vrot.slane %v5606, 4
        %v5608 = vmax.f32 %v5606, %v5607
        %v5609 = vrot.slane %v5608, 2
        %v5610 = vmax.f32 %v5608, %v5609
        %v5611 = vrot.slane %v5610, 1
        %v5612 = vmax.f32 %v5610, %v5611
        %v5613 = vld [vmem:[#allocation5 + $0x240] sm:$0xff]
        %v5614 = vld [vmem:[#allocation5 + $0x248] sm:$0xff]
        %v5615 = vld [vmem:[#allocation5 + $0x250] sm:$0xff]
        %v5616 = vld [vmem:[#allocation5 + $0x258] sm:$0xff]
        %v5617 = vld [vmem:[#allocation5 + $0x260] sm:$0xff]
        %v5618 = vld [vmem:[#allocation5 + $0x268] sm:$0xff]
        %v5619 = vld [vmem:[#allocation5 + $0x270] sm:$0xff]
        %v5620 = vld [vmem:[#allocation5 + $0x278] sm:$0xff]
        %v5621 = vld [vmem:[#allocation5 + $0x280] sm:$0xff]
        %v5622 = vld [vmem:[#allocation5 + $0x288] sm:$0xff]
        %v5623 = vld [vmem:[#allocation5 + $0x290] sm:$0xff]
        %v5624 = vld [vmem:[#allocation5 + $0x298] sm:$0xff]
        %v5625 = vld [vmem:[#allocation5 + $0x2a0] sm:$0xff]
        %v5626 = vld [vmem:[#allocation5 + $0x2a8] sm:$0xff]
        %v5627 = vld [vmem:[#allocation5 + $0x2b0] sm:$0xff]
        %v5628 = vld [vmem:[#allocation5 + $0x2b8] sm:$0xff]
        %v5629 = vld [vmem:[#allocation5 + $0x2c0] sm:$0xff]
        %v5630 = vld [vmem:[#allocation5 + $0x2c8] sm:$0xff]
        %v5631 = vld [vmem:[#allocation5 + $0x2d0] sm:$0xff]
        %v5632 = vld [vmem:[#allocation5 + $0x2d8] sm:$0xff]
        %v5633 = vld [vmem:[#allocation5 + $0x2e0] sm:$0xff]
        %v5634 = vld [vmem:[#allocation5 + $0x2e8] sm:$0xff]
        %v5635 = vld [vmem:[#allocation5 + $0x2f0] sm:$0xff]
        %v5636 = vld [vmem:[#allocation5 + $0x2f8] sm:$0xff]
        %v5637 = vld [vmem:[#allocation5 + $0x300] sm:$0xff]
        %v5638 = vld [vmem:[#allocation5 + $0x308] sm:$0xff]
        %v5639 = vld [vmem:[#allocation5 + $0x310] sm:$0xff]
        %v5640 = vld [vmem:[#allocation5 + $0x318] sm:$0xff]
        %v5641 = vld [vmem:[#allocation5 + $0x320] sm:$0xff]
        %v5642 = vld [vmem:[#allocation5 + $0x328] sm:$0xff]
        %v5643 = vld [vmem:[#allocation5 + $0x330] sm:$0xff]
        %v5644 = vld [vmem:[#allocation5 + $0x338] sm:$0xff]
        %v5645 = vld [vmem:[#allocation5 + $0x340] sm:$0xff]
        %v5646 = vld [vmem:[#allocation5 + $0x348] sm:$0xff]
        %v5647 = vld [vmem:[#allocation5 + $0x350] sm:$0xff]
        %v5648 = vld [vmem:[#allocation5 + $0x358] sm:$0xff]
        %v5649 = vld [vmem:[#allocation5 + $0x360] sm:$0xff]
        %v5650 = vld [vmem:[#allocation5 + $0x368] sm:$0xff]
        %v5651 = vld [vmem:[#allocation5 + $0x370] sm:$0xff]
        %v5652 = vld [vmem:[#allocation5 + $0x378] sm:$0xff]
        %v5653 = vld [vmem:[#allocation5 + $0x380] sm:$0xff]
        %v5654 = vld [vmem:[#allocation5 + $0x388] sm:$0xff]
        %v5655 = vld [vmem:[#allocation5 + $0x390] sm:$0xff]
        %v5656 = vld [vmem:[#allocation5 + $0x398] sm:$0xff]
        %v5657 = vld [vmem:[#allocation5 + $0x3a0] sm:$0xff]
        %v5658 = vld [vmem:[#allocation5 + $0x3a8] sm:$0xff]
        %v5659 = vld [vmem:[#allocation5 + $0x3b0] sm:$0xff]
        %v5660 = vld [vmem:[#allocation5 + $0x3b8] sm:$0xff]
        %v5661 = vld [vmem:[#allocation5 + $0x3c0] sm:$0xff]
        %v5662 = vld [vmem:[#allocation5 + $0x3c8] sm:$0xff]
        %v5663 = vld [vmem:[#allocation5 + $0x3d0] sm:$0xff]
        %v5664 = vld [vmem:[#allocation5 + $0x3d8] sm:$0xff]
        %v5665 = vld [vmem:[#allocation5 + $0x3e0] sm:$0xff]
        %v5666 = vld [vmem:[#allocation5 + $0x3e8] sm:$0xff]
        %v5667 = vld [vmem:[#allocation5 + $0x3f0] sm:$0xff]
        %v5668 = vld [vmem:[#allocation5 + $0x3f8] sm:$0xff]
        %v5669 = vld [vmem:[#allocation5 + $0x400] sm:$0xff]
        %v5670 = vld [vmem:[#allocation5 + $0x408] sm:$0xff]
        %v5671 = vld [vmem:[#allocation5 + $0x410] sm:$0xff]
        %v5672 = vld [vmem:[#allocation5 + $0x418] sm:$0xff]
        %v5673 = vld [vmem:[#allocation5 + $0x420] sm:$0xff]
        %v5674 = vld [vmem:[#allocation5 + $0x428] sm:$0xff]
        %v5675 = vld [vmem:[#allocation5 + $0x430] sm:$0xff]
        %v5676 = vld [vmem:[#allocation5 + $0x438] sm:$0xff]
        %v5677 = vld [vmem:[#allocation5 + $0x440] sm:$0xff]
        %v5678 = vld [vmem:[#allocation5 + $0x448] sm:$0xff]
        %v5679 = vld [vmem:[#allocation5 + $0x450] sm:$0xff]
        %v5680 = vld [vmem:[#allocation5 + $0x458] sm:$0xff]
        %v5681 = vld [vmem:[#allocation5 + $0x460] sm:$0xff]
        %v5682 = vld [vmem:[#allocation5 + $0x468] sm:$0xff]
        %v5683 = vld [vmem:[#allocation5 + $0x470] sm:$0xff]
        %v5684 = vld [vmem:[#allocation5 + $0x478] sm:$0xff]
        %5685 = vmatprep.subr.mxu0 %v4695
        %5686 = vmatpush1.msra.mxu0 %v4694
        %5687 = vmatprep.subr.mxu0 %v4693
        %5688 = vmatpush1.msra.mxu0 %v4692
        %5689 = vmatprep.subr.mxu0 %v4691
        %5690 = vmatpush1.msra.mxu0 %v4690
        %5691 = vmatprep.subr.mxu0 %v4689
        %5692 = vmatpush1.msra.mxu0 %v4688
        %5693 = vmatprep.subr.mxu0 %v4687
        %5694 = vmatpush1.msra.mxu0 %v4686
        %5695 = vmatprep.subr.mxu0 %v4685
        %5696 = vmatpush1.msra.mxu0 %v4684
        %5697 = vmatprep.subr.mxu0 %v4683
        %5698 = vmatpush1.msra.mxu0 %v4682
        %5699 = vmatprep.subr.mxu0 %v4681
        %5700 = vmatpush1.msra.mxu0 %v4680
        %5701 = vmatprep.subr.mxu0 %v4679
        %5702 = vmatpush1.msra.mxu0 %v4678
        %5703 = vmatprep.subr.mxu0 %v4677
        %5704 = vmatpush1.msra.mxu0 %v4676
        %5705 = vmatprep.subr.mxu0 %v4675
        %5706 = vmatpush1.msra.mxu0 %v4674
        %5707 = vmatprep.subr.mxu0 %v4673
        %5708 = vmatpush1.msra.mxu0 %v4672
        %5709 = vmatprep.subr.mxu0 %v4671
        %5710 = vmatpush1.msra.mxu0 %v4670
        %5711 = vmatprep.subr.mxu0 %v4669
        %5712 = vmatpush1.msra.mxu0 %v4668
        %5713 = vmatprep.subr.mxu0 %v4667
        %5714 = vmatpush1.msra.mxu0 %v4666
        %5715 = vmatprep.subr.mxu0 %v4665
        %5716 = vmatpush1.msra.mxu0 %v4664
        %5717 = vmatprep.subr.mxu0 %v4727
        %5718 = vmatpush2.msra.mxu0 %v4726
        %5719 = vmatprep.subr.mxu0 %v4725
        %5720 = vmatpush2.msra.mxu0 %v4724
        %5721 = vmatprep.subr.mxu0 %v4723
        %5722 = vmatpush2.msra.mxu0 %v4722
        %5723 = vmatprep.subr.mxu0 %v4721
        %5724 = vmatpush2.msra.mxu0 %v4720
        %5725 = vmatprep.subr.mxu0 %v4719
        %5726 = vmatpush2.msra.mxu0 %v4718
        %5727 = vmatprep.subr.mxu0 %v4717
        %5728 = vmatpush2.msra.mxu0 %v4716
        %5729 = vmatprep.subr.mxu0 %v4715
        %5730 = vmatpush2.msra.mxu0 %v4714
        %5731 = vmatprep.subr.mxu0 %v4713
        %5732 = vmatpush2.msra.mxu0 %v4712
        %5733 = vmatprep.subr.mxu0 %v4711
        %5734 = vmatpush2.msra.mxu0 %v4710
        %5735 = vmatprep.subr.mxu0 %v4709
        %5736 = vmatpush2.msra.mxu0 %v4708
        %5737 = vmatprep.subr.mxu0 %v4707
        %5738 = vmatpush2.msra.mxu0 %v4706
        %5739 = vmatprep.subr.mxu0 %v4705
        %5740 = vmatpush2.msra.mxu0 %v4704
        %5741 = vmatprep.subr.mxu0 %v4703
        %5742 = vmatpush2.msra.mxu0 %v4702
        %5743 = vmatprep.subr.mxu0 %v4701
        %5744 = vmatpush2.msra.mxu0 %v4700
        %5745 = vmatprep.subr.mxu0 %v4699
        %5746 = vmatpush2.msra.mxu0 %v4698
        %5747 = vmatprep.subr.mxu0 %v4697
        %5748 = vmatpush2.msra.mxu0 %v4696
        %5749 = vmatprep.mubr.f32.mxu0 %v5614
        %5750 = vmatmul.mubr.f32.gmra.mxu0 %v5613
        %v5751 = vpop.f32.mrf.mxu0
        %v5752 = vadd.f32 0.0, %v5751
        %v5753 = vpop.f32.mrf.mxu0
        %v5754 = vadd.f32 0.0, %v5753
        %5755 = vmatprep.mubr.f32.mxu0 %v5623
        %5756 = vmatmul.mubr.f32.gmra.mxu0 %v5622
        %v5757 = vpop.f32.mrf.mxu0
        %v5758 = vadd.f32 0.0, %v5757
        %v5759 = vpop.f32.mrf.mxu0
        %v5760 = vadd.f32 0.0, %v5759
        %5761 = vmatprep.mubr.f32.mxu0 %v5632
        %5762 = vmatmul.mubr.f32.gmra.mxu0 %v5631
        %v5763 = vpop.f32.mrf.mxu0
        %v5764 = vadd.f32 0.0, %v5763
        %v5765 = vpop.f32.mrf.mxu0
        %v5766 = vadd.f32 0.0, %v5765
        %5767 = vmatprep.mubr.f32.mxu0 %v5641
        %5768 = vmatmul.mubr.f32.gmra.mxu0 %v5640
        %v5769 = vpop.f32.mrf.mxu0
        %v5770 = vadd.f32 0.0, %v5769
        %v5771 = vpop.f32.mrf.mxu0
        %v5772 = vadd.f32 0.0, %v5771
        %5773 = vmatprep.mubr.f32.mxu0 %v5650
        %5774 = vmatmul.mubr.f32.gmra.mxu0 %v5649
        %v5775 = vpop.f32.mrf.mxu0
        %v5776 = vadd.f32 0.0, %v5775
        %v5777 = vpop.f32.mrf.mxu0
        %v5778 = vadd.f32 0.0, %v5777
        %5779 = vmatprep.mubr.f32.mxu0 %v5659
        %5780 = vmatmul.mubr.f32.gmra.mxu0 %v5658
        %v5781 = vpop.f32.mrf.mxu0
        %v5782 = vadd.f32 0.0, %v5781
        %v5783 = vpop.f32.mrf.mxu0
        %v5784 = vadd.f32 0.0, %v5783
        %5785 = vmatprep.mubr.f32.mxu0 %v5668
        %5786 = vmatmul.mubr.f32.gmra.mxu0 %v5667
        %v5787 = vpop.f32.mrf.mxu0
        %v5788 = vadd.f32 0.0, %v5787
        %v5789 = vpop.f32.mrf.mxu0
        %v5790 = vadd.f32 0.0, %v5789
        %5791 = vmatprep.mubr.f32.mxu0 %v5677
        %5792 = vmatmul.mubr.f32.gmra.mxu0 %v5676
        %v5793 = vpop.f32.mrf.mxu0
        %v5794 = vadd.f32 0.0, %v5793
        %v5795 = vpop.f32.mrf.mxu0
        %v5796 = vadd.f32 0.0, %v5795
        %5797 = vdwg.mxu0
        %5798 = vmatprep.subr.mxu0 %v4759
        %5799 = vmatpush1.msra.mxu0 %v4758
        %5800 = vmatprep.subr.mxu0 %v4757
        %5801 = vmatpush1.msra.mxu0 %v4756
        %5802 = vmatprep.subr.mxu0 %v4755
        %5803 = vmatpush1.msra.mxu0 %v4754
        %5804 = vmatprep.subr.mxu0 %v4753
        %5805 = vmatpush1.msra.mxu0 %v4752
        %5806 = vmatprep.subr.mxu0 %v4751
        %5807 = vmatpush1.msra.mxu0 %v4750
        %5808 = vmatprep.subr.mxu0 %v4749
        %5809 = vmatpush1.msra.mxu0 %v4748
        %5810 = vmatprep.subr.mxu0 %v4747
        %5811 = vmatpush1.msra.mxu0 %v4746
        %5812 = vmatprep.subr.mxu0 %v4745
        %5813 = vmatpush1.msra.mxu0 %v4744
        %5814 = vmatprep.subr.mxu0 %v4743
        %5815 = vmatpush1.msra.mxu0 %v4742
        %5816 = vmatprep.subr.mxu0 %v4741
        %5817 = vmatpush1.msra.mxu0 %v4740
        %5818 = vmatprep.subr.mxu0 %v4739
        %5819 = vmatpush1.msra.mxu0 %v4738
        %5820 = vmatprep.subr.mxu0 %v4737
        %5821 = vmatpush1.msra.mxu0 %v4736
        %5822 = vmatprep.subr.mxu0 %v4735
        %5823 = vmatpush1.msra.mxu0 %v4734
        %5824 = vmatprep.subr.mxu0 %v4733
        %5825 = vmatpush1.msra.mxu0 %v4732
        %5826 = vmatprep.subr.mxu0 %v4731
        %5827 = vmatpush1.msra.mxu0 %v4730
        %5828 = vmatprep.subr.mxu0 %v4729
        %5829 = vmatpush1.msra.mxu0 %v4728
        %5830 = vmatprep.subr.mxu0 %v4791
        %5831 = vmatpush2.msra.mxu0 %v4790
        %5832 = vmatprep.subr.mxu0 %v4789
        %5833 = vmatpush2.msra.mxu0 %v4788
        %5834 = vmatprep.subr.mxu0 %v4787
        %5835 = vmatpush2.msra.mxu0 %v4786
        %5836 = vmatprep.subr.mxu0 %v4785
        %5837 = vmatpush2.msra.mxu0 %v4784
        %5838 = vmatprep.subr.mxu0 %v4783
        %5839 = vmatpush2.msra.mxu0 %v4782
        %5840 = vmatprep.subr.mxu0 %v4781
        %5841 = vmatpush2.msra.mxu0 %v4780
        %5842 = vmatprep.subr.mxu0 %v4779
        %5843 = vmatpush2.msra.mxu0 %v4778
        %5844 = vmatprep.subr.mxu0 %v4777
        %5845 = vmatpush2.msra.mxu0 %v4776
        %5846 = vmatprep.subr.mxu0 %v4775
        %5847 = vmatpush2.msra.mxu0 %v4774
        %5848 = vmatprep.subr.mxu0 %v4773
        %5849 = vmatpush2.msra.mxu0 %v4772
        %5850 = vmatprep.subr.mxu0 %v4771
        %5851 = vmatpush2.msra.mxu0 %v4770
        %5852 = vmatprep.subr.mxu0 %v4769
        %5853 = vmatpush2.msra.mxu0 %v4768
        %5854 = vmatprep.subr.mxu0 %v4767
        %5855 = vmatpush2.msra.mxu0 %v4766
        %5856 = vmatprep.subr.mxu0 %v4765
        %5857 = vmatpush2.msra.mxu0 %v4764
        %5858 = vmatprep.subr.mxu0 %v4763
        %5859 = vmatpush2.msra.mxu0 %v4762
        %5860 = vmatprep.subr.mxu0 %v4761
        %5861 = vmatpush2.msra.mxu0 %v4760
        %5862 = vmatprep.mubr.f32.mxu0 %v5616
        %5863 = vmatmul.mubr.f32.gmra.mxu0 %v5615
        %v5864 = vpop.f32.mrf.mxu0
        %v5865 = vadd.f32 %v5752, %v5864
        %v5866 = vpop.f32.mrf.mxu0
        %v5867 = vadd.f32 %v5754, %v5866
        %5868 = vmatprep.mubr.f32.mxu0 %v5625
        %5869 = vmatmul.mubr.f32.gmra.mxu0 %v5624
        %v5870 = vpop.f32.mrf.mxu0
        %v5871 = vadd.f32 %v5758, %v5870
        %v5872 = vpop.f32.mrf.mxu0
        %v5873 = vadd.f32 %v5760, %v5872
        %5874 = vmatprep.mubr.f32.mxu0 %v5634
        %5875 = vmatmul.mubr.f32.gmra.mxu0 %v5633
        %v5876 = vpop.f32.mrf.mxu0
        %v5877 = vadd.f32 %v5764, %v5876
        %v5878 = vpop.f32.mrf.mxu0
        %v5879 = vadd.f32 %v5766, %v5878
        %5880 = vmatprep.mubr.f32.mxu0 %v5643
        %5881 = vmatmul.mubr.f32.gmra.mxu0 %v5642
        %v5882 = vpop.f32.mrf.mxu0
        %v5883 = vadd.f32 %v5770, %v5882
        %v5884 = vpop.f32.mrf.mxu0
        %v5885 = vadd.f32 %v5772, %v5884
        %5886 = vmatprep.mubr.f32.mxu0 %v5652
        %5887 = vmatmul.mubr.f32.gmra.mxu0 %v5651
        %v5888 = vpop.f32.mrf.mxu0
        %v5889 = vadd.f32 %v5776, %v5888
        %v5890 = vpop.f32.mrf.mxu0
        %v5891 = vadd.f32 %v5778, %v5890
        %5892 = vmatprep.mubr.f32.mxu0 %v5661
        %5893 = vmatmul.mubr.f32.gmra.mxu0 %v5660
        %v5894 = vpop.f32.mrf.mxu0
        %v5895 = vadd.f32 %v5782, %v5894
        %v5896 = vpop.f32.mrf.mxu0
        %v5897 = vadd.f32 %v5784, %v5896
        %5898 = vmatprep.mubr.f32.mxu0 %v5670
        %5899 = vmatmul.mubr.f32.gmra.mxu0 %v5669
        %v5900 = vpop.f32.mrf.mxu0
        %v5901 = vadd.f32 %v5788, %v5900
        %v5902 = vpop.f32.mrf.mxu0
        %v5903 = vadd.f32 %v5790, %v5902
        %5904 = vmatprep.mubr.f32.mxu0 %v5679
        %5905 = vmatmul.mubr.f32.gmra.mxu0 %v5678
        %v5906 = vpop.f32.mrf.mxu0
        %v5907 = vadd.f32 %v5794, %v5906
        %v5908 = vpop.f32.mrf.mxu0
        %v5909 = vadd.f32 %v5796, %v5908
        %5910 = vdwg.mxu0
        %5911 = vmatprep.subr.mxu0 %v4823
        %5912 = vmatpush1.msra.mxu0 %v4822
        %5913 = vmatprep.subr.mxu0 %v4821
        %5914 = vmatpush1.msra.mxu0 %v4820
        %5915 = vmatprep.subr.mxu0 %v4819
        %5916 = vmatpush1.msra.mxu0 %v4818
        %5917 = vmatprep.subr.mxu0 %v4817
        %5918 = vmatpush1.msra.mxu0 %v4816
        %5919 = vmatprep.subr.mxu0 %v4815
        %5920 = vmatpush1.msra.mxu0 %v4814
        %5921 = vmatprep.subr.mxu0 %v4813
        %5922 = vmatpush1.msra.mxu0 %v4812
        %5923 = vmatprep.subr.mxu0 %v4811
        %5924 = vmatpush1.msra.mxu0 %v4810
        %5925 = vmatprep.subr.mxu0 %v4809
        %5926 = vmatpush1.msra.mxu0 %v4808
        %5927 = vmatprep.subr.mxu0 %v4807
        %5928 = vmatpush1.msra.mxu0 %v4806
        %5929 = vmatprep.subr.mxu0 %v4805
        %5930 = vmatpush1.msra.mxu0 %v4804
        %5931 = vmatprep.subr.mxu0 %v4803
        %5932 = vmatpush1.msra.mxu0 %v4802
        %5933 = vmatprep.subr.mxu0 %v4801
        %5934 = vmatpush1.msra.mxu0 %v4800
        %5935 = vmatprep.subr.mxu0 %v4799
        %5936 = vmatpush1.msra.mxu0 %v4798
        %5937 = vmatprep.subr.mxu0 %v4797
        %5938 = vmatpush1.msra.mxu0 %v4796
        %5939 = vmatprep.subr.mxu0 %v4795
        %5940 = vmatpush1.msra.mxu0 %v4794
        %5941 = vmatprep.subr.mxu0 %v4793
        %5942 = vmatpush1.msra.mxu0 %v4792
        %5943 = vmatprep.subr.mxu0 %v4855
        %5944 = vmatpush2.msra.mxu0 %v4854
        %5945 = vmatprep.subr.mxu0 %v4853
        %5946 = vmatpush2.msra.mxu0 %v4852
        %5947 = vmatprep.subr.mxu0 %v4851
        %5948 = vmatpush2.msra.mxu0 %v4850
        %5949 = vmatprep.subr.mxu0 %v4849
        %5950 = vmatpush2.msra.mxu0 %v4848
        %5951 = vmatprep.subr.mxu0 %v4847
        %5952 = vmatpush2.msra.mxu0 %v4846
        %5953 = vmatprep.subr.mxu0 %v4845
        %5954 = vmatpush2.msra.mxu0 %v4844
        %5955 = vmatprep.subr.mxu0 %v4843
        %5956 = vmatpush2.msra.mxu0 %v4842
        %5957 = vmatprep.subr.mxu0 %v4841
        %5958 = vmatpush2.msra.mxu0 %v4840
        %5959 = vmatprep.subr.mxu0 %v4839
        %5960 = vmatpush2.msra.mxu0 %v4838
        %5961 = vmatprep.subr.mxu0 %v4837
        %5962 = vmatpush2.msra.mxu0 %v4836
        %5963 = vmatprep.subr.mxu0 %v4835
        %5964 = vmatpush2.msra.mxu0 %v4834
        %5965 = vmatprep.subr.mxu0 %v4833
        %5966 = vmatpush2.msra.mxu0 %v4832
        %5967 = vmatprep.subr.mxu0 %v4831
        %5968 = vmatpush2.msra.mxu0 %v4830
        %5969 = vmatprep.subr.mxu0 %v4829
        %5970 = vmatpush2.msra.mxu0 %v4828
        %5971 = vmatprep.subr.mxu0 %v4827
        %5972 = vmatpush2.msra.mxu0 %v4826
        %5973 = vmatprep.subr.mxu0 %v4825
        %5974 = vmatpush2.msra.mxu0 %v4824
        %5975 = vmatprep.mubr.f32.mxu0 %v5618
        %5976 = vmatmul.mubr.f32.gmra.mxu0 %v5617
        %v5977 = vpop.f32.mrf.mxu0
        %v5978 = vadd.f32 %v5865, %v5977
        %v5979 = vpop.f32.mrf.mxu0
        %v5980 = vadd.f32 %v5867, %v5979
        %5981 = vmatprep.mubr.f32.mxu0 %v5627
        %5982 = vmatmul.mubr.f32.gmra.mxu0 %v5626
        %v5983 = vpop.f32.mrf.mxu0
        %v5984 = vadd.f32 %v5871, %v5983
        %v5985 = vpop.f32.mrf.mxu0
        %v5986 = vadd.f32 %v5873, %v5985
        %5987 = vmatprep.mubr.f32.mxu0 %v5636
        %5988 = vmatmul.mubr.f32.gmra.mxu0 %v5635
        %v5989 = vpop.f32.mrf.mxu0
        %v5990 = vadd.f32 %v5877, %v5989
        %v5991 = vpop.f32.mrf.mxu0
        %v5992 = vadd.f32 %v5879, %v5991
        %5993 = vmatprep.mubr.f32.mxu0 %v5645
        %5994 = vmatmul.mubr.f32.gmra.mxu0 %v5644
        %v5995 = vpop.f32.mrf.mxu0
        %v5996 = vadd.f32 %v5883, %v5995
        %v5997 = vpop.f32.mrf.mxu0
        %v5998 = vadd.f32 %v5885, %v5997
        %5999 = vmatprep.mubr.f32.mxu0 %v5654
        %6000 = vmatmul.mubr.f32.gmra.mxu0 %v5653
        %v6001 = vpop.f32.mrf.mxu0
        %v6002 = vadd.f32 %v5889, %v6001
        %v6003 = vpop.f32.mrf.mxu0
        %v6004 = vadd.f32 %v5891, %v6003
        %6005 = vmatprep.mubr.f32.mxu0 %v5663
        %6006 = vmatmul.mubr.f32.gmra.mxu0 %v5662
        %v6007 = vpop.f32.mrf.mxu0
        %v6008 = vadd.f32 %v5895, %v6007
        %v6009 = vpop.f32.mrf.mxu0
        %v6010 = vadd.f32 %v5897, %v6009
        %6011 = vmatprep.mubr.f32.mxu0 %v5672
        %6012 = vmatmul.mubr.f32.gmra.mxu0 %v5671
        %v6013 = vpop.f32.mrf.mxu0
        %v6014 = vadd.f32 %v5901, %v6013
        %v6015 = vpop.f32.mrf.mxu0
        %v6016 = vadd.f32 %v5903, %v6015
        %6017 = vmatprep.mubr.f32.mxu0 %v5681
        %6018 = vmatmul.mubr.f32.gmra.mxu0 %v5680
        %v6019 = vpop.f32.mrf.mxu0
        %v6020 = vadd.f32 %v5907, %v6019
        %v6021 = vpop.f32.mrf.mxu0
        %v6022 = vadd.f32 %v5909, %v6021
        %6023 = vdwg.mxu0
        %6024 = vmatprep.subr.mxu0 %v4887
        %6025 = vmatpush1.msra.mxu0 %v4886
        %6026 = vmatprep.subr.mxu0 %v4885
        %6027 = vmatpush1.msra.mxu0 %v4884
        %6028 = vmatprep.subr.mxu0 %v4883
        %6029 = vmatpush1.msra.mxu0 %v4882
        %6030 = vmatprep.subr.mxu0 %v4881
        %6031 = vmatpush1.msra.mxu0 %v4880
        %6032 = vmatprep.subr.mxu0 %v4879
        %6033 = vmatpush1.msra.mxu0 %v4878
        %6034 = vmatprep.subr.mxu0 %v4877
        %6035 = vmatpush1.msra.mxu0 %v4876
        %6036 = vmatprep.subr.mxu0 %v4875
        %6037 = vmatpush1.msra.mxu0 %v4874
        %6038 = vmatprep.subr.mxu0 %v4873
        %6039 = vmatpush1.msra.mxu0 %v4872
        %6040 = vmatprep.subr.mxu0 %v4871
        %6041 = vmatpush1.msra.mxu0 %v4870
        %6042 = vmatprep.subr.mxu0 %v4869
        %6043 = vmatpush1.msra.mxu0 %v4868
        %6044 = vmatprep.subr.mxu0 %v4867
        %6045 = vmatpush1.msra.mxu0 %v4866
        %6046 = vmatprep.subr.mxu0 %v4865
        %6047 = vmatpush1.msra.mxu0 %v4864
        %6048 = vmatprep.subr.mxu0 %v4863
        %6049 = vmatpush1.msra.mxu0 %v4862
        %6050 = vmatprep.subr.mxu0 %v4861
        %6051 = vmatpush1.msra.mxu0 %v4860
        %6052 = vmatprep.subr.mxu0 %v4859
        %6053 = vmatpush1.msra.mxu0 %v4858
        %6054 = vmatprep.subr.mxu0 %v4857
        %6055 = vmatpush1.msra.mxu0 %v4856
        %6056 = vmatprep.subr.mxu0 %v4919
        %6057 = vmatpush2.msra.mxu0 %v4918
        %6058 = vmatprep.subr.mxu0 %v4917
        %6059 = vmatpush2.msra.mxu0 %v4916
        %6060 = vmatprep.subr.mxu0 %v4915
        %6061 = vmatpush2.msra.mxu0 %v4914
        %6062 = vmatprep.subr.mxu0 %v4913
        %6063 = vmatpush2.msra.mxu0 %v4912
        %6064 = vmatprep.subr.mxu0 %v4911
        %6065 = vmatpush2.msra.mxu0 %v4910
        %6066 = vmatprep.subr.mxu0 %v4909
        %6067 = vmatpush2.msra.mxu0 %v4908
        %6068 = vmatprep.subr.mxu0 %v4907
        %6069 = vmatpush2.msra.mxu0 %v4906
        %6070 = vmatprep.subr.mxu0 %v4905
        %6071 = vmatpush2.msra.mxu0 %v4904
        %6072 = vmatprep.subr.mxu0 %v4903
        %6073 = vmatpush2.msra.mxu0 %v4902
        %6074 = vmatprep.subr.mxu0 %v4901
        %6075 = vmatpush2.msra.mxu0 %v4900
        %6076 = vmatprep.subr.mxu0 %v4899
        %6077 = vmatpush2.msra.mxu0 %v4898
        %6078 = vmatprep.subr.mxu0 %v4897
        %6079 = vmatpush2.msra.mxu0 %v4896
        %6080 = vmatprep.subr.mxu0 %v4895
        %6081 = vmatpush2.msra.mxu0 %v4894
        %6082 = vmatprep.subr.mxu0 %v4893
        %6083 = vmatpush2.msra.mxu0 %v4892
        %6084 = vmatprep.subr.mxu0 %v4891
        %6085 = vmatpush2.msra.mxu0 %v4890
        %6086 = vmatprep.subr.mxu0 %v4889
        %6087 = vmatpush2.msra.mxu0 %v4888
        %6088 = vmatprep.mubr.f32.mxu0 %v5620
        %6089 = vmatmul.mubr.f32.gmra.mxu0 %v5619
        %v6090 = vpop.f32.mrf.mxu0
        %v6091 = vadd.f32 %v5978, %v6090
        %v6092 = vpop.f32.mrf.mxu0
        %v6093 = vadd.f32 %v5980, %v6092
        %6094 = vmatprep.mubr.f32.mxu0 %v5629
        %6095 = vmatmul.mubr.f32.gmra.mxu0 %v5628
        %v6096 = vpop.f32.mrf.mxu0
        %v6097 = vadd.f32 %v5984, %v6096
        %v6098 = vpop.f32.mrf.mxu0
        %v6099 = vadd.f32 %v5986, %v6098
        %6100 = vmatprep.mubr.f32.mxu0 %v5638
        %6101 = vmatmul.mubr.f32.gmra.mxu0 %v5637
        %v6102 = vpop.f32.mrf.mxu0
        %v6103 = vadd.f32 %v5990, %v6102
        %v6104 = vpop.f32.mrf.mxu0
        %v6105 = vadd.f32 %v5992, %v6104
        %6106 = vmatprep.mubr.f32.mxu0 %v5647
        %6107 = vmatmul.mubr.f32.gmra.mxu0 %v5646
        %v6108 = vpop.f32.mrf.mxu0
        %v6109 = vadd.f32 %v5996, %v6108
        %v6110 = vpop.f32.mrf.mxu0
        %v6111 = vadd.f32 %v5998, %v6110
        %6112 = vmatprep.mubr.f32.mxu0 %v5656
        %6113 = vmatmul.mubr.f32.gmra.mxu0 %v5655
        %v6114 = vpop.f32.mrf.mxu0
        %v6115 = vadd.f32 %v6002, %v6114
        %v6116 = vpop.f32.mrf.mxu0
        %v6117 = vadd.f32 %v6004, %v6116
        %6118 = vmatprep.mubr.f32.mxu0 %v5665
        %6119 = vmatmul.mubr.f32.gmra.mxu0 %v5664
        %v6120 = vpop.f32.mrf.mxu0
        %v6121 = vadd.f32 %v6008, %v6120
        %v6122 = vpop.f32.mrf.mxu0
        %v6123 = vadd.f32 %v6010, %v6122
        %6124 = vmatprep.mubr.f32.mxu0 %v5674
        %6125 = vmatmul.mubr.f32.gmra.mxu0 %v5673
        %v6126 = vpop.f32.mrf.mxu0
        %v6127 = vadd.f32 %v6014, %v6126
        %v6128 = vpop.f32.mrf.mxu0
        %v6129 = vadd.f32 %v6016, %v6128
        %6130 = vmatprep.mubr.f32.mxu0 %v5683
        %6131 = vmatmul.mubr.f32.gmra.mxu0 %v5682
        %v6132 = vpop.f32.mrf.mxu0
        %v6133 = vadd.f32 %v6020, %v6132
        %v6134 = vpop.f32.mrf.mxu0
        %v6135 = vadd.f32 %v6022, %v6134
        %6136 = vdwg.mxu0
        %6137 = vmatprep.subr.mxu0 %v4951
        %6138 = vmatpush1.msra.mxu0 %v4950
        %6139 = vmatprep.subr.mxu0 %v4949
        %6140 = vmatpush1.msra.mxu0 %v4948
        %6141 = vmatprep.subr.mxu0 %v4947
        %6142 = vmatpush1.msra.mxu0 %v4946
        %6143 = vmatprep.subr.mxu0 %v4945
        %6144 = vmatpush1.msra.mxu0 %v4944
        %6145 = vmatprep.subr.mxu0 %v4943
        %6146 = vmatpush1.msra.mxu0 %v4942
        %6147 = vmatprep.subr.mxu0 %v4941
        %6148 = vmatpush1.msra.mxu0 %v4940
        %6149 = vmatprep.subr.mxu0 %v4939
        %6150 = vmatpush1.msra.mxu0 %v4938
        %6151 = vmatprep.subr.mxu0 %v4937
        %6152 = vmatpush1.msra.mxu0 %v4936
        %6153 = vmatprep.subr.mxu0 %v4935
        %6154 = vmatpush1.msra.mxu0 %v4934
        %6155 = vmatprep.subr.mxu0 %v4933
        %6156 = vmatpush1.msra.mxu0 %v4932
        %6157 = vmatprep.subr.mxu0 %v4931
        %6158 = vmatpush1.msra.mxu0 %v4930
        %6159 = vmatprep.subr.mxu0 %v4929
        %6160 = vmatpush1.msra.mxu0 %v4928
        %6161 = vmatprep.subr.mxu0 %v4927
        %6162 = vmatpush1.msra.mxu0 %v4926
        %6163 = vmatprep.subr.mxu0 %v4925
        %6164 = vmatpush1.msra.mxu0 %v4924
        %6165 = vmatprep.subr.mxu0 %v4923
        %6166 = vmatpush1.msra.mxu0 %v4922
        %6167 = vmatprep.subr.mxu0 %v4921
        %6168 = vmatpush1.msra.mxu0 %v4920
        %6169 = vmatprep.subr.mxu0 0.0
        %6170 = vmatpush2.msra.mxu0 0.0
        %6171 = vmatprep.subr.mxu0 0.0
        %6172 = vmatpush2.msra.mxu0 0.0
        %6173 = vmatprep.subr.mxu0 0.0
        %6174 = vmatpush2.msra.mxu0 0.0
        %6175 = vmatprep.subr.mxu0 0.0
        %6176 = vmatpush2.msra.mxu0 0.0
        %6177 = vmatprep.subr.mxu0 0.0
        %6178 = vmatpush2.msra.mxu0 0.0
        %6179 = vmatprep.subr.mxu0 0.0
        %6180 = vmatpush2.msra.mxu0 0.0
        %6181 = vmatprep.subr.mxu0 0.0
        %6182 = vmatpush2.msra.mxu0 0.0
        %6183 = vmatprep.subr.mxu0 0.0
        %6184 = vmatpush2.msra.mxu0 0.0
        %6185 = vmatprep.subr.mxu0 0.0
        %6186 = vmatpush2.msra.mxu0 0.0
        %6187 = vmatprep.subr.mxu0 0.0
        %6188 = vmatpush2.msra.mxu0 0.0
        %6189 = vmatprep.subr.mxu0 0.0
        %6190 = vmatpush2.msra.mxu0 0.0
        %6191 = vmatprep.subr.mxu0 0.0
        %6192 = vmatpush2.msra.mxu0 0.0
        %6193 = vmatprep.subr.mxu0 0.0
        %6194 = vmatpush2.msra.mxu0 0.0
        %6195 = vmatprep.subr.mxu0 0.0
        %6196 = vmatpush2.msra.mxu0 0.0
        %6197 = vmatprep.subr.mxu0 0.0
        %6198 = vmatpush2.msra.mxu0 0.0
        %6199 = vmatprep.subr.mxu0 0.0
        %6200 = vmatpush2.msra.mxu0 0.0
        %6201 = vmatprep.mubr.f32.mxu0 0.0
        %6202 = vmatmul.mubr.f32.gmra.mxu0 %v5621
        %v6203 = vpop.f32.mrf.mxu0
        %v6204 = vadd.f32 %v6091, %v6203
        %v6205 = vpop.f32.mrf.mxu0
        %v6206 = vadd.f32 %v6093, %v6205
        %6207 = vmatprep.mubr.f32.mxu0 0.0
        %6208 = vmatmul.mubr.f32.gmra.mxu0 %v5630
        %v6209 = vpop.f32.mrf.mxu0
        %v6210 = vadd.f32 %v6097, %v6209
        %v6211 = vpop.f32.mrf.mxu0
        %v6212 = vadd.f32 %v6099, %v6211
        %6213 = vmatprep.mubr.f32.mxu0 0.0
        %6214 = vmatmul.mubr.f32.gmra.mxu0 %v5639
        %v6215 = vpop.f32.mrf.mxu0
        %v6216 = vadd.f32 %v6103, %v6215
        %v6217 = vpop.f32.mrf.mxu0
        %v6218 = vadd.f32 %v6105, %v6217
        %6219 = vmatprep.mubr.f32.mxu0 0.0
        %6220 = vmatmul.mubr.f32.gmra.mxu0 %v5648
        %v6221 = vpop.f32.mrf.mxu0
        %v6222 = vadd.f32 %v6109, %v6221
        %v6223 = vpop.f32.mrf.mxu0
        %v6224 = vadd.f32 %v6111, %v6223
        %6225 = vmatprep.mubr.f32.mxu0 0.0
        %6226 = vmatmul.mubr.f32.gmra.mxu0 %v5657
        %v6227 = vpop.f32.mrf.mxu0
        %v6228 = vadd.f32 %v6115, %v6227
        %v6229 = vpop.f32.mrf.mxu0
        %v6230 = vadd.f32 %v6117, %v6229
        %6231 = vmatprep.mubr.f32.mxu0 0.0
        %6232 = vmatmul.mubr.f32.gmra.mxu0 %v5666
        %v6233 = vpop.f32.mrf.mxu0
        %v6234 = vadd.f32 %v6121, %v6233
        %v6235 = vpop.f32.mrf.mxu0
        %v6236 = vadd.f32 %v6123, %v6235
        %6237 = vmatprep.mubr.f32.mxu0 0.0
        %6238 = vmatmul.mubr.f32.gmra.mxu0 %v5675
        %v6239 = vpop.f32.mrf.mxu0
        %v6240 = vadd.f32 %v6127, %v6239
        %v6241 = vpop.f32.mrf.mxu0
        %v6242 = vadd.f32 %v6129, %v6241
        %6243 = vmatprep.mubr.f32.mxu0 0.0
        %6244 = vmatmul.mubr.f32.gmra.mxu0 %v5684
        %v6245 = vpop.f32.mrf.mxu0
        %v6246 = vadd.f32 %v6133, %v6245
        %v6247 = vpop.f32.mrf.mxu0
        %v6248 = vadd.f32 %v6135, %v6247
        %6249 = vdwg.mxu0
        %v6250 = vmul.f32 %v6204, %v5521
        %v6251 = vmul.f32 %v6206, %v5525
        %v6252 = vmul.f32 %v6210, %v5521
        %v6253 = vmul.f32 %v6212, %v5525
        %v6254 = vmul.f32 %v6216, %v5521
        %v6255 = vmul.f32 %v6218, %v5525
        %v6256 = vmul.f32 %v6222, %v5521
        %v6257 = vmul.f32 %v6224, %v5525
        %v6258 = vmul.f32 %v6228, %v5521
        %v6259 = vmul.f32 %v6230, %v5525
        %v6260 = vmul.f32 %v6234, %v5521
        %v6261 = vmul.f32 %v6236, %v5525
        %v6262 = vmul.f32 %v6240, %v5521
        %v6263 = vmul.f32 %v6242, %v5525
        %v6264 = vmul.f32 %v6246, %v5521
        %v6265 = vmul.f32 %v6248, %v5525
        %v6266 = vadd.f32 %v6250, %v5548
        %v6267 = vadd.f32 %v6251, %v5552
        %v6268 = vadd.f32 %v6252, %v5548
        %v6269 = vadd.f32 %v6253, %v5552
        %v6270 = vadd.f32 %v6254, %v5548
        %v6271 = vadd.f32 %v6255, %v5552
        %v6272 = vadd.f32 %v6256, %v5548
        %v6273 = vadd.f32 %v6257, %v5552
        %v6274 = vadd.f32 %v6258, %v5548
        %v6275 = vadd.f32 %v6259, %v5552
        %v6276 = vadd.f32 %v6260, %v5548
        %v6277 = vadd.f32 %v6261, %v5552
        %v6278 = vadd.f32 %v6262, %v5548
        %v6279 = vadd.f32 %v6263, %v5552
        %v6280 = vadd.f32 %v6264, %v5548
        %v6281 = vadd.f32 %v6265, %v5552
        %v6282 = vmax.f32 %v6266, 0.0
        %v6283 = vmax.f32 %v6267, 0.0
        %v6284 = vmax.f32 %v6268, 0.0
        %v6285 = vmax.f32 %v6269, 0.0
        %v6286 = vmax.f32 %v6270, 0.0
        %v6287 = vmax.f32 %v6271, 0.0
        %v6288 = vmax.f32 %v6272, 0.0
        %v6289 = vmax.f32 %v6273, 0.0
        %v6290 = vmax.f32 %v6274, 0.0
        %v6291 = vmax.f32 %v6275, 0.0
        %v6292 = vmax.f32 %v6276, 0.0
        %v6293 = vmax.f32 %v6277, 0.0
        %v6294 = vmax.f32 %v6278, 0.0
        %v6295 = vmax.f32 %v6279, 0.0
        %v6296 = vmax.f32 %v6280, 0.0
        %v6297 = vmax.f32 %v6281, 0.0
        %v6298 = vmax.f32 %v6282, %v6286
        %v6299 = vmax.f32 %v6284, %v6288
        %v6300 = vmax.f32 %v6298, %v6290
        %v6301 = vmax.f32 %v6299, %v6292
        %v6302 = vmax.f32 %v6300, %v6294
        %v6303 = vmax.f32 %v6301, %v6296
        %v6304 = vmax.f32 %v6302, %v6303
        %v6305 = vrot.slane %v6304, 4
        %v6306 = vmax.f32 %v6304, %v6305
        %v6307 = vrot.slane %v6306, 2
        %v6308 = vmax.f32 %v6306, %v6307
        %v6309 = vrot.slane %v6308, 1
        %v6310 = vmax.f32 %v6308, %v6309
        %v6311 = vmax.f32 %v6283, %v6287
        %v6312 = vmax.f32 %v6285, %v6289
        %v6313 = vmax.f32 %v6311, %v6291
        %v6314 = vmax.f32 %v6312, %v6293
        %v6315 = vmax.f32 %v6313, %v6295
        %v6316 = vmax.f32 %v6314, %v6297
        %v6317 = vmax.f32 %v6315, %v6316
        %v6318 = vrot.slane %v6317, 4
        %v6319 = vmax.f32 %v6317, %v6318
        %v6320 = vrot.slane %v6319, 2
        %v6321 = vmax.f32 %v6319, %v6320
        %v6322 = vrot.slane %v6321, 1
        %v6323 = vmax.f32 %v6321, %v6322
        %v6324 = vmax.f32 %v5599, %v6310
        %v6325 = vmax.f32 %v5612, %v6323
        %v6326 = vld [vmem:[#allocation5 + $0x480] sm:$0xff]
        %v6327 = vld [vmem:[#allocation5 + $0x488] sm:$0xff]
        %v6328 = vld [vmem:[#allocation5 + $0x490] sm:$0xff]
        %v6329 = vld [vmem:[#allocation5 + $0x498] sm:$0xff]
        %v6330 = vld [vmem:[#allocation5 + $0x4a0] sm:$0xff]
        %v6331 = vld [vmem:[#allocation5 + $0x4a8] sm:$0xff]
        %v6332 = vld [vmem:[#allocation5 + $0x4b0] sm:$0xff]
        %v6333 = vld [vmem:[#allocation5 + $0x4b8] sm:$0xff]
        %v6334 = vld [vmem:[#allocation5 + $0x4c0] sm:$0xff]
        %v6335 = vld [vmem:[#allocation5 + $0x4c8] sm:$0xff]
        %v6336 = vld [vmem:[#allocation5 + $0x4d0] sm:$0xff]
        %v6337 = vld [vmem:[#allocation5 + $0x4d8] sm:$0xff]
        %v6338 = vld [vmem:[#allocation5 + $0x4e0] sm:$0xff]
        %v6339 = vld [vmem:[#allocation5 + $0x4e8] sm:$0xff]
        %v6340 = vld [vmem:[#allocation5 + $0x4f0] sm:$0xff]
        %v6341 = vld [vmem:[#allocation5 + $0x4f8] sm:$0xff]
        %v6342 = vld [vmem:[#allocation5 + $0x500] sm:$0xff]
        %v6343 = vld [vmem:[#allocation5 + $0x508] sm:$0xff]
        %v6344 = vld [vmem:[#allocation5 + $0x510] sm:$0xff]
        %v6345 = vld [vmem:[#allocation5 + $0x518] sm:$0xff]
        %v6346 = vld [vmem:[#allocation5 + $0x520] sm:$0xff]
        %v6347 = vld [vmem:[#allocation5 + $0x528] sm:$0xff]
        %v6348 = vld [vmem:[#allocation5 + $0x530] sm:$0xff]
        %v6349 = vld [vmem:[#allocation5 + $0x538] sm:$0xff]
        %v6350 = vld [vmem:[#allocation5 + $0x540] sm:$0xff]
        %v6351 = vld [vmem:[#allocation5 + $0x548] sm:$0xff]
        %v6352 = vld [vmem:[#allocation5 + $0x550] sm:$0xff]
        %v6353 = vld [vmem:[#allocation5 + $0x558] sm:$0xff]
        %v6354 = vld [vmem:[#allocation5 + $0x560] sm:$0xff]
        %v6355 = vld [vmem:[#allocation5 + $0x568] sm:$0xff]
        %v6356 = vld [vmem:[#allocation5 + $0x570] sm:$0xff]
        %v6357 = vld [vmem:[#allocation5 + $0x578] sm:$0xff]
        %v6358 = vld [vmem:[#allocation5 + $0x580] sm:$0xff]
        %v6359 = vld [vmem:[#allocation5 + $0x588] sm:$0xff]
        %v6360 = vld [vmem:[#allocation5 + $0x590] sm:$0xff]
        %v6361 = vld [vmem:[#allocation5 + $0x598] sm:$0xff]
        %v6362 = vld [vmem:[#allocation5 + $0x5a0] sm:$0xff]
        %v6363 = vld [vmem:[#allocation5 + $0x5a8] sm:$0xff]
        %v6364 = vld [vmem:[#allocation5 + $0x5b0] sm:$0xff]
        %v6365 = vld [vmem:[#allocation5 + $0x5b8] sm:$0xff]
        %v6366 = vld [vmem:[#allocation5 + $0x5c0] sm:$0xff]
        %v6367 = vld [vmem:[#allocation5 + $0x5c8] sm:$0xff]
        %v6368 = vld [vmem:[#allocation5 + $0x5d0] sm:$0xff]
        %v6369 = vld [vmem:[#allocation5 + $0x5d8] sm:$0xff]
        %v6370 = vld [vmem:[#allocation5 + $0x5e0] sm:$0xff]
        %v6371 = vld [vmem:[#allocation5 + $0x5e8] sm:$0xff]
        %v6372 = vld [vmem:[#allocation5 + $0x5f0] sm:$0xff]
        %v6373 = vld [vmem:[#allocation5 + $0x5f8] sm:$0xff]
        %v6374 = vld [vmem:[#allocation5 + $0x600] sm:$0xff]
        %v6375 = vld [vmem:[#allocation5 + $0x608] sm:$0xff]
        %v6376 = vld [vmem:[#allocation5 + $0x610] sm:$0xff]
        %v6377 = vld [vmem:[#allocation5 + $0x618] sm:$0xff]
        %v6378 = vld [vmem:[#allocation5 + $0x620] sm:$0xff]
        %v6379 = vld [vmem:[#allocation5 + $0x628] sm:$0xff]
        %v6380 = vld [vmem:[#allocation5 + $0x630] sm:$0xff]
        %v6381 = vld [vmem:[#allocation5 + $0x638] sm:$0xff]
        %v6382 = vld [vmem:[#allocation5 + $0x640] sm:$0xff]
        %v6383 = vld [vmem:[#allocation5 + $0x648] sm:$0xff]
        %v6384 = vld [vmem:[#allocation5 + $0x650] sm:$0xff]
        %v6385 = vld [vmem:[#allocation5 + $0x658] sm:$0xff]
        %v6386 = vld [vmem:[#allocation5 + $0x660] sm:$0xff]
        %v6387 = vld [vmem:[#allocation5 + $0x668] sm:$0xff]
        %v6388 = vld [vmem:[#allocation5 + $0x670] sm:$0xff]
        %v6389 = vld [vmem:[#allocation5 + $0x678] sm:$0xff]
        %v6390 = vld [vmem:[#allocation5 + $0x680] sm:$0xff]
        %v6391 = vld [vmem:[#allocation5 + $0x688] sm:$0xff]
        %v6392 = vld [vmem:[#allocation5 + $0x690] sm:$0xff]
        %v6393 = vld [vmem:[#allocation5 + $0x698] sm:$0xff]
        %v6394 = vld [vmem:[#allocation5 + $0x6a0] sm:$0xff]
        %v6395 = vld [vmem:[#allocation5 + $0x6a8] sm:$0xff]
        %v6396 = vld [vmem:[#allocation5 + $0x6b0] sm:$0xff]
        %v6397 = vld [vmem:[#allocation5 + $0x6b8] sm:$0xff]
        %6398 = vmatprep.subr.mxu0 %v4695
        %6399 = vmatpush1.msra.mxu0 %v4694
        %6400 = vmatprep.subr.mxu0 %v4693
        %6401 = vmatpush1.msra.mxu0 %v4692
        %6402 = vmatprep.subr.mxu0 %v4691
        %6403 = vmatpush1.msra.mxu0 %v4690
        %6404 = vmatprep.subr.mxu0 %v4689
        %6405 = vmatpush1.msra.mxu0 %v4688
        %6406 = vmatprep.subr.mxu0 %v4687
        %6407 = vmatpush1.msra.mxu0 %v4686
        %6408 = vmatprep.subr.mxu0 %v4685
        %6409 = vmatpush1.msra.mxu0 %v4684
        %6410 = vmatprep.subr.mxu0 %v4683
        %6411 = vmatpush1.msra.mxu0 %v4682
        %6412 = vmatprep.subr.mxu0 %v4681
        %6413 = vmatpush1.msra.mxu0 %v4680
        %6414 = vmatprep.subr.mxu0 %v4679
        %6415 = vmatpush1.msra.mxu0 %v4678
        %6416 = vmatprep.subr.mxu0 %v4677
        %6417 = vmatpush1.msra.mxu0 %v4676
        %6418 = vmatprep.subr.mxu0 %v4675
        %6419 = vmatpush1.msra.mxu0 %v4674
        %6420 = vmatprep.subr.mxu0 %v4673
        %6421 = vmatpush1.msra.mxu0 %v4672
        %6422 = vmatprep.subr.mxu0 %v4671
        %6423 = vmatpush1.msra.mxu0 %v4670
        %6424 = vmatprep.subr.mxu0 %v4669
        %6425 = vmatpush1.msra.mxu0 %v4668
        %6426 = vmatprep.subr.mxu0 %v4667
        %6427 = vmatpush1.msra.mxu0 %v4666
        %6428 = vmatprep.subr.mxu0 %v4665
        %6429 = vmatpush1.msra.mxu0 %v4664
        %6430 = vmatprep.subr.mxu0 %v4727
        %6431 = vmatpush2.msra.mxu0 %v4726
        %6432 = vmatprep.subr.mxu0 %v4725
        %6433 = vmatpush2.msra.mxu0 %v4724
        %6434 = vmatprep.subr.mxu0 %v4723
        %6435 = vmatpush2.msra.mxu0 %v4722
        %6436 = vmatprep.subr.mxu0 %v4721
        %6437 = vmatpush2.msra.mxu0 %v4720
        %6438 = vmatprep.subr.mxu0 %v4719
        %6439 = vmatpush2.msra.mxu0 %v4718
        %6440 = vmatprep.subr.mxu0 %v4717
        %6441 = vmatpush2.msra.mxu0 %v4716
        %6442 = vmatprep.subr.mxu0 %v4715
        %6443 = vmatpush2.msra.mxu0 %v4714
        %6444 = vmatprep.subr.mxu0 %v4713
        %6445 = vmatpush2.msra.mxu0 %v4712
        %6446 = vmatprep.subr.mxu0 %v4711
        %6447 = vmatpush2.msra.mxu0 %v4710
        %6448 = vmatprep.subr.mxu0 %v4709
        %6449 = vmatpush2.msra.mxu0 %v4708
        %6450 = vmatprep.subr.mxu0 %v4707
        %6451 = vmatpush2.msra.mxu0 %v4706
        %6452 = vmatprep.subr.mxu0 %v4705
        %6453 = vmatpush2.msra.mxu0 %v4704
        %6454 = vmatprep.subr.mxu0 %v4703
        %6455 = vmatpush2.msra.mxu0 %v4702
        %6456 = vmatprep.subr.mxu0 %v4701
        %6457 = vmatpush2.msra.mxu0 %v4700
        %6458 = vmatprep.subr.mxu0 %v4699
        %6459 = vmatpush2.msra.mxu0 %v4698
        %6460 = vmatprep.subr.mxu0 %v4697
        %6461 = vmatpush2.msra.mxu0 %v4696
        %6462 = vmatprep.mubr.f32.mxu0 %v6327
        %6463 = vmatmul.mubr.f32.gmra.mxu0 %v6326
        %v6464 = vpop.f32.mrf.mxu0
        %v6465 = vadd.f32 0.0, %v6464
        %v6466 = vpop.f32.mrf.mxu0
        %v6467 = vadd.f32 0.0, %v6466
        %6468 = vmatprep.mubr.f32.mxu0 %v6336
        %6469 = vmatmul.mubr.f32.gmra.mxu0 %v6335
        %v6470 = vpop.f32.mrf.mxu0
        %v6471 = vadd.f32 0.0, %v6470
        %v6472 = vpop.f32.mrf.mxu0
        %v6473 = vadd.f32 0.0, %v6472
        %6474 = vmatprep.mubr.f32.mxu0 %v6345
        %6475 = vmatmul.mubr.f32.gmra.mxu0 %v6344
        %v6476 = vpop.f32.mrf.mxu0
        %v6477 = vadd.f32 0.0, %v6476
        %v6478 = vpop.f32.mrf.mxu0
        %v6479 = vadd.f32 0.0, %v6478
        %6480 = vmatprep.mubr.f32.mxu0 %v6354
        %6481 = vmatmul.mubr.f32.gmra.mxu0 %v6353
        %v6482 = vpop.f32.mrf.mxu0
        %v6483 = vadd.f32 0.0, %v6482
        %v6484 = vpop.f32.mrf.mxu0
        %v6485 = vadd.f32 0.0, %v6484
        %6486 = vmatprep.mubr.f32.mxu0 %v6363
        %6487 = vmatmul.mubr.f32.gmra.mxu0 %v6362
        %v6488 = vpop.f32.mrf.mxu0
        %v6489 = vadd.f32 0.0, %v6488
        %v6490 = vpop.f32.mrf.mxu0
        %v6491 = vadd.f32 0.0, %v6490
        %6492 = vmatprep.mubr.f32.mxu0 %v6372
        %6493 = vmatmul.mubr.f32.gmra.mxu0 %v6371
        %v6494 = vpop.f32.mrf.mxu0
        %v6495 = vadd.f32 0.0, %v6494
        %v6496 = vpop.f32.mrf.mxu0
        %v6497 = vadd.f32 0.0, %v6496
        %6498 = vmatprep.mubr.f32.mxu0 %v6381
        %6499 = vmatmul.mubr.f32.gmra.mxu0 %v6380
        %v6500 = vpop.f32.mrf.mxu0
        %v6501 = vadd.f32 0.0, %v6500
        %v6502 = vpop.f32.mrf.mxu0
        %v6503 = vadd.f32 0.0, %v6502
        %6504 = vmatprep.mubr.f32.mxu0 %v6390
        %6505 = vmatmul.mubr.f32.gmra.mxu0 %v6389
        %v6506 = vpop.f32.mrf.mxu0
        %v6507 = vadd.f32 0.0, %v6506
        %v6508 = vpop.f32.mrf.mxu0
        %v6509 = vadd.f32 0.0, %v6508
        %6510 = vdwg.mxu0
        %6511 = vmatprep.subr.mxu0 %v4759
        %6512 = vmatpush1.msra.mxu0 %v4758
        %6513 = vmatprep.subr.mxu0 %v4757
        %6514 = vmatpush1.msra.mxu0 %v4756
        %6515 = vmatprep.subr.mxu0 %v4755
        %6516 = vmatpush1.msra.mxu0 %v4754
        %6517 = vmatprep.subr.mxu0 %v4753
        %6518 = vmatpush1.msra.mxu0 %v4752
        %6519 = vmatprep.subr.mxu0 %v4751
        %6520 = vmatpush1.msra.mxu0 %v4750
        %6521 = vmatprep.subr.mxu0 %v4749
        %6522 = vmatpush1.msra.mxu0 %v4748
        %6523 = vmatprep.subr.mxu0 %v4747
        %6524 = vmatpush1.msra.mxu0 %v4746
        %6525 = vmatprep.subr.mxu0 %v4745
        %6526 = vmatpush1.msra.mxu0 %v4744
        %6527 = vmatprep.subr.mxu0 %v4743
        %6528 = vmatpush1.msra.mxu0 %v4742
        %6529 = vmatprep.subr.mxu0 %v4741
        %6530 = vmatpush1.msra.mxu0 %v4740
        %6531 = vmatprep.subr.mxu0 %v4739
        %6532 = vmatpush1.msra.mxu0 %v4738
        %6533 = vmatprep.subr.mxu0 %v4737
        %6534 = vmatpush1.msra.mxu0 %v4736
        %6535 = vmatprep.subr.mxu0 %v4735
        %6536 = vmatpush1.msra.mxu0 %v4734
        %6537 = vmatprep.subr.mxu0 %v4733
        %6538 = vmatpush1.msra.mxu0 %v4732
        %6539 = vmatprep.subr.mxu0 %v4731
        %6540 = vmatpush1.msra.mxu0 %v4730
        %6541 = vmatprep.subr.mxu0 %v4729
        %6542 = vmatpush1.msra.mxu0 %v4728
        %6543 = vmatprep.subr.mxu0 %v4791
        %6544 = vmatpush2.msra.mxu0 %v4790
        %6545 = vmatprep.subr.mxu0 %v4789
        %6546 = vmatpush2.msra.mxu0 %v4788
        %6547 = vmatprep.subr.mxu0 %v4787
        %6548 = vmatpush2.msra.mxu0 %v4786
        %6549 = vmatprep.subr.mxu0 %v4785
        %6550 = vmatpush2.msra.mxu0 %v4784
        %6551 = vmatprep.subr.mxu0 %v4783
        %6552 = vmatpush2.msra.mxu0 %v4782
        %6553 = vmatprep.subr.mxu0 %v4781
        %6554 = vmatpush2.msra.mxu0 %v4780
        %6555 = vmatprep.subr.mxu0 %v4779
        %6556 = vmatpush2.msra.mxu0 %v4778
        %6557 = vmatprep.subr.mxu0 %v4777
        %6558 = vmatpush2.msra.mxu0 %v4776
        %6559 = vmatprep.subr.mxu0 %v4775
        %6560 = vmatpush2.msra.mxu0 %v4774
        %6561 = vmatprep.subr.mxu0 %v4773
        %6562 = vmatpush2.msra.mxu0 %v4772
        %6563 = vmatprep.subr.mxu0 %v4771
        %6564 = vmatpush2.msra.mxu0 %v4770
        %6565 = vmatprep.subr.mxu0 %v4769
        %6566 = vmatpush2.msra.mxu0 %v4768
        %6567 = vmatprep.subr.mxu0 %v4767
        %6568 = vmatpush2.msra.mxu0 %v4766
        %6569 = vmatprep.subr.mxu0 %v4765
        %6570 = vmatpush2.msra.mxu0 %v4764
        %6571 = vmatprep.subr.mxu0 %v4763
        %6572 = vmatpush2.msra.mxu0 %v4762
        %6573 = vmatprep.subr.mxu0 %v4761
        %6574 = vmatpush2.msra.mxu0 %v4760
        %6575 = vmatprep.mubr.f32.mxu0 %v6329
        %6576 = vmatmul.mubr.f32.gmra.mxu0 %v6328
        %v6577 = vpop.f32.mrf.mxu0
        %v6578 = vadd.f32 %v6465, %v6577
        %v6579 = vpop.f32.mrf.mxu0
        %v6580 = vadd.f32 %v6467, %v6579
        %6581 = vmatprep.mubr.f32.mxu0 %v6338
        %6582 = vmatmul.mubr.f32.gmra.mxu0 %v6337
        %v6583 = vpop.f32.mrf.mxu0
        %v6584 = vadd.f32 %v6471, %v6583
        %v6585 = vpop.f32.mrf.mxu0
        %v6586 = vadd.f32 %v6473, %v6585
        %6587 = vmatprep.mubr.f32.mxu0 %v6347
        %6588 = vmatmul.mubr.f32.gmra.mxu0 %v6346
        %v6589 = vpop.f32.mrf.mxu0
        %v6590 = vadd.f32 %v6477, %v6589
        %v6591 = vpop.f32.mrf.mxu0
        %v6592 = vadd.f32 %v6479, %v6591
        %6593 = vmatprep.mubr.f32.mxu0 %v6356
        %6594 = vmatmul.mubr.f32.gmra.mxu0 %v6355
        %v6595 = vpop.f32.mrf.mxu0
        %v6596 = vadd.f32 %v6483, %v6595
        %v6597 = vpop.f32.mrf.mxu0
        %v6598 = vadd.f32 %v6485, %v6597
        %6599 = vmatprep.mubr.f32.mxu0 %v6365
        %6600 = vmatmul.mubr.f32.gmra.mxu0 %v6364
        %v6601 = vpop.f32.mrf.mxu0
        %v6602 = vadd.f32 %v6489, %v6601
        %v6603 = vpop.f32.mrf.mxu0
        %v6604 = vadd.f32 %v6491, %v6603
        %6605 = vmatprep.mubr.f32.mxu0 %v6374
        %6606 = vmatmul.mubr.f32.gmra.mxu0 %v6373
        %v6607 = vpop.f32.mrf.mxu0
        %v6608 = vadd.f32 %v6495, %v6607
        %v6609 = vpop.f32.mrf.mxu0
        %v6610 = vadd.f32 %v6497, %v6609
        %6611 = vmatprep.mubr.f32.mxu0 %v6383
        %6612 = vmatmul.mubr.f32.gmra.mxu0 %v6382
        %v6613 = vpop.f32.mrf.mxu0
        %v6614 = vadd.f32 %v6501, %v6613
        %v6615 = vpop.f32.mrf.mxu0
        %v6616 = vadd.f32 %v6503, %v6615
        %6617 = vmatprep.mubr.f32.mxu0 %v6392
        %6618 = vmatmul.mubr.f32.gmra.mxu0 %v6391
        %v6619 = vpop.f32.mrf.mxu0
        %v6620 = vadd.f32 %v6507, %v6619
        %v6621 = vpop.f32.mrf.mxu0
        %v6622 = vadd.f32 %v6509, %v6621
        %6623 = vdwg.mxu0
        %6624 = vmatprep.subr.mxu0 %v4823
        %6625 = vmatpush1.msra.mxu0 %v4822
        %6626 = vmatprep.subr.mxu0 %v4821
        %6627 = vmatpush1.msra.mxu0 %v4820
        %6628 = vmatprep.subr.mxu0 %v4819
        %6629 = vmatpush1.msra.mxu0 %v4818
        %6630 = vmatprep.subr.mxu0 %v4817
        %6631 = vmatpush1.msra.mxu0 %v4816
        %6632 = vmatprep.subr.mxu0 %v4815
        %6633 = vmatpush1.msra.mxu0 %v4814
        %6634 = vmatprep.subr.mxu0 %v4813
        %6635 = vmatpush1.msra.mxu0 %v4812
        %6636 = vmatprep.subr.mxu0 %v4811
        %6637 = vmatpush1.msra.mxu0 %v4810
        %6638 = vmatprep.subr.mxu0 %v4809
        %6639 = vmatpush1.msra.mxu0 %v4808
        %6640 = vmatprep.subr.mxu0 %v4807
        %6641 = vmatpush1.msra.mxu0 %v4806
        %6642 = vmatprep.subr.mxu0 %v4805
        %6643 = vmatpush1.msra.mxu0 %v4804
        %6644 = vmatprep.subr.mxu0 %v4803
        %6645 = vmatpush1.msra.mxu0 %v4802
        %6646 = vmatprep.subr.mxu0 %v4801
        %6647 = vmatpush1.msra.mxu0 %v4800
        %6648 = vmatprep.subr.mxu0 %v4799
        %6649 = vmatpush1.msra.mxu0 %v4798
        %6650 = vmatprep.subr.mxu0 %v4797
        %6651 = vmatpush1.msra.mxu0 %v4796
        %6652 = vmatprep.subr.mxu0 %v4795
        %6653 = vmatpush1.msra.mxu0 %v4794
        %6654 = vmatprep.subr.mxu0 %v4793
        %6655 = vmatpush1.msra.mxu0 %v4792
        %6656 = vmatprep.subr.mxu0 %v4855
        %6657 = vmatpush2.msra.mxu0 %v4854
        %6658 = vmatprep.subr.mxu0 %v4853
        %6659 = vmatpush2.msra.mxu0 %v4852
        %6660 = vmatprep.subr.mxu0 %v4851
        %6661 = vmatpush2.msra.mxu0 %v4850
        %6662 = vmatprep.subr.mxu0 %v4849
        %6663 = vmatpush2.msra.mxu0 %v4848
        %6664 = vmatprep.subr.mxu0 %v4847
        %6665 = vmatpush2.msra.mxu0 %v4846
        %6666 = vmatprep.subr.mxu0 %v4845
        %6667 = vmatpush2.msra.mxu0 %v4844
        %6668 = vmatprep.subr.mxu0 %v4843
        %6669 = vmatpush2.msra.mxu0 %v4842
        %6670 = vmatprep.subr.mxu0 %v4841
        %6671 = vmatpush2.msra.mxu0 %v4840
        %6672 = vmatprep.subr.mxu0 %v4839
        %6673 = vmatpush2.msra.mxu0 %v4838
        %6674 = vmatprep.subr.mxu0 %v4837
        %6675 = vmatpush2.msra.mxu0 %v4836
        %6676 = vmatprep.subr.mxu0 %v4835
        %6677 = vmatpush2.msra.mxu0 %v4834
        %6678 = vmatprep.subr.mxu0 %v4833
        %6679 = vmatpush2.msra.mxu0 %v4832
        %6680 = vmatprep.subr.mxu0 %v4831
        %6681 = vmatpush2.msra.mxu0 %v4830
        %6682 = vmatprep.subr.mxu0 %v4829
        %6683 = vmatpush2.msra.mxu0 %v4828
        %6684 = vmatprep.subr.mxu0 %v4827
        %6685 = vmatpush2.msra.mxu0 %v4826
        %6686 = vmatprep.subr.mxu0 %v4825
        %6687 = vmatpush2.msra.mxu0 %v4824
        %6688 = vmatprep.mubr.f32.mxu0 %v6331
        %6689 = vmatmul.mubr.f32.gmra.mxu0 %v6330
        %v6690 = vpop.f32.mrf.mxu0
        %v6691 = vadd.f32 %v6578, %v6690
        %v6692 = vpop.f32.mrf.mxu0
        %v6693 = vadd.f32 %v6580, %v6692
        %6694 = vmatprep.mubr.f32.mxu0 %v6340
        %6695 = vmatmul.mubr.f32.gmra.mxu0 %v6339
        %v6696 = vpop.f32.mrf.mxu0
        %v6697 = vadd.f32 %v6584, %v6696
        %v6698 = vpop.f32.mrf.mxu0
        %v6699 = vadd.f32 %v6586, %v6698
        %6700 = vmatprep.mubr.f32.mxu0 %v6349
        %6701 = vmatmul.mubr.f32.gmra.mxu0 %v6348
        %v6702 = vpop.f32.mrf.mxu0
        %v6703 = vadd.f32 %v6590, %v6702
        %v6704 = vpop.f32.mrf.mxu0
        %v6705 = vadd.f32 %v6592, %v6704
        %6706 = vmatprep.mubr.f32.mxu0 %v6358
        %6707 = vmatmul.mubr.f32.gmra.mxu0 %v6357
        %v6708 = vpop.f32.mrf.mxu0
        %v6709 = vadd.f32 %v6596, %v6708
        %v6710 = vpop.f32.mrf.mxu0
        %v6711 = vadd.f32 %v6598, %v6710
        %6712 = vmatprep.mubr.f32.mxu0 %v6367
        %6713 = vmatmul.mubr.f32.gmra.mxu0 %v6366
        %v6714 = vpop.f32.mrf.mxu0
        %v6715 = vadd.f32 %v6602, %v6714
        %v6716 = vpop.f32.mrf.mxu0
        %v6717 = vadd.f32 %v6604, %v6716
        %6718 = vmatprep.mubr.f32.mxu0 %v6376
        %6719 = vmatmul.mubr.f32.gmra.mxu0 %v6375
        %v6720 = vpop.f32.mrf.mxu0
        %v6721 = vadd.f32 %v6608, %v6720
        %v6722 = vpop.f32.mrf.mxu0
        %v6723 = vadd.f32 %v6610, %v6722
        %6724 = vmatprep.mubr.f32.mxu0 %v6385
        %6725 = vmatmul.mubr.f32.gmra.mxu0 %v6384
        %v6726 = vpop.f32.mrf.mxu0
        %v6727 = vadd.f32 %v6614, %v6726
        %v6728 = vpop.f32.mrf.mxu0
        %v6729 = vadd.f32 %v6616, %v6728
        %6730 = vmatprep.mubr.f32.mxu0 %v6394
        %6731 = vmatmul.mubr.f32.gmra.mxu0 %v6393
        %v6732 = vpop.f32.mrf.mxu0
        %v6733 = vadd.f32 %v6620, %v6732
        %v6734 = vpop.f32.mrf.mxu0
        %v6735 = vadd.f32 %v6622, %v6734
        %6736 = vdwg.mxu0
        %6737 = vmatprep.subr.mxu0 %v4887
        %6738 = vmatpush1.msra.mxu0 %v4886
        %6739 = vmatprep.subr.mxu0 %v4885
        %6740 = vmatpush1.msra.mxu0 %v4884
        %6741 = vmatprep.subr.mxu0 %v4883
        %6742 = vmatpush1.msra.mxu0 %v4882
        %6743 = vmatprep.subr.mxu0 %v4881
        %6744 = vmatpush1.msra.mxu0 %v4880
        %6745 = vmatprep.subr.mxu0 %v4879
        %6746 = vmatpush1.msra.mxu0 %v4878
        %6747 = vmatprep.subr.mxu0 %v4877
        %6748 = vmatpush1.msra.mxu0 %v4876
        %6749 = vmatprep.subr.mxu0 %v4875
        %6750 = vmatpush1.msra.mxu0 %v4874
        %6751 = vmatprep.subr.mxu0 %v4873
        %6752 = vmatpush1.msra.mxu0 %v4872
        %6753 = vmatprep.subr.mxu0 %v4871
        %6754 = vmatpush1.msra.mxu0 %v4870
        %6755 = vmatprep.subr.mxu0 %v4869
        %6756 = vmatpush1.msra.mxu0 %v4868
        %6757 = vmatprep.subr.mxu0 %v4867
        %6758 = vmatpush1.msra.mxu0 %v4866
        %6759 = vmatprep.subr.mxu0 %v4865
        %6760 = vmatpush1.msra.mxu0 %v4864
        %6761 = vmatprep.subr.mxu0 %v4863
        %6762 = vmatpush1.msra.mxu0 %v4862
        %6763 = vmatprep.subr.mxu0 %v4861
        %6764 = vmatpush1.msra.mxu0 %v4860
        %6765 = vmatprep.subr.mxu0 %v4859
        %6766 = vmatpush1.msra.mxu0 %v4858
        %6767 = vmatprep.subr.mxu0 %v4857
        %6768 = vmatpush1.msra.mxu0 %v4856
        %6769 = vmatprep.subr.mxu0 %v4919
        %6770 = vmatpush2.msra.mxu0 %v4918
        %6771 = vmatprep.subr.mxu0 %v4917
        %6772 = vmatpush2.msra.mxu0 %v4916
        %6773 = vmatprep.subr.mxu0 %v4915
        %6774 = vmatpush2.msra.mxu0 %v4914
        %6775 = vmatprep.subr.mxu0 %v4913
        %6776 = vmatpush2.msra.mxu0 %v4912
        %6777 = vmatprep.subr.mxu0 %v4911
        %6778 = vmatpush2.msra.mxu0 %v4910
        %6779 = vmatprep.subr.mxu0 %v4909
        %6780 = vmatpush2.msra.mxu0 %v4908
        %6781 = vmatprep.subr.mxu0 %v4907
        %6782 = vmatpush2.msra.mxu0 %v4906
        %6783 = vmatprep.subr.mxu0 %v4905
        %6784 = vmatpush2.msra.mxu0 %v4904
        %6785 = vmatprep.subr.mxu0 %v4903
        %6786 = vmatpush2.msra.mxu0 %v4902
        %6787 = vmatprep.subr.mxu0 %v4901
        %6788 = vmatpush2.msra.mxu0 %v4900
        %6789 = vmatprep.subr.mxu0 %v4899
        %6790 = vmatpush2.msra.mxu0 %v4898
        %6791 = vmatprep.subr.mxu0 %v4897
        %6792 = vmatpush2.msra.mxu0 %v4896
        %6793 = vmatprep.subr.mxu0 %v4895
        %6794 = vmatpush2.msra.mxu0 %v4894
        %6795 = vmatprep.subr.mxu0 %v4893
        %6796 = vmatpush2.msra.mxu0 %v4892
        %6797 = vmatprep.subr.mxu0 %v4891
        %6798 = vmatpush2.msra.mxu0 %v4890
        %6799 = vmatprep.subr.mxu0 %v4889
        %6800 = vmatpush2.msra.mxu0 %v4888
        %6801 = vmatprep.mubr.f32.mxu0 %v6333
        %6802 = vmatmul.mubr.f32.gmra.mxu0 %v6332
        %v6803 = vpop.f32.mrf.mxu0
        %v6804 = vadd.f32 %v6691, %v6803
        %v6805 = vpop.f32.mrf.mxu0
        %v6806 = vadd.f32 %v6693, %v6805
        %6807 = vmatprep.mubr.f32.mxu0 %v6342
        %6808 = vmatmul.mubr.f32.gmra.mxu0 %v6341
        %v6809 = vpop.f32.mrf.mxu0
        %v6810 = vadd.f32 %v6697, %v6809
        %v6811 = vpop.f32.mrf.mxu0
        %v6812 = vadd.f32 %v6699, %v6811
        %6813 = vmatprep.mubr.f32.mxu0 %v6351
        %6814 = vmatmul.mubr.f32.gmra.mxu0 %v6350
        %v6815 = vpop.f32.mrf.mxu0
        %v6816 = vadd.f32 %v6703, %v6815
        %v6817 = vpop.f32.mrf.mxu0
        %v6818 = vadd.f32 %v6705, %v6817
        %6819 = vmatprep.mubr.f32.mxu0 %v6360
        %6820 = vmatmul.mubr.f32.gmra.mxu0 %v6359
        %v6821 = vpop.f32.mrf.mxu0
        %v6822 = vadd.f32 %v6709, %v6821
        %v6823 = vpop.f32.mrf.mxu0
        %v6824 = vadd.f32 %v6711, %v6823
        %6825 = vmatprep.mubr.f32.mxu0 %v6369
        %6826 = vmatmul.mubr.f32.gmra.mxu0 %v6368
        %v6827 = vpop.f32.mrf.mxu0
        %v6828 = vadd.f32 %v6715, %v6827
        %v6829 = vpop.f32.mrf.mxu0
        %v6830 = vadd.f32 %v6717, %v6829
        %6831 = vmatprep.mubr.f32.mxu0 %v6378
        %6832 = vmatmul.mubr.f32.gmra.mxu0 %v6377
        %v6833 = vpop.f32.mrf.mxu0
        %v6834 = vadd.f32 %v6721, %v6833
        %v6835 = vpop.f32.mrf.mxu0
        %v6836 = vadd.f32 %v6723, %v6835
        %6837 = vmatprep.mubr.f32.mxu0 %v6387
        %6838 = vmatmul.mubr.f32.gmra.mxu0 %v6386
        %v6839 = vpop.f32.mrf.mxu0
        %v6840 = vadd.f32 %v6727, %v6839
        %v6841 = vpop.f32.mrf.mxu0
        %v6842 = vadd.f32 %v6729, %v6841
        %6843 = vmatprep.mubr.f32.mxu0 %v6396
        %6844 = vmatmul.mubr.f32.gmra.mxu0 %v6395
        %v6845 = vpop.f32.mrf.mxu0
        %v6846 = vadd.f32 %v6733, %v6845
        %v6847 = vpop.f32.mrf.mxu0
        %v6848 = vadd.f32 %v6735, %v6847
        %6849 = vdwg.mxu0
        %6850 = vmatprep.subr.mxu0 %v4951
        %6851 = vmatpush1.msra.mxu0 %v4950
        %6852 = vmatprep.subr.mxu0 %v4949
        %6853 = vmatpush1.msra.mxu0 %v4948
        %6854 = vmatprep.subr.mxu0 %v4947
        %6855 = vmatpush1.msra.mxu0 %v4946
        %6856 = vmatprep.subr.mxu0 %v4945
        %6857 = vmatpush1.msra.mxu0 %v4944
        %6858 = vmatprep.subr.mxu0 %v4943
        %6859 = vmatpush1.msra.mxu0 %v4942
        %6860 = vmatprep.subr.mxu0 %v4941
        %6861 = vmatpush1.msra.mxu0 %v4940
        %6862 = vmatprep.subr.mxu0 %v4939
        %6863 = vmatpush1.msra.mxu0 %v4938
        %6864 = vmatprep.subr.mxu0 %v4937
        %6865 = vmatpush1.msra.mxu0 %v4936
        %6866 = vmatprep.subr.mxu0 %v4935
        %6867 = vmatpush1.msra.mxu0 %v4934
        %6868 = vmatprep.subr.mxu0 %v4933
        %6869 = vmatpush1.msra.mxu0 %v4932
        %6870 = vmatprep.subr.mxu0 %v4931
        %6871 = vmatpush1.msra.mxu0 %v4930
        %6872 = vmatprep.subr.mxu0 %v4929
        %6873 = vmatpush1.msra.mxu0 %v4928
        %6874 = vmatprep.subr.mxu0 %v4927
        %6875 = vmatpush1.msra.mxu0 %v4926
        %6876 = vmatprep.subr.mxu0 %v4925
        %6877 = vmatpush1.msra.mxu0 %v4924
        %6878 = vmatprep.subr.mxu0 %v4923
        %6879 = vmatpush1.msra.mxu0 %v4922
        %6880 = vmatprep.subr.mxu0 %v4921
        %6881 = vmatpush1.msra.mxu0 %v4920
        %6882 = vmatprep.subr.mxu0 0.0
        %6883 = vmatpush2.msra.mxu0 0.0
        %6884 = vmatprep.subr.mxu0 0.0
        %6885 = vmatpush2.msra.mxu0 0.0
        %6886 = vmatprep.subr.mxu0 0.0
        %6887 = vmatpush2.msra.mxu0 0.0
        %6888 = vmatprep.subr.mxu0 0.0
        %6889 = vmatpush2.msra.mxu0 0.0
        %6890 = vmatprep.subr.mxu0 0.0
        %6891 = vmatpush2.msra.mxu0 0.0
        %6892 = vmatprep.subr.mxu0 0.0
        %6893 = vmatpush2.msra.mxu0 0.0
        %6894 = vmatprep.subr.mxu0 0.0
        %6895 = vmatpush2.msra.mxu0 0.0
        %6896 = vmatprep.subr.mxu0 0.0
        %6897 = vmatpush2.msra.mxu0 0.0
        %6898 = vmatprep.subr.mxu0 0.0
        %6899 = vmatpush2.msra.mxu0 0.0
        %6900 = vmatprep.subr.mxu0 0.0
        %6901 = vmatpush2.msra.mxu0 0.0
        %6902 = vmatprep.subr.mxu0 0.0
        %6903 = vmatpush2.msra.mxu0 0.0
        %6904 = vmatprep.subr.mxu0 0.0
        %6905 = vmatpush2.msra.mxu0 0.0
        %6906 = vmatprep.subr.mxu0 0.0
        %6907 = vmatpush2.msra.mxu0 0.0
        %6908 = vmatprep.subr.mxu0 0.0
        %6909 = vmatpush2.msra.mxu0 0.0
        %6910 = vmatprep.subr.mxu0 0.0
        %6911 = vmatpush2.msra.mxu0 0.0
        %6912 = vmatprep.subr.mxu0 0.0
        %6913 = vmatpush2.msra.mxu0 0.0
        %6914 = vmatprep.mubr.f32.mxu0 0.0
        %6915 = vmatmul.mubr.f32.gmra.mxu0 %v6334
        %v6916 = vpop.f32.mrf.mxu0
        %v6917 = vadd.f32 %v6804, %v6916
        %v6918 = vpop.f32.mrf.mxu0
        %v6919 = vadd.f32 %v6806, %v6918
        %6920 = vmatprep.mubr.f32.mxu0 0.0
        %6921 = vmatmul.mubr.f32.gmra.mxu0 %v6343
        %v6922 = vpop.f32.mrf.mxu0
        %v6923 = vadd.f32 %v6810, %v6922
        %v6924 = vpop.f32.mrf.mxu0
        %v6925 = vadd.f32 %v6812, %v6924
        %6926 = vmatprep.mubr.f32.mxu0 0.0
        %6927 = vmatmul.mubr.f32.gmra.mxu0 %v6352
        %v6928 = vpop.f32.mrf.mxu0
        %v6929 = vadd.f32 %v6816, %v6928
        %v6930 = vpop.f32.mrf.mxu0
        %v6931 = vadd.f32 %v6818, %v6930
        %6932 = vmatprep.mubr.f32.mxu0 0.0
        %6933 = vmatmul.mubr.f32.gmra.mxu0 %v6361
        %v6934 = vpop.f32.mrf.mxu0
        %v6935 = vadd.f32 %v6822, %v6934
        %v6936 = vpop.f32.mrf.mxu0
        %v6937 = vadd.f32 %v6824, %v6936
        %6938 = vmatprep.mubr.f32.mxu0 0.0
        %6939 = vmatmul.mubr.f32.gmra.mxu0 %v6370
        %v6940 = vpop.f32.mrf.mxu0
        %v6941 = vadd.f32 %v6828, %v6940
        %v6942 = vpop.f32.mrf.mxu0
        %v6943 = vadd.f32 %v6830, %v6942
        %6944 = vmatprep.mubr.f32.mxu0 0.0
        %6945 = vmatmul.mubr.f32.gmra.mxu0 %v6379
        %v6946 = vpop.f32.mrf.mxu0
        %v6947 = vadd.f32 %v6834, %v6946
        %v6948 = vpop.f32.mrf.mxu0
        %v6949 = vadd.f32 %v6836, %v6948
        %6950 = vmatprep.mubr.f32.mxu0 0.0
        %6951 = vmatmul.mubr.f32.gmra.mxu0 %v6388
        %v6952 = vpop.f32.mrf.mxu0
        %v6953 = vadd.f32 %v6840, %v6952
        %v6954 = vpop.f32.mrf.mxu0
        %v6955 = vadd.f32 %v6842, %v6954
        %6956 = vmatprep.mubr.f32.mxu0 0.0
        %6957 = vmatmul.mubr.f32.gmra.mxu0 %v6397
        %v6958 = vpop.f32.mrf.mxu0
        %v6959 = vadd.f32 %v6846, %v6958
        %v6960 = vpop.f32.mrf.mxu0
        %v6961 = vadd.f32 %v6848, %v6960
        %6962 = vdwg.mxu0
        %v6963 = vmul.f32 %v6917, %v5521
        %v6964 = vmul.f32 %v6919, %v5525
        %v6965 = vmul.f32 %v6923, %v5521
        %v6966 = vmul.f32 %v6925, %v5525
        %v6967 = vmul.f32 %v6929, %v5521
        %v6968 = vmul.f32 %v6931, %v5525
        %v6969 = vmul.f32 %v6935, %v5521
        %v6970 = vmul.f32 %v6937, %v5525
        %v6971 = vmul.f32 %v6941, %v5521
        %v6972 = vmul.f32 %v6943, %v5525
        %v6973 = vmul.f32 %v6947, %v5521
        %v6974 = vmul.f32 %v6949, %v5525
        %v6975 = vmul.f32 %v6953, %v5521
        %v6976 = vmul.f32 %v6955, %v5525
        %v6977 = vmul.f32 %v6959, %v5521
        %v6978 = vmul.f32 %v6961, %v5525
        %v6979 = vadd.f32 %v6963, %v5548
        %v6980 = vadd.f32 %v6964, %v5552
        %v6981 = vadd.f32 %v6965, %v5548
        %v6982 = vadd.f32 %v6966, %v5552
        %v6983 = vadd.f32 %v6967, %v5548
        %v6984 = vadd.f32 %v6968, %v5552
        %v6985 = vadd.f32 %v6969, %v5548
        %v6986 = vadd.f32 %v6970, %v5552
        %v6987 = vadd.f32 %v6971, %v5548
        %v6988 = vadd.f32 %v6972, %v5552
        %v6989 = vadd.f32 %v6973, %v5548
        %v6990 = vadd.f32 %v6974, %v5552
        %v6991 = vadd.f32 %v6975, %v5548
        %v6992 = vadd.f32 %v6976, %v5552
        %v6993 = vadd.f32 %v6977, %v5548
        %v6994 = vadd.f32 %v6978, %v5552
        %v6995 = vmax.f32 %v6979, 0.0
        %v6996 = vmax.f32 %v6980, 0.0
        %v6997 = vmax.f32 %v6981, 0.0
        %v6998 = vmax.f32 %v6982, 0.0
        %v6999 = vmax.f32 %v6983, 0.0
        %v7000 = vmax.f32 %v6984, 0.0
        %v7001 = vmax.f32 %v6985, 0.0
        %v7002 = vmax.f32 %v6986, 0.0
        %v7003 = vmax.f32 %v6987, 0.0
        %v7004 = vmax.f32 %v6988, 0.0
        %v7005 = vmax.f32 %v6989, 0.0
        %v7006 = vmax.f32 %v6990, 0.0
        %v7007 = vmax.f32 %v6991, 0.0
        %v7008 = vmax.f32 %v6992, 0.0
        %v7009 = vmax.f32 %v6993, 0.0
        %v7010 = vmax.f32 %v6994, 0.0
        %v7011 = vmax.f32 %v6995, %v6999
        %v7012 = vmax.f32 %v6997, %v7001
        %v7013 = vmax.f32 %v7011, %v7003
        %v7014 = vmax.f32 %v7012, %v7005
        %v7015 = vmax.f32 %v7013, %v7007
        %v7016 = vmax.f32 %v7014, %v7009
        %v7017 = vmax.f32 %v7015, %v7016
        %v7018 = vrot.slane %v7017, 4
        %v7019 = vmax.f32 %v7017, %v7018
        %v7020 = vrot.slane %v7019, 2
        %v7021 = vmax.f32 %v7019, %v7020
        %v7022 = vrot.slane %v7021, 1
        %v7023 = vmax.f32 %v7021, %v7022
        %v7024 = vmax.f32 %v6996, %v7000
        %v7025 = vmax.f32 %v6998, %v7002
        %v7026 = vmax.f32 %v7024, %v7004
        %v7027 = vmax.f32 %v7025, %v7006
        %v7028 = vmax.f32 %v7026, %v7008
        %v7029 = vmax.f32 %v7027, %v7010
        %v7030 = vmax.f32 %v7028, %v7029
        %v7031 = vrot.slane %v7030, 4
        %v7032 = vmax.f32 %v7030, %v7031
        %v7033 = vrot.slane %v7032, 2
        %v7034 = vmax.f32 %v7032, %v7033
        %v7035 = vrot.slane %v7034, 1
        %v7036 = vmax.f32 %v7034, %v7035
        %v7037 = vmax.f32 %v6324, %v7023
        %v7038 = vmax.f32 %v6325, %v7036
        %v7039 = vld [vmem:[#allocation5 + $0x6c0] sm:$0xff]
        %v7040 = vld [vmem:[#allocation5 + $0x6c8] sm:$0xff]
        %v7041 = vld [vmem:[#allocation5 + $0x6d0] sm:$0xff]
        %v7042 = vld [vmem:[#allocation5 + $0x6d8] sm:$0xff]
        %v7043 = vld [vmem:[#allocation5 + $0x6e0] sm:$0xff]
        %v7044 = vld [vmem:[#allocation5 + $0x6e8] sm:$0xff]
        %v7045 = vld [vmem:[#allocation5 + $0x6f0] sm:$0xff]
        %v7046 = vld [vmem:[#allocation5 + $0x6f8] sm:$0xff]
        %v7047 = vld [vmem:[#allocation5 + $0x700] sm:$0xff]
        %v7048 = vld [vmem:[#allocation5 + $0x708] sm:$0xff]
        %v7049 = vld [vmem:[#allocation5 + $0x710] sm:$0xff]
        %v7050 = vld [vmem:[#allocation5 + $0x718] sm:$0xff]
        %v7051 = vld [vmem:[#allocation5 + $0x720] sm:$0xff]
        %v7052 = vld [vmem:[#allocation5 + $0x728] sm:$0xff]
        %v7053 = vld [vmem:[#allocation5 + $0x730] sm:$0xff]
        %v7054 = vld [vmem:[#allocation5 + $0x738] sm:$0xff]
        %v7055 = vld [vmem:[#allocation5 + $0x740] sm:$0xff]
        %v7056 = vld [vmem:[#allocation5 + $0x748] sm:$0xff]
        %v7057 = vld [vmem:[#allocation5 + $0x750] sm:$0xff]
        %v7058 = vld [vmem:[#allocation5 + $0x758] sm:$0xff]
        %v7059 = vld [vmem:[#allocation5 + $0x760] sm:$0xff]
        %v7060 = vld [vmem:[#allocation5 + $0x768] sm:$0xff]
        %v7061 = vld [vmem:[#allocation5 + $0x770] sm:$0xff]
        %v7062 = vld [vmem:[#allocation5 + $0x778] sm:$0xff]
        %v7063 = vld [vmem:[#allocation5 + $0x780] sm:$0xff]
        %v7064 = vld [vmem:[#allocation5 + $0x788] sm:$0xff]
        %v7065 = vld [vmem:[#allocation5 + $0x790] sm:$0xff]
        %v7066 = vld [vmem:[#allocation5 + $0x798] sm:$0xff]
        %v7067 = vld [vmem:[#allocation5 + $0x7a0] sm:$0xff]
        %v7068 = vld [vmem:[#allocation5 + $0x7a8] sm:$0xff]
        %v7069 = vld [vmem:[#allocation5 + $0x7b0] sm:$0xff]
        %v7070 = vld [vmem:[#allocation5 + $0x7b8] sm:$0xff]
        %v7071 = vld [vmem:[#allocation5 + $0x7c0] sm:$0xff]
        %v7072 = vld [vmem:[#allocation5 + $0x7c8] sm:$0xff]
        %v7073 = vld [vmem:[#allocation5 + $0x7d0] sm:$0xff]
        %v7074 = vld [vmem:[#allocation5 + $0x7d8] sm:$0xff]
        %v7075 = vld [vmem:[#allocation5 + $0x7e0] sm:$0xff]
        %v7076 = vld [vmem:[#allocation5 + $0x7e8] sm:$0xff]
        %v7077 = vld [vmem:[#allocation5 + $0x7f0] sm:$0xff]
        %v7078 = vld [vmem:[#allocation5 + $0x7f8] sm:$0xff]
        %v7079 = vld [vmem:[#allocation5 + $0x800] sm:$0xff]
        %v7080 = vld [vmem:[#allocation5 + $0x808] sm:$0xff]
        %v7081 = vld [vmem:[#allocation5 + $0x810] sm:$0xff]
        %v7082 = vld [vmem:[#allocation5 + $0x818] sm:$0xff]
        %v7083 = vld [vmem:[#allocation5 + $0x820] sm:$0xff]
        %v7084 = vld [vmem:[#allocation5 + $0x828] sm:$0xff]
        %v7085 = vld [vmem:[#allocation5 + $0x830] sm:$0xff]
        %v7086 = vld [vmem:[#allocation5 + $0x838] sm:$0xff]
        %v7087 = vld [vmem:[#allocation5 + $0x840] sm:$0xff]
        %v7088 = vld [vmem:[#allocation5 + $0x848] sm:$0xff]
        %v7089 = vld [vmem:[#allocation5 + $0x850] sm:$0xff]
        %v7090 = vld [vmem:[#allocation5 + $0x858] sm:$0xff]
        %v7091 = vld [vmem:[#allocation5 + $0x860] sm:$0xff]
        %v7092 = vld [vmem:[#allocation5 + $0x868] sm:$0xff]
        %v7093 = vld [vmem:[#allocation5 + $0x870] sm:$0xff]
        %v7094 = vld [vmem:[#allocation5 + $0x878] sm:$0xff]
        %v7095 = vld [vmem:[#allocation5 + $0x880] sm:$0xff]
        %v7096 = vld [vmem:[#allocation5 + $0x888] sm:$0xff]
        %v7097 = vld [vmem:[#allocation5 + $0x890] sm:$0xff]
        %v7098 = vld [vmem:[#allocation5 + $0x898] sm:$0xff]
        %v7099 = vld [vmem:[#allocation5 + $0x8a0] sm:$0xff]
        %v7100 = vld [vmem:[#allocation5 + $0x8a8] sm:$0xff]
        %v7101 = vld [vmem:[#allocation5 + $0x8b0] sm:$0xff]
        %v7102 = vld [vmem:[#allocation5 + $0x8b8] sm:$0xff]
        %v7103 = vld [vmem:[#allocation5 + $0x8c0] sm:$0xff]
        %v7104 = vld [vmem:[#allocation5 + $0x8c8] sm:$0xff]
        %v7105 = vld [vmem:[#allocation5 + $0x8d0] sm:$0xff]
        %v7106 = vld [vmem:[#allocation5 + $0x8d8] sm:$0xff]
        %v7107 = vld [vmem:[#allocation5 + $0x8e0] sm:$0xff]
        %v7108 = vld [vmem:[#allocation5 + $0x8e8] sm:$0xff]
        %v7109 = vld [vmem:[#allocation5 + $0x8f0] sm:$0xff]
        %v7110 = vld [vmem:[#allocation5 + $0x8f8] sm:$0xff]
        %7111 = vmatprep.subr.mxu0 %v4695
        %7112 = vmatpush1.msra.mxu0 %v4694
        %7113 = vmatprep.subr.mxu0 %v4693
        %7114 = vmatpush1.msra.mxu0 %v4692
        %7115 = vmatprep.subr.mxu0 %v4691
        %7116 = vmatpush1.msra.mxu0 %v4690
        %7117 = vmatprep.subr.mxu0 %v4689
        %7118 = vmatpush1.msra.mxu0 %v4688
        %7119 = vmatprep.subr.mxu0 %v4687
        %7120 = vmatpush1.msra.mxu0 %v4686
        %7121 = vmatprep.subr.mxu0 %v4685
        %7122 = vmatpush1.msra.mxu0 %v4684
        %7123 = vmatprep.subr.mxu0 %v4683
        %7124 = vmatpush1.msra.mxu0 %v4682
        %7125 = vmatprep.subr.mxu0 %v4681
        %7126 = vmatpush1.msra.mxu0 %v4680
        %7127 = vmatprep.subr.mxu0 %v4679
        %7128 = vmatpush1.msra.mxu0 %v4678
        %7129 = vmatprep.subr.mxu0 %v4677
        %7130 = vmatpush1.msra.mxu0 %v4676
        %7131 = vmatprep.subr.mxu0 %v4675
        %7132 = vmatpush1.msra.mxu0 %v4674
        %7133 = vmatprep.subr.mxu0 %v4673
        %7134 = vmatpush1.msra.mxu0 %v4672
        %7135 = vmatprep.subr.mxu0 %v4671
        %7136 = vmatpush1.msra.mxu0 %v4670
        %7137 = vmatprep.subr.mxu0 %v4669
        %7138 = vmatpush1.msra.mxu0 %v4668
        %7139 = vmatprep.subr.mxu0 %v4667
        %7140 = vmatpush1.msra.mxu0 %v4666
        %7141 = vmatprep.subr.mxu0 %v4665
        %7142 = vmatpush1.msra.mxu0 %v4664
        %7143 = vmatprep.subr.mxu0 %v4727
        %7144 = vmatpush2.msra.mxu0 %v4726
        %7145 = vmatprep.subr.mxu0 %v4725
        %7146 = vmatpush2.msra.mxu0 %v4724
        %7147 = vmatprep.subr.mxu0 %v4723
        %7148 = vmatpush2.msra.mxu0 %v4722
        %7149 = vmatprep.subr.mxu0 %v4721
        %7150 = vmatpush2.msra.mxu0 %v4720
        %7151 = vmatprep.subr.mxu0 %v4719
        %7152 = vmatpush2.msra.mxu0 %v4718
        %7153 = vmatprep.subr.mxu0 %v4717
        %7154 = vmatpush2.msra.mxu0 %v4716
        %7155 = vmatprep.subr.mxu0 %v4715
        %7156 = vmatpush2.msra.mxu0 %v4714
        %7157 = vmatprep.subr.mxu0 %v4713
        %7158 = vmatpush2.msra.mxu0 %v4712
        %7159 = vmatprep.subr.mxu0 %v4711
        %7160 = vmatpush2.msra.mxu0 %v4710
        %7161 = vmatprep.subr.mxu0 %v4709
        %7162 = vmatpush2.msra.mxu0 %v4708
        %7163 = vmatprep.subr.mxu0 %v4707
        %7164 = vmatpush2.msra.mxu0 %v4706
        %7165 = vmatprep.subr.mxu0 %v4705
        %7166 = vmatpush2.msra.mxu0 %v4704
        %7167 = vmatprep.subr.mxu0 %v4703
        %7168 = vmatpush2.msra.mxu0 %v4702
        %7169 = vmatprep.subr.mxu0 %v4701
        %7170 = vmatpush2.msra.mxu0 %v4700
        %7171 = vmatprep.subr.mxu0 %v4699
        %7172 = vmatpush2.msra.mxu0 %v4698
        %7173 = vmatprep.subr.mxu0 %v4697
        %7174 = vmatpush2.msra.mxu0 %v4696
        %7175 = vmatprep.mubr.f32.mxu0 %v7040
        %7176 = vmatmul.mubr.f32.gmra.mxu0 %v7039
        %v7177 = vpop.f32.mrf.mxu0
        %v7178 = vadd.f32 0.0, %v7177
        %v7179 = vpop.f32.mrf.mxu0
        %v7180 = vadd.f32 0.0, %v7179
        %7181 = vmatprep.mubr.f32.mxu0 %v7049
        %7182 = vmatmul.mubr.f32.gmra.mxu0 %v7048
        %v7183 = vpop.f32.mrf.mxu0
        %v7184 = vadd.f32 0.0, %v7183
        %v7185 = vpop.f32.mrf.mxu0
        %v7186 = vadd.f32 0.0, %v7185
        %7187 = vmatprep.mubr.f32.mxu0 %v7058
        %7188 = vmatmul.mubr.f32.gmra.mxu0 %v7057
        %v7189 = vpop.f32.mrf.mxu0
        %v7190 = vadd.f32 0.0, %v7189
        %v7191 = vpop.f32.mrf.mxu0
        %v7192 = vadd.f32 0.0, %v7191
        %7193 = vmatprep.mubr.f32.mxu0 %v7067
        %7194 = vmatmul.mubr.f32.gmra.mxu0 %v7066
        %v7195 = vpop.f32.mrf.mxu0
        %v7196 = vadd.f32 0.0, %v7195
        %v7197 = vpop.f32.mrf.mxu0
        %v7198 = vadd.f32 0.0, %v7197
        %7199 = vmatprep.mubr.f32.mxu0 %v7076
        %7200 = vmatmul.mubr.f32.gmra.mxu0 %v7075
        %v7201 = vpop.f32.mrf.mxu0
        %v7202 = vadd.f32 0.0, %v7201
        %v7203 = vpop.f32.mrf.mxu0
        %v7204 = vadd.f32 0.0, %v7203
        %7205 = vmatprep.mubr.f32.mxu0 %v7085
        %7206 = vmatmul.mubr.f32.gmra.mxu0 %v7084
        %v7207 = vpop.f32.mrf.mxu0
        %v7208 = vadd.f32 0.0, %v7207
        %v7209 = vpop.f32.mrf.mxu0
        %v7210 = vadd.f32 0.0, %v7209
        %7211 = vmatprep.mubr.f32.mxu0 %v7094
        %7212 = vmatmul.mubr.f32.gmra.mxu0 %v7093
        %v7213 = vpop.f32.mrf.mxu0
        %v7214 = vadd.f32 0.0, %v7213
        %v7215 = vpop.f32.mrf.mxu0
        %v7216 = vadd.f32 0.0, %v7215
        %7217 = vmatprep.mubr.f32.mxu0 %v7103
        %7218 = vmatmul.mubr.f32.gmra.mxu0 %v7102
        %v7219 = vpop.f32.mrf.mxu0
        %v7220 = vadd.f32 0.0, %v7219
        %v7221 = vpop.f32.mrf.mxu0
        %v7222 = vadd.f32 0.0, %v7221
        %7223 = vdwg.mxu0
        %7224 = vmatprep.subr.mxu0 %v4759
        %7225 = vmatpush1.msra.mxu0 %v4758
        %7226 = vmatprep.subr.mxu0 %v4757
        %7227 = vmatpush1.msra.mxu0 %v4756
        %7228 = vmatprep.subr.mxu0 %v4755
        %7229 = vmatpush1.msra.mxu0 %v4754
        %7230 = vmatprep.subr.mxu0 %v4753
        %7231 = vmatpush1.msra.mxu0 %v4752
        %7232 = vmatprep.subr.mxu0 %v4751
        %7233 = vmatpush1.msra.mxu0 %v4750
        %7234 = vmatprep.subr.mxu0 %v4749
        %7235 = vmatpush1.msra.mxu0 %v4748
        %7236 = vmatprep.subr.mxu0 %v4747
        %7237 = vmatpush1.msra.mxu0 %v4746
        %7238 = vmatprep.subr.mxu0 %v4745
        %7239 = vmatpush1.msra.mxu0 %v4744
        %7240 = vmatprep.subr.mxu0 %v4743
        %7241 = vmatpush1.msra.mxu0 %v4742
        %7242 = vmatprep.subr.mxu0 %v4741
        %7243 = vmatpush1.msra.mxu0 %v4740
        %7244 = vmatprep.subr.mxu0 %v4739
        %7245 = vmatpush1.msra.mxu0 %v4738
        %7246 = vmatprep.subr.mxu0 %v4737
        %7247 = vmatpush1.msra.mxu0 %v4736
        %7248 = vmatprep.subr.mxu0 %v4735
        %7249 = vmatpush1.msra.mxu0 %v4734
        %7250 = vmatprep.subr.mxu0 %v4733
        %7251 = vmatpush1.msra.mxu0 %v4732
        %7252 = vmatprep.subr.mxu0 %v4731
        %7253 = vmatpush1.msra.mxu0 %v4730
        %7254 = vmatprep.subr.mxu0 %v4729
        %7255 = vmatpush1.msra.mxu0 %v4728
        %7256 = vmatprep.subr.mxu0 %v4791
        %7257 = vmatpush2.msra.mxu0 %v4790
        %7258 = vmatprep.subr.mxu0 %v4789
        %7259 = vmatpush2.msra.mxu0 %v4788
        %7260 = vmatprep.subr.mxu0 %v4787
        %7261 = vmatpush2.msra.mxu0 %v4786
        %7262 = vmatprep.subr.mxu0 %v4785
        %7263 = vmatpush2.msra.mxu0 %v4784
        %7264 = vmatprep.subr.mxu0 %v4783
        %7265 = vmatpush2.msra.mxu0 %v4782
        %7266 = vmatprep.subr.mxu0 %v4781
        %7267 = vmatpush2.msra.mxu0 %v4780
        %7268 = vmatprep.subr.mxu0 %v4779
        %7269 = vmatpush2.msra.mxu0 %v4778
        %7270 = vmatprep.subr.mxu0 %v4777
        %7271 = vmatpush2.msra.mxu0 %v4776
        %7272 = vmatprep.subr.mxu0 %v4775
        %7273 = vmatpush2.msra.mxu0 %v4774
        %7274 = vmatprep.subr.mxu0 %v4773
        %7275 = vmatpush2.msra.mxu0 %v4772
        %7276 = vmatprep.subr.mxu0 %v4771
        %7277 = vmatpush2.msra.mxu0 %v4770
        %7278 = vmatprep.subr.mxu0 %v4769
        %7279 = vmatpush2.msra.mxu0 %v4768
        %7280 = vmatprep.subr.mxu0 %v4767
        %7281 = vmatpush2.msra.mxu0 %v4766
        %7282 = vmatprep.subr.mxu0 %v4765
        %7283 = vmatpush2.msra.mxu0 %v4764
        %7284 = vmatprep.subr.mxu0 %v4763
        %7285 = vmatpush2.msra.mxu0 %v4762
        %7286 = vmatprep.subr.mxu0 %v4761
        %7287 = vmatpush2.msra.mxu0 %v4760
        %7288 = vmatprep.mubr.f32.mxu0 %v7042
        %7289 = vmatmul.mubr.f32.gmra.mxu0 %v7041
        %v7290 = vpop.f32.mrf.mxu0
        %v7291 = vadd.f32 %v7178, %v7290
        %v7292 = vpop.f32.mrf.mxu0
        %v7293 = vadd.f32 %v7180, %v7292
        %7294 = vmatprep.mubr.f32.mxu0 %v7051
        %7295 = vmatmul.mubr.f32.gmra.mxu0 %v7050
        %v7296 = vpop.f32.mrf.mxu0
        %v7297 = vadd.f32 %v7184, %v7296
        %v7298 = vpop.f32.mrf.mxu0
        %v7299 = vadd.f32 %v7186, %v7298
        %7300 = vmatprep.mubr.f32.mxu0 %v7060
        %7301 = vmatmul.mubr.f32.gmra.mxu0 %v7059
        %v7302 = vpop.f32.mrf.mxu0
        %v7303 = vadd.f32 %v7190, %v7302
        %v7304 = vpop.f32.mrf.mxu0
        %v7305 = vadd.f32 %v7192, %v7304
        %7306 = vmatprep.mubr.f32.mxu0 %v7069
        %7307 = vmatmul.mubr.f32.gmra.mxu0 %v7068
        %v7308 = vpop.f32.mrf.mxu0
        %v7309 = vadd.f32 %v7196, %v7308
        %v7310 = vpop.f32.mrf.mxu0
        %v7311 = vadd.f32 %v7198, %v7310
        %7312 = vmatprep.mubr.f32.mxu0 %v7078
        %7313 = vmatmul.mubr.f32.gmra.mxu0 %v7077
        %v7314 = vpop.f32.mrf.mxu0
        %v7315 = vadd.f32 %v7202, %v7314
        %v7316 = vpop.f32.mrf.mxu0
        %v7317 = vadd.f32 %v7204, %v7316
        %7318 = vmatprep.mubr.f32.mxu0 %v7087
        %7319 = vmatmul.mubr.f32.gmra.mxu0 %v7086
        %v7320 = vpop.f32.mrf.mxu0
        %v7321 = vadd.f32 %v7208, %v7320
        %v7322 = vpop.f32.mrf.mxu0
        %v7323 = vadd.f32 %v7210, %v7322
        %7324 = vmatprep.mubr.f32.mxu0 %v7096
        %7325 = vmatmul.mubr.f32.gmra.mxu0 %v7095
        %v7326 = vpop.f32.mrf.mxu0
        %v7327 = vadd.f32 %v7214, %v7326
        %v7328 = vpop.f32.mrf.mxu0
        %v7329 = vadd.f32 %v7216, %v7328
        %7330 = vmatprep.mubr.f32.mxu0 %v7105
        %7331 = vmatmul.mubr.f32.gmra.mxu0 %v7104
        %v7332 = vpop.f32.mrf.mxu0
        %v7333 = vadd.f32 %v7220, %v7332
        %v7334 = vpop.f32.mrf.mxu0
        %v7335 = vadd.f32 %v7222, %v7334
        %7336 = vdwg.mxu0
        %7337 = vmatprep.subr.mxu0 %v4823
        %7338 = vmatpush1.msra.mxu0 %v4822
        %7339 = vmatprep.subr.mxu0 %v4821
        %7340 = vmatpush1.msra.mxu0 %v4820
        %7341 = vmatprep.subr.mxu0 %v4819
        %7342 = vmatpush1.msra.mxu0 %v4818
        %7343 = vmatprep.subr.mxu0 %v4817
        %7344 = vmatpush1.msra.mxu0 %v4816
        %7345 = vmatprep.subr.mxu0 %v4815
        %7346 = vmatpush1.msra.mxu0 %v4814
        %7347 = vmatprep.subr.mxu0 %v4813
        %7348 = vmatpush1.msra.mxu0 %v4812
        %7349 = vmatprep.subr.mxu0 %v4811
        %7350 = vmatpush1.msra.mxu0 %v4810
        %7351 = vmatprep.subr.mxu0 %v4809
        %7352 = vmatpush1.msra.mxu0 %v4808
        %7353 = vmatprep.subr.mxu0 %v4807
        %7354 = vmatpush1.msra.mxu0 %v4806
        %7355 = vmatprep.subr.mxu0 %v4805
        %7356 = vmatpush1.msra.mxu0 %v4804
        %7357 = vmatprep.subr.mxu0 %v4803
        %7358 = vmatpush1.msra.mxu0 %v4802
        %7359 = vmatprep.subr.mxu0 %v4801
        %7360 = vmatpush1.msra.mxu0 %v4800
        %7361 = vmatprep.subr.mxu0 %v4799
        %7362 = vmatpush1.msra.mxu0 %v4798
        %7363 = vmatprep.subr.mxu0 %v4797
        %7364 = vmatpush1.msra.mxu0 %v4796
        %7365 = vmatprep.subr.mxu0 %v4795
        %7366 = vmatpush1.msra.mxu0 %v4794
        %7367 = vmatprep.subr.mxu0 %v4793
        %7368 = vmatpush1.msra.mxu0 %v4792
        %7369 = vmatprep.subr.mxu0 %v4855
        %7370 = vmatpush2.msra.mxu0 %v4854
        %7371 = vmatprep.subr.mxu0 %v4853
        %7372 = vmatpush2.msra.mxu0 %v4852
        %7373 = vmatprep.subr.mxu0 %v4851
        %7374 = vmatpush2.msra.mxu0 %v4850
        %7375 = vmatprep.subr.mxu0 %v4849
        %7376 = vmatpush2.msra.mxu0 %v4848
        %7377 = vmatprep.subr.mxu0 %v4847
        %7378 = vmatpush2.msra.mxu0 %v4846
        %7379 = vmatprep.subr.mxu0 %v4845
        %7380 = vmatpush2.msra.mxu0 %v4844
        %7381 = vmatprep.subr.mxu0 %v4843
        %7382 = vmatpush2.msra.mxu0 %v4842
        %7383 = vmatprep.subr.mxu0 %v4841
        %7384 = vmatpush2.msra.mxu0 %v4840
        %7385 = vmatprep.subr.mxu0 %v4839
        %7386 = vmatpush2.msra.mxu0 %v4838
        %7387 = vmatprep.subr.mxu0 %v4837
        %7388 = vmatpush2.msra.mxu0 %v4836
        %7389 = vmatprep.subr.mxu0 %v4835
        %7390 = vmatpush2.msra.mxu0 %v4834
        %7391 = vmatprep.subr.mxu0 %v4833
        %7392 = vmatpush2.msra.mxu0 %v4832
        %7393 = vmatprep.subr.mxu0 %v4831
        %7394 = vmatpush2.msra.mxu0 %v4830
        %7395 = vmatprep.subr.mxu0 %v4829
        %7396 = vmatpush2.msra.mxu0 %v4828
        %7397 = vmatprep.subr.mxu0 %v4827
        %7398 = vmatpush2.msra.mxu0 %v4826
        %7399 = vmatprep.subr.mxu0 %v4825
        %7400 = vmatpush2.msra.mxu0 %v4824
        %7401 = vmatprep.mubr.f32.mxu0 %v7044
        %7402 = vmatmul.mubr.f32.gmra.mxu0 %v7043
        %v7403 = vpop.f32.mrf.mxu0
        %v7404 = vadd.f32 %v7291, %v7403
        %v7405 = vpop.f32.mrf.mxu0
        %v7406 = vadd.f32 %v7293, %v7405
        %7407 = vmatprep.mubr.f32.mxu0 %v7053
        %7408 = vmatmul.mubr.f32.gmra.mxu0 %v7052
        %v7409 = vpop.f32.mrf.mxu0
        %v7410 = vadd.f32 %v7297, %v7409
        %v7411 = vpop.f32.mrf.mxu0
        %v7412 = vadd.f32 %v7299, %v7411
        %7413 = vmatprep.mubr.f32.mxu0 %v7062
        %7414 = vmatmul.mubr.f32.gmra.mxu0 %v7061
        %v7415 = vpop.f32.mrf.mxu0
        %v7416 = vadd.f32 %v7303, %v7415
        %v7417 = vpop.f32.mrf.mxu0
        %v7418 = vadd.f32 %v7305, %v7417
        %7419 = vmatprep.mubr.f32.mxu0 %v7071
        %7420 = vmatmul.mubr.f32.gmra.mxu0 %v7070
        %v7421 = vpop.f32.mrf.mxu0
        %v7422 = vadd.f32 %v7309, %v7421
        %v7423 = vpop.f32.mrf.mxu0
        %v7424 = vadd.f32 %v7311, %v7423
        %7425 = vmatprep.mubr.f32.mxu0 %v7080
        %7426 = vmatmul.mubr.f32.gmra.mxu0 %v7079
        %v7427 = vpop.f32.mrf.mxu0
        %v7428 = vadd.f32 %v7315, %v7427
        %v7429 = vpop.f32.mrf.mxu0
        %v7430 = vadd.f32 %v7317, %v7429
        %7431 = vmatprep.mubr.f32.mxu0 %v7089
        %7432 = vmatmul.mubr.f32.gmra.mxu0 %v7088
        %v7433 = vpop.f32.mrf.mxu0
        %v7434 = vadd.f32 %v7321, %v7433
        %v7435 = vpop.f32.mrf.mxu0
        %v7436 = vadd.f32 %v7323, %v7435
        %7437 = vmatprep.mubr.f32.mxu0 %v7098
        %7438 = vmatmul.mubr.f32.gmra.mxu0 %v7097
        %v7439 = vpop.f32.mrf.mxu0
        %v7440 = vadd.f32 %v7327, %v7439
        %v7441 = vpop.f32.mrf.mxu0
        %v7442 = vadd.f32 %v7329, %v7441
        %7443 = vmatprep.mubr.f32.mxu0 %v7107
        %7444 = vmatmul.mubr.f32.gmra.mxu0 %v7106
        %v7445 = vpop.f32.mrf.mxu0
        %v7446 = vadd.f32 %v7333, %v7445
        %v7447 = vpop.f32.mrf.mxu0
        %v7448 = vadd.f32 %v7335, %v7447
        %7449 = vdwg.mxu0
        %7450 = vmatprep.subr.mxu0 %v4887
        %7451 = vmatpush1.msra.mxu0 %v4886
        %7452 = vmatprep.subr.mxu0 %v4885
        %7453 = vmatpush1.msra.mxu0 %v4884
        %7454 = vmatprep.subr.mxu0 %v4883
        %7455 = vmatpush1.msra.mxu0 %v4882
        %7456 = vmatprep.subr.mxu0 %v4881
        %7457 = vmatpush1.msra.mxu0 %v4880
        %7458 = vmatprep.subr.mxu0 %v4879
        %7459 = vmatpush1.msra.mxu0 %v4878
        %7460 = vmatprep.subr.mxu0 %v4877
        %7461 = vmatpush1.msra.mxu0 %v4876
        %7462 = vmatprep.subr.mxu0 %v4875
        %7463 = vmatpush1.msra.mxu0 %v4874
        %7464 = vmatprep.subr.mxu0 %v4873
        %7465 = vmatpush1.msra.mxu0 %v4872
        %7466 = vmatprep.subr.mxu0 %v4871
        %7467 = vmatpush1.msra.mxu0 %v4870
        %7468 = vmatprep.subr.mxu0 %v4869
        %7469 = vmatpush1.msra.mxu0 %v4868
        %7470 = vmatprep.subr.mxu0 %v4867
        %7471 = vmatpush1.msra.mxu0 %v4866
        %7472 = vmatprep.subr.mxu0 %v4865
        %7473 = vmatpush1.msra.mxu0 %v4864
        %7474 = vmatprep.subr.mxu0 %v4863
        %7475 = vmatpush1.msra.mxu0 %v4862
        %7476 = vmatprep.subr.mxu0 %v4861
        %7477 = vmatpush1.msra.mxu0 %v4860
        %7478 = vmatprep.subr.mxu0 %v4859
        %7479 = vmatpush1.msra.mxu0 %v4858
        %7480 = vmatprep.subr.mxu0 %v4857
        %7481 = vmatpush1.msra.mxu0 %v4856
        %7482 = vmatprep.subr.mxu0 %v4919
        %7483 = vmatpush2.msra.mxu0 %v4918
        %7484 = vmatprep.subr.mxu0 %v4917
        %7485 = vmatpush2.msra.mxu0 %v4916
        %7486 = vmatprep.subr.mxu0 %v4915
        %7487 = vmatpush2.msra.mxu0 %v4914
        %7488 = vmatprep.subr.mxu0 %v4913
        %7489 = vmatpush2.msra.mxu0 %v4912
        %7490 = vmatprep.subr.mxu0 %v4911
        %7491 = vmatpush2.msra.mxu0 %v4910
        %7492 = vmatprep.subr.mxu0 %v4909
        %7493 = vmatpush2.msra.mxu0 %v4908
        %7494 = vmatprep.subr.mxu0 %v4907
        %7495 = vmatpush2.msra.mxu0 %v4906
        %7496 = vmatprep.subr.mxu0 %v4905
        %7497 = vmatpush2.msra.mxu0 %v4904
        %7498 = vmatprep.subr.mxu0 %v4903
        %7499 = vmatpush2.msra.mxu0 %v4902
        %7500 = vmatprep.subr.mxu0 %v4901
        %7501 = vmatpush2.msra.mxu0 %v4900
        %7502 = vmatprep.subr.mxu0 %v4899
        %7503 = vmatpush2.msra.mxu0 %v4898
        %7504 = vmatprep.subr.mxu0 %v4897
        %7505 = vmatpush2.msra.mxu0 %v4896
        %7506 = vmatprep.subr.mxu0 %v4895
        %7507 = vmatpush2.msra.mxu0 %v4894
        %7508 = vmatprep.subr.mxu0 %v4893
        %7509 = vmatpush2.msra.mxu0 %v4892
        %7510 = vmatprep.subr.mxu0 %v4891
        %7511 = vmatpush2.msra.mxu0 %v4890
        %7512 = vmatprep.subr.mxu0 %v4889
        %7513 = vmatpush2.msra.mxu0 %v4888
        %7514 = vmatprep.mubr.f32.mxu0 %v7046
        %7515 = vmatmul.mubr.f32.gmra.mxu0 %v7045
        %v7516 = vpop.f32.mrf.mxu0
        %v7517 = vadd.f32 %v7404, %v7516
        %v7518 = vpop.f32.mrf.mxu0
        %v7519 = vadd.f32 %v7406, %v7518
        %7520 = vmatprep.mubr.f32.mxu0 %v7055
        %7521 = vmatmul.mubr.f32.gmra.mxu0 %v7054
        %v7522 = vpop.f32.mrf.mxu0
        %v7523 = vadd.f32 %v7410, %v7522
        %v7524 = vpop.f32.mrf.mxu0
        %v7525 = vadd.f32 %v7412, %v7524
        %7526 = vmatprep.mubr.f32.mxu0 %v7064
        %7527 = vmatmul.mubr.f32.gmra.mxu0 %v7063
        %v7528 = vpop.f32.mrf.mxu0
        %v7529 = vadd.f32 %v7416, %v7528
        %v7530 = vpop.f32.mrf.mxu0
        %v7531 = vadd.f32 %v7418, %v7530
        %7532 = vmatprep.mubr.f32.mxu0 %v7073
        %7533 = vmatmul.mubr.f32.gmra.mxu0 %v7072
        %v7534 = vpop.f32.mrf.mxu0
        %v7535 = vadd.f32 %v7422, %v7534
        %v7536 = vpop.f32.mrf.mxu0
        %v7537 = vadd.f32 %v7424, %v7536
        %7538 = vmatprep.mubr.f32.mxu0 %v7082
        %7539 = vmatmul.mubr.f32.gmra.mxu0 %v7081
        %v7540 = vpop.f32.mrf.mxu0
        %v7541 = vadd.f32 %v7428, %v7540
        %v7542 = vpop.f32.mrf.mxu0
        %v7543 = vadd.f32 %v7430, %v7542
        %7544 = vmatprep.mubr.f32.mxu0 %v7091
        %7545 = vmatmul.mubr.f32.gmra.mxu0 %v7090
        %v7546 = vpop.f32.mrf.mxu0
        %v7547 = vadd.f32 %v7434, %v7546
        %v7548 = vpop.f32.mrf.mxu0
        %v7549 = vadd.f32 %v7436, %v7548
        %7550 = vmatprep.mubr.f32.mxu0 %v7100
        %7551 = vmatmul.mubr.f32.gmra.mxu0 %v7099
        %v7552 = vpop.f32.mrf.mxu0
        %v7553 = vadd.f32 %v7440, %v7552
        %v7554 = vpop.f32.mrf.mxu0
        %v7555 = vadd.f32 %v7442, %v7554
        %7556 = vmatprep.mubr.f32.mxu0 %v7109
        %7557 = vmatmul.mubr.f32.gmra.mxu0 %v7108
        %v7558 = vpop.f32.mrf.mxu0
        %v7559 = vadd.f32 %v7446, %v7558
        %v7560 = vpop.f32.mrf.mxu0
        %v7561 = vadd.f32 %v7448, %v7560
        %7562 = vdwg.mxu0
        %7563 = vmatprep.subr.mxu0 %v4951
        %7564 = vmatpush1.msra.mxu0 %v4950
        %7565 = vmatprep.subr.mxu0 %v4949
        %7566 = vmatpush1.msra.mxu0 %v4948
        %7567 = vmatprep.subr.mxu0 %v4947
        %7568 = vmatpush1.msra.mxu0 %v4946
        %7569 = vmatprep.subr.mxu0 %v4945
        %7570 = vmatpush1.msra.mxu0 %v4944
        %7571 = vmatprep.subr.mxu0 %v4943
        %7572 = vmatpush1.msra.mxu0 %v4942
        %7573 = vmatprep.subr.mxu0 %v4941
        %7574 = vmatpush1.msra.mxu0 %v4940
        %7575 = vmatprep.subr.mxu0 %v4939
        %7576 = vmatpush1.msra.mxu0 %v4938
        %7577 = vmatprep.subr.mxu0 %v4937
        %7578 = vmatpush1.msra.mxu0 %v4936
        %7579 = vmatprep.subr.mxu0 %v4935
        %7580 = vmatpush1.msra.mxu0 %v4934
        %7581 = vmatprep.subr.mxu0 %v4933
        %7582 = vmatpush1.msra.mxu0 %v4932
        %7583 = vmatprep.subr.mxu0 %v4931
        %7584 = vmatpush1.msra.mxu0 %v4930
        %7585 = vmatprep.subr.mxu0 %v4929
        %7586 = vmatpush1.msra.mxu0 %v4928
        %7587 = vmatprep.subr.mxu0 %v4927
        %7588 = vmatpush1.msra.mxu0 %v4926
        %7589 = vmatprep.subr.mxu0 %v4925
        %7590 = vmatpush1.msra.mxu0 %v4924
        %7591 = vmatprep.subr.mxu0 %v4923
        %7592 = vmatpush1.msra.mxu0 %v4922
        %7593 = vmatprep.subr.mxu0 %v4921
        %7594 = vmatpush1.msra.mxu0 %v4920
        %7595 = vmatprep.subr.mxu0 0.0
        %7596 = vmatpush2.msra.mxu0 0.0
        %7597 = vmatprep.subr.mxu0 0.0
        %7598 = vmatpush2.msra.mxu0 0.0
        %7599 = vmatprep.subr.mxu0 0.0
        %7600 = vmatpush2.msra.mxu0 0.0
        %7601 = vmatprep.subr.mxu0 0.0
        %7602 = vmatpush2.msra.mxu0 0.0
        %7603 = vmatprep.subr.mxu0 0.0
        %7604 = vmatpush2.msra.mxu0 0.0
        %7605 = vmatprep.subr.mxu0 0.0
        %7606 = vmatpush2.msra.mxu0 0.0
        %7607 = vmatprep.subr.mxu0 0.0
        %7608 = vmatpush2.msra.mxu0 0.0
        %7609 = vmatprep.subr.mxu0 0.0
        %7610 = vmatpush2.msra.mxu0 0.0
        %7611 = vmatprep.subr.mxu0 0.0
        %7612 = vmatpush2.msra.mxu0 0.0
        %7613 = vmatprep.subr.mxu0 0.0
        %7614 = vmatpush2.msra.mxu0 0.0
        %7615 = vmatprep.subr.mxu0 0.0
        %7616 = vmatpush2.msra.mxu0 0.0
        %7617 = vmatprep.subr.mxu0 0.0
        %7618 = vmatpush2.msra.mxu0 0.0
        %7619 = vmatprep.subr.mxu0 0.0
        %7620 = vmatpush2.msra.mxu0 0.0
        %7621 = vmatprep.subr.mxu0 0.0
        %7622 = vmatpush2.msra.mxu0 0.0
        %7623 = vmatprep.subr.mxu0 0.0
        %7624 = vmatpush2.msra.mxu0 0.0
        %7625 = vmatprep.subr.mxu0 0.0
        %7626 = vmatpush2.msra.mxu0 0.0
        %7627 = vmatprep.mubr.f32.mxu0 0.0
        %7628 = vmatmul.mubr.f32.gmra.mxu0 %v7047
        %v7629 = vpop.f32.mrf.mxu0
        %v7630 = vadd.f32 %v7517, %v7629
        %v7631 = vpop.f32.mrf.mxu0
        %v7632 = vadd.f32 %v7519, %v7631
        %7633 = vmatprep.mubr.f32.mxu0 0.0
        %7634 = vmatmul.mubr.f32.gmra.mxu0 %v7056
        %v7635 = vpop.f32.mrf.mxu0
        %v7636 = vadd.f32 %v7523, %v7635
        %v7637 = vpop.f32.mrf.mxu0
        %v7638 = vadd.f32 %v7525, %v7637
        %7639 = vmatprep.mubr.f32.mxu0 0.0
        %7640 = vmatmul.mubr.f32.gmra.mxu0 %v7065
        %v7641 = vpop.f32.mrf.mxu0
        %v7642 = vadd.f32 %v7529, %v7641
        %v7643 = vpop.f32.mrf.mxu0
        %v7644 = vadd.f32 %v7531, %v7643
        %7645 = vmatprep.mubr.f32.mxu0 0.0
        %7646 = vmatmul.mubr.f32.gmra.mxu0 %v7074
        %v7647 = vpop.f32.mrf.mxu0
        %v7648 = vadd.f32 %v7535, %v7647
        %v7649 = vpop.f32.mrf.mxu0
        %v7650 = vadd.f32 %v7537, %v7649
        %7651 = vmatprep.mubr.f32.mxu0 0.0
        %7652 = vmatmul.mubr.f32.gmra.mxu0 %v7083
        %v7653 = vpop.f32.mrf.mxu0
        %v7654 = vadd.f32 %v7541, %v7653
        %v7655 = vpop.f32.mrf.mxu0
        %v7656 = vadd.f32 %v7543, %v7655
        %7657 = vmatprep.mubr.f32.mxu0 0.0
        %7658 = vmatmul.mubr.f32.gmra.mxu0 %v7092
        %v7659 = vpop.f32.mrf.mxu0
        %v7660 = vadd.f32 %v7547, %v7659
        %v7661 = vpop.f32.mrf.mxu0
        %v7662 = vadd.f32 %v7549, %v7661
        %7663 = vmatprep.mubr.f32.mxu0 0.0
        %7664 = vmatmul.mubr.f32.gmra.mxu0 %v7101
        %v7665 = vpop.f32.mrf.mxu0
        %v7666 = vadd.f32 %v7553, %v7665
        %v7667 = vpop.f32.mrf.mxu0
        %v7668 = vadd.f32 %v7555, %v7667
        %7669 = vmatprep.mubr.f32.mxu0 0.0
        %7670 = vmatmul.mubr.f32.gmra.mxu0 %v7110
        %v7671 = vpop.f32.mrf.mxu0
        %v7672 = vadd.f32 %v7559, %v7671
        %v7673 = vpop.f32.mrf.mxu0
        %v7674 = vadd.f32 %v7561, %v7673
        %7675 = vdwg.mxu0
        %v7676 = vmul.f32 %v7630, %v5521
        %v7677 = vmul.f32 %v7632, %v5525
        %v7678 = vmul.f32 %v7636, %v5521
        %v7679 = vmul.f32 %v7638, %v5525
        %v7680 = vmul.f32 %v7642, %v5521
        %v7681 = vmul.f32 %v7644, %v5525
        %v7682 = vmul.f32 %v7648, %v5521
        %v7683 = vmul.f32 %v7650, %v5525
        %v7684 = vmul.f32 %v7654, %v5521
        %v7685 = vmul.f32 %v7656, %v5525
        %v7686 = vmul.f32 %v7660, %v5521
        %v7687 = vmul.f32 %v7662, %v5525
        %v7688 = vmul.f32 %v7666, %v5521
        %v7689 = vmul.f32 %v7668, %v5525
        %v7690 = vmul.f32 %v7672, %v5521
        %v7691 = vmul.f32 %v7674, %v5525
        %v7692 = vadd.f32 %v7676, %v5548
        %v7693 = vadd.f32 %v7677, %v5552
        %v7694 = vadd.f32 %v7678, %v5548
        %v7695 = vadd.f32 %v7679, %v5552
        %v7696 = vadd.f32 %v7680, %v5548
        %v7697 = vadd.f32 %v7681, %v5552
        %v7698 = vadd.f32 %v7682, %v5548
        %v7699 = vadd.f32 %v7683, %v5552
        %v7700 = vadd.f32 %v7684, %v5548
        %v7701 = vadd.f32 %v7685, %v5552
        %v7702 = vadd.f32 %v7686, %v5548
        %v7703 = vadd.f32 %v7687, %v5552
        %v7704 = vadd.f32 %v7688, %v5548
        %v7705 = vadd.f32 %v7689, %v5552
        %v7706 = vadd.f32 %v7690, %v5548
        %v7707 = vadd.f32 %v7691, %v5552
        %v7708 = vmax.f32 %v7692, 0.0
        %v7709 = vmax.f32 %v7693, 0.0
        %v7710 = vmax.f32 %v7694, 0.0
        %v7711 = vmax.f32 %v7695, 0.0
        %v7712 = vmax.f32 %v7696, 0.0
        %v7713 = vmax.f32 %v7697, 0.0
        %v7714 = vmax.f32 %v7698, 0.0
        %v7715 = vmax.f32 %v7699, 0.0
        %v7716 = vmax.f32 %v7700, 0.0
        %v7717 = vmax.f32 %v7701, 0.0
        %v7718 = vmax.f32 %v7702, 0.0
        %v7719 = vmax.f32 %v7703, 0.0
        %v7720 = vmax.f32 %v7704, 0.0
        %v7721 = vmax.f32 %v7705, 0.0
        %v7722 = vmax.f32 %v7706, 0.0
        %v7723 = vmax.f32 %v7707, 0.0
        %v7724 = vmax.f32 %v7708, %v7712
        %v7725 = vmax.f32 %v7710, %v7714
        %v7726 = vmax.f32 %v7724, %v7716
        %v7727 = vmax.f32 %v7725, %v7718
        %v7728 = vmax.f32 %v7726, %v7720
        %v7729 = vmax.f32 %v7727, %v7722
        %v7730 = vmax.f32 %v7728, %v7729
        %v7731 = vrot.slane %v7730, 4
        %v7732 = vmax.f32 %v7730, %v7731
        %v7733 = vrot.slane %v7732, 2
        %v7734 = vmax.f32 %v7732, %v7733
        %v7735 = vrot.slane %v7734, 1
        %v7736 = vmax.f32 %v7734, %v7735
        %v7737 = vmax.f32 %v7709, %v7713
        %v7738 = vmax.f32 %v7711, %v7715
        %v7739 = vmax.f32 %v7737, %v7717
        %v7740 = vmax.f32 %v7738, %v7719
        %v7741 = vmax.f32 %v7739, %v7721
        %v7742 = vmax.f32 %v7740, %v7723
        %v7743 = vmax.f32 %v7741, %v7742
        %v7744 = vrot.slane %v7743, 4
        %v7745 = vmax.f32 %v7743, %v7744
        %v7746 = vrot.slane %v7745, 2
        %v7747 = vmax.f32 %v7745, %v7746
        %v7748 = vrot.slane %v7747, 1
        %v7749 = vmax.f32 %v7747, %v7748
        %v7750 = vmax.f32 %v7037, %v7736
        %v7751 = vmax.f32 %v7038, %v7749
        %v7754 = vcombine.low %v7750, %v7751
        %v7756 = vunpack.c.l.s4 1966171168
        %v7757 = vunpack.c.0.s8 %v7756
        %v7758 = vlaneseq
        %v7759 = vshrl.u32 %v7758, 7
        %v7760 = vsub.s32 %v7757, %v7759
        %v7761 = vrot.slane %v7754, %v7760
        %v7763 = vunpack.c.l.s4 1966171168
        %v7764 = vunpack.c.0.s8 %v7763
        %v7765 = vlaneseq
        %v7766 = vshrl.u32 %v7765, 7
        %v7767 = vsub.s32 %v7764, %v7766
        %v7768 = vrot.slane %v7761, %v7767
        %v7770 = vlaneseq
        %vm7771 = vcmp.ge.s32.totalorder %v7770, 0
        %vm7772 = vcmp.lt.s32.totalorder %v7770, 256
        %vm7773 = vmand %vm7771, %vm7772
        %7774 = vst.msk [vmem:[%s352] sm:$0x3] %vm7773, %v7768
        %s7775 = sand.u32 %s247, 1
        %s7776 = scalar_lea.sflag [#allocation7], %s7775
        %s7777 = sand.u32 %s247, 1
        %s7778 = smul.addr %s7777, 2
        %s7779 = scalar_lea.vmem [#allocation6], %s7778
        // Predicated region
        $region61: #{feature_extractor_forward.1} parent=59 // pred_check
          %p7780 = pneg %p257
        $region62: #{feature_extractor_forward.1} parent=59 // pred_check_branch
          %7782 = sbr.rel (%p7780) target = $region64
        $region63: #{feature_extractor_forward.1} parent=59 // pred_region
          %s7784 = ssub.s32 32, 32
          %7785 = vsyncadd %s7776, %s7784
          %s7786 = smul.addr %s24, 2
          %s7787 = smul.addr %s7786, 16
          %s7788 = scalar_lea.hbm %s10, %s7787
          %s7790 = sshll.u32 %s7779, 4
          %s7791 = int_to_ptr.vmem [resolvable:$true] %s7790
          %7793 = dma.vmem_to_hbm [thread:$0]  %s7791, 32, %s7788, %s7776
        $region64: #{feature_extractor_forward.1} parent=59 // pred_fallthru
          _
      $region60: #{feature_extractor_forward.1} parent=5 // pred_fallthru
        _
      %p7794 = scmp.le.s32.totalorder 2, %s19
      // Predicated region
      $region65: #{feature_extractor_forward.1} parent=5 // pred_check
        %p7795 = pneg %p7794
      $region66: #{feature_extractor_forward.1} parent=5 // pred_check_branch
        %7797 = sbr.rel (%p7795) target = $region68
      $region67: #{feature_extractor_forward.1} parent=5 // pred_region
        %s7798 = ssub.s32 %s19, 2
        // Predicated region
        $region69: #{feature_extractor_forward.1} parent=67 // pred_check
          %p7799 = pneg %p263
        $region70: #{feature_extractor_forward.1} parent=67 // pred_check_branch
          %7801 = sbr.rel (%p7799) target = $region72
        $region71: #{feature_extractor_forward.1} parent=67 // pred_region
          %s7802 = sand.u32 %s248, 1
          %s7803 = scalar_lea.sflag [#allocation7], %s7802
          %s7804 = sand.u32 %s248, 1
          %s7805 = smul.addr %s7804, 2
          %s7806 = scalar_lea.vmem [#allocation6], %s7805
          %7807 = dma.done %s7803, 32
        $region72: #{feature_extractor_forward.1} parent=67 // pred_fallthru
          _
      $region68: #{feature_extractor_forward.1} parent=5 // pred_fallthru
        _
    $region6: #{feature_extractor_forward.1} parent=1 // loop_footer
      %s23 = sadd.s32 1, %s19
    $region7: #{feature_extractor_forward.1} parent=1 // loop_footer_branch
      %18 = sbr.rel target = $region3
    $region8: #{feature_extractor_forward.1} parent=1 // loop_exit
      _
    %7808 = vsyncpa [#allocation7], 1
    %s7809 = scalar_lea.sflag [#allocation7], 1
    %7810 = vsyncpa %s7809, 1

</llo_original>
